<compile_context>
chip_gen: v7x
topology: tpu7x:2x2x1
jax: 0.10.0
libtpu: 0.0.40
codegen_flags: <defaults>
</compile_context>

<pallas_src>
import functools

import jax
import jax.numpy as jnp
import numpy as np
from jax.experimental import pallas as pl
from jax.experimental.pallas import tpu as pltpu

_MAX_TILE_ROWS = 4            # output rows per grid step: amortizes ~0.35us/step grid
                              # overhead while keeping per-step VMEM slabs small enough
                              # for v7x's 64 MiB VMEM.
_VMEM_LIMIT = 64 * 1024 * 1024


def _largest_divisor_leq(n, cap):
    for d in range(min(n, cap), 0, -1):
        if n % d == 0:
            return d
    return 1


# ------------- kernel 1: conv 9x9 + ReLU + conv 1x1 + ReLU (fused, per row tile) -------------
def _conv_relu_conv1x1_relu_kernel(x_ref, w1t_ref, b1_ref, w2t_ref, b2_ref, o_ref,
                                   *, kh, kw, tile_rows, wo):
    # x_ref  : (1, H, Cpad, W)  full image for this batch element (resident across row tiles)
    # w1t_ref: (n1, kh*kw*Cpad); b1_ref: (n1, 1)
    # w2t_ref: (n2, n1)        ; b2_ref: (n2, 1)
    # o_ref  : (1, tile_rows, n2, Wo)
    w1t = w1t_ref[...]
    b1 = b1_ref[...]
    w2t = w2t_ref[...]
    b2 = b2_ref[...]
    r0 = pl.program_id(1) * tile_rows
    for t in range(tile_rows):                                   # static unroll
        # Build the (kh*kw*Cpad, Wo) patch matrix for output row r0+t from shifted
        # slices of the resident image (sublane-aligned concat; no HBM im2col).
        slabs = []
        for di in range(kh):
            plane = x_ref[0, pl.ds(r0 + t + di, 1), :, :][0]     # (Cpad, W)
            for dj in range(kw):
                slabs.append(plane[:, dj:dj + wo])               # (Cpad, Wo)
        patches = jnp.concatenate(slabs, axis=0)                 # (kh*kw*Cpad, Wo)
        h = jnp.dot(w1t, patches, preferred_element_type=jnp.float32)   # (n1, Wo)
        h = jnp.maximum(h + b1, 0.0)
        y = jnp.dot(w2t, h, preferred_element_type=jnp.float32)         # (n2, Wo)
        y = jnp.maximum(y + b2, 0.0)
        o_ref[0, t, :, :] = y.astype(o_ref.dtype)


def _fused_conv1_conv2(x, w1t, b1, w2t, b2, kh, kw):
    # x: (N, H, Cpad, W) channel-major layout.  Returns (N, Ho, n2, Wo).
    n, h, cp, w = x.shape
    ho, wo = h - kh + 1, w - kw + 1
    assert ho > 0 and wo > 0
    n1 = w1t.shape[0]
    n2 = w2t.shape[0]
    tr = _largest_divisor_leq(ho, _MAX_TILE_ROWS)
    kernel = functools.partial(_conv_relu_conv1x1_relu_kernel,
                               kh=kh, kw=kw, tile_rows=tr, wo=wo)
    flops = 2 * n * ho * wo * (w1t.shape[1] * n1 + n1 * n2)
    bytes_accessed = 4 * (x.size + w1t.size + b1.size + w2t.size + b2.size
                          + n * ho * n2 * wo)
    return pl.pallas_call(
        kernel,
        out_shape=jax.ShapeDtypeStruct((n, ho, n2, wo), jnp.float32),
        grid=(n, ho // tr),
        in_specs=[
            pl.BlockSpec((1, h, cp, w), lambda i, r: (i, 0, 0, 0)),  # image: resident per batch
            pl.BlockSpec(w1t.shape, lambda i, r: (0, 0)),            # weights/bias: resident
            pl.BlockSpec(b1.shape, lambda i, r: (0, 0)),
            pl.BlockSpec(w2t.shape, lambda i, r: (0, 0)),
            pl.BlockSpec(b2.shape, lambda i, r: (0, 0)),
        ],
        out_specs=pl.BlockSpec((1, tr, n2, wo), lambda i, r: (i, r, 0, 0)),
        compiler_params=pltpu.CompilerParams(
            dimension_semantics=("parallel", "parallel"),
            vmem_limit_bytes=_VMEM_LIMIT),
        cost_estimate=pl.CostEstimate(flops=flops, transcendentals=0,
                                      bytes_accessed=bytes_accessed),
    )(x, w1t, b1, w2t, b2)


# ----------------------------- kernel 2: conv 5x5 (no ReLU) -----------------------------
def _conv5x5_kernel(x_ref, w3t_ref, b3_ref, o_ref, *, kh, kw, tile_rows, wo):
    # x_ref  : (1, Hin, n2, Win)  resident per batch element
    # w3t_ref: (cout, kh*kw*n2)  ; b3_ref: (cout, 1)
    # o_ref  : (1, tile_rows, cout, Wo)   -- channel-major, lane-dense along Wo
    w3t = w3t_ref[...]
    b3 = b3_ref[...]
    r0 = pl.program_id(1) * tile_rows
    for t in range(tile_rows):
        slabs = []
        for di in range(kh):
            plane = x_ref[0, pl.ds(r0 + t + di, 1), :, :][0]     # (n2, Win)
            for dj in range(kw):
                slabs.append(plane[:, dj:dj + wo])               # (n2, Wo)
        patches = jnp.concatenate(slabs, axis=0)                 # (kh*kw*n2, Wo)
        y = jnp.dot(w3t, patches, preferred_element_type=jnp.float32) + b3
        o_ref[0, t, :, :] = y.astype(o_ref.dtype)


def _conv3(y1, w3t, b3, kh, kw):
    n, hin, n2, win = y1.shape
    ho, wo = hin - kh + 1, win - kw + 1
    assert ho > 0 and wo > 0
    cout = w3t.shape[0]
    tr = _largest_divisor_leq(ho, _MAX_TILE_ROWS)
    kernel = functools.partial(_conv5x5_kernel, kh=kh, kw=kw, tile_rows=tr, wo=wo)
    flops = 2 * n * ho * wo * w3t.shape[1] * cout
    bytes_accessed = 4 * (y1.size + w3t.size + b3.size + n * ho * cout * wo)
    return pl.pallas_call(
        kernel,
        out_shape=jax.ShapeDtypeStruct((n, ho, cout, wo), jnp.float32),
        grid=(n, ho // tr),
        in_specs=[
            # TODO(synk): for very large images switch this to halo row-tiles instead
            # of keeping the full per-batch feature map resident in VMEM.
            pl.BlockSpec((1, hin, n2, win), lambda i, r: (i, 0, 0, 0)),
            pl.BlockSpec(w3t.shape, lambda i, r: (0, 0)),
            pl.BlockSpec(b3.shape, lambda i, r: (0, 0)),
        ],
        out_specs=pl.BlockSpec((1, tr, cout, wo), lambda i, r: (i, r, 0, 0)),
        compiler_params=pltpu.CompilerParams(
            dimension_semantics=("parallel", "parallel"),
            vmem_limit_bytes=_VMEM_LIMIT),
        cost_estimate=pl.CostEstimate(flops=flops, transcendentals=0,
                                      bytes_accessed=bytes_accessed),
    )(y1, w3t, b3)


# ------------------------- parameters (matches the PyTorch module init) -------------------------
def init_params(key, num_channels=3):
    std = 1e-3  # conv*.weight.data.normal_(mean=0.0, std=0.001); biases zero
    k1, k2, k3 = jax.random.split(key, 3)
    w1 = std * jax.random.normal(k1, (9, 9, num_channels, 64), jnp.float32)   # HWIO
    b1 = jnp.zeros((64,), jnp.float32)
    w2 = std * jax.random.normal(k2, (1, 1, 64, 32), jnp.float32)
    b2 = jnp.zeros((32,), jnp.float32)
    w3 = std * jax.random.normal(k3, (5, 5, 32, num_channels), jnp.float32)
    b3 = jnp.zeros((num_channels,), jnp.float32)
    return (w1, b1, w2, b2, w3, b3)


# ------------------------- forward pass (wrapper = layout plumbing only) -------------------------
def srcnn_forward(x_nchw, params):
    w1, b1, w2, b2, w3, b3 = params
    n, c, h, w = x_nchw.shape
    kh1 = kw1 = w1.shape[0]            # 9
    kh3 = kw3 = w3.shape[0]            # 5
    n1 = w1.shape[3]                   # 64
    n2 = w2.shape[3]                   # 32
    cp = -(-c // 8) * 8                # pad input channels to the f32 sublane tile

    # NCHW -> channel-on-sublane / width-on-lane layout (N, H, Cpad, W).
    x = jnp.transpose(x_nchw, (0, 2, 1, 3))
    x = jnp.pad(x, ((0, 0), (0, 0), (0, cp - c), (0, 0)))

    # Flatten weights to (Cout, K) with K ordered (di, dj, cin), matching the kernels'
    # patch construction; biases become (Cout, 1) columns (broadcast along W / lanes).
    w1p = jnp.pad(w1, ((0, 0), (0, 0), (0, cp - c), (0, 0)))
    w1t = jnp.transpose(w1p, (3, 0, 1, 2)).reshape(n1, kh1 * kw1 * cp)
    w2t = jnp.transpose(w2.reshape(n1, n2))                       # (32, 64)
    w3t = jnp.transpose(w3, (3, 0, 1, 2)).reshape(c, kh3 * kw3 * n2)

    y1 = _fused_conv1_conv2(x, w1t, b1.reshape(n1, 1), w2t, b2.reshape(n2, 1),
                            kh1, kw1)                             # (N, Ho1, 32, Wo1)
    out = _conv3(y1, w3t, b3.reshape(c, 1), kh3, kw3)             # (N, Ho3, C, Wo3)
    return jnp.transpose(out, (0, 2, 1, 3))                       # -> NCHW


# ------------------------- pure-JAX reference for the sanity check -------------------------
def srcnn_reference(x_nchw, params):
    w1, b1, w2, b2, w3, b3 = params
    dn = ('NHWC', 'HWIO', 'NHWC')
    x = jnp.transpose(x_nchw, (0, 2, 3, 1))
    x = jax.lax.conv_general_dilated(x, w1, (1, 1), 'VALID', dimension_numbers=dn) + b1
    x = jnp.maximum(x, 0.0)
    x = jax.lax.conv_general_dilated(x, w2, (1, 1), 'VALID', dimension_numbers=dn) + b2
    x = jnp.maximum(x, 0.0)
    x = jax.lax.conv_general_dilated(x, w3, (1, 1), 'VALID', dimension_numbers=dn) + b3
    return jnp.transpose(x, (0, 3, 1, 2))


if __name__ == "__main__":
    key = jax.random.PRNGKey(0)
    k_param, k_x = jax.random.split(key)

    num_channels = 3
    N, H, W = 2, 20, 20                 # output: (2, 3, 8, 8) after the 9x9 and 5x5 VALID convs
    x = jax.random.normal(k_x, (N, num_channels, H, W), jnp.float32)
    params = init_params(k_param, num_channels)

    fwd = jax.jit(srcnn_forward)
    out = jax.block_until_ready(fwd(x, params))
    assert out.shape == (N, num_channels, H - 12, W - 12), out.shape

    ref = jax.block_until_ready(srcnn_reference(x, params))
    if not np.allclose(np.asarray(out), np.asarray(ref), rtol=5e-2, atol=1e-8):
        raise AssertionError("Pallas SRCNN output mismatch vs JAX reference")

    print("KERNEL_OK")
</pallas_src>

<mosaic_0001>
module attributes {stable_mosaic.version = 11 : i64} {
  func.func @_conv_relu_conv1x1_relu_kernel(%arg0: i32, %arg1: i32, %arg2: memref<1x20x8x20xf32, #tpu.memory_space<vmem>>, %arg3: memref<64x648xf32, #tpu.memory_space<vmem>>, %arg4: memref<64x1xf32, #tpu.memory_space<vmem>>, %arg5: memref<32x64xf32, #tpu.memory_space<vmem>>, %arg6: memref<32x1xf32, #tpu.memory_space<vmem>>, %arg7: memref<1x4x32x12xf32, #tpu.memory_space<vmem>>) attributes {dimension_semantics = [#tpu.dimension_semantics<parallel>, #tpu.dimension_semantics<parallel>], iteration_bounds = array<i64: 2, 3>, scalar_prefetch = 0 : i64, scratch_operands = 0 : i64, tpu.core_type = #tpu.core_type<tc>, window_params = [{transform_indices = @transform_0, window_bounds = array<i64: 1, 20, 8, 20>}, {pipeline_mode = #tpu.pipeline_mode<synchronous>, transform_indices = @transform_1, window_bounds = array<i64: 64, 648>}, {pipeline_mode = #tpu.pipeline_mode<synchronous>, transform_indices = @transform_2, window_bounds = array<i64: 64, 1>}, {pipeline_mode = #tpu.pipeline_mode<synchronous>, transform_indices = @transform_3, window_bounds = array<i64: 32, 64>}, {pipeline_mode = #tpu.pipeline_mode<synchronous>, transform_indices = @transform_4, window_bounds = array<i64: 32, 1>}, {transform_indices = @transform_5, window_bounds = array<i64: 1, 4, 32, 12>}]} {
    %c0 = arith.constant 0 : index
    %c0_0 = arith.constant 0 : index
    %0 = vector.load %arg3[%c0, %c0_0] : memref<64x648xf32, #tpu.memory_space<vmem>>, vector<64x648xf32>
    %c0_1 = arith.constant 0 : index
    %c0_2 = arith.constant 0 : index
    %1 = vector.load %arg4[%c0_1, %c0_2] : memref<64x1xf32, #tpu.memory_space<vmem>>, vector<64x1xf32>
    %c0_3 = arith.constant 0 : index
    %c0_4 = arith.constant 0 : index
    %2 = vector.load %arg5[%c0_3, %c0_4] : memref<32x64xf32, #tpu.memory_space<vmem>>, vector<32x64xf32>
    %c0_5 = arith.constant 0 : index
    %c0_6 = arith.constant 0 : index
    %3 = vector.load %arg6[%c0_5, %c0_6] : memref<32x1xf32, #tpu.memory_space<vmem>>, vector<32x1xf32>
    %c4_i32 = arith.constant 4 : i32
    %4 = arith.muli %arg1, %c4_i32 : i32
    %c0_i32 = arith.constant 0 : i32
    %5 = arith.addi %4, %c0_i32 : i32
    %c0_i32_7 = arith.constant 0 : i32
    %6 = arith.addi %5, %c0_i32_7 : i32
    %c0_8 = arith.constant 0 : index
    %7 = arith.index_cast %6 : i32 to index
    %c0_9 = arith.constant 0 : index
    %c0_10 = arith.constant 0 : index
    %8 = vector.load %arg2[%c0_8, %7, %c0_9, %c0_10] : memref<1x20x8x20xf32, #tpu.memory_space<vmem>>, vector<1x1x8x20xf32>
    %9 = vector.shape_cast %8 : vector<1x1x8x20xf32> to vector<1x8x20xf32>
    %10 = vector.shape_cast %9 : vector<1x8x20xf32> to vector<8x20xf32>
    %11 = vector.extract_strided_slice %10 {offsets = [0, 0], sizes = [8, 12], strides = [1, 1]} : vector<8x20xf32> to vector<8x12xf32>
    %12 = vector.extract_strided_slice %10 {offsets = [0, 1], sizes = [8, 12], strides = [1, 1]} : vector<8x20xf32> to vector<8x12xf32>
    %13 = vector.extract_strided_slice %10 {offsets = [0, 2], sizes = [8, 12], strides = [1, 1]} : vector<8x20xf32> to vector<8x12xf32>
    %14 = vector.extract_strided_slice %10 {offsets = [0, 3], sizes = [8, 12], strides = [1, 1]} : vector<8x20xf32> to vector<8x12xf32>
    %15 = vector.extract_strided_slice %10 {offsets = [0, 4], sizes = [8, 12], strides = [1, 1]} : vector<8x20xf32> to vector<8x12xf32>
    %16 = vector.extract_strided_slice %10 {offsets = [0, 5], sizes = [8, 12], strides = [1, 1]} : vector<8x20xf32> to vector<8x12xf32>
    %17 = vector.extract_strided_slice %10 {offsets = [0, 6], sizes = [8, 12], strides = [1, 1]} : vector<8x20xf32> to vector<8x12xf32>
    %18 = vector.extract_strided_slice %10 {offsets = [0, 7], sizes = [8, 12], strides = [1, 1]} : vector<8x20xf32> to vector<8x12xf32>
    %19 = vector.extract_strided_slice %10 {offsets = [0, 8], sizes = [8, 12], strides = [1, 1]} : vector<8x20xf32> to vector<8x12xf32>
    %c0_i32_11 = arith.constant 0 : i32
    %20 = arith.addi %4, %c0_i32_11 : i32
    %c1_i32 = arith.constant 1 : i32
    %21 = arith.addi %20, %c1_i32 : i32
    %c0_12 = arith.constant 0 : index
    %22 = arith.index_cast %21 : i32 to index
    %c0_13 = arith.constant 0 : index
    %c0_14 = arith.constant 0 : index
    %23 = vector.load %arg2[%c0_12, %22, %c0_13, %c0_14] : memref<1x20x8x20xf32, #tpu.memory_space<vmem>>, vector<1x1x8x20xf32>
    %24 = vector.shape_cast %23 : vector<1x1x8x20xf32> to vector<1x8x20xf32>
    %25 = vector.shape_cast %24 : vector<1x8x20xf32> to vector<8x20xf32>
    %26 = vector.extract_strided_slice %25 {offsets = [0, 0], sizes = [8, 12], strides = [1, 1]} : vector<8x20xf32> to vector<8x12xf32>
    %27 = vector.extract_strided_slice %25 {offsets = [0, 1], sizes = [8, 12], strides = [1, 1]} : vector<8x20xf32> to vector<8x12xf32>
    %28 = vector.extract_strided_slice %25 {offsets = [0, 2], sizes = [8, 12], strides = [1, 1]} : vector<8x20xf32> to vector<8x12xf32>
    %29 = vector.extract_strided_slice %25 {offsets = [0, 3], sizes = [8, 12], strides = [1, 1]} : vector<8x20xf32> to vector<8x12xf32>
    %30 = vector.extract_strided_slice %25 {offsets = [0, 4], sizes = [8, 12], strides = [1, 1]} : vector<8x20xf32> to vector<8x12xf32>
    %31 = vector.extract_strided_slice %25 {offsets = [0, 5], sizes = [8, 12], strides = [1, 1]} : vector<8x20xf32> to vector<8x12xf32>
    %32 = vector.extract_strided_slice %25 {offsets = [0, 6], sizes = [8, 12], strides = [1, 1]} : vector<8x20xf32> to vector<8x12xf32>
    %33 = vector.extract_strided_slice %25 {offsets = [0, 7], sizes = [8, 12], strides = [1, 1]} : vector<8x20xf32> to vector<8x12xf32>
    %34 = vector.extract_strided_slice %25 {offsets = [0, 8], sizes = [8, 12], strides = [1, 1]} : vector<8x20xf32> to vector<8x12xf32>
    %c0_i32_15 = arith.constant 0 : i32
    %35 = arith.addi %4, %c0_i32_15 : i32
    %c2_i32 = arith.constant 2 : i32
    %36 = arith.addi %35, %c2_i32 : i32
    %c0_16 = arith.constant 0 : index
    %37 = arith.index_cast %36 : i32 to index
    %c0_17 = arith.constant 0 : index
    %c0_18 = arith.constant 0 : index
    %38 = vector.load %arg2[%c0_16, %37, %c0_17, %c0_18] : memref<1x20x8x20xf32, #tpu.memory_space<vmem>>, vector<1x1x8x20xf32>
    %39 = vector.shape_cast %38 : vector<1x1x8x20xf32> to vector<1x8x20xf32>
    %40 = vector.shape_cast %39 : vector<1x8x20xf32> to vector<8x20xf32>
    %41 = vector.extract_strided_slice %40 {offsets = [0, 0], sizes = [8, 12], strides = [1, 1]} : vector<8x20xf32> to vector<8x12xf32>
    %42 = vector.extract_strided_slice %40 {offsets = [0, 1], sizes = [8, 12], strides = [1, 1]} : vector<8x20xf32> to vector<8x12xf32>
    %43 = vector.extract_strided_slice %40 {offsets = [0, 2], sizes = [8, 12], strides = [1, 1]} : vector<8x20xf32> to vector<8x12xf32>
    %44 = vector.extract_strided_slice %40 {offsets = [0, 3], sizes = [8, 12], strides = [1, 1]} : vector<8x20xf32> to vector<8x12xf32>
    %45 = vector.extract_strided_slice %40 {offsets = [0, 4], sizes = [8, 12], strides = [1, 1]} : vector<8x20xf32> to vector<8x12xf32>
    %46 = vector.extract_strided_slice %40 {offsets = [0, 5], sizes = [8, 12], strides = [1, 1]} : vector<8x20xf32> to vector<8x12xf32>
    %47 = vector.extract_strided_slice %40 {offsets = [0, 6], sizes = [8, 12], strides = [1, 1]} : vector<8x20xf32> to vector<8x12xf32>
    %48 = vector.extract_strided_slice %40 {offsets = [0, 7], sizes = [8, 12], strides = [1, 1]} : vector<8x20xf32> to vector<8x12xf32>
    %49 = vector.extract_strided_slice %40 {offsets = [0, 8], sizes = [8, 12], strides = [1, 1]} : vector<8x20xf32> to vector<8x12xf32>
    %c0_i32_19 = arith.constant 0 : i32
    %50 = arith.addi %4, %c0_i32_19 : i32
    %c3_i32 = arith.constant 3 : i32
    %51 = arith.addi %50, %c3_i32 : i32
    %c0_20 = arith.constant 0 : index
    %52 = arith.index_cast %51 : i32 to index
    %c0_21 = arith.constant 0 : index
    %c0_22 = arith.constant 0 : index
    %53 = vector.load %arg2[%c0_20, %52, %c0_21, %c0_22] : memref<1x20x8x20xf32, #tpu.memory_space<vmem>>, vector<1x1x8x20xf32>
    %54 = vector.shape_cast %53 : vector<1x1x8x20xf32> to vector<1x8x20xf32>
    %55 = vector.shape_cast %54 : vector<1x8x20xf32> to vector<8x20xf32>
    %56 = vector.extract_strided_slice %55 {offsets = [0, 0], sizes = [8, 12], strides = [1, 1]} : vector<8x20xf32> to vector<8x12xf32>
    %57 = vector.extract_strided_slice %55 {offsets = [0, 1], sizes = [8, 12], strides = [1, 1]} : vector<8x20xf32> to vector<8x12xf32>
    %58 = vector.extract_strided_slice %55 {offsets = [0, 2], sizes = [8, 12], strides = [1, 1]} : vector<8x20xf32> to vector<8x12xf32>
    %59 = vector.extract_strided_slice %55 {offsets = [0, 3], sizes = [8, 12], strides = [1, 1]} : vector<8x20xf32> to vector<8x12xf32>
    %60 = vector.extract_strided_slice %55 {offsets = [0, 4], sizes = [8, 12], strides = [1, 1]} : vector<8x20xf32> to vector<8x12xf32>
    %61 = vector.extract_strided_slice %55 {offsets = [0, 5], sizes = [8, 12], strides = [1, 1]} : vector<8x20xf32> to vector<8x12xf32>
    %62 = vector.extract_strided_slice %55 {offsets = [0, 6], sizes = [8, 12], strides = [1, 1]} : vector<8x20xf32> to vector<8x12xf32>
    %63 = vector.extract_strided_slice %55 {offsets = [0, 7], sizes = [8, 12], strides = [1, 1]} : vector<8x20xf32> to vector<8x12xf32>
    %64 = vector.extract_strided_slice %55 {offsets = [0, 8], sizes = [8, 12], strides = [1, 1]} : vector<8x20xf32> to vector<8x12xf32>
    %c0_i32_23 = arith.constant 0 : i32
    %65 = arith.addi %4, %c0_i32_23 : i32
    %c4_i32_24 = arith.constant 4 : i32
    %66 = arith.addi %65, %c4_i32_24 : i32
    %c0_25 = arith.constant 0 : index
    %67 = arith.index_cast %66 : i32 to index
    %c0_26 = arith.constant 0 : index
    %c0_27 = arith.constant 0 : index
    %68 = vector.load %arg2[%c0_25, %67, %c0_26, %c0_27] : memref<1x20x8x20xf32, #tpu.memory_space<vmem>>, vector<1x1x8x20xf32>
    %69 = vector.shape_cast %68 : vector<1x1x8x20xf32> to vector<1x8x20xf32>
    %70 = vector.shape_cast %69 : vector<1x8x20xf32> to vector<8x20xf32>
    %71 = vector.extract_strided_slice %70 {offsets = [0, 0], sizes = [8, 12], strides = [1, 1]} : vector<8x20xf32> to vector<8x12xf32>
    %72 = vector.extract_strided_slice %70 {offsets = [0, 1], sizes = [8, 12], strides = [1, 1]} : vector<8x20xf32> to vector<8x12xf32>
    %73 = vector.extract_strided_slice %70 {offsets = [0, 2], sizes = [8, 12], strides = [1, 1]} : vector<8x20xf32> to vector<8x12xf32>
    %74 = vector.extract_strided_slice %70 {offsets = [0, 3], sizes = [8, 12], strides = [1, 1]} : vector<8x20xf32> to vector<8x12xf32>
    %75 = vector.extract_strided_slice %70 {offsets = [0, 4], sizes = [8, 12], strides = [1, 1]} : vector<8x20xf32> to vector<8x12xf32>
    %76 = vector.extract_strided_slice %70 {offsets = [0, 5], sizes = [8, 12], strides = [1, 1]} : vector<8x20xf32> to vector<8x12xf32>
    %77 = vector.extract_strided_slice %70 {offsets = [0, 6], sizes = [8, 12], strides = [1, 1]} : vector<8x20xf32> to vector<8x12xf32>
    %78 = vector.extract_strided_slice %70 {offsets = [0, 7], sizes = [8, 12], strides = [1, 1]} : vector<8x20xf32> to vector<8x12xf32>
    %79 = vector.extract_strided_slice %70 {offsets = [0, 8], sizes = [8, 12], strides = [1, 1]} : vector<8x20xf32> to vector<8x12xf32>
    %c0_i32_28 = arith.constant 0 : i32
    %80 = arith.addi %4, %c0_i32_28 : i32
    %c5_i32 = arith.constant 5 : i32
    %81 = arith.addi %80, %c5_i32 : i32
    %c0_29 = arith.constant 0 : index
    %82 = arith.index_cast %81 : i32 to index
    %c0_30 = arith.constant 0 : index
    %c0_31 = arith.constant 0 : index
    %83 = vector.load %arg2[%c0_29, %82, %c0_30, %c0_31] : memref<1x20x8x20xf32, #tpu.memory_space<vmem>>, vector<1x1x8x20xf32>
    %84 = vector.shape_cast %83 : vector<1x1x8x20xf32> to vector<1x8x20xf32>
    %85 = vector.shape_cast %84 : vector<1x8x20xf32> to vector<8x20xf32>
    %86 = vector.extract_strided_slice %85 {offsets = [0, 0], sizes = [8, 12], strides = [1, 1]} : vector<8x20xf32> to vector<8x12xf32>
    %87 = vector.extract_strided_slice %85 {offsets = [0, 1], sizes = [8, 12], strides = [1, 1]} : vector<8x20xf32> to vector<8x12xf32>
    %88 = vector.extract_strided_slice %85 {offsets = [0, 2], sizes = [8, 12], strides = [1, 1]} : vector<8x20xf32> to vector<8x12xf32>
    %89 = vector.extract_strided_slice %85 {offsets = [0, 3], sizes = [8, 12], strides = [1, 1]} : vector<8x20xf32> to vector<8x12xf32>
    %90 = vector.extract_strided_slice %85 {offsets = [0, 4], sizes = [8, 12], strides = [1, 1]} : vector<8x20xf32> to vector<8x12xf32>
    %91 = vector.extract_strided_slice %85 {offsets = [0, 5], sizes = [8, 12], strides = [1, 1]} : vector<8x20xf32> to vector<8x12xf32>
    %92 = vector.extract_strided_slice %85 {offsets = [0, 6], sizes = [8, 12], strides = [1, 1]} : vector<8x20xf32> to vector<8x12xf32>
    %93 = vector.extract_strided_slice %85 {offsets = [0, 7], sizes = [8, 12], strides = [1, 1]} : vector<8x20xf32> to vector<8x12xf32>
    %94 = vector.extract_strided_slice %85 {offsets = [0, 8], sizes = [8, 12], strides = [1, 1]} : vector<8x20xf32> to vector<8x12xf32>
    %c0_i32_32 = arith.constant 0 : i32
    %95 = arith.addi %4, %c0_i32_32 : i32
    %c6_i32 = arith.constant 6 : i32
    %96 = arith.addi %95, %c6_i32 : i32
    %c0_33 = arith.constant 0 : index
    %97 = arith.index_cast %96 : i32 to index
    %c0_34 = arith.constant 0 : index
    %c0_35 = arith.constant 0 : index
    %98 = vector.load %arg2[%c0_33, %97, %c0_34, %c0_35] : memref<1x20x8x20xf32, #tpu.memory_space<vmem>>, vector<1x1x8x20xf32>
    %99 = vector.shape_cast %98 : vector<1x1x8x20xf32> to vector<1x8x20xf32>
    %100 = vector.shape_cast %99 : vector<1x8x20xf32> to vector<8x20xf32>
    %101 = vector.extract_strided_slice %100 {offsets = [0, 0], sizes = [8, 12], strides = [1, 1]} : vector<8x20xf32> to vector<8x12xf32>
    %102 = vector.extract_strided_slice %100 {offsets = [0, 1], sizes = [8, 12], strides = [1, 1]} : vector<8x20xf32> to vector<8x12xf32>
    %103 = vector.extract_strided_slice %100 {offsets = [0, 2], sizes = [8, 12], strides = [1, 1]} : vector<8x20xf32> to vector<8x12xf32>
    %104 = vector.extract_strided_slice %100 {offsets = [0, 3], sizes = [8, 12], strides = [1, 1]} : vector<8x20xf32> to vector<8x12xf32>
    %105 = vector.extract_strided_slice %100 {offsets = [0, 4], sizes = [8, 12], strides = [1, 1]} : vector<8x20xf32> to vector<8x12xf32>
    %106 = vector.extract_strided_slice %100 {offsets = [0, 5], sizes = [8, 12], strides = [1, 1]} : vector<8x20xf32> to vector<8x12xf32>
    %107 = vector.extract_strided_slice %100 {offsets = [0, 6], sizes = [8, 12], strides = [1, 1]} : vector<8x20xf32> to vector<8x12xf32>
    %108 = vector.extract_strided_slice %100 {offsets = [0, 7], sizes = [8, 12], strides = [1, 1]} : vector<8x20xf32> to vector<8x12xf32>
    %109 = vector.extract_strided_slice %100 {offsets = [0, 8], sizes = [8, 12], strides = [1, 1]} : vector<8x20xf32> to vector<8x12xf32>
    %c0_i32_36 = arith.constant 0 : i32
    %110 = arith.addi %4, %c0_i32_36 : i32
    %c7_i32 = arith.constant 7 : i32
    %111 = arith.addi %110, %c7_i32 : i32
    %c0_37 = arith.constant 0 : index
    %112 = arith.index_cast %111 : i32 to index
    %c0_38 = arith.constant 0 : index
    %c0_39 = arith.constant 0 : index
    %113 = vector.load %arg2[%c0_37, %112, %c0_38, %c0_39] : memref<1x20x8x20xf32, #tpu.memory_space<vmem>>, vector<1x1x8x20xf32>
    %114 = vector.shape_cast %113 : vector<1x1x8x20xf32> to vector<1x8x20xf32>
    %115 = vector.shape_cast %114 : vector<1x8x20xf32> to vector<8x20xf32>
    %116 = vector.extract_strided_slice %115 {offsets = [0, 0], sizes = [8, 12], strides = [1, 1]} : vector<8x20xf32> to vector<8x12xf32>
    %117 = vector.extract_strided_slice %115 {offsets = [0, 1], sizes = [8, 12], strides = [1, 1]} : vector<8x20xf32> to vector<8x12xf32>
    %118 = vector.extract_strided_slice %115 {offsets = [0, 2], sizes = [8, 12], strides = [1, 1]} : vector<8x20xf32> to vector<8x12xf32>
    %119 = vector.extract_strided_slice %115 {offsets = [0, 3], sizes = [8, 12], strides = [1, 1]} : vector<8x20xf32> to vector<8x12xf32>
    %120 = vector.extract_strided_slice %115 {offsets = [0, 4], sizes = [8, 12], strides = [1, 1]} : vector<8x20xf32> to vector<8x12xf32>
    %121 = vector.extract_strided_slice %115 {offsets = [0, 5], sizes = [8, 12], strides = [1, 1]} : vector<8x20xf32> to vector<8x12xf32>
    %122 = vector.extract_strided_slice %115 {offsets = [0, 6], sizes = [8, 12], strides = [1, 1]} : vector<8x20xf32> to vector<8x12xf32>
    %123 = vector.extract_strided_slice %115 {offsets = [0, 7], sizes = [8, 12], strides = [1, 1]} : vector<8x20xf32> to vector<8x12xf32>
    %124 = vector.extract_strided_slice %115 {offsets = [0, 8], sizes = [8, 12], strides = [1, 1]} : vector<8x20xf32> to vector<8x12xf32>
    %c0_i32_40 = arith.constant 0 : i32
    %125 = arith.addi %4, %c0_i32_40 : i32
    %c8_i32 = arith.constant 8 : i32
    %126 = arith.addi %125, %c8_i32 : i32
    %c0_41 = arith.constant 0 : index
    %127 = arith.index_cast %126 : i32 to index
    %c0_42 = arith.constant 0 : index
    %c0_43 = arith.constant 0 : index
    %128 = vector.load %arg2[%c0_41, %127, %c0_42, %c0_43] : memref<1x20x8x20xf32, #tpu.memory_space<vmem>>, vector<1x1x8x20xf32>
    %129 = vector.shape_cast %128 : vector<1x1x8x20xf32> to vector<1x8x20xf32>
    %130 = vector.shape_cast %129 : vector<1x8x20xf32> to vector<8x20xf32>
    %131 = vector.extract_strided_slice %130 {offsets = [0, 0], sizes = [8, 12], strides = [1, 1]} : vector<8x20xf32> to vector<8x12xf32>
    %132 = vector.extract_strided_slice %130 {offsets = [0, 1], sizes = [8, 12], strides = [1, 1]} : vector<8x20xf32> to vector<8x12xf32>
    %133 = vector.extract_strided_slice %130 {offsets = [0, 2], sizes = [8, 12], strides = [1, 1]} : vector<8x20xf32> to vector<8x12xf32>
    %134 = vector.extract_strided_slice %130 {offsets = [0, 3], sizes = [8, 12], strides = [1, 1]} : vector<8x20xf32> to vector<8x12xf32>
    %135 = vector.extract_strided_slice %130 {offsets = [0, 4], sizes = [8, 12], strides = [1, 1]} : vector<8x20xf32> to vector<8x12xf32>
    %136 = vector.extract_strided_slice %130 {offsets = [0, 5], sizes = [8, 12], strides = [1, 1]} : vector<8x20xf32> to vector<8x12xf32>
    %137 = vector.extract_strided_slice %130 {offsets = [0, 6], sizes = [8, 12], strides = [1, 1]} : vector<8x20xf32> to vector<8x12xf32>
    %138 = vector.extract_strided_slice %130 {offsets = [0, 7], sizes = [8, 12], strides = [1, 1]} : vector<8x20xf32> to vector<8x12xf32>
    %139 = vector.extract_strided_slice %130 {offsets = [0, 8], sizes = [8, 12], strides = [1, 1]} : vector<8x20xf32> to vector<8x12xf32>
    %140 = tpu.concatenate %11, %12, %13, %14, %15, %16, %17, %18, %19, %26, %27, %28, %29, %30, %31, %32 in 0 : vector<8x12xf32>, vector<8x12xf32>, vector<8x12xf32>, vector<8x12xf32>, vector<8x12xf32>, vector<8x12xf32>, vector<8x12xf32>, vector<8x12xf32>, vector<8x12xf32>, vector<8x12xf32>, vector<8x12xf32>, vector<8x12xf32>, vector<8x12xf32>, vector<8x12xf32>, vector<8x12xf32>, vector<8x12xf32> -> vector<128x12xf32>
    %141 = tpu.concatenate %33, %34, %41, %42, %43, %44, %45, %46, %47, %48, %49, %56, %57, %58, %59, %60 in 0 : vector<8x12xf32>, vector<8x12xf32>, vector<8x12xf32>, vector<8x12xf32>, vector<8x12xf32>, vector<8x12xf32>, vector<8x12xf32>, vector<8x12xf32>, vector<8x12xf32>, vector<8x12xf32>, vector<8x12xf32>, vector<8x12xf32>, vector<8x12xf32>, vector<8x12xf32>, vector<8x12xf32>, vector<8x12xf32> -> vector<128x12xf32>
    %142 = tpu.concatenate %61, %62, %63, %64, %71, %72, %73, %74, %75, %76, %77, %78, %79, %86, %87, %88 in 0 : vector<8x12xf32>, vector<8x12xf32>, vector<8x12xf32>, vector<8x12xf32>, vector<8x12xf32>, vector<8x12xf32>, vector<8x12xf32>, vector<8x12xf32>, vector<8x12xf32>, vector<8x12xf32>, vector<8x12xf32>, vector<8x12xf32>, vector<8x12xf32>, vector<8x12xf32>, vector<8x12xf32>, vector<8x12xf32> -> vector<128x12xf32>
    %143 = tpu.concatenate %89, %90, %91, %92, %93, %94, %101, %102, %103, %104, %105, %106, %107, %108, %109, %116 in 0 : vector<8x12xf32>, vector<8x12xf32>, vector<8x12xf32>, vector<8x12xf32>, vector<8x12xf32>, vector<8x12xf32>, vector<8x12xf32>, vector<8x12xf32>, vector<8x12xf32>, vector<8x12xf32>, vector<8x12xf32>, vector<8x12xf32>, vector<8x12xf32>, vector<8x12xf32>, vector<8x12xf32>, vector<8x12xf32> -> vector<128x12xf32>
    %144 = tpu.concatenate %117, %118, %119, %120, %121, %122, %123, %124, %131, %132, %133, %134, %135, %136, %137, %138 in 0 : vector<8x12xf32>, vector<8x12xf32>, vector<8x12xf32>, vector<8x12xf32>, vector<8x12xf32>, vector<8x12xf32>, vector<8x12xf32>, vector<8x12xf32>, vector<8x12xf32>, vector<8x12xf32>, vector<8x12xf32>, vector<8x12xf32>, vector<8x12xf32>, vector<8x12xf32>, vector<8x12xf32>, vector<8x12xf32> -> vector<128x12xf32>
    %145 = tpu.concatenate %140, %141, %142, %143, %144, %139 in 0 : vector<128x12xf32>, vector<128x12xf32>, vector<128x12xf32>, vector<128x12xf32>, vector<128x12xf32>, vector<8x12xf32> -> vector<648x12xf32>
    %cst = arith.constant dense<0.000000e+00> : vector<64x12xf32>
    %146 = tpu.matmul %0, %145, %cst {dimension_numbers = #tpu.dot_dimension_numbers<[1], [0], [0], [1], [0, 0, 1, 1], [], []>} : vector<64x648xf32>, vector<648x12xf32>, vector<64x12xf32> -> vector<64x12xf32>
    %147 = vector.broadcast %1 : vector<64x1xf32> to vector<64x12xf32>
    %148 = arith.addf %146, %147 : vector<64x12xf32>
    %cst_44 = arith.constant 0.000000e+00 : f32
    %149 = vector.broadcast %cst_44 : f32 to vector<64x12xf32>
    %150 = arith.maximumf %148, %149 : vector<64x12xf32>
    %cst_45 = arith.constant dense<0.000000e+00> : vector<32x12xf32>
    %151 = tpu.matmul %2, %150, %cst_45 {dimension_numbers = #tpu.dot_dimension_numbers<[1], [0], [0], [1], [0, 0, 1, 1], [], []>} : vector<32x64xf32>, vector<64x12xf32>, vector<32x12xf32> -> vector<32x12xf32>
    %152 = vector.broadcast %3 : vector<32x1xf32> to vector<32x12xf32>
    %153 = arith.addf %151, %152 : vector<32x12xf32>
    %cst_46 = arith.constant 0.000000e+00 : f32
    %154 = vector.broadcast %cst_46 : f32 to vector<32x12xf32>
    %155 = arith.maximumf %153, %154 : vector<32x12xf32>
    %c0_47 = arith.constant 0 : index
    %c0_48 = arith.constant 0 : index
    %c0_49 = arith.constant 0 : index
    %c0_50 = arith.constant 0 : index
    %156 = vector.load %arg7[%c0_47, %c0_48, %c0_49, %c0_50] : memref<1x4x32x12xf32, #tpu.memory_space<vmem>>, vector<1x1x32x12xf32>
    %157 = vector.shape_cast %156 : vector<1x1x32x12xf32> to vector<32x12xf32>
    %158 = vector.shape_cast %155 : vector<32x12xf32> to vector<1x1x32x12xf32>
    tpu.vector_store %arg7[%c0_47, %c0_48, %c0_49, %c0_50], %158 {strides = array<i32>} : memref<1x4x32x12xf32, #tpu.memory_space<vmem>>, vector<1x1x32x12xf32>,
    %c1_i32_51 = arith.constant 1 : i32
    %159 = arith.addi %4, %c1_i32_51 : i32
    %c0_i32_52 = arith.constant 0 : i32
    %160 = arith.addi %159, %c0_i32_52 : i32
    %c0_53 = arith.constant 0 : index
    %161 = arith.index_cast %160 : i32 to index
    %c0_54 = arith.constant 0 : index
    %c0_55 = arith.constant 0 : index
    %162 = vector.load %arg2[%c0_53, %161, %c0_54, %c0_55] : memref<1x20x8x20xf32, #tpu.memory_space<vmem>>, vector<1x1x8x20xf32>
    %163 = vector.shape_cast %162 : vector<1x1x8x20xf32> to vector<1x8x20xf32>
    %164 = vector.shape_cast %163 : vector<1x8x20xf32> to vector<8x20xf32>
    %165 = vector.extract_strided_slice %164 {offsets = [0, 0], sizes = [8, 12], strides = [1, 1]} : vector<8x20xf32> to vector<8x12xf32>
    %166 = vector.extract_strided_slice %164 {offsets = [0, 1], sizes = [8, 12], strides = [1, 1]} : vector<8x20xf32> to vector<8x12xf32>
    %167 = vector.extract_strided_slice %164 {offsets = [0, 2], sizes = [8, 12], strides = [1, 1]} : vector<8x20xf32> to vector<8x12xf32>
    %168 = vector.extract_strided_slice %164 {offsets = [0, 3], sizes = [8, 12], strides = [1, 1]} : vector<8x20xf32> to vector<8x12xf32>
    %169 = vector.extract_strided_slice %164 {offsets = [0, 4], sizes = [8, 12], strides = [1, 1]} : vector<8x20xf32> to vector<8x12xf32>
    %170 = vector.extract_strided_slice %164 {offsets = [0, 5], sizes = [8, 12], strides = [1, 1]} : vector<8x20xf32> to vector<8x12xf32>
    %171 = vector.extract_strided_slice %164 {offsets = [0, 6], sizes = [8, 12], strides = [1, 1]} : vector<8x20xf32> to vector<8x12xf32>
    %172 = vector.extract_strided_slice %164 {offsets = [0, 7], sizes = [8, 12], strides = [1, 1]} : vector<8x20xf32> to vector<8x12xf32>
    %173 = vector.extract_strided_slice %164 {offsets = [0, 8], sizes = [8, 12], strides = [1, 1]} : vector<8x20xf32> to vector<8x12xf32>
    %c1_i32_56 = arith.constant 1 : i32
    %174 = arith.addi %4, %c1_i32_56 : i32
    %c1_i32_57 = arith.constant 1 : i32
    %175 = arith.addi %174, %c1_i32_57 : i32
    %c0_58 = arith.constant 0 : index
    %176 = arith.index_cast %175 : i32 to index
    %c0_59 = arith.constant 0 : index
    %c0_60 = arith.constant 0 : index
    %177 = vector.load %arg2[%c0_58, %176, %c0_59, %c0_60] : memref<1x20x8x20xf32, #tpu.memory_space<vmem>>, vector<1x1x8x20xf32>
    %178 = vector.shape_cast %177 : vector<1x1x8x20xf32> to vector<1x8x20xf32>
    %179 = vector.shape_cast %178 : vector<1x8x20xf32> to vector<8x20xf32>
    %180 = vector.extract_strided_slice %179 {offsets = [0, 0], sizes = [8, 12], strides = [1, 1]} : vector<8x20xf32> to vector<8x12xf32>
    %181 = vector.extract_strided_slice %179 {offsets = [0, 1], sizes = [8, 12], strides = [1, 1]} : vector<8x20xf32> to vector<8x12xf32>
    %182 = vector.extract_strided_slice %179 {offsets = [0, 2], sizes = [8, 12], strides = [1, 1]} : vector<8x20xf32> to vector<8x12xf32>
    %183 = vector.extract_strided_slice %179 {offsets = [0, 3], sizes = [8, 12], strides = [1, 1]} : vector<8x20xf32> to vector<8x12xf32>
    %184 = vector.extract_strided_slice %179 {offsets = [0, 4], sizes = [8, 12], strides = [1, 1]} : vector<8x20xf32> to vector<8x12xf32>
    %185 = vector.extract_strided_slice %179 {offsets = [0, 5], sizes = [8, 12], strides = [1, 1]} : vector<8x20xf32> to vector<8x12xf32>
    %186 = vector.extract_strided_slice %179 {offsets = [0, 6], sizes = [8, 12], strides = [1, 1]} : vector<8x20xf32> to vector<8x12xf32>
    %187 = vector.extract_strided_slice %179 {offsets = [0, 7], sizes = [8, 12], strides = [1, 1]} : vector<8x20xf32> to vector<8x12xf32>
    %188 = vector.extract_strided_slice %179 {offsets = [0, 8], sizes = [8, 12], strides = [1, 1]} : vector<8x20xf32> to vector<8x12xf32>
    %c1_i32_61 = arith.constant 1 : i32
    %189 = arith.addi %4, %c1_i32_61 : i32
    %c2_i32_62 = arith.constant 2 : i32
    %190 = arith.addi %189, %c2_i32_62 : i32
    %c0_63 = arith.constant 0 : index
    %191 = arith.index_cast %190 : i32 to index
    %c0_64 = arith.constant 0 : index
    %c0_65 = arith.constant 0 : index
    %192 = vector.load %arg2[%c0_63, %191, %c0_64, %c0_65] : memref<1x20x8x20xf32, #tpu.memory_space<vmem>>, vector<1x1x8x20xf32>
    %193 = vector.shape_cast %192 : vector<1x1x8x20xf32> to vector<1x8x20xf32>
    %194 = vector.shape_cast %193 : vector<1x8x20xf32> to vector<8x20xf32>
    %195 = vector.extract_strided_slice %194 {offsets = [0, 0], sizes = [8, 12], strides = [1, 1]} : vector<8x20xf32> to vector<8x12xf32>
    %196 = vector.extract_strided_slice %194 {offsets = [0, 1], sizes = [8, 12], strides = [1, 1]} : vector<8x20xf32> to vector<8x12xf32>
    %197 = vector.extract_strided_slice %194 {offsets = [0, 2], sizes = [8, 12], strides = [1, 1]} : vector<8x20xf32> to vector<8x12xf32>
    %198 = vector.extract_strided_slice %194 {offsets = [0, 3], sizes = [8, 12], strides = [1, 1]} : vector<8x20xf32> to vector<8x12xf32>
    %199 = vector.extract_strided_slice %194 {offsets = [0, 4], sizes = [8, 12], strides = [1, 1]} : vector<8x20xf32> to vector<8x12xf32>
    %200 = vector.extract_strided_slice %194 {offsets = [0, 5], sizes = [8, 12], strides = [1, 1]} : vector<8x20xf32> to vector<8x12xf32>
    %201 = vector.extract_strided_slice %194 {offsets = [0, 6], sizes = [8, 12], strides = [1, 1]} : vector<8x20xf32> to vector<8x12xf32>
    %202 = vector.extract_strided_slice %194 {offsets = [0, 7], sizes = [8, 12], strides = [1, 1]} : vector<8x20xf32> to vector<8x12xf32>
    %203 = vector.extract_strided_slice %194 {offsets = [0, 8], sizes = [8, 12], strides = [1, 1]} : vector<8x20xf32> to vector<8x12xf32>
    %c1_i32_66 = arith.constant 1 : i32
    %204 = arith.addi %4, %c1_i32_66 : i32
    %c3_i32_67 = arith.constant 3 : i32
    %205 = arith.addi %204, %c3_i32_67 : i32
    %c0_68 = arith.constant 0 : index
    %206 = arith.index_cast %205 : i32 to index
    %c0_69 = arith.constant 0 : index
    %c0_70 = arith.constant 0 : index
    %207 = vector.load %arg2[%c0_68, %206, %c0_69, %c0_70] : memref<1x20x8x20xf32, #tpu.memory_space<vmem>>, vector<1x1x8x20xf32>
    %208 = vector.shape_cast %207 : vector<1x1x8x20xf32> to vector<1x8x20xf32>
    %209 = vector.shape_cast %208 : vector<1x8x20xf32> to vector<8x20xf32>
    %210 = vector.extract_strided_slice %209 {offsets = [0, 0], sizes = [8, 12], strides = [1, 1]} : vector<8x20xf32> to vector<8x12xf32>
    %211 = vector.extract_strided_slice %209 {offsets = [0, 1], sizes = [8, 12], strides = [1, 1]} : vector<8x20xf32> to vector<8x12xf32>
    %212 = vector.extract_strided_slice %209 {offsets = [0, 2], sizes = [8, 12], strides = [1, 1]} : vector<8x20xf32> to vector<8x12xf32>
    %213 = vector.extract_strided_slice %209 {offsets = [0, 3], sizes = [8, 12], strides = [1, 1]} : vector<8x20xf32> to vector<8x12xf32>
    %214 = vector.extract_strided_slice %209 {offsets = [0, 4], sizes = [8, 12], strides = [1, 1]} : vector<8x20xf32> to vector<8x12xf32>
    %215 = vector.extract_strided_slice %209 {offsets = [0, 5], sizes = [8, 12], strides = [1, 1]} : vector<8x20xf32> to vector<8x12xf32>
    %216 = vector.extract_strided_slice %209 {offsets = [0, 6], sizes = [8, 12], strides = [1, 1]} : vector<8x20xf32> to vector<8x12xf32>
    %217 = vector.extract_strided_slice %209 {offsets = [0, 7], sizes = [8, 12], strides = [1, 1]} : vector<8x20xf32> to vector<8x12xf32>
    %218 = vector.extract_strided_slice %209 {offsets = [0, 8], sizes = [8, 12], strides = [1, 1]} : vector<8x20xf32> to vector<8x12xf32>
    %c1_i32_71 = arith.constant 1 : i32
    %219 = arith.addi %4, %c1_i32_71 : i32
    %c4_i32_72 = arith.constant 4 : i32
    %220 = arith.addi %219, %c4_i32_72 : i32
    %c0_73 = arith.constant 0 : index
    %221 = arith.index_cast %220 : i32 to index
    %c0_74 = arith.constant 0 : index
    %c0_75 = arith.constant 0 : index
    %222 = vector.load %arg2[%c0_73, %221, %c0_74, %c0_75] : memref<1x20x8x20xf32, #tpu.memory_space<vmem>>, vector<1x1x8x20xf32>
    %223 = vector.shape_cast %222 : vector<1x1x8x20xf32> to vector<1x8x20xf32>
    %224 = vector.shape_cast %223 : vector<1x8x20xf32> to vector<8x20xf32>
    %225 = vector.extract_strided_slice %224 {offsets = [0, 0], sizes = [8, 12], strides = [1, 1]} : vector<8x20xf32> to vector<8x12xf32>
    %226 = vector.extract_strided_slice %224 {offsets = [0, 1], sizes = [8, 12], strides = [1, 1]} : vector<8x20xf32> to vector<8x12xf32>
    %227 = vector.extract_strided_slice %224 {offsets = [0, 2], sizes = [8, 12], strides = [1, 1]} : vector<8x20xf32> to vector<8x12xf32>
    %228 = vector.extract_strided_slice %224 {offsets = [0, 3], sizes = [8, 12], strides = [1, 1]} : vector<8x20xf32> to vector<8x12xf32>
    %229 = vector.extract_strided_slice %224 {offsets = [0, 4], sizes = [8, 12], strides = [1, 1]} : vector<8x20xf32> to vector<8x12xf32>
    %230 = vector.extract_strided_slice %224 {offsets = [0, 5], sizes = [8, 12], strides = [1, 1]} : vector<8x20xf32> to vector<8x12xf32>
    %231 = vector.extract_strided_slice %224 {offsets = [0, 6], sizes = [8, 12], strides = [1, 1]} : vector<8x20xf32> to vector<8x12xf32>
    %232 = vector.extract_strided_slice %224 {offsets = [0, 7], sizes = [8, 12], strides = [1, 1]} : vector<8x20xf32> to vector<8x12xf32>
    %233 = vector.extract_strided_slice %224 {offsets = [0, 8], sizes = [8, 12], strides = [1, 1]} : vector<8x20xf32> to vector<8x12xf32>
    %c1_i32_76 = arith.constant 1 : i32
    %234 = arith.addi %4, %c1_i32_76 : i32
    %c5_i32_77 = arith.constant 5 : i32
    %235 = arith.addi %234, %c5_i32_77 : i32
    %c0_78 = arith.constant 0 : index
    %236 = arith.index_cast %235 : i32 to index
    %c0_79 = arith.constant 0 : index
    %c0_80 = arith.constant 0 : index
    %237 = vector.load %arg2[%c0_78, %236, %c0_79, %c0_80] : memref<1x20x8x20xf32, #tpu.memory_space<vmem>>, vector<1x1x8x20xf32>
    %238 = vector.shape_cast %237 : vector<1x1x8x20xf32> to vector<1x8x20xf32>
    %239 = vector.shape_cast %238 : vector<1x8x20xf32> to vector<8x20xf32>
    %240 = vector.extract_strided_slice %239 {offsets = [0, 0], sizes = [8, 12], strides = [1, 1]} : vector<8x20xf32> to vector<8x12xf32>
    %241 = vector.extract_strided_slice %239 {offsets = [0, 1], sizes = [8, 12], strides = [1, 1]} : vector<8x20xf32> to vector<8x12xf32>
    %242 = vector.extract_strided_slice %239 {offsets = [0, 2], sizes = [8, 12], strides = [1, 1]} : vector<8x20xf32> to vector<8x12xf32>
    %243 = vector.extract_strided_slice %239 {offsets = [0, 3], sizes = [8, 12], strides = [1, 1]} : vector<8x20xf32> to vector<8x12xf32>
    %244 = vector.extract_strided_slice %239 {offsets = [0, 4], sizes = [8, 12], strides = [1, 1]} : vector<8x20xf32> to vector<8x12xf32>
    %245 = vector.extract_strided_slice %239 {offsets = [0, 5], sizes = [8, 12], strides = [1, 1]} : vector<8x20xf32> to vector<8x12xf32>
    %246 = vector.extract_strided_slice %239 {offsets = [0, 6], sizes = [8, 12], strides = [1, 1]} : vector<8x20xf32> to vector<8x12xf32>
    %247 = vector.extract_strided_slice %239 {offsets = [0, 7], sizes = [8, 12], strides = [1, 1]} : vector<8x20xf32> to vector<8x12xf32>
    %248 = vector.extract_strided_slice %239 {offsets = [0, 8], sizes = [8, 12], strides = [1, 1]} : vector<8x20xf32> to vector<8x12xf32>
    %c1_i32_81 = arith.constant 1 : i32
    %249 = arith.addi %4, %c1_i32_81 : i32
    %c6_i32_82 = arith.constant 6 : i32
    %250 = arith.addi %249, %c6_i32_82 : i32
    %c0_83 = arith.constant 0 : index
    %251 = arith.index_cast %250 : i32 to index
    %c0_84 = arith.constant 0 : index
    %c0_85 = arith.constant 0 : index
    %252 = vector.load %arg2[%c0_83, %251, %c0_84, %c0_85] : memref<1x20x8x20xf32, #tpu.memory_space<vmem>>, vector<1x1x8x20xf32>
    %253 = vector.shape_cast %252 : vector<1x1x8x20xf32> to vector<1x8x20xf32>
    %254 = vector.shape_cast %253 : vector<1x8x20xf32> to vector<8x20xf32>
    %255 = vector.extract_strided_slice %254 {offsets = [0, 0], sizes = [8, 12], strides = [1, 1]} : vector<8x20xf32> to vector<8x12xf32>
    %256 = vector.extract_strided_slice %254 {offsets = [0, 1], sizes = [8, 12], strides = [1, 1]} : vector<8x20xf32> to vector<8x12xf32>
    %257 = vector.extract_strided_slice %254 {offsets = [0, 2], sizes = [8, 12], strides = [1, 1]} : vector<8x20xf32> to vector<8x12xf32>
    %258 = vector.extract_strided_slice %254 {offsets = [0, 3], sizes = [8, 12], strides = [1, 1]} : vector<8x20xf32> to vector<8x12xf32>
    %259 = vector.extract_strided_slice %254 {offsets = [0, 4], sizes = [8, 12], strides = [1, 1]} : vector<8x20xf32> to vector<8x12xf32>
    %260 = vector.extract_strided_slice %254 {offsets = [0, 5], sizes = [8, 12], strides = [1, 1]} : vector<8x20xf32> to vector<8x12xf32>
    %261 = vector.extract_strided_slice %254 {offsets = [0, 6], sizes = [8, 12], strides = [1, 1]} : vector<8x20xf32> to vector<8x12xf32>
    %262 = vector.extract_strided_slice %254 {offsets = [0, 7], sizes = [8, 12], strides = [1, 1]} : vector<8x20xf32> to vector<8x12xf32>
    %263 = vector.extract_strided_slice %254 {offsets = [0, 8], sizes = [8, 12], strides = [1, 1]} : vector<8x20xf32> to vector<8x12xf32>
    %c1_i32_86 = arith.constant 1 : i32
    %264 = arith.addi %4, %c1_i32_86 : i32
    %c7_i32_87 = arith.constant 7 : i32
    %265 = arith.addi %264, %c7_i32_87 : i32
    %c0_88 = arith.constant 0 : index
    %266 = arith.index_cast %265 : i32 to index
    %c0_89 = arith.constant 0 : index
    %c0_90 = arith.constant 0 : index
    %267 = vector.load %arg2[%c0_88, %266, %c0_89, %c0_90] : memref<1x20x8x20xf32, #tpu.memory_space<vmem>>, vector<1x1x8x20xf32>
    %268 = vector.shape_cast %267 : vector<1x1x8x20xf32> to vector<1x8x20xf32>
    %269 = vector.shape_cast %268 : vector<1x8x20xf32> to vector<8x20xf32>
    %270 = vector.extract_strided_slice %269 {offsets = [0, 0], sizes = [8, 12], strides = [1, 1]} : vector<8x20xf32> to vector<8x12xf32>
    %271 = vector.extract_strided_slice %269 {offsets = [0, 1], sizes = [8, 12], strides = [1, 1]} : vector<8x20xf32> to vector<8x12xf32>
    %272 = vector.extract_strided_slice %269 {offsets = [0, 2], sizes = [8, 12], strides = [1, 1]} : vector<8x20xf32> to vector<8x12xf32>
    %273 = vector.extract_strided_slice %269 {offsets = [0, 3], sizes = [8, 12], strides = [1, 1]} : vector<8x20xf32> to vector<8x12xf32>
    %274 = vector.extract_strided_slice %269 {offsets = [0, 4], sizes = [8, 12], strides = [1, 1]} : vector<8x20xf32> to vector<8x12xf32>
    %275 = vector.extract_strided_slice %269 {offsets = [0, 5], sizes = [8, 12], strides = [1, 1]} : vector<8x20xf32> to vector<8x12xf32>
    %276 = vector.extract_strided_slice %269 {offsets = [0, 6], sizes = [8, 12], strides = [1, 1]} : vector<8x20xf32> to vector<8x12xf32>
    %277 = vector.extract_strided_slice %269 {offsets = [0, 7], sizes = [8, 12], strides = [1, 1]} : vector<8x20xf32> to vector<8x12xf32>
    %278 = vector.extract_strided_slice %269 {offsets = [0, 8], sizes = [8, 12], strides = [1, 1]} : vector<8x20xf32> to vector<8x12xf32>
    %c1_i32_91 = arith.constant 1 : i32
    %279 = arith.addi %4, %c1_i32_91 : i32
    %c8_i32_92 = arith.constant 8 : i32
    %280 = arith.addi %279, %c8_i32_92 : i32
    %c0_93 = arith.constant 0 : index
    %281 = arith.index_cast %280 : i32 to index
    %c0_94 = arith.constant 0 : index
    %c0_95 = arith.constant 0 : index
    %282 = vector.load %arg2[%c0_93, %281, %c0_94, %c0_95] : memref<1x20x8x20xf32, #tpu.memory_space<vmem>>, vector<1x1x8x20xf32>
    %283 = vector.shape_cast %282 : vector<1x1x8x20xf32> to vector<1x8x20xf32>
    %284 = vector.shape_cast %283 : vector<1x8x20xf32> to vector<8x20xf32>
    %285 = vector.extract_strided_slice %284 {offsets = [0, 0], sizes = [8, 12], strides = [1, 1]} : vector<8x20xf32> to vector<8x12xf32>
    %286 = vector.extract_strided_slice %284 {offsets = [0, 1], sizes = [8, 12], strides = [1, 1]} : vector<8x20xf32> to vector<8x12xf32>
    %287 = vector.extract_strided_slice %284 {offsets = [0, 2], sizes = [8, 12], strides = [1, 1]} : vector<8x20xf32> to vector<8x12xf32>
    %288 = vector.extract_strided_slice %284 {offsets = [0, 3], sizes = [8, 12], strides = [1, 1]} : vector<8x20xf32> to vector<8x12xf32>
    %289 = vector.extract_strided_slice %284 {offsets = [0, 4], sizes = [8, 12], strides = [1, 1]} : vector<8x20xf32> to vector<8x12xf32>
    %290 = vector.extract_strided_slice %284 {offsets = [0, 5], sizes = [8, 12], strides = [1, 1]} : vector<8x20xf32> to vector<8x12xf32>
    %291 = vector.extract_strided_slice %284 {offsets = [0, 6], sizes = [8, 12], strides = [1, 1]} : vector<8x20xf32> to vector<8x12xf32>
    %292 = vector.extract_strided_slice %284 {offsets = [0, 7], sizes = [8, 12], strides = [1, 1]} : vector<8x20xf32> to vector<8x12xf32>
    %293 = vector.extract_strided_slice %284 {offsets = [0, 8], sizes = [8, 12], strides = [1, 1]} : vector<8x20xf32> to vector<8x12xf32>
    %294 = tpu.concatenate %165, %166, %167, %168, %169, %170, %171, %172, %173, %180, %181, %182, %183, %184, %185, %186 in 0 : vector<8x12xf32>, vector<8x12xf32>, vector<8x12xf32>, vector<8x12xf32>, vector<8x12xf32>, vector<8x12xf32>, vector<8x12xf32>, vector<8x12xf32>, vector<8x12xf32>, vector<8x12xf32>, vector<8x12xf32>, vector<8x12xf32>, vector<8x12xf32>, vector<8x12xf32>, vector<8x12xf32>, vector<8x12xf32> -> vector<128x12xf32>
    %295 = tpu.concatenate %187, %188, %195, %196, %197, %198, %199, %200, %201, %202, %203, %210, %211, %212, %213, %214 in 0 : vector<8x12xf32>, vector<8x12xf32>, vector<8x12xf32>, vector<8x12xf32>, vector<8x12xf32>, vector<8x12xf32>, vector<8x12xf32>, vector<8x12xf32>, vector<8x12xf32>, vector<8x12xf32>, vector<8x12xf32>, vector<8x12xf32>, vector<8x12xf32>, vector<8x12xf32>, vector<8x12xf32>, vector<8x12xf32> -> vector<128x12xf32>
    %296 = tpu.concatenate %215, %216, %217, %218, %225, %226, %227, %228, %229, %230, %231, %232, %233, %240, %241, %242 in 0 : vector<8x12xf32>, vector<8x12xf32>, vector<8x12xf32>, vector<8x12xf32>, vector<8x12xf32>, vector<8x12xf32>, vector<8x12xf32>, vector<8x12xf32>, vector<8x12xf32>, vector<8x12xf32>, vector<8x12xf32>, vector<8x12xf32>, vector<8x12xf32>, vector<8x12xf32>, vector<8x12xf32>, vector<8x12xf32> -> vector<128x12xf32>
    %297 = tpu.concatenate %243, %244, %245, %246, %247, %248, %255, %256, %257, %258, %259, %260, %261, %262, %263, %270 in 0 : vector<8x12xf32>, vector<8x12xf32>, vector<8x12xf32>, vector<8x12xf32>, vector<8x12xf32>, vector<8x12xf32>, vector<8x12xf32>, vector<8x12xf32>, vector<8x12xf32>, vector<8x12xf32>, vector<8x12xf32>, vector<8x12xf32>, vector<8x12xf32>, vector<8x12xf32>, vector<8x12xf32>, vector<8x12xf32> -> vector<128x12xf32>
    %298 = tpu.concatenate %271, %272, %273, %274, %275, %276, %277, %278, %285, %286, %287, %288, %289, %290, %291, %292 in 0 : vector<8x12xf32>, vector<8x12xf32>, vector<8x12xf32>, vector<8x12xf32>, vector<8x12xf32>, vector<8x12xf32>, vector<8x12xf32>, vector<8x12xf32>, vector<8x12xf32>, vector<8x12xf32>, vector<8x12xf32>, vector<8x12xf32>, vector<8x12xf32>, vector<8x12xf32>, vector<8x12xf32>, vector<8x12xf32> -> vector<128x12xf32>
    %299 = tpu.concatenate %294, %295, %296, %297, %298, %293 in 0 : vector<128x12xf32>, vector<128x12xf32>, vector<128x12xf32>, vector<128x12xf32>, vector<128x12xf32>, vector<8x12xf32> -> vector<648x12xf32>
    %cst_96 = arith.constant dense<0.000000e+00> : vector<64x12xf32>
    %300 = tpu.matmul %0, %299, %cst_96 {dimension_numbers = #tpu.dot_dimension_numbers<[1], [0], [0], [1], [0, 0, 1, 1], [], []>} : vector<64x648xf32>, vector<648x12xf32>, vector<64x12xf32> -> vector<64x12xf32>
    %301 = vector.broadcast %1 : vector<64x1xf32> to vector<64x12xf32>
    %302 = arith.addf %300, %301 : vector<64x12xf32>
    %cst_97 = arith.constant 0.000000e+00 : f32
    %303 = vector.broadcast %cst_97 : f32 to vector<64x12xf32>
    %304 = arith.maximumf %302, %303 : vector<64x12xf32>
    %cst_98 = arith.constant dense<0.000000e+00> : vector<32x12xf32>
    %305 = tpu.matmul %2, %304, %cst_98 {dimension_numbers = #tpu.dot_dimension_numbers<[1], [0], [0], [1], [0, 0, 1, 1], [], []>} : vector<32x64xf32>, vector<64x12xf32>, vector<32x12xf32> -> vector<32x12xf32>
    %306 = vector.broadcast %3 : vector<32x1xf32> to vector<32x12xf32>
    %307 = arith.addf %305, %306 : vector<32x12xf32>
    %cst_99 = arith.constant 0.000000e+00 : f32
    %308 = vector.broadcast %cst_99 : f32 to vector<32x12xf32>
    %309 = arith.maximumf %307, %308 : vector<32x12xf32>
    %c0_100 = arith.constant 0 : index
    %c1 = arith.constant 1 : index
    %c0_101 = arith.constant 0 : index
    %c0_102 = arith.constant 0 : index
    %310 = vector.load %arg7[%c0_100, %c1, %c0_101, %c0_102] : memref<1x4x32x12xf32, #tpu.memory_space<vmem>>, vector<1x1x32x12xf32>
    %311 = vector.shape_cast %310 : vector<1x1x32x12xf32> to vector<32x12xf32>
    %312 = vector.shape_cast %309 : vector<32x12xf32> to vector<1x1x32x12xf32>
    tpu.vector_store %arg7[%c0_100, %c1, %c0_101, %c0_102], %312 {strides = array<i32>} : memref<1x4x32x12xf32, #tpu.memory_space<vmem>>, vector<1x1x32x12xf32>,
    %c2_i32_103 = arith.constant 2 : i32
    %313 = arith.addi %4, %c2_i32_103 : i32
    %c0_i32_104 = arith.constant 0 : i32
    %314 = arith.addi %313, %c0_i32_104 : i32
    %c0_105 = arith.constant 0 : index
    %315 = arith.index_cast %314 : i32 to index
    %c0_106 = arith.constant 0 : index
    %c0_107 = arith.constant 0 : index
    %316 = vector.load %arg2[%c0_105, %315, %c0_106, %c0_107] : memref<1x20x8x20xf32, #tpu.memory_space<vmem>>, vector<1x1x8x20xf32>
    %317 = vector.shape_cast %316 : vector<1x1x8x20xf32> to vector<1x8x20xf32>
    %318 = vector.shape_cast %317 : vector<1x8x20xf32> to vector<8x20xf32>
    %319 = vector.extract_strided_slice %318 {offsets = [0, 0], sizes = [8, 12], strides = [1, 1]} : vector<8x20xf32> to vector<8x12xf32>
    %320 = vector.extract_strided_slice %318 {offsets = [0, 1], sizes = [8, 12], strides = [1, 1]} : vector<8x20xf32> to vector<8x12xf32>
    %321 = vector.extract_strided_slice %318 {offsets = [0, 2], sizes = [8, 12], strides = [1, 1]} : vector<8x20xf32> to vector<8x12xf32>
    %322 = vector.extract_strided_slice %318 {offsets = [0, 3], sizes = [8, 12], strides = [1, 1]} : vector<8x20xf32> to vector<8x12xf32>
    %323 = vector.extract_strided_slice %318 {offsets = [0, 4], sizes = [8, 12], strides = [1, 1]} : vector<8x20xf32> to vector<8x12xf32>
    %324 = vector.extract_strided_slice %318 {offsets = [0, 5], sizes = [8, 12], strides = [1, 1]} : vector<8x20xf32> to vector<8x12xf32>
    %325 = vector.extract_strided_slice %318 {offsets = [0, 6], sizes = [8, 12], strides = [1, 1]} : vector<8x20xf32> to vector<8x12xf32>
    %326 = vector.extract_strided_slice %318 {offsets = [0, 7], sizes = [8, 12], strides = [1, 1]} : vector<8x20xf32> to vector<8x12xf32>
    %327 = vector.extract_strided_slice %318 {offsets = [0, 8], sizes = [8, 12], strides = [1, 1]} : vector<8x20xf32> to vector<8x12xf32>
    %c2_i32_108 = arith.constant 2 : i32
    %328 = arith.addi %4, %c2_i32_108 : i32
    %c1_i32_109 = arith.constant 1 : i32
    %329 = arith.addi %328, %c1_i32_109 : i32
    %c0_110 = arith.constant 0 : index
    %330 = arith.index_cast %329 : i32 to index
    %c0_111 = arith.constant 0 : index
    %c0_112 = arith.constant 0 : index
    %331 = vector.load %arg2[%c0_110, %330, %c0_111, %c0_112] : memref<1x20x8x20xf32, #tpu.memory_space<vmem>>, vector<1x1x8x20xf32>
    %332 = vector.shape_cast %331 : vector<1x1x8x20xf32> to vector<1x8x20xf32>
    %333 = vector.shape_cast %332 : vector<1x8x20xf32> to vector<8x20xf32>
    %334 = vector.extract_strided_slice %333 {offsets = [0, 0], sizes = [8, 12], strides = [1, 1]} : vector<8x20xf32> to vector<8x12xf32>
    %335 = vector.extract_strided_slice %333 {offsets = [0, 1], sizes = [8, 12], strides = [1, 1]} : vector<8x20xf32> to vector<8x12xf32>
    %336 = vector.extract_strided_slice %333 {offsets = [0, 2], sizes = [8, 12], strides = [1, 1]} : vector<8x20xf32> to vector<8x12xf32>
    %337 = vector.extract_strided_slice %333 {offsets = [0, 3], sizes = [8, 12], strides = [1, 1]} : vector<8x20xf32> to vector<8x12xf32>
    %338 = vector.extract_strided_slice %333 {offsets = [0, 4], sizes = [8, 12], strides = [1, 1]} : vector<8x20xf32> to vector<8x12xf32>
    %339 = vector.extract_strided_slice %333 {offsets = [0, 5], sizes = [8, 12], strides = [1, 1]} : vector<8x20xf32> to vector<8x12xf32>
    %340 = vector.extract_strided_slice %333 {offsets = [0, 6], sizes = [8, 12], strides = [1, 1]} : vector<8x20xf32> to vector<8x12xf32>
    %341 = vector.extract_strided_slice %333 {offsets = [0, 7], sizes = [8, 12], strides = [1, 1]} : vector<8x20xf32> to vector<8x12xf32>
    %342 = vector.extract_strided_slice %333 {offsets = [0, 8], sizes = [8, 12], strides = [1, 1]} : vector<8x20xf32> to vector<8x12xf32>
    %c2_i32_113 = arith.constant 2 : i32
    %343 = arith.addi %4, %c2_i32_113 : i32
    %c2_i32_114 = arith.constant 2 : i32
    %344 = arith.addi %343, %c2_i32_114 : i32
    %c0_115 = arith.constant 0 : index
    %345 = arith.index_cast %344 : i32 to index
    %c0_116 = arith.constant 0 : index
    %c0_117 = arith.constant 0 : index
    %346 = vector.load %arg2[%c0_115, %345, %c0_116, %c0_117] : memref<1x20x8x20xf32, #tpu.memory_space<vmem>>, vector<1x1x8x20xf32>
    %347 = vector.shape_cast %346 : vector<1x1x8x20xf32> to vector<1x8x20xf32>
    %348 = vector.shape_cast %347 : vector<1x8x20xf32> to vector<8x20xf32>
    %349 = vector.extract_strided_slice %348 {offsets = [0, 0], sizes = [8, 12], strides = [1, 1]} : vector<8x20xf32> to vector<8x12xf32>
    %350 = vector.extract_strided_slice %348 {offsets = [0, 1], sizes = [8, 12], strides = [1, 1]} : vector<8x20xf32> to vector<8x12xf32>
    %351 = vector.extract_strided_slice %348 {offsets = [0, 2], sizes = [8, 12], strides = [1, 1]} : vector<8x20xf32> to vector<8x12xf32>
    %352 = vector.extract_strided_slice %348 {offsets = [0, 3], sizes = [8, 12], strides = [1, 1]} : vector<8x20xf32> to vector<8x12xf32>
    %353 = vector.extract_strided_slice %348 {offsets = [0, 4], sizes = [8, 12], strides = [1, 1]} : vector<8x20xf32> to vector<8x12xf32>
    %354 = vector.extract_strided_slice %348 {offsets = [0, 5], sizes = [8, 12], strides = [1, 1]} : vector<8x20xf32> to vector<8x12xf32>
    %355 = vector.extract_strided_slice %348 {offsets = [0, 6], sizes = [8, 12], strides = [1, 1]} : vector<8x20xf32> to vector<8x12xf32>
    %356 = vector.extract_strided_slice %348 {offsets = [0, 7], sizes = [8, 12], strides = [1, 1]} : vector<8x20xf32> to vector<8x12xf32>
    %357 = vector.extract_strided_slice %348 {offsets = [0, 8], sizes = [8, 12], strides = [1, 1]} : vector<8x20xf32> to vector<8x12xf32>
    %c2_i32_118 = arith.constant 2 : i32
    %358 = arith.addi %4, %c2_i32_118 : i32
    %c3_i32_119 = arith.constant 3 : i32
    %359 = arith.addi %358, %c3_i32_119 : i32
    %c0_120 = arith.constant 0 : index
    %360 = arith.index_cast %359 : i32 to index
    %c0_121 = arith.constant 0 : index
    %c0_122 = arith.constant 0 : index
    %361 = vector.load %arg2[%c0_120, %360, %c0_121, %c0_122] : memref<1x20x8x20xf32, #tpu.memory_space<vmem>>, vector<1x1x8x20xf32>
    %362 = vector.shape_cast %361 : vector<1x1x8x20xf32> to vector<1x8x20xf32>
    %363 = vector.shape_cast %362 : vector<1x8x20xf32> to vector<8x20xf32>
    %364 = vector.extract_strided_slice %363 {offsets = [0, 0], sizes = [8, 12], strides = [1, 1]} : vector<8x20xf32> to vector<8x12xf32>
    %365 = vector.extract_strided_slice %363 {offsets = [0, 1], sizes = [8, 12], strides = [1, 1]} : vector<8x20xf32> to vector<8x12xf32>
    %366 = vector.extract_strided_slice %363 {offsets = [0, 2], sizes = [8, 12], strides = [1, 1]} : vector<8x20xf32> to vector<8x12xf32>
    %367 = vector.extract_strided_slice %363 {offsets = [0, 3], sizes = [8, 12], strides = [1, 1]} : vector<8x20xf32> to vector<8x12xf32>
    %368 = vector.extract_strided_slice %363 {offsets = [0, 4], sizes = [8, 12], strides = [1, 1]} : vector<8x20xf32> to vector<8x12xf32>
    %369 = vector.extract_strided_slice %363 {offsets = [0, 5], sizes = [8, 12], strides = [1, 1]} : vector<8x20xf32> to vector<8x12xf32>
    %370 = vector.extract_strided_slice %363 {offsets = [0, 6], sizes = [8, 12], strides = [1, 1]} : vector<8x20xf32> to vector<8x12xf32>
    %371 = vector.extract_strided_slice %363 {offsets = [0, 7], sizes = [8, 12], strides = [1, 1]} : vector<8x20xf32> to vector<8x12xf32>
    %372 = vector.extract_strided_slice %363 {offsets = [0, 8], sizes = [8, 12], strides = [1, 1]} : vector<8x20xf32> to vector<8x12xf32>
    %c2_i32_123 = arith.constant 2 : i32
    %373 = arith.addi %4, %c2_i32_123 : i32
    %c4_i32_124 = arith.constant 4 : i32
    %374 = arith.addi %373, %c4_i32_124 : i32
    %c0_125 = arith.constant 0 : index
    %375 = arith.index_cast %374 : i32 to index
    %c0_126 = arith.constant 0 : index
    %c0_127 = arith.constant 0 : index
    %376 = vector.load %arg2[%c0_125, %375, %c0_126, %c0_127] : memref<1x20x8x20xf32, #tpu.memory_space<vmem>>, vector<1x1x8x20xf32>
    %377 = vector.shape_cast %376 : vector<1x1x8x20xf32> to vector<1x8x20xf32>
    %378 = vector.shape_cast %377 : vector<1x8x20xf32> to vector<8x20xf32>
    %379 = vector.extract_strided_slice %378 {offsets = [0, 0], sizes = [8, 12], strides = [1, 1]} : vector<8x20xf32> to vector<8x12xf32>
    %380 = vector.extract_strided_slice %378 {offsets = [0, 1], sizes = [8, 12], strides = [1, 1]} : vector<8x20xf32> to vector<8x12xf32>
    %381 = vector.extract_strided_slice %378 {offsets = [0, 2], sizes = [8, 12], strides = [1, 1]} : vector<8x20xf32> to vector<8x12xf32>
    %382 = vector.extract_strided_slice %378 {offsets = [0, 3], sizes = [8, 12], strides = [1, 1]} : vector<8x20xf32> to vector<8x12xf32>
    %383 = vector.extract_strided_slice %378 {offsets = [0, 4], sizes = [8, 12], strides = [1, 1]} : vector<8x20xf32> to vector<8x12xf32>
    %384 = vector.extract_strided_slice %378 {offsets = [0, 5], sizes = [8, 12], strides = [1, 1]} : vector<8x20xf32> to vector<8x12xf32>
    %385 = vector.extract_strided_slice %378 {offsets = [0, 6], sizes = [8, 12], strides = [1, 1]} : vector<8x20xf32> to vector<8x12xf32>
    %386 = vector.extract_strided_slice %378 {offsets = [0, 7], sizes = [8, 12], strides = [1, 1]} : vector<8x20xf32> to vector<8x12xf32>
    %387 = vector.extract_strided_slice %378 {offsets = [0, 8], sizes = [8, 12], strides = [1, 1]} : vector<8x20xf32> to vector<8x12xf32>
    %c2_i32_128 = arith.constant 2 : i32
    %388 = arith.addi %4, %c2_i32_128 : i32
    %c5_i32_129 = arith.constant 5 : i32
    %389 = arith.addi %388, %c5_i32_129 : i32
    %c0_130 = arith.constant 0 : index
    %390 = arith.index_cast %389 : i32 to index
    %c0_131 = arith.constant 0 : index
    %c0_132 = arith.constant 0 : index
    %391 = vector.load %arg2[%c0_130, %390, %c0_131, %c0_132] : memref<1x20x8x20xf32, #tpu.memory_space<vmem>>, vector<1x1x8x20xf32>
    %392 = vector.shape_cast %391 : vector<1x1x8x20xf32> to vector<1x8x20xf32>
    %393 = vector.shape_cast %392 : vector<1x8x20xf32> to vector<8x20xf32>
    %394 = vector.extract_strided_slice %393 {offsets = [0, 0], sizes = [8, 12], strides = [1, 1]} : vector<8x20xf32> to vector<8x12xf32>
    %395 = vector.extract_strided_slice %393 {offsets = [0, 1], sizes = [8, 12], strides = [1, 1]} : vector<8x20xf32> to vector<8x12xf32>
    %396 = vector.extract_strided_slice %393 {offsets = [0, 2], sizes = [8, 12], strides = [1, 1]} : vector<8x20xf32> to vector<8x12xf32>
    %397 = vector.extract_strided_slice %393 {offsets = [0, 3], sizes = [8, 12], strides = [1, 1]} : vector<8x20xf32> to vector<8x12xf32>
    %398 = vector.extract_strided_slice %393 {offsets = [0, 4], sizes = [8, 12], strides = [1, 1]} : vector<8x20xf32> to vector<8x12xf32>
    %399 = vector.extract_strided_slice %393 {offsets = [0, 5], sizes = [8, 12], strides = [1, 1]} : vector<8x20xf32> to vector<8x12xf32>
    %400 = vector.extract_strided_slice %393 {offsets = [0, 6], sizes = [8, 12], strides = [1, 1]} : vector<8x20xf32> to vector<8x12xf32>
    %401 = vector.extract_strided_slice %393 {offsets = [0, 7], sizes = [8, 12], strides = [1, 1]} : vector<8x20xf32> to vector<8x12xf32>
    %402 = vector.extract_strided_slice %393 {offsets = [0, 8], sizes = [8, 12], strides = [1, 1]} : vector<8x20xf32> to vector<8x12xf32>
    %c2_i32_133 = arith.constant 2 : i32
    %403 = arith.addi %4, %c2_i32_133 : i32
    %c6_i32_134 = arith.constant 6 : i32
    %404 = arith.addi %403, %c6_i32_134 : i32
    %c0_135 = arith.constant 0 : index
    %405 = arith.index_cast %404 : i32 to index
    %c0_136 = arith.constant 0 : index
    %c0_137 = arith.constant 0 : index
    %406 = vector.load %arg2[%c0_135, %405, %c0_136, %c0_137] : memref<1x20x8x20xf32, #tpu.memory_space<vmem>>, vector<1x1x8x20xf32>
    %407 = vector.shape_cast %406 : vector<1x1x8x20xf32> to vector<1x8x20xf32>
    %408 = vector.shape_cast %407 : vector<1x8x20xf32> to vector<8x20xf32>
    %409 = vector.extract_strided_slice %408 {offsets = [0, 0], sizes = [8, 12], strides = [1, 1]} : vector<8x20xf32> to vector<8x12xf32>
    %410 = vector.extract_strided_slice %408 {offsets = [0, 1], sizes = [8, 12], strides = [1, 1]} : vector<8x20xf32> to vector<8x12xf32>
    %411 = vector.extract_strided_slice %408 {offsets = [0, 2], sizes = [8, 12], strides = [1, 1]} : vector<8x20xf32> to vector<8x12xf32>
    %412 = vector.extract_strided_slice %408 {offsets = [0, 3], sizes = [8, 12], strides = [1, 1]} : vector<8x20xf32> to vector<8x12xf32>
    %413 = vector.extract_strided_slice %408 {offsets = [0, 4], sizes = [8, 12], strides = [1, 1]} : vector<8x20xf32> to vector<8x12xf32>
    %414 = vector.extract_strided_slice %408 {offsets = [0, 5], sizes = [8, 12], strides = [1, 1]} : vector<8x20xf32> to vector<8x12xf32>
    %415 = vector.extract_strided_slice %408 {offsets = [0, 6], sizes = [8, 12], strides = [1, 1]} : vector<8x20xf32> to vector<8x12xf32>
    %416 = vector.extract_strided_slice %408 {offsets = [0, 7], sizes = [8, 12], strides = [1, 1]} : vector<8x20xf32> to vector<8x12xf32>
    %417 = vector.extract_strided_slice %408 {offsets = [0, 8], sizes = [8, 12], strides = [1, 1]} : vector<8x20xf32> to vector<8x12xf32>
    %c2_i32_138 = arith.constant 2 : i32
    %418 = arith.addi %4, %c2_i32_138 : i32
    %c7_i32_139 = arith.constant 7 : i32
    %419 = arith.addi %418, %c7_i32_139 : i32
    %c0_140 = arith.constant 0 : index
    %420 = arith.index_cast %419 : i32 to index
    %c0_141 = arith.constant 0 : index
    %c0_142 = arith.constant 0 : index
    %421 = vector.load %arg2[%c0_140, %420, %c0_141, %c0_142] : memref<1x20x8x20xf32, #tpu.memory_space<vmem>>, vector<1x1x8x20xf32>
    %422 = vector.shape_cast %421 : vector<1x1x8x20xf32> to vector<1x8x20xf32>
    %423 = vector.shape_cast %422 : vector<1x8x20xf32> to vector<8x20xf32>
    %424 = vector.extract_strided_slice %423 {offsets = [0, 0], sizes = [8, 12], strides = [1, 1]} : vector<8x20xf32> to vector<8x12xf32>
    %425 = vector.extract_strided_slice %423 {offsets = [0, 1], sizes = [8, 12], strides = [1, 1]} : vector<8x20xf32> to vector<8x12xf32>
    %426 = vector.extract_strided_slice %423 {offsets = [0, 2], sizes = [8, 12], strides = [1, 1]} : vector<8x20xf32> to vector<8x12xf32>
    %427 = vector.extract_strided_slice %423 {offsets = [0, 3], sizes = [8, 12], strides = [1, 1]} : vector<8x20xf32> to vector<8x12xf32>
    %428 = vector.extract_strided_slice %423 {offsets = [0, 4], sizes = [8, 12], strides = [1, 1]} : vector<8x20xf32> to vector<8x12xf32>
    %429 = vector.extract_strided_slice %423 {offsets = [0, 5], sizes = [8, 12], strides = [1, 1]} : vector<8x20xf32> to vector<8x12xf32>
    %430 = vector.extract_strided_slice %423 {offsets = [0, 6], sizes = [8, 12], strides = [1, 1]} : vector<8x20xf32> to vector<8x12xf32>
    %431 = vector.extract_strided_slice %423 {offsets = [0, 7], sizes = [8, 12], strides = [1, 1]} : vector<8x20xf32> to vector<8x12xf32>
    %432 = vector.extract_strided_slice %423 {offsets = [0, 8], sizes = [8, 12], strides = [1, 1]} : vector<8x20xf32> to vector<8x12xf32>
    %c2_i32_143 = arith.constant 2 : i32
    %433 = arith.addi %4, %c2_i32_143 : i32
    %c8_i32_144 = arith.constant 8 : i32
    %434 = arith.addi %433, %c8_i32_144 : i32
    %c0_145 = arith.constant 0 : index
    %435 = arith.index_cast %434 : i32 to index
    %c0_146 = arith.constant 0 : index
    %c0_147 = arith.constant 0 : index
    %436 = vector.load %arg2[%c0_145, %435, %c0_146, %c0_147] : memref<1x20x8x20xf32, #tpu.memory_space<vmem>>, vector<1x1x8x20xf32>
    %437 = vector.shape_cast %436 : vector<1x1x8x20xf32> to vector<1x8x20xf32>
    %438 = vector.shape_cast %437 : vector<1x8x20xf32> to vector<8x20xf32>
    %439 = vector.extract_strided_slice %438 {offsets = [0, 0], sizes = [8, 12], strides = [1, 1]} : vector<8x20xf32> to vector<8x12xf32>
    %440 = vector.extract_strided_slice %438 {offsets = [0, 1], sizes = [8, 12], strides = [1, 1]} : vector<8x20xf32> to vector<8x12xf32>
    %441 = vector.extract_strided_slice %438 {offsets = [0, 2], sizes = [8, 12], strides = [1, 1]} : vector<8x20xf32> to vector<8x12xf32>
    %442 = vector.extract_strided_slice %438 {offsets = [0, 3], sizes = [8, 12], strides = [1, 1]} : vector<8x20xf32> to vector<8x12xf32>
    %443 = vector.extract_strided_slice %438 {offsets = [0, 4], sizes = [8, 12], strides = [1, 1]} : vector<8x20xf32> to vector<8x12xf32>
    %444 = vector.extract_strided_slice %438 {offsets = [0, 5], sizes = [8, 12], strides = [1, 1]} : vector<8x20xf32> to vector<8x12xf32>
    %445 = vector.extract_strided_slice %438 {offsets = [0, 6], sizes = [8, 12], strides = [1, 1]} : vector<8x20xf32> to vector<8x12xf32>
    %446 = vector.extract_strided_slice %438 {offsets = [0, 7], sizes = [8, 12], strides = [1, 1]} : vector<8x20xf32> to vector<8x12xf32>
    %447 = vector.extract_strided_slice %438 {offsets = [0, 8], sizes = [8, 12], strides = [1, 1]} : vector<8x20xf32> to vector<8x12xf32>
    %448 = tpu.concatenate %319, %320, %321, %322, %323, %324, %325, %326, %327, %334, %335, %336, %337, %338, %339, %340 in 0 : vector<8x12xf32>, vector<8x12xf32>, vector<8x12xf32>, vector<8x12xf32>, vector<8x12xf32>, vector<8x12xf32>, vector<8x12xf32>, vector<8x12xf32>, vector<8x12xf32>, vector<8x12xf32>, vector<8x12xf32>, vector<8x12xf32>, vector<8x12xf32>, vector<8x12xf32>, vector<8x12xf32>, vector<8x12xf32> -> vector<128x12xf32>
    %449 = tpu.concatenate %341, %342, %349, %350, %351, %352, %353, %354, %355, %356, %357, %364, %365, %366, %367, %368 in 0 : vector<8x12xf32>, vector<8x12xf32>, vector<8x12xf32>, vector<8x12xf32>, vector<8x12xf32>, vector<8x12xf32>, vector<8x12xf32>, vector<8x12xf32>, vector<8x12xf32>, vector<8x12xf32>, vector<8x12xf32>, vector<8x12xf32>, vector<8x12xf32>, vector<8x12xf32>, vector<8x12xf32>, vector<8x12xf32> -> vector<128x12xf32>
    %450 = tpu.concatenate %369, %370, %371, %372, %379, %380, %381, %382, %383, %384, %385, %386, %387, %394, %395, %396 in 0 : vector<8x12xf32>, vector<8x12xf32>, vector<8x12xf32>, vector<8x12xf32>, vector<8x12xf32>, vector<8x12xf32>, vector<8x12xf32>, vector<8x12xf32>, vector<8x12xf32>, vector<8x12xf32>, vector<8x12xf32>, vector<8x12xf32>, vector<8x12xf32>, vector<8x12xf32>, vector<8x12xf32>, vector<8x12xf32> -> vector<128x12xf32>
    %451 = tpu.concatenate %397, %398, %399, %400, %401, %402, %409, %410, %411, %412, %413, %414, %415, %416, %417, %424 in 0 : vector<8x12xf32>, vector<8x12xf32>, vector<8x12xf32>, vector<8x12xf32>, vector<8x12xf32>, vector<8x12xf32>, vector<8x12xf32>, vector<8x12xf32>, vector<8x12xf32>, vector<8x12xf32>, vector<8x12xf32>, vector<8x12xf32>, vector<8x12xf32>, vector<8x12xf32>, vector<8x12xf32>, vector<8x12xf32> -> vector<128x12xf32>
    %452 = tpu.concatenate %425, %426, %427, %428, %429, %430, %431, %432, %439, %440, %441, %442, %443, %444, %445, %446 in 0 : vector<8x12xf32>, vector<8x12xf32>, vector<8x12xf32>, vector<8x12xf32>, vector<8x12xf32>, vector<8x12xf32>, vector<8x12xf32>, vector<8x12xf32>, vector<8x12xf32>, vector<8x12xf32>, vector<8x12xf32>, vector<8x12xf32>, vector<8x12xf32>, vector<8x12xf32>, vector<8x12xf32>, vector<8x12xf32> -> vector<128x12xf32>
    %453 = tpu.concatenate %448, %449, %450, %451, %452, %447 in 0 : vector<128x12xf32>, vector<128x12xf32>, vector<128x12xf32>, vector<128x12xf32>, vector<128x12xf32>, vector<8x12xf32> -> vector<648x12xf32>
    %cst_148 = arith.constant dense<0.000000e+00> : vector<64x12xf32>
    %454 = tpu.matmul %0, %453, %cst_148 {dimension_numbers = #tpu.dot_dimension_numbers<[1], [0], [0], [1], [0, 0, 1, 1], [], []>} : vector<64x648xf32>, vector<648x12xf32>, vector<64x12xf32> -> vector<64x12xf32>
    %455 = vector.broadcast %1 : vector<64x1xf32> to vector<64x12xf32>
    %456 = arith.addf %454, %455 : vector<64x12xf32>
    %cst_149 = arith.constant 0.000000e+00 : f32
    %457 = vector.broadcast %cst_149 : f32 to vector<64x12xf32>
    %458 = arith.maximumf %456, %457 : vector<64x12xf32>
    %cst_150 = arith.constant dense<0.000000e+00> : vector<32x12xf32>
    %459 = tpu.matmul %2, %458, %cst_150 {dimension_numbers = #tpu.dot_dimension_numbers<[1], [0], [0], [1], [0, 0, 1, 1], [], []>} : vector<32x64xf32>, vector<64x12xf32>, vector<32x12xf32> -> vector<32x12xf32>
    %460 = vector.broadcast %3 : vector<32x1xf32> to vector<32x12xf32>
    %461 = arith.addf %459, %460 : vector<32x12xf32>
    %cst_151 = arith.constant 0.000000e+00 : f32
    %462 = vector.broadcast %cst_151 : f32 to vector<32x12xf32>
    %463 = arith.maximumf %461, %462 : vector<32x12xf32>
    %c0_152 = arith.constant 0 : index
    %c2 = arith.constant 2 : index
    %c0_153 = arith.constant 0 : index
    %c0_154 = arith.constant 0 : index
    %464 = vector.load %arg7[%c0_152, %c2, %c0_153, %c0_154] : memref<1x4x32x12xf32, #tpu.memory_space<vmem>>, vector<1x1x32x12xf32>
    %465 = vector.shape_cast %464 : vector<1x1x32x12xf32> to vector<32x12xf32>
    %466 = vector.shape_cast %463 : vector<32x12xf32> to vector<1x1x32x12xf32>
    tpu.vector_store %arg7[%c0_152, %c2, %c0_153, %c0_154], %466 {strides = array<i32>} : memref<1x4x32x12xf32, #tpu.memory_space<vmem>>, vector<1x1x32x12xf32>,
    %c3_i32_155 = arith.constant 3 : i32
    %467 = arith.addi %4, %c3_i32_155 : i32
    %c0_i32_156 = arith.constant 0 : i32
    %468 = arith.addi %467, %c0_i32_156 : i32
    %c0_157 = arith.constant 0 : index
    %469 = arith.index_cast %468 : i32 to index
    %c0_158 = arith.constant 0 : index
    %c0_159 = arith.constant 0 : index
    %470 = vector.load %arg2[%c0_157, %469, %c0_158, %c0_159] : memref<1x20x8x20xf32, #tpu.memory_space<vmem>>, vector<1x1x8x20xf32>
    %471 = vector.shape_cast %470 : vector<1x1x8x20xf32> to vector<1x8x20xf32>
    %472 = vector.shape_cast %471 : vector<1x8x20xf32> to vector<8x20xf32>
    %473 = vector.extract_strided_slice %472 {offsets = [0, 0], sizes = [8, 12], strides = [1, 1]} : vector<8x20xf32> to vector<8x12xf32>
    %474 = vector.extract_strided_slice %472 {offsets = [0, 1], sizes = [8, 12], strides = [1, 1]} : vector<8x20xf32> to vector<8x12xf32>
    %475 = vector.extract_strided_slice %472 {offsets = [0, 2], sizes = [8, 12], strides = [1, 1]} : vector<8x20xf32> to vector<8x12xf32>
    %476 = vector.extract_strided_slice %472 {offsets = [0, 3], sizes = [8, 12], strides = [1, 1]} : vector<8x20xf32> to vector<8x12xf32>
    %477 = vector.extract_strided_slice %472 {offsets = [0, 4], sizes = [8, 12], strides = [1, 1]} : vector<8x20xf32> to vector<8x12xf32>
    %478 = vector.extract_strided_slice %472 {offsets = [0, 5], sizes = [8, 12], strides = [1, 1]} : vector<8x20xf32> to vector<8x12xf32>
    %479 = vector.extract_strided_slice %472 {offsets = [0, 6], sizes = [8, 12], strides = [1, 1]} : vector<8x20xf32> to vector<8x12xf32>
    %480 = vector.extract_strided_slice %472 {offsets = [0, 7], sizes = [8, 12], strides = [1, 1]} : vector<8x20xf32> to vector<8x12xf32>
    %481 = vector.extract_strided_slice %472 {offsets = [0, 8], sizes = [8, 12], strides = [1, 1]} : vector<8x20xf32> to vector<8x12xf32>
    %c3_i32_160 = arith.constant 3 : i32
    %482 = arith.addi %4, %c3_i32_160 : i32
    %c1_i32_161 = arith.constant 1 : i32
    %483 = arith.addi %482, %c1_i32_161 : i32
    %c0_162 = arith.constant 0 : index
    %484 = arith.index_cast %483 : i32 to index
    %c0_163 = arith.constant 0 : index
    %c0_164 = arith.constant 0 : index
    %485 = vector.load %arg2[%c0_162, %484, %c0_163, %c0_164] : memref<1x20x8x20xf32, #tpu.memory_space<vmem>>, vector<1x1x8x20xf32>
    %486 = vector.shape_cast %485 : vector<1x1x8x20xf32> to vector<1x8x20xf32>
    %487 = vector.shape_cast %486 : vector<1x8x20xf32> to vector<8x20xf32>
    %488 = vector.extract_strided_slice %487 {offsets = [0, 0], sizes = [8, 12], strides = [1, 1]} : vector<8x20xf32> to vector<8x12xf32>
    %489 = vector.extract_strided_slice %487 {offsets = [0, 1], sizes = [8, 12], strides = [1, 1]} : vector<8x20xf32> to vector<8x12xf32>
    %490 = vector.extract_strided_slice %487 {offsets = [0, 2], sizes = [8, 12], strides = [1, 1]} : vector<8x20xf32> to vector<8x12xf32>
    %491 = vector.extract_strided_slice %487 {offsets = [0, 3], sizes = [8, 12], strides = [1, 1]} : vector<8x20xf32> to vector<8x12xf32>
    %492 = vector.extract_strided_slice %487 {offsets = [0, 4], sizes = [8, 12], strides = [1, 1]} : vector<8x20xf32> to vector<8x12xf32>
    %493 = vector.extract_strided_slice %487 {offsets = [0, 5], sizes = [8, 12], strides = [1, 1]} : vector<8x20xf32> to vector<8x12xf32>
    %494 = vector.extract_strided_slice %487 {offsets = [0, 6], sizes = [8, 12], strides = [1, 1]} : vector<8x20xf32> to vector<8x12xf32>
    %495 = vector.extract_strided_slice %487 {offsets = [0, 7], sizes = [8, 12], strides = [1, 1]} : vector<8x20xf32> to vector<8x12xf32>
    %496 = vector.extract_strided_slice %487 {offsets = [0, 8], sizes = [8, 12], strides = [1, 1]} : vector<8x20xf32> to vector<8x12xf32>
    %c3_i32_165 = arith.constant 3 : i32
    %497 = arith.addi %4, %c3_i32_165 : i32
    %c2_i32_166 = arith.constant 2 : i32
    %498 = arith.addi %497, %c2_i32_166 : i32
    %c0_167 = arith.constant 0 : index
    %499 = arith.index_cast %498 : i32 to index
    %c0_168 = arith.constant 0 : index
    %c0_169 = arith.constant 0 : index
    %500 = vector.load %arg2[%c0_167, %499, %c0_168, %c0_169] : memref<1x20x8x20xf32, #tpu.memory_space<vmem>>, vector<1x1x8x20xf32>
    %501 = vector.shape_cast %500 : vector<1x1x8x20xf32> to vector<1x8x20xf32>
    %502 = vector.shape_cast %501 : vector<1x8x20xf32> to vector<8x20xf32>
    %503 = vector.extract_strided_slice %502 {offsets = [0, 0], sizes = [8, 12], strides = [1, 1]} : vector<8x20xf32> to vector<8x12xf32>
    %504 = vector.extract_strided_slice %502 {offsets = [0, 1], sizes = [8, 12], strides = [1, 1]} : vector<8x20xf32> to vector<8x12xf32>
    %505 = vector.extract_strided_slice %502 {offsets = [0, 2], sizes = [8, 12], strides = [1, 1]} : vector<8x20xf32> to vector<8x12xf32>
    %506 = vector.extract_strided_slice %502 {offsets = [0, 3], sizes = [8, 12], strides = [1, 1]} : vector<8x20xf32> to vector<8x12xf32>
    %507 = vector.extract_strided_slice %502 {offsets = [0, 4], sizes = [8, 12], strides = [1, 1]} : vector<8x20xf32> to vector<8x12xf32>
    %508 = vector.extract_strided_slice %502 {offsets = [0, 5], sizes = [8, 12], strides = [1, 1]} : vector<8x20xf32> to vector<8x12xf32>
    %509 = vector.extract_strided_slice %502 {offsets = [0, 6], sizes = [8, 12], strides = [1, 1]} : vector<8x20xf32> to vector<8x12xf32>
    %510 = vector.extract_strided_slice %502 {offsets = [0, 7], sizes = [8, 12], strides = [1, 1]} : vector<8x20xf32> to vector<8x12xf32>
    %511 = vector.extract_strided_slice %502 {offsets = [0, 8], sizes = [8, 12], strides = [1, 1]} : vector<8x20xf32> to vector<8x12xf32>
    %c3_i32_170 = arith.constant 3 : i32
    %512 = arith.addi %4, %c3_i32_170 : i32
    %c3_i32_171 = arith.constant 3 : i32
    %513 = arith.addi %512, %c3_i32_171 : i32
    %c0_172 = arith.constant 0 : index
    %514 = arith.index_cast %513 : i32 to index
    %c0_173 = arith.constant 0 : index
    %c0_174 = arith.constant 0 : index
    %515 = vector.load %arg2[%c0_172, %514, %c0_173, %c0_174] : memref<1x20x8x20xf32, #tpu.memory_space<vmem>>, vector<1x1x8x20xf32>
    %516 = vector.shape_cast %515 : vector<1x1x8x20xf32> to vector<1x8x20xf32>
    %517 = vector.shape_cast %516 : vector<1x8x20xf32> to vector<8x20xf32>
    %518 = vector.extract_strided_slice %517 {offsets = [0, 0], sizes = [8, 12], strides = [1, 1]} : vector<8x20xf32> to vector<8x12xf32>
    %519 = vector.extract_strided_slice %517 {offsets = [0, 1], sizes = [8, 12], strides = [1, 1]} : vector<8x20xf32> to vector<8x12xf32>
    %520 = vector.extract_strided_slice %517 {offsets = [0, 2], sizes = [8, 12], strides = [1, 1]} : vector<8x20xf32> to vector<8x12xf32>
    %521 = vector.extract_strided_slice %517 {offsets = [0, 3], sizes = [8, 12], strides = [1, 1]} : vector<8x20xf32> to vector<8x12xf32>
    %522 = vector.extract_strided_slice %517 {offsets = [0, 4], sizes = [8, 12], strides = [1, 1]} : vector<8x20xf32> to vector<8x12xf32>
    %523 = vector.extract_strided_slice %517 {offsets = [0, 5], sizes = [8, 12], strides = [1, 1]} : vector<8x20xf32> to vector<8x12xf32>
    %524 = vector.extract_strided_slice %517 {offsets = [0, 6], sizes = [8, 12], strides = [1, 1]} : vector<8x20xf32> to vector<8x12xf32>
    %525 = vector.extract_strided_slice %517 {offsets = [0, 7], sizes = [8, 12], strides = [1, 1]} : vector<8x20xf32> to vector<8x12xf32>
    %526 = vector.extract_strided_slice %517 {offsets = [0, 8], sizes = [8, 12], strides = [1, 1]} : vector<8x20xf32> to vector<8x12xf32>
    %c3_i32_175 = arith.constant 3 : i32
    %527 = arith.addi %4, %c3_i32_175 : i32
    %c4_i32_176 = arith.constant 4 : i32
    %528 = arith.addi %527, %c4_i32_176 : i32
    %c0_177 = arith.constant 0 : index
    %529 = arith.index_cast %528 : i32 to index
    %c0_178 = arith.constant 0 : index
    %c0_179 = arith.constant 0 : index
    %530 = vector.load %arg2[%c0_177, %529, %c0_178, %c0_179] : memref<1x20x8x20xf32, #tpu.memory_space<vmem>>, vector<1x1x8x20xf32>
    %531 = vector.shape_cast %530 : vector<1x1x8x20xf32> to vector<1x8x20xf32>
    %532 = vector.shape_cast %531 : vector<1x8x20xf32> to vector<8x20xf32>
    %533 = vector.extract_strided_slice %532 {offsets = [0, 0], sizes = [8, 12], strides = [1, 1]} : vector<8x20xf32> to vector<8x12xf32>
    %534 = vector.extract_strided_slice %532 {offsets = [0, 1], sizes = [8, 12], strides = [1, 1]} : vector<8x20xf32> to vector<8x12xf32>
    %535 = vector.extract_strided_slice %532 {offsets = [0, 2], sizes = [8, 12], strides = [1, 1]} : vector<8x20xf32> to vector<8x12xf32>
    %536 = vector.extract_strided_slice %532 {offsets = [0, 3], sizes = [8, 12], strides = [1, 1]} : vector<8x20xf32> to vector<8x12xf32>
    %537 = vector.extract_strided_slice %532 {offsets = [0, 4], sizes = [8, 12], strides = [1, 1]} : vector<8x20xf32> to vector<8x12xf32>
    %538 = vector.extract_strided_slice %532 {offsets = [0, 5], sizes = [8, 12], strides = [1, 1]} : vector<8x20xf32> to vector<8x12xf32>
    %539 = vector.extract_strided_slice %532 {offsets = [0, 6], sizes = [8, 12], strides = [1, 1]} : vector<8x20xf32> to vector<8x12xf32>
    %540 = vector.extract_strided_slice %532 {offsets = [0, 7], sizes = [8, 12], strides = [1, 1]} : vector<8x20xf32> to vector<8x12xf32>
    %541 = vector.extract_strided_slice %532 {offsets = [0, 8], sizes = [8, 12], strides = [1, 1]} : vector<8x20xf32> to vector<8x12xf32>
    %c3_i32_180 = arith.constant 3 : i32
    %542 = arith.addi %4, %c3_i32_180 : i32
    %c5_i32_181 = arith.constant 5 : i32
    %543 = arith.addi %542, %c5_i32_181 : i32
    %c0_182 = arith.constant 0 : index
    %544 = arith.index_cast %543 : i32 to index
    %c0_183 = arith.constant 0 : index
    %c0_184 = arith.constant 0 : index
    %545 = vector.load %arg2[%c0_182, %544, %c0_183, %c0_184] : memref<1x20x8x20xf32, #tpu.memory_space<vmem>>, vector<1x1x8x20xf32>
    %546 = vector.shape_cast %545 : vector<1x1x8x20xf32> to vector<1x8x20xf32>
    %547 = vector.shape_cast %546 : vector<1x8x20xf32> to vector<8x20xf32>
    %548 = vector.extract_strided_slice %547 {offsets = [0, 0], sizes = [8, 12], strides = [1, 1]} : vector<8x20xf32> to vector<8x12xf32>
    %549 = vector.extract_strided_slice %547 {offsets = [0, 1], sizes = [8, 12], strides = [1, 1]} : vector<8x20xf32> to vector<8x12xf32>
    %550 = vector.extract_strided_slice %547 {offsets = [0, 2], sizes = [8, 12], strides = [1, 1]} : vector<8x20xf32> to vector<8x12xf32>
    %551 = vector.extract_strided_slice %547 {offsets = [0, 3], sizes = [8, 12], strides = [1, 1]} : vector<8x20xf32> to vector<8x12xf32>
    %552 = vector.extract_strided_slice %547 {offsets = [0, 4], sizes = [8, 12], strides = [1, 1]} : vector<8x20xf32> to vector<8x12xf32>
    %553 = vector.extract_strided_slice %547 {offsets = [0, 5], sizes = [8, 12], strides = [1, 1]} : vector<8x20xf32> to vector<8x12xf32>
    %554 = vector.extract_strided_slice %547 {offsets = [0, 6], sizes = [8, 12], strides = [1, 1]} : vector<8x20xf32> to vector<8x12xf32>
    %555 = vector.extract_strided_slice %547 {offsets = [0, 7], sizes = [8, 12], strides = [1, 1]} : vector<8x20xf32> to vector<8x12xf32>
    %556 = vector.extract_strided_slice %547 {offsets = [0, 8], sizes = [8, 12], strides = [1, 1]} : vector<8x20xf32> to vector<8x12xf32>
    %c3_i32_185 = arith.constant 3 : i32
    %557 = arith.addi %4, %c3_i32_185 : i32
    %c6_i32_186 = arith.constant 6 : i32
    %558 = arith.addi %557, %c6_i32_186 : i32
    %c0_187 = arith.constant 0 : index
    %559 = arith.index_cast %558 : i32 to index
    %c0_188 = arith.constant 0 : index
    %c0_189 = arith.constant 0 : index
    %560 = vector.load %arg2[%c0_187, %559, %c0_188, %c0_189] : memref<1x20x8x20xf32, #tpu.memory_space<vmem>>, vector<1x1x8x20xf32>
    %561 = vector.shape_cast %560 : vector<1x1x8x20xf32> to vector<1x8x20xf32>
    %562 = vector.shape_cast %561 : vector<1x8x20xf32> to vector<8x20xf32>
    %563 = vector.extract_strided_slice %562 {offsets = [0, 0], sizes = [8, 12], strides = [1, 1]} : vector<8x20xf32> to vector<8x12xf32>
    %564 = vector.extract_strided_slice %562 {offsets = [0, 1], sizes = [8, 12], strides = [1, 1]} : vector<8x20xf32> to vector<8x12xf32>
    %565 = vector.extract_strided_slice %562 {offsets = [0, 2], sizes = [8, 12], strides = [1, 1]} : vector<8x20xf32> to vector<8x12xf32>
    %566 = vector.extract_strided_slice %562 {offsets = [0, 3], sizes = [8, 12], strides = [1, 1]} : vector<8x20xf32> to vector<8x12xf32>
    %567 = vector.extract_strided_slice %562 {offsets = [0, 4], sizes = [8, 12], strides = [1, 1]} : vector<8x20xf32> to vector<8x12xf32>
    %568 = vector.extract_strided_slice %562 {offsets = [0, 5], sizes = [8, 12], strides = [1, 1]} : vector<8x20xf32> to vector<8x12xf32>
    %569 = vector.extract_strided_slice %562 {offsets = [0, 6], sizes = [8, 12], strides = [1, 1]} : vector<8x20xf32> to vector<8x12xf32>
    %570 = vector.extract_strided_slice %562 {offsets = [0, 7], sizes = [8, 12], strides = [1, 1]} : vector<8x20xf32> to vector<8x12xf32>
    %571 = vector.extract_strided_slice %562 {offsets = [0, 8], sizes = [8, 12], strides = [1, 1]} : vector<8x20xf32> to vector<8x12xf32>
    %c3_i32_190 = arith.constant 3 : i32
    %572 = arith.addi %4, %c3_i32_190 : i32
    %c7_i32_191 = arith.constant 7 : i32
    %573 = arith.addi %572, %c7_i32_191 : i32
    %c0_192 = arith.constant 0 : index
    %574 = arith.index_cast %573 : i32 to index
    %c0_193 = arith.constant 0 : index
    %c0_194 = arith.constant 0 : index
    %575 = vector.load %arg2[%c0_192, %574, %c0_193, %c0_194] : memref<1x20x8x20xf32, #tpu.memory_space<vmem>>, vector<1x1x8x20xf32>
    %576 = vector.shape_cast %575 : vector<1x1x8x20xf32> to vector<1x8x20xf32>
    %577 = vector.shape_cast %576 : vector<1x8x20xf32> to vector<8x20xf32>
    %578 = vector.extract_strided_slice %577 {offsets = [0, 0], sizes = [8, 12], strides = [1, 1]} : vector<8x20xf32> to vector<8x12xf32>
    %579 = vector.extract_strided_slice %577 {offsets = [0, 1], sizes = [8, 12], strides = [1, 1]} : vector<8x20xf32> to vector<8x12xf32>
    %580 = vector.extract_strided_slice %577 {offsets = [0, 2], sizes = [8, 12], strides = [1, 1]} : vector<8x20xf32> to vector<8x12xf32>
    %581 = vector.extract_strided_slice %577 {offsets = [0, 3], sizes = [8, 12], strides = [1, 1]} : vector<8x20xf32> to vector<8x12xf32>
    %582 = vector.extract_strided_slice %577 {offsets = [0, 4], sizes = [8, 12], strides = [1, 1]} : vector<8x20xf32> to vector<8x12xf32>
    %583 = vector.extract_strided_slice %577 {offsets = [0, 5], sizes = [8, 12], strides = [1, 1]} : vector<8x20xf32> to vector<8x12xf32>
    %584 = vector.extract_strided_slice %577 {offsets = [0, 6], sizes = [8, 12], strides = [1, 1]} : vector<8x20xf32> to vector<8x12xf32>
    %585 = vector.extract_strided_slice %577 {offsets = [0, 7], sizes = [8, 12], strides = [1, 1]} : vector<8x20xf32> to vector<8x12xf32>
    %586 = vector.extract_strided_slice %577 {offsets = [0, 8], sizes = [8, 12], strides = [1, 1]} : vector<8x20xf32> to vector<8x12xf32>
    %c3_i32_195 = arith.constant 3 : i32
    %587 = arith.addi %4, %c3_i32_195 : i32
    %c8_i32_196 = arith.constant 8 : i32
    %588 = arith.addi %587, %c8_i32_196 : i32
    %c0_197 = arith.constant 0 : index
    %589 = arith.index_cast %588 : i32 to index
    %c0_198 = arith.constant 0 : index
    %c0_199 = arith.constant 0 : index
    %590 = vector.load %arg2[%c0_197, %589, %c0_198, %c0_199] : memref<1x20x8x20xf32, #tpu.memory_space<vmem>>, vector<1x1x8x20xf32>
    %591 = vector.shape_cast %590 : vector<1x1x8x20xf32> to vector<1x8x20xf32>
    %592 = vector.shape_cast %591 : vector<1x8x20xf32> to vector<8x20xf32>
    %593 = vector.extract_strided_slice %592 {offsets = [0, 0], sizes = [8, 12], strides = [1, 1]} : vector<8x20xf32> to vector<8x12xf32>
    %594 = vector.extract_strided_slice %592 {offsets = [0, 1], sizes = [8, 12], strides = [1, 1]} : vector<8x20xf32> to vector<8x12xf32>
    %595 = vector.extract_strided_slice %592 {offsets = [0, 2], sizes = [8, 12], strides = [1, 1]} : vector<8x20xf32> to vector<8x12xf32>
    %596 = vector.extract_strided_slice %592 {offsets = [0, 3], sizes = [8, 12], strides = [1, 1]} : vector<8x20xf32> to vector<8x12xf32>
    %597 = vector.extract_strided_slice %592 {offsets = [0, 4], sizes = [8, 12], strides = [1, 1]} : vector<8x20xf32> to vector<8x12xf32>
    %598 = vector.extract_strided_slice %592 {offsets = [0, 5], sizes = [8, 12], strides = [1, 1]} : vector<8x20xf32> to vector<8x12xf32>
    %599 = vector.extract_strided_slice %592 {offsets = [0, 6], sizes = [8, 12], strides = [1, 1]} : vector<8x20xf32> to vector<8x12xf32>
    %600 = vector.extract_strided_slice %592 {offsets = [0, 7], sizes = [8, 12], strides = [1, 1]} : vector<8x20xf32> to vector<8x12xf32>
    %601 = vector.extract_strided_slice %592 {offsets = [0, 8], sizes = [8, 12], strides = [1, 1]} : vector<8x20xf32> to vector<8x12xf32>
    %602 = tpu.concatenate %473, %474, %475, %476, %477, %478, %479, %480, %481, %488, %489, %490, %491, %492, %493, %494 in 0 : vector<8x12xf32>, vector<8x12xf32>, vector<8x12xf32>, vector<8x12xf32>, vector<8x12xf32>, vector<8x12xf32>, vector<8x12xf32>, vector<8x12xf32>, vector<8x12xf32>, vector<8x12xf32>, vector<8x12xf32>, vector<8x12xf32>, vector<8x12xf32>, vector<8x12xf32>, vector<8x12xf32>, vector<8x12xf32> -> vector<128x12xf32>
    %603 = tpu.concatenate %495, %496, %503, %504, %505, %506, %507, %508, %509, %510, %511, %518, %519, %520, %521, %522 in 0 : vector<8x12xf32>, vector<8x12xf32>, vector<8x12xf32>, vector<8x12xf32>, vector<8x12xf32>, vector<8x12xf32>, vector<8x12xf32>, vector<8x12xf32>, vector<8x12xf32>, vector<8x12xf32>, vector<8x12xf32>, vector<8x12xf32>, vector<8x12xf32>, vector<8x12xf32>, vector<8x12xf32>, vector<8x12xf32> -> vector<128x12xf32>
    %604 = tpu.concatenate %523, %524, %525, %526, %533, %534, %535, %536, %537, %538, %539, %540, %541, %548, %549, %550 in 0 : vector<8x12xf32>, vector<8x12xf32>, vector<8x12xf32>, vector<8x12xf32>, vector<8x12xf32>, vector<8x12xf32>, vector<8x12xf32>, vector<8x12xf32>, vector<8x12xf32>, vector<8x12xf32>, vector<8x12xf32>, vector<8x12xf32>, vector<8x12xf32>, vector<8x12xf32>, vector<8x12xf32>, vector<8x12xf32> -> vector<128x12xf32>
    %605 = tpu.concatenate %551, %552, %553, %554, %555, %556, %563, %564, %565, %566, %567, %568, %569, %570, %571, %578 in 0 : vector<8x12xf32>, vector<8x12xf32>, vector<8x12xf32>, vector<8x12xf32>, vector<8x12xf32>, vector<8x12xf32>, vector<8x12xf32>, vector<8x12xf32>, vector<8x12xf32>, vector<8x12xf32>, vector<8x12xf32>, vector<8x12xf32>, vector<8x12xf32>, vector<8x12xf32>, vector<8x12xf32>, vector<8x12xf32> -> vector<128x12xf32>
    %606 = tpu.concatenate %579, %580, %581, %582, %583, %584, %585, %586, %593, %594, %595, %596, %597, %598, %599, %600 in 0 : vector<8x12xf32>, vector<8x12xf32>, vector<8x12xf32>, vector<8x12xf32>, vector<8x12xf32>, vector<8x12xf32>, vector<8x12xf32>, vector<8x12xf32>, vector<8x12xf32>, vector<8x12xf32>, vector<8x12xf32>, vector<8x12xf32>, vector<8x12xf32>, vector<8x12xf32>, vector<8x12xf32>, vector<8x12xf32> -> vector<128x12xf32>
    %607 = tpu.concatenate %602, %603, %604, %605, %606, %601 in 0 : vector<128x12xf32>, vector<128x12xf32>, vector<128x12xf32>, vector<128x12xf32>, vector<128x12xf32>, vector<8x12xf32> -> vector<648x12xf32>
    %cst_200 = arith.constant dense<0.000000e+00> : vector<64x12xf32>
    %608 = tpu.matmul %0, %607, %cst_200 {dimension_numbers = #tpu.dot_dimension_numbers<[1], [0], [0], [1], [0, 0, 1, 1], [], []>} : vector<64x648xf32>, vector<648x12xf32>, vector<64x12xf32> -> vector<64x12xf32>
    %609 = vector.broadcast %1 : vector<64x1xf32> to vector<64x12xf32>
    %610 = arith.addf %608, %609 : vector<64x12xf32>
    %cst_201 = arith.constant 0.000000e+00 : f32
    %611 = vector.broadcast %cst_201 : f32 to vector<64x12xf32>
    %612 = arith.maximumf %610, %611 : vector<64x12xf32>
    %cst_202 = arith.constant dense<0.000000e+00> : vector<32x12xf32>
    %613 = tpu.matmul %2, %612, %cst_202 {dimension_numbers = #tpu.dot_dimension_numbers<[1], [0], [0], [1], [0, 0, 1, 1], [], []>} : vector<32x64xf32>, vector<64x12xf32>, vector<32x12xf32> -> vector<32x12xf32>
    %614 = vector.broadcast %3 : vector<32x1xf32> to vector<32x12xf32>
    %615 = arith.addf %613, %614 : vector<32x12xf32>
    %cst_203 = arith.constant 0.000000e+00 : f32
    %616 = vector.broadcast %cst_203 : f32 to vector<32x12xf32>
    %617 = arith.maximumf %615, %616 : vector<32x12xf32>
    %c0_204 = arith.constant 0 : index
    %c3 = arith.constant 3 : index
    %c0_205 = arith.constant 0 : index
    %c0_206 = arith.constant 0 : index
    %618 = vector.load %arg7[%c0_204, %c3, %c0_205, %c0_206] : memref<1x4x32x12xf32, #tpu.memory_space<vmem>>, vector<1x1x32x12xf32>
    %619 = vector.shape_cast %618 : vector<1x1x32x12xf32> to vector<32x12xf32>
    %620 = vector.shape_cast %617 : vector<32x12xf32> to vector<1x1x32x12xf32>
    tpu.vector_store %arg7[%c0_204, %c3, %c0_205, %c0_206], %620 {strides = array<i32>} : memref<1x4x32x12xf32, #tpu.memory_space<vmem>>, vector<1x1x32x12xf32>,
    return
  }
  func.func @transform_0(%arg0: i32, %arg1: i32) -> (i32, i32, i32, i32) {
    %c0_i32 = arith.constant 0 : i32
    %c0_i32_0 = arith.constant 0 : i32
    %c0_i32_1 = arith.constant 0 : i32
    %c0_i32_2 = arith.constant 0 : i32
    return %arg0, %c0_i32, %c0_i32_0, %c0_i32_1 : i32, i32, i32, i32
  }
  func.func @transform_1(%arg0: i32, %arg1: i32) -> (i32, i32) {
    %c0_i32 = arith.constant 0 : i32
    %c0_i32_0 = arith.constant 0 : i32
    %c0_i32_1 = arith.constant 0 : i32
    return %c0_i32, %c0_i32_0 : i32, i32
  }
  func.func @transform_2(%arg0: i32, %arg1: i32) -> (i32, i32) {
    %c0_i32 = arith.constant 0 : i32
    %c0_i32_0 = arith.constant 0 : i32
    %c0_i32_1 = arith.constant 0 : i32
    return %c0_i32, %c0_i32_0 : i32, i32
  }
  func.func @transform_3(%arg0: i32, %arg1: i32) -> (i32, i32) {
    %c0_i32 = arith.constant 0 : i32
    %c0_i32_0 = arith.constant 0 : i32
    %c0_i32_1 = arith.constant 0 : i32
    return %c0_i32, %c0_i32_0 : i32, i32
  }
  func.func @transform_4(%arg0: i32, %arg1: i32) -> (i32, i32) {
    %c0_i32 = arith.constant 0 : i32
    %c0_i32_0 = arith.constant 0 : i32
    %c0_i32_1 = arith.constant 0 : i32
    return %c0_i32, %c0_i32_0 : i32, i32
  }
  func.func @transform_5(%arg0: i32, %arg1: i32) -> (i32, i32, i32, i32) {
    %c0_i32 = arith.constant 0 : i32
    %c0_i32_0 = arith.constant 0 : i32
    %c0_i32_1 = arith.constant 0 : i32
    return %arg0, %arg1, %c0_i32, %c0_i32_0 : i32, i32, i32, i32
  }
}

module attributes {stable_mosaic.version = 11 : i64} {
  func.func @_conv5x5_kernel(%arg0: i32, %arg1: i32, %arg2: memref<1x12x32x12xf32, #tpu.memory_space<vmem>>, %arg3: memref<3x800xf32, #tpu.memory_space<vmem>>, %arg4: memref<3x1xf32, #tpu.memory_space<vmem>>, %arg5: memref<1x4x3x8xf32, #tpu.memory_space<vmem>>) attributes {dimension_semantics = [#tpu.dimension_semantics<parallel>, #tpu.dimension_semantics<parallel>], iteration_bounds = array<i64: 2, 2>, scalar_prefetch = 0 : i64, scratch_operands = 0 : i64, tpu.core_type = #tpu.core_type<tc>, window_params = [{transform_indices = @transform_0, window_bounds = array<i64: 1, 12, 32, 12>}, {pipeline_mode = #tpu.pipeline_mode<synchronous>, transform_indices = @transform_1, window_bounds = array<i64: 3, 800>}, {pipeline_mode = #tpu.pipeline_mode<synchronous>, transform_indices = @transform_2, window_bounds = array<i64: 3, 1>}, {transform_indices = @transform_3, window_bounds = array<i64: 1, 4, 3, 8>}]} {
    %c0 = arith.constant 0 : index
    %c0_0 = arith.constant 0 : index
    %0 = vector.load %arg3[%c0, %c0_0] : memref<3x800xf32, #tpu.memory_space<vmem>>, vector<3x800xf32>
    %c0_1 = arith.constant 0 : index
    %c0_2 = arith.constant 0 : index
    %1 = vector.load %arg4[%c0_1, %c0_2] : memref<3x1xf32, #tpu.memory_space<vmem>>, vector<3x1xf32>
    %c4_i32 = arith.constant 4 : i32
    %2 = arith.muli %arg1, %c4_i32 : i32
    %c0_i32 = arith.constant 0 : i32
    %3 = arith.addi %2, %c0_i32 : i32
    %c0_i32_3 = arith.constant 0 : i32
    %4 = arith.addi %3, %c0_i32_3 : i32
    %c0_4 = arith.constant 0 : index
    %5 = arith.index_cast %4 : i32 to index
    %c0_5 = arith.constant 0 : index
    %c0_6 = arith.constant 0 : index
    %6 = vector.load %arg2[%c0_4, %5, %c0_5, %c0_6] : memref<1x12x32x12xf32, #tpu.memory_space<vmem>>, vector<1x1x32x12xf32>
    %7 = vector.shape_cast %6 : vector<1x1x32x12xf32> to vector<1x32x12xf32>
    %8 = vector.shape_cast %7 : vector<1x32x12xf32> to vector<32x12xf32>
    %9 = vector.extract_strided_slice %8 {offsets = [0, 0], sizes = [32, 8], strides = [1, 1]} : vector<32x12xf32> to vector<32x8xf32>
    %10 = vector.extract_strided_slice %8 {offsets = [0, 1], sizes = [32, 8], strides = [1, 1]} : vector<32x12xf32> to vector<32x8xf32>
    %11 = vector.extract_strided_slice %8 {offsets = [0, 2], sizes = [32, 8], strides = [1, 1]} : vector<32x12xf32> to vector<32x8xf32>
    %12 = vector.extract_strided_slice %8 {offsets = [0, 3], sizes = [32, 8], strides = [1, 1]} : vector<32x12xf32> to vector<32x8xf32>
    %13 = vector.extract_strided_slice %8 {offsets = [0, 4], sizes = [32, 8], strides = [1, 1]} : vector<32x12xf32> to vector<32x8xf32>
    %c0_i32_7 = arith.constant 0 : i32
    %14 = arith.addi %2, %c0_i32_7 : i32
    %c1_i32 = arith.constant 1 : i32
    %15 = arith.addi %14, %c1_i32 : i32
    %c0_8 = arith.constant 0 : index
    %16 = arith.index_cast %15 : i32 to index
    %c0_9 = arith.constant 0 : index
    %c0_10 = arith.constant 0 : index
    %17 = vector.load %arg2[%c0_8, %16, %c0_9, %c0_10] : memref<1x12x32x12xf32, #tpu.memory_space<vmem>>, vector<1x1x32x12xf32>
    %18 = vector.shape_cast %17 : vector<1x1x32x12xf32> to vector<1x32x12xf32>
    %19 = vector.shape_cast %18 : vector<1x32x12xf32> to vector<32x12xf32>
    %20 = vector.extract_strided_slice %19 {offsets = [0, 0], sizes = [32, 8], strides = [1, 1]} : vector<32x12xf32> to vector<32x8xf32>
    %21 = vector.extract_strided_slice %19 {offsets = [0, 1], sizes = [32, 8], strides = [1, 1]} : vector<32x12xf32> to vector<32x8xf32>
    %22 = vector.extract_strided_slice %19 {offsets = [0, 2], sizes = [32, 8], strides = [1, 1]} : vector<32x12xf32> to vector<32x8xf32>
    %23 = vector.extract_strided_slice %19 {offsets = [0, 3], sizes = [32, 8], strides = [1, 1]} : vector<32x12xf32> to vector<32x8xf32>
    %24 = vector.extract_strided_slice %19 {offsets = [0, 4], sizes = [32, 8], strides = [1, 1]} : vector<32x12xf32> to vector<32x8xf32>
    %c0_i32_11 = arith.constant 0 : i32
    %25 = arith.addi %2, %c0_i32_11 : i32
    %c2_i32 = arith.constant 2 : i32
    %26 = arith.addi %25, %c2_i32 : i32
    %c0_12 = arith.constant 0 : index
    %27 = arith.index_cast %26 : i32 to index
    %c0_13 = arith.constant 0 : index
    %c0_14 = arith.constant 0 : index
    %28 = vector.load %arg2[%c0_12, %27, %c0_13, %c0_14] : memref<1x12x32x12xf32, #tpu.memory_space<vmem>>, vector<1x1x32x12xf32>
    %29 = vector.shape_cast %28 : vector<1x1x32x12xf32> to vector<1x32x12xf32>
    %30 = vector.shape_cast %29 : vector<1x32x12xf32> to vector<32x12xf32>
    %31 = vector.extract_strided_slice %30 {offsets = [0, 0], sizes = [32, 8], strides = [1, 1]} : vector<32x12xf32> to vector<32x8xf32>
    %32 = vector.extract_strided_slice %30 {offsets = [0, 1], sizes = [32, 8], strides = [1, 1]} : vector<32x12xf32> to vector<32x8xf32>
    %33 = vector.extract_strided_slice %30 {offsets = [0, 2], sizes = [32, 8], strides = [1, 1]} : vector<32x12xf32> to vector<32x8xf32>
    %34 = vector.extract_strided_slice %30 {offsets = [0, 3], sizes = [32, 8], strides = [1, 1]} : vector<32x12xf32> to vector<32x8xf32>
    %35 = vector.extract_strided_slice %30 {offsets = [0, 4], sizes = [32, 8], strides = [1, 1]} : vector<32x12xf32> to vector<32x8xf32>
    %c0_i32_15 = arith.constant 0 : i32
    %36 = arith.addi %2, %c0_i32_15 : i32
    %c3_i32 = arith.constant 3 : i32
    %37 = arith.addi %36, %c3_i32 : i32
    %c0_16 = arith.constant 0 : index
    %38 = arith.index_cast %37 : i32 to index
    %c0_17 = arith.constant 0 : index
    %c0_18 = arith.constant 0 : index
    %39 = vector.load %arg2[%c0_16, %38, %c0_17, %c0_18] : memref<1x12x32x12xf32, #tpu.memory_space<vmem>>, vector<1x1x32x12xf32>
    %40 = vector.shape_cast %39 : vector<1x1x32x12xf32> to vector<1x32x12xf32>
    %41 = vector.shape_cast %40 : vector<1x32x12xf32> to vector<32x12xf32>
    %42 = vector.extract_strided_slice %41 {offsets = [0, 0], sizes = [32, 8], strides = [1, 1]} : vector<32x12xf32> to vector<32x8xf32>
    %43 = vector.extract_strided_slice %41 {offsets = [0, 1], sizes = [32, 8], strides = [1, 1]} : vector<32x12xf32> to vector<32x8xf32>
    %44 = vector.extract_strided_slice %41 {offsets = [0, 2], sizes = [32, 8], strides = [1, 1]} : vector<32x12xf32> to vector<32x8xf32>
    %45 = vector.extract_strided_slice %41 {offsets = [0, 3], sizes = [32, 8], strides = [1, 1]} : vector<32x12xf32> to vector<32x8xf32>
    %46 = vector.extract_strided_slice %41 {offsets = [0, 4], sizes = [32, 8], strides = [1, 1]} : vector<32x12xf32> to vector<32x8xf32>
    %c0_i32_19 = arith.constant 0 : i32
    %47 = arith.addi %2, %c0_i32_19 : i32
    %c4_i32_20 = arith.constant 4 : i32
    %48 = arith.addi %47, %c4_i32_20 : i32
    %c0_21 = arith.constant 0 : index
    %49 = arith.index_cast %48 : i32 to index
    %c0_22 = arith.constant 0 : index
    %c0_23 = arith.constant 0 : index
    %50 = vector.load %arg2[%c0_21, %49, %c0_22, %c0_23] : memref<1x12x32x12xf32, #tpu.memory_space<vmem>>, vector<1x1x32x12xf32>
    %51 = vector.shape_cast %50 : vector<1x1x32x12xf32> to vector<1x32x12xf32>
    %52 = vector.shape_cast %51 : vector<1x32x12xf32> to vector<32x12xf32>
    %53 = vector.extract_strided_slice %52 {offsets = [0, 0], sizes = [32, 8], strides = [1, 1]} : vector<32x12xf32> to vector<32x8xf32>
    %54 = vector.extract_strided_slice %52 {offsets = [0, 1], sizes = [32, 8], strides = [1, 1]} : vector<32x12xf32> to vector<32x8xf32>
    %55 = vector.extract_strided_slice %52 {offsets = [0, 2], sizes = [32, 8], strides = [1, 1]} : vector<32x12xf32> to vector<32x8xf32>
    %56 = vector.extract_strided_slice %52 {offsets = [0, 3], sizes = [32, 8], strides = [1, 1]} : vector<32x12xf32> to vector<32x8xf32>
    %57 = vector.extract_strided_slice %52 {offsets = [0, 4], sizes = [32, 8], strides = [1, 1]} : vector<32x12xf32> to vector<32x8xf32>
    %58 = tpu.concatenate %9, %10, %11, %12, %13, %20, %21, %22, %23, %24, %31, %32, %33, %34, %35, %42 in 0 : vector<32x8xf32>, vector<32x8xf32>, vector<32x8xf32>, vector<32x8xf32>, vector<32x8xf32>, vector<32x8xf32>, vector<32x8xf32>, vector<32x8xf32>, vector<32x8xf32>, vector<32x8xf32>, vector<32x8xf32>, vector<32x8xf32>, vector<32x8xf32>, vector<32x8xf32>, vector<32x8xf32>, vector<32x8xf32> -> vector<512x8xf32>
    %59 = tpu.concatenate %43, %44, %45, %46, %53, %54, %55, %56, %57 in 0 : vector<32x8xf32>, vector<32x8xf32>, vector<32x8xf32>, vector<32x8xf32>, vector<32x8xf32>, vector<32x8xf32>, vector<32x8xf32>, vector<32x8xf32>, vector<32x8xf32> -> vector<288x8xf32>
    %60 = tpu.concatenate %58, %59 in 0 : vector<512x8xf32>, vector<288x8xf32> -> vector<800x8xf32>
    %cst = arith.constant dense<0.000000e+00> : vector<3x8xf32>
    %61 = tpu.matmul %0, %60, %cst {dimension_numbers = #tpu.dot_dimension_numbers<[1], [0], [0], [1], [0, 0, 1, 1], [], []>} : vector<3x800xf32>, vector<800x8xf32>, vector<3x8xf32> -> vector<3x8xf32>
    %62 = vector.broadcast %1 : vector<3x1xf32> to vector<3x8xf32>
    %63 = arith.addf %61, %62 : vector<3x8xf32>
    %c0_24 = arith.constant 0 : index
    %c0_25 = arith.constant 0 : index
    %c0_26 = arith.constant 0 : index
    %c0_27 = arith.constant 0 : index
    %64 = vector.load %arg5[%c0_24, %c0_25, %c0_26, %c0_27] : memref<1x4x3x8xf32, #tpu.memory_space<vmem>>, vector<1x1x3x8xf32>
    %65 = vector.shape_cast %64 : vector<1x1x3x8xf32> to vector<3x8xf32>
    %66 = vector.shape_cast %63 : vector<3x8xf32> to vector<1x1x3x8xf32>
    tpu.vector_store %arg5[%c0_24, %c0_25, %c0_26, %c0_27], %66 {strides = array<i32>} : memref<1x4x3x8xf32, #tpu.memory_space<vmem>>, vector<1x1x3x8xf32>,
    %c1_i32_28 = arith.constant 1 : i32
    %67 = arith.addi %2, %c1_i32_28 : i32
    %c0_i32_29 = arith.constant 0 : i32
    %68 = arith.addi %67, %c0_i32_29 : i32
    %c0_30 = arith.constant 0 : index
    %69 = arith.index_cast %68 : i32 to index
    %c0_31 = arith.constant 0 : index
    %c0_32 = arith.constant 0 : index
    %70 = vector.load %arg2[%c0_30, %69, %c0_31, %c0_32] : memref<1x12x32x12xf32, #tpu.memory_space<vmem>>, vector<1x1x32x12xf32>
    %71 = vector.shape_cast %70 : vector<1x1x32x12xf32> to vector<1x32x12xf32>
    %72 = vector.shape_cast %71 : vector<1x32x12xf32> to vector<32x12xf32>
    %73 = vector.extract_strided_slice %72 {offsets = [0, 0], sizes = [32, 8], strides = [1, 1]} : vector<32x12xf32> to vector<32x8xf32>
    %74 = vector.extract_strided_slice %72 {offsets = [0, 1], sizes = [32, 8], strides = [1, 1]} : vector<32x12xf32> to vector<32x8xf32>
    %75 = vector.extract_strided_slice %72 {offsets = [0, 2], sizes = [32, 8], strides = [1, 1]} : vector<32x12xf32> to vector<32x8xf32>
    %76 = vector.extract_strided_slice %72 {offsets = [0, 3], sizes = [32, 8], strides = [1, 1]} : vector<32x12xf32> to vector<32x8xf32>
    %77 = vector.extract_strided_slice %72 {offsets = [0, 4], sizes = [32, 8], strides = [1, 1]} : vector<32x12xf32> to vector<32x8xf32>
    %c1_i32_33 = arith.constant 1 : i32
    %78 = arith.addi %2, %c1_i32_33 : i32
    %c1_i32_34 = arith.constant 1 : i32
    %79 = arith.addi %78, %c1_i32_34 : i32
    %c0_35 = arith.constant 0 : index
    %80 = arith.index_cast %79 : i32 to index
    %c0_36 = arith.constant 0 : index
    %c0_37 = arith.constant 0 : index
    %81 = vector.load %arg2[%c0_35, %80, %c0_36, %c0_37] : memref<1x12x32x12xf32, #tpu.memory_space<vmem>>, vector<1x1x32x12xf32>
    %82 = vector.shape_cast %81 : vector<1x1x32x12xf32> to vector<1x32x12xf32>
    %83 = vector.shape_cast %82 : vector<1x32x12xf32> to vector<32x12xf32>
    %84 = vector.extract_strided_slice %83 {offsets = [0, 0], sizes = [32, 8], strides = [1, 1]} : vector<32x12xf32> to vector<32x8xf32>
    %85 = vector.extract_strided_slice %83 {offsets = [0, 1], sizes = [32, 8], strides = [1, 1]} : vector<32x12xf32> to vector<32x8xf32>
    %86 = vector.extract_strided_slice %83 {offsets = [0, 2], sizes = [32, 8], strides = [1, 1]} : vector<32x12xf32> to vector<32x8xf32>
    %87 = vector.extract_strided_slice %83 {offsets = [0, 3], sizes = [32, 8], strides = [1, 1]} : vector<32x12xf32> to vector<32x8xf32>
    %88 = vector.extract_strided_slice %83 {offsets = [0, 4], sizes = [32, 8], strides = [1, 1]} : vector<32x12xf32> to vector<32x8xf32>
    %c1_i32_38 = arith.constant 1 : i32
    %89 = arith.addi %2, %c1_i32_38 : i32
    %c2_i32_39 = arith.constant 2 : i32
    %90 = arith.addi %89, %c2_i32_39 : i32
    %c0_40 = arith.constant 0 : index
    %91 = arith.index_cast %90 : i32 to index
    %c0_41 = arith.constant 0 : index
    %c0_42 = arith.constant 0 : index
    %92 = vector.load %arg2[%c0_40, %91, %c0_41, %c0_42] : memref<1x12x32x12xf32, #tpu.memory_space<vmem>>, vector<1x1x32x12xf32>
    %93 = vector.shape_cast %92 : vector<1x1x32x12xf32> to vector<1x32x12xf32>
    %94 = vector.shape_cast %93 : vector<1x32x12xf32> to vector<32x12xf32>
    %95 = vector.extract_strided_slice %94 {offsets = [0, 0], sizes = [32, 8], strides = [1, 1]} : vector<32x12xf32> to vector<32x8xf32>
    %96 = vector.extract_strided_slice %94 {offsets = [0, 1], sizes = [32, 8], strides = [1, 1]} : vector<32x12xf32> to vector<32x8xf32>
    %97 = vector.extract_strided_slice %94 {offsets = [0, 2], sizes = [32, 8], strides = [1, 1]} : vector<32x12xf32> to vector<32x8xf32>
    %98 = vector.extract_strided_slice %94 {offsets = [0, 3], sizes = [32, 8], strides = [1, 1]} : vector<32x12xf32> to vector<32x8xf32>
    %99 = vector.extract_strided_slice %94 {offsets = [0, 4], sizes = [32, 8], strides = [1, 1]} : vector<32x12xf32> to vector<32x8xf32>
    %c1_i32_43 = arith.constant 1 : i32
    %100 = arith.addi %2, %c1_i32_43 : i32
    %c3_i32_44 = arith.constant 3 : i32
    %101 = arith.addi %100, %c3_i32_44 : i32
    %c0_45 = arith.constant 0 : index
    %102 = arith.index_cast %101 : i32 to index
    %c0_46 = arith.constant 0 : index
    %c0_47 = arith.constant 0 : index
    %103 = vector.load %arg2[%c0_45, %102, %c0_46, %c0_47] : memref<1x12x32x12xf32, #tpu.memory_space<vmem>>, vector<1x1x32x12xf32>
    %104 = vector.shape_cast %103 : vector<1x1x32x12xf32> to vector<1x32x12xf32>
    %105 = vector.shape_cast %104 : vector<1x32x12xf32> to vector<32x12xf32>
    %106 = vector.extract_strided_slice %105 {offsets = [0, 0], sizes = [32, 8], strides = [1, 1]} : vector<32x12xf32> to vector<32x8xf32>
    %107 = vector.extract_strided_slice %105 {offsets = [0, 1], sizes = [32, 8], strides = [1, 1]} : vector<32x12xf32> to vector<32x8xf32>
    %108 = vector.extract_strided_slice %105 {offsets = [0, 2], sizes = [32, 8], strides = [1, 1]} : vector<32x12xf32> to vector<32x8xf32>
    %109 = vector.extract_strided_slice %105 {offsets = [0, 3], sizes = [32, 8], strides = [1, 1]} : vector<32x12xf32> to vector<32x8xf32>
    %110 = vector.extract_strided_slice %105 {offsets = [0, 4], sizes = [32, 8], strides = [1, 1]} : vector<32x12xf32> to vector<32x8xf32>
    %c1_i32_48 = arith.constant 1 : i32
    %111 = arith.addi %2, %c1_i32_48 : i32
    %c4_i32_49 = arith.constant 4 : i32
    %112 = arith.addi %111, %c4_i32_49 : i32
    %c0_50 = arith.constant 0 : index
    %113 = arith.index_cast %112 : i32 to index
    %c0_51 = arith.constant 0 : index
    %c0_52 = arith.constant 0 : index
    %114 = vector.load %arg2[%c0_50, %113, %c0_51, %c0_52] : memref<1x12x32x12xf32, #tpu.memory_space<vmem>>, vector<1x1x32x12xf32>
    %115 = vector.shape_cast %114 : vector<1x1x32x12xf32> to vector<1x32x12xf32>
    %116 = vector.shape_cast %115 : vector<1x32x12xf32> to vector<32x12xf32>
    %117 = vector.extract_strided_slice %116 {offsets = [0, 0], sizes = [32, 8], strides = [1, 1]} : vector<32x12xf32> to vector<32x8xf32>
    %118 = vector.extract_strided_slice %116 {offsets = [0, 1], sizes = [32, 8], strides = [1, 1]} : vector<32x12xf32> to vector<32x8xf32>
    %119 = vector.extract_strided_slice %116 {offsets = [0, 2], sizes = [32, 8], strides = [1, 1]} : vector<32x12xf32> to vector<32x8xf32>
    %120 = vector.extract_strided_slice %116 {offsets = [0, 3], sizes = [32, 8], strides = [1, 1]} : vector<32x12xf32> to vector<32x8xf32>
    %121 = vector.extract_strided_slice %116 {offsets = [0, 4], sizes = [32, 8], strides = [1, 1]} : vector<32x12xf32> to vector<32x8xf32>
    %122 = tpu.concatenate %73, %74, %75, %76, %77, %84, %85, %86, %87, %88, %95, %96, %97, %98, %99, %106 in 0 : vector<32x8xf32>, vector<32x8xf32>, vector<32x8xf32>, vector<32x8xf32>, vector<32x8xf32>, vector<32x8xf32>, vector<32x8xf32>, vector<32x8xf32>, vector<32x8xf32>, vector<32x8xf32>, vector<32x8xf32>, vector<32x8xf32>, vector<32x8xf32>, vector<32x8xf32>, vector<32x8xf32>, vector<32x8xf32> -> vector<512x8xf32>
    %123 = tpu.concatenate %107, %108, %109, %110, %117, %118, %119, %120, %121 in 0 : vector<32x8xf32>, vector<32x8xf32>, vector<32x8xf32>, vector<32x8xf32>, vector<32x8xf32>, vector<32x8xf32>, vector<32x8xf32>, vector<32x8xf32>, vector<32x8xf32> -> vector<288x8xf32>
    %124 = tpu.concatenate %122, %123 in 0 : vector<512x8xf32>, vector<288x8xf32> -> vector<800x8xf32>
    %cst_53 = arith.constant dense<0.000000e+00> : vector<3x8xf32>
    %125 = tpu.matmul %0, %124, %cst_53 {dimension_numbers = #tpu.dot_dimension_numbers<[1], [0], [0], [1], [0, 0, 1, 1], [], []>} : vector<3x800xf32>, vector<800x8xf32>, vector<3x8xf32> -> vector<3x8xf32>
    %126 = vector.broadcast %1 : vector<3x1xf32> to vector<3x8xf32>
    %127 = arith.addf %125, %126 : vector<3x8xf32>
    %c0_54 = arith.constant 0 : index
    %c1 = arith.constant 1 : index
    %c0_55 = arith.constant 0 : index
    %c0_56 = arith.constant 0 : index
    %128 = vector.load %arg5[%c0_54, %c1, %c0_55, %c0_56] : memref<1x4x3x8xf32, #tpu.memory_space<vmem>>, vector<1x1x3x8xf32>
    %129 = vector.shape_cast %128 : vector<1x1x3x8xf32> to vector<3x8xf32>
    %130 = vector.shape_cast %127 : vector<3x8xf32> to vector<1x1x3x8xf32>
    tpu.vector_store %arg5[%c0_54, %c1, %c0_55, %c0_56], %130 {strides = array<i32>} : memref<1x4x3x8xf32, #tpu.memory_space<vmem>>, vector<1x1x3x8xf32>,
    %c2_i32_57 = arith.constant 2 : i32
    %131 = arith.addi %2, %c2_i32_57 : i32
    %c0_i32_58 = arith.constant 0 : i32
    %132 = arith.addi %131, %c0_i32_58 : i32
    %c0_59 = arith.constant 0 : index
    %133 = arith.index_cast %132 : i32 to index
    %c0_60 = arith.constant 0 : index
    %c0_61 = arith.constant 0 : index
    %134 = vector.load %arg2[%c0_59, %133, %c0_60, %c0_61] : memref<1x12x32x12xf32, #tpu.memory_space<vmem>>, vector<1x1x32x12xf32>
    %135 = vector.shape_cast %134 : vector<1x1x32x12xf32> to vector<1x32x12xf32>
    %136 = vector.shape_cast %135 : vector<1x32x12xf32> to vector<32x12xf32>
    %137 = vector.extract_strided_slice %136 {offsets = [0, 0], sizes = [32, 8], strides = [1, 1]} : vector<32x12xf32> to vector<32x8xf32>
    %138 = vector.extract_strided_slice %136 {offsets = [0, 1], sizes = [32, 8], strides = [1, 1]} : vector<32x12xf32> to vector<32x8xf32>
    %139 = vector.extract_strided_slice %136 {offsets = [0, 2], sizes = [32, 8], strides = [1, 1]} : vector<32x12xf32> to vector<32x8xf32>
    %140 = vector.extract_strided_slice %136 {offsets = [0, 3], sizes = [32, 8], strides = [1, 1]} : vector<32x12xf32> to vector<32x8xf32>
    %141 = vector.extract_strided_slice %136 {offsets = [0, 4], sizes = [32, 8], strides = [1, 1]} : vector<32x12xf32> to vector<32x8xf32>
    %c2_i32_62 = arith.constant 2 : i32
    %142 = arith.addi %2, %c2_i32_62 : i32
    %c1_i32_63 = arith.constant 1 : i32
    %143 = arith.addi %142, %c1_i32_63 : i32
    %c0_64 = arith.constant 0 : index
    %144 = arith.index_cast %143 : i32 to index
    %c0_65 = arith.constant 0 : index
    %c0_66 = arith.constant 0 : index
    %145 = vector.load %arg2[%c0_64, %144, %c0_65, %c0_66] : memref<1x12x32x12xf32, #tpu.memory_space<vmem>>, vector<1x1x32x12xf32>
    %146 = vector.shape_cast %145 : vector<1x1x32x12xf32> to vector<1x32x12xf32>
    %147 = vector.shape_cast %146 : vector<1x32x12xf32> to vector<32x12xf32>
    %148 = vector.extract_strided_slice %147 {offsets = [0, 0], sizes = [32, 8], strides = [1, 1]} : vector<32x12xf32> to vector<32x8xf32>
    %149 = vector.extract_strided_slice %147 {offsets = [0, 1], sizes = [32, 8], strides = [1, 1]} : vector<32x12xf32> to vector<32x8xf32>
    %150 = vector.extract_strided_slice %147 {offsets = [0, 2], sizes = [32, 8], strides = [1, 1]} : vector<32x12xf32> to vector<32x8xf32>
    %151 = vector.extract_strided_slice %147 {offsets = [0, 3], sizes = [32, 8], strides = [1, 1]} : vector<32x12xf32> to vector<32x8xf32>
    %152 = vector.extract_strided_slice %147 {offsets = [0, 4], sizes = [32, 8], strides = [1, 1]} : vector<32x12xf32> to vector<32x8xf32>
    %c2_i32_67 = arith.constant 2 : i32
    %153 = arith.addi %2, %c2_i32_67 : i32
    %c2_i32_68 = arith.constant 2 : i32
    %154 = arith.addi %153, %c2_i32_68 : i32
    %c0_69 = arith.constant 0 : index
    %155 = arith.index_cast %154 : i32 to index
    %c0_70 = arith.constant 0 : index
    %c0_71 = arith.constant 0 : index
    %156 = vector.load %arg2[%c0_69, %155, %c0_70, %c0_71] : memref<1x12x32x12xf32, #tpu.memory_space<vmem>>, vector<1x1x32x12xf32>
    %157 = vector.shape_cast %156 : vector<1x1x32x12xf32> to vector<1x32x12xf32>
    %158 = vector.shape_cast %157 : vector<1x32x12xf32> to vector<32x12xf32>
    %159 = vector.extract_strided_slice %158 {offsets = [0, 0], sizes = [32, 8], strides = [1, 1]} : vector<32x12xf32> to vector<32x8xf32>
    %160 = vector.extract_strided_slice %158 {offsets = [0, 1], sizes = [32, 8], strides = [1, 1]} : vector<32x12xf32> to vector<32x8xf32>
    %161 = vector.extract_strided_slice %158 {offsets = [0, 2], sizes = [32, 8], strides = [1, 1]} : vector<32x12xf32> to vector<32x8xf32>
    %162 = vector.extract_strided_slice %158 {offsets = [0, 3], sizes = [32, 8], strides = [1, 1]} : vector<32x12xf32> to vector<32x8xf32>
    %163 = vector.extract_strided_slice %158 {offsets = [0, 4], sizes = [32, 8], strides = [1, 1]} : vector<32x12xf32> to vector<32x8xf32>
    %c2_i32_72 = arith.constant 2 : i32
    %164 = arith.addi %2, %c2_i32_72 : i32
    %c3_i32_73 = arith.constant 3 : i32
    %165 = arith.addi %164, %c3_i32_73 : i32
    %c0_74 = arith.constant 0 : index
    %166 = arith.index_cast %165 : i32 to index
    %c0_75 = arith.constant 0 : index
    %c0_76 = arith.constant 0 : index
    %167 = vector.load %arg2[%c0_74, %166, %c0_75, %c0_76] : memref<1x12x32x12xf32, #tpu.memory_space<vmem>>, vector<1x1x32x12xf32>
    %168 = vector.shape_cast %167 : vector<1x1x32x12xf32> to vector<1x32x12xf32>
    %169 = vector.shape_cast %168 : vector<1x32x12xf32> to vector<32x12xf32>
    %170 = vector.extract_strided_slice %169 {offsets = [0, 0], sizes = [32, 8], strides = [1, 1]} : vector<32x12xf32> to vector<32x8xf32>
    %171 = vector.extract_strided_slice %169 {offsets = [0, 1], sizes = [32, 8], strides = [1, 1]} : vector<32x12xf32> to vector<32x8xf32>
    %172 = vector.extract_strided_slice %169 {offsets = [0, 2], sizes = [32, 8], strides = [1, 1]} : vector<32x12xf32> to vector<32x8xf32>
    %173 = vector.extract_strided_slice %169 {offsets = [0, 3], sizes = [32, 8], strides = [1, 1]} : vector<32x12xf32> to vector<32x8xf32>
    %174 = vector.extract_strided_slice %169 {offsets = [0, 4], sizes = [32, 8], strides = [1, 1]} : vector<32x12xf32> to vector<32x8xf32>
    %c2_i32_77 = arith.constant 2 : i32
    %175 = arith.addi %2, %c2_i32_77 : i32
    %c4_i32_78 = arith.constant 4 : i32
    %176 = arith.addi %175, %c4_i32_78 : i32
    %c0_79 = arith.constant 0 : index
    %177 = arith.index_cast %176 : i32 to index
    %c0_80 = arith.constant 0 : index
    %c0_81 = arith.constant 0 : index
    %178 = vector.load %arg2[%c0_79, %177, %c0_80, %c0_81] : memref<1x12x32x12xf32, #tpu.memory_space<vmem>>, vector<1x1x32x12xf32>
    %179 = vector.shape_cast %178 : vector<1x1x32x12xf32> to vector<1x32x12xf32>
    %180 = vector.shape_cast %179 : vector<1x32x12xf32> to vector<32x12xf32>
    %181 = vector.extract_strided_slice %180 {offsets = [0, 0], sizes = [32, 8], strides = [1, 1]} : vector<32x12xf32> to vector<32x8xf32>
    %182 = vector.extract_strided_slice %180 {offsets = [0, 1], sizes = [32, 8], strides = [1, 1]} : vector<32x12xf32> to vector<32x8xf32>
    %183 = vector.extract_strided_slice %180 {offsets = [0, 2], sizes = [32, 8], strides = [1, 1]} : vector<32x12xf32> to vector<32x8xf32>
    %184 = vector.extract_strided_slice %180 {offsets = [0, 3], sizes = [32, 8], strides = [1, 1]} : vector<32x12xf32> to vector<32x8xf32>
    %185 = vector.extract_strided_slice %180 {offsets = [0, 4], sizes = [32, 8], strides = [1, 1]} : vector<32x12xf32> to vector<32x8xf32>
    %186 = tpu.concatenate %137, %138, %139, %140, %141, %148, %149, %150, %151, %152, %159, %160, %161, %162, %163, %170 in 0 : vector<32x8xf32>, vector<32x8xf32>, vector<32x8xf32>, vector<32x8xf32>, vector<32x8xf32>, vector<32x8xf32>, vector<32x8xf32>, vector<32x8xf32>, vector<32x8xf32>, vector<32x8xf32>, vector<32x8xf32>, vector<32x8xf32>, vector<32x8xf32>, vector<32x8xf32>, vector<32x8xf32>, vector<32x8xf32> -> vector<512x8xf32>
    %187 = tpu.concatenate %171, %172, %173, %174, %181, %182, %183, %184, %185 in 0 : vector<32x8xf32>, vector<32x8xf32>, vector<32x8xf32>, vector<32x8xf32>, vector<32x8xf32>, vector<32x8xf32>, vector<32x8xf32>, vector<32x8xf32>, vector<32x8xf32> -> vector<288x8xf32>
    %188 = tpu.concatenate %186, %187 in 0 : vector<512x8xf32>, vector<288x8xf32> -> vector<800x8xf32>
    %cst_82 = arith.constant dense<0.000000e+00> : vector<3x8xf32>
    %189 = tpu.matmul %0, %188, %cst_82 {dimension_numbers = #tpu.dot_dimension_numbers<[1], [0], [0], [1], [0, 0, 1, 1], [], []>} : vector<3x800xf32>, vector<800x8xf32>, vector<3x8xf32> -> vector<3x8xf32>
    %190 = vector.broadcast %1 : vector<3x1xf32> to vector<3x8xf32>
    %191 = arith.addf %189, %190 : vector<3x8xf32>
    %c0_83 = arith.constant 0 : index
    %c2 = arith.constant 2 : index
    %c0_84 = arith.constant 0 : index
    %c0_85 = arith.constant 0 : index
    %192 = vector.load %arg5[%c0_83, %c2, %c0_84, %c0_85] : memref<1x4x3x8xf32, #tpu.memory_space<vmem>>, vector<1x1x3x8xf32>
    %193 = vector.shape_cast %192 : vector<1x1x3x8xf32> to vector<3x8xf32>
    %194 = vector.shape_cast %191 : vector<3x8xf32> to vector<1x1x3x8xf32>
    tpu.vector_store %arg5[%c0_83, %c2, %c0_84, %c0_85], %194 {strides = array<i32>} : memref<1x4x3x8xf32, #tpu.memory_space<vmem>>, vector<1x1x3x8xf32>,
    %c3_i32_86 = arith.constant 3 : i32
    %195 = arith.addi %2, %c3_i32_86 : i32
    %c0_i32_87 = arith.constant 0 : i32
    %196 = arith.addi %195, %c0_i32_87 : i32
    %c0_88 = arith.constant 0 : index
    %197 = arith.index_cast %196 : i32 to index
    %c0_89 = arith.constant 0 : index
    %c0_90 = arith.constant 0 : index
    %198 = vector.load %arg2[%c0_88, %197, %c0_89, %c0_90] : memref<1x12x32x12xf32, #tpu.memory_space<vmem>>, vector<1x1x32x12xf32>
    %199 = vector.shape_cast %198 : vector<1x1x32x12xf32> to vector<1x32x12xf32>
    %200 = vector.shape_cast %199 : vector<1x32x12xf32> to vector<32x12xf32>
    %201 = vector.extract_strided_slice %200 {offsets = [0, 0], sizes = [32, 8], strides = [1, 1]} : vector<32x12xf32> to vector<32x8xf32>
    %202 = vector.extract_strided_slice %200 {offsets = [0, 1], sizes = [32, 8], strides = [1, 1]} : vector<32x12xf32> to vector<32x8xf32>
    %203 = vector.extract_strided_slice %200 {offsets = [0, 2], sizes = [32, 8], strides = [1, 1]} : vector<32x12xf32> to vector<32x8xf32>
    %204 = vector.extract_strided_slice %200 {offsets = [0, 3], sizes = [32, 8], strides = [1, 1]} : vector<32x12xf32> to vector<32x8xf32>
    %205 = vector.extract_strided_slice %200 {offsets = [0, 4], sizes = [32, 8], strides = [1, 1]} : vector<32x12xf32> to vector<32x8xf32>
    %c3_i32_91 = arith.constant 3 : i32
    %206 = arith.addi %2, %c3_i32_91 : i32
    %c1_i32_92 = arith.constant 1 : i32
    %207 = arith.addi %206, %c1_i32_92 : i32
    %c0_93 = arith.constant 0 : index
    %208 = arith.index_cast %207 : i32 to index
    %c0_94 = arith.constant 0 : index
    %c0_95 = arith.constant 0 : index
    %209 = vector.load %arg2[%c0_93, %208, %c0_94, %c0_95] : memref<1x12x32x12xf32, #tpu.memory_space<vmem>>, vector<1x1x32x12xf32>
    %210 = vector.shape_cast %209 : vector<1x1x32x12xf32> to vector<1x32x12xf32>
    %211 = vector.shape_cast %210 : vector<1x32x12xf32> to vector<32x12xf32>
    %212 = vector.extract_strided_slice %211 {offsets = [0, 0], sizes = [32, 8], strides = [1, 1]} : vector<32x12xf32> to vector<32x8xf32>
    %213 = vector.extract_strided_slice %211 {offsets = [0, 1], sizes = [32, 8], strides = [1, 1]} : vector<32x12xf32> to vector<32x8xf32>
    %214 = vector.extract_strided_slice %211 {offsets = [0, 2], sizes = [32, 8], strides = [1, 1]} : vector<32x12xf32> to vector<32x8xf32>
    %215 = vector.extract_strided_slice %211 {offsets = [0, 3], sizes = [32, 8], strides = [1, 1]} : vector<32x12xf32> to vector<32x8xf32>
    %216 = vector.extract_strided_slice %211 {offsets = [0, 4], sizes = [32, 8], strides = [1, 1]} : vector<32x12xf32> to vector<32x8xf32>
    %c3_i32_96 = arith.constant 3 : i32
    %217 = arith.addi %2, %c3_i32_96 : i32
    %c2_i32_97 = arith.constant 2 : i32
    %218 = arith.addi %217, %c2_i32_97 : i32
    %c0_98 = arith.constant 0 : index
    %219 = arith.index_cast %218 : i32 to index
    %c0_99 = arith.constant 0 : index
    %c0_100 = arith.constant 0 : index
    %220 = vector.load %arg2[%c0_98, %219, %c0_99, %c0_100] : memref<1x12x32x12xf32, #tpu.memory_space<vmem>>, vector<1x1x32x12xf32>
    %221 = vector.shape_cast %220 : vector<1x1x32x12xf32> to vector<1x32x12xf32>
    %222 = vector.shape_cast %221 : vector<1x32x12xf32> to vector<32x12xf32>
    %223 = vector.extract_strided_slice %222 {offsets = [0, 0], sizes = [32, 8], strides = [1, 1]} : vector<32x12xf32> to vector<32x8xf32>
    %224 = vector.extract_strided_slice %222 {offsets = [0, 1], sizes = [32, 8], strides = [1, 1]} : vector<32x12xf32> to vector<32x8xf32>
    %225 = vector.extract_strided_slice %222 {offsets = [0, 2], sizes = [32, 8], strides = [1, 1]} : vector<32x12xf32> to vector<32x8xf32>
    %226 = vector.extract_strided_slice %222 {offsets = [0, 3], sizes = [32, 8], strides = [1, 1]} : vector<32x12xf32> to vector<32x8xf32>
    %227 = vector.extract_strided_slice %222 {offsets = [0, 4], sizes = [32, 8], strides = [1, 1]} : vector<32x12xf32> to vector<32x8xf32>
    %c3_i32_101 = arith.constant 3 : i32
    %228 = arith.addi %2, %c3_i32_101 : i32
    %c3_i32_102 = arith.constant 3 : i32
    %229 = arith.addi %228, %c3_i32_102 : i32
    %c0_103 = arith.constant 0 : index
    %230 = arith.index_cast %229 : i32 to index
    %c0_104 = arith.constant 0 : index
    %c0_105 = arith.constant 0 : index
    %231 = vector.load %arg2[%c0_103, %230, %c0_104, %c0_105] : memref<1x12x32x12xf32, #tpu.memory_space<vmem>>, vector<1x1x32x12xf32>
    %232 = vector.shape_cast %231 : vector<1x1x32x12xf32> to vector<1x32x12xf32>
    %233 = vector.shape_cast %232 : vector<1x32x12xf32> to vector<32x12xf32>
    %234 = vector.extract_strided_slice %233 {offsets = [0, 0], sizes = [32, 8], strides = [1, 1]} : vector<32x12xf32> to vector<32x8xf32>
    %235 = vector.extract_strided_slice %233 {offsets = [0, 1], sizes = [32, 8], strides = [1, 1]} : vector<32x12xf32> to vector<32x8xf32>
    %236 = vector.extract_strided_slice %233 {offsets = [0, 2], sizes = [32, 8], strides = [1, 1]} : vector<32x12xf32> to vector<32x8xf32>
    %237 = vector.extract_strided_slice %233 {offsets = [0, 3], sizes = [32, 8], strides = [1, 1]} : vector<32x12xf32> to vector<32x8xf32>
    %238 = vector.extract_strided_slice %233 {offsets = [0, 4], sizes = [32, 8], strides = [1, 1]} : vector<32x12xf32> to vector<32x8xf32>
    %c3_i32_106 = arith.constant 3 : i32
    %239 = arith.addi %2, %c3_i32_106 : i32
    %c4_i32_107 = arith.constant 4 : i32
    %240 = arith.addi %239, %c4_i32_107 : i32
    %c0_108 = arith.constant 0 : index
    %241 = arith.index_cast %240 : i32 to index
    %c0_109 = arith.constant 0 : index
    %c0_110 = arith.constant 0 : index
    %242 = vector.load %arg2[%c0_108, %241, %c0_109, %c0_110] : memref<1x12x32x12xf32, #tpu.memory_space<vmem>>, vector<1x1x32x12xf32>
    %243 = vector.shape_cast %242 : vector<1x1x32x12xf32> to vector<1x32x12xf32>
    %244 = vector.shape_cast %243 : vector<1x32x12xf32> to vector<32x12xf32>
    %245 = vector.extract_strided_slice %244 {offsets = [0, 0], sizes = [32, 8], strides = [1, 1]} : vector<32x12xf32> to vector<32x8xf32>
    %246 = vector.extract_strided_slice %244 {offsets = [0, 1], sizes = [32, 8], strides = [1, 1]} : vector<32x12xf32> to vector<32x8xf32>
    %247 = vector.extract_strided_slice %244 {offsets = [0, 2], sizes = [32, 8], strides = [1, 1]} : vector<32x12xf32> to vector<32x8xf32>
    %248 = vector.extract_strided_slice %244 {offsets = [0, 3], sizes = [32, 8], strides = [1, 1]} : vector<32x12xf32> to vector<32x8xf32>
    %249 = vector.extract_strided_slice %244 {offsets = [0, 4], sizes = [32, 8], strides = [1, 1]} : vector<32x12xf32> to vector<32x8xf32>
    %250 = tpu.concatenate %201, %202, %203, %204, %205, %212, %213, %214, %215, %216, %223, %224, %225, %226, %227, %234 in 0 : vector<32x8xf32>, vector<32x8xf32>, vector<32x8xf32>, vector<32x8xf32>, vector<32x8xf32>, vector<32x8xf32>, vector<32x8xf32>, vector<32x8xf32>, vector<32x8xf32>, vector<32x8xf32>, vector<32x8xf32>, vector<32x8xf32>, vector<32x8xf32>, vector<32x8xf32>, vector<32x8xf32>, vector<32x8xf32> -> vector<512x8xf32>
    %251 = tpu.concatenate %235, %236, %237, %238, %245, %246, %247, %248, %249 in 0 : vector<32x8xf32>, vector<32x8xf32>, vector<32x8xf32>, vector<32x8xf32>, vector<32x8xf32>, vector<32x8xf32>, vector<32x8xf32>, vector<32x8xf32>, vector<32x8xf32> -> vector<288x8xf32>
    %252 = tpu.concatenate %250, %251 in 0 : vector<512x8xf32>, vector<288x8xf32> -> vector<800x8xf32>
    %cst_111 = arith.constant dense<0.000000e+00> : vector<3x8xf32>
    %253 = tpu.matmul %0, %252, %cst_111 {dimension_numbers = #tpu.dot_dimension_numbers<[1], [0], [0], [1], [0, 0, 1, 1], [], []>} : vector<3x800xf32>, vector<800x8xf32>, vector<3x8xf32> -> vector<3x8xf32>
    %254 = vector.broadcast %1 : vector<3x1xf32> to vector<3x8xf32>
    %255 = arith.addf %253, %254 : vector<3x8xf32>
    %c0_112 = arith.constant 0 : index
    %c3 = arith.constant 3 : index
    %c0_113 = arith.constant 0 : index
    %c0_114 = arith.constant 0 : index
    %256 = vector.load %arg5[%c0_112, %c3, %c0_113, %c0_114] : memref<1x4x3x8xf32, #tpu.memory_space<vmem>>, vector<1x1x3x8xf32>
    %257 = vector.shape_cast %256 : vector<1x1x3x8xf32> to vector<3x8xf32>
    %258 = vector.shape_cast %255 : vector<3x8xf32> to vector<1x1x3x8xf32>
    tpu.vector_store %arg5[%c0_112, %c3, %c0_113, %c0_114], %258 {strides = array<i32>} : memref<1x4x3x8xf32, #tpu.memory_space<vmem>>, vector<1x1x3x8xf32>,
    return
  }
  func.func @transform_0(%arg0: i32, %arg1: i32) -> (i32, i32, i32, i32) {
    %c0_i32 = arith.constant 0 : i32
    %c0_i32_0 = arith.constant 0 : i32
    %c0_i32_1 = arith.constant 0 : i32
    %c0_i32_2 = arith.constant 0 : i32
    return %arg0, %c0_i32, %c0_i32_0, %c0_i32_1 : i32, i32, i32, i32
  }
  func.func @transform_1(%arg0: i32, %arg1: i32) -> (i32, i32) {
    %c0_i32 = arith.constant 0 : i32
    %c0_i32_0 = arith.constant 0 : i32
    %c0_i32_1 = arith.constant 0 : i32
    return %c0_i32, %c0_i32_0 : i32, i32
  }
  func.func @transform_2(%arg0: i32, %arg1: i32) -> (i32, i32) {
    %c0_i32 = arith.constant 0 : i32
    %c0_i32_0 = arith.constant 0 : i32
    %c0_i32_1 = arith.constant 0 : i32
    return %c0_i32, %c0_i32_0 : i32, i32
  }
  func.func @transform_3(%arg0: i32, %arg1: i32) -> (i32, i32, i32, i32) {
    %c0_i32 = arith.constant 0 : i32
    %c0_i32_0 = arith.constant 0 : i32
    %c0_i32_1 = arith.constant 0 : i32
    return %arg0, %arg1, %c0_i32, %c0_i32_0 : i32, i32, i32, i32
  }
}

</mosaic_0001>

<llo_original>
// kernel: srcnn_forward.3
$region0: #{srcnn_forward.3}
  #allocation0 [shape = 'u32[]', space=smem, size = 0x4, offset = 0x4, fixed_abs, tag = 'smem constant byte address 0x4 - core index']
  #allocation1 [shape = 'u32[144,128]{1,0:T(1,128)}', space=vmem, size = 0x12000, scoped, tag = 'internal scratch']
  %s0 = inlined_call_operand.hbm [shape: f32[2,12,32,12], index: 0, kind: input, shape index: {}]
  %s1 = inlined_call_operand.hbm [shape: f32[3,800], index: 1, kind: input, shape index: {}]
  %s2 = inlined_call_operand.hbm [shape: f32[3,1], index: 2, kind: input, shape index: {}]
  %s3 = inlined_call_operand.hbm [shape: f32[2,8,3,8], index: 3, kind: output, shape index: {}]
  %s4 = sld [smem:[#allocation0]]
  $region57: #{srcnn_forward.3} parent=0
    _
  %s6 = ssub.s32 1, %s4
  %s7 = scalar_select 0, %s6, %s4
  $region1: #{srcnn_forward.3} parent=0
    #allocation2 [shape = 'u8[393216]{0}', space=vmem, size = 0x60000, scoped, tag = 'input window, operand 0']
    #allocation3 [shape = 's32[2]{0}', space=sflag, size = 0x8, scoped, tag = 'scoped memory for srcnn_forward.3']
    #allocation4 [shape = 's32[2]{0}', space=sflag, size = 0x8, scoped, tag = 'scoped memory for srcnn_forward.3']
    #allocation5 [shape = 'u8[14336]{0}', space=vmem, size = 0x3800, scoped, tag = 'input window, operand 1, single buffered']
    #allocation6 [shape = 's32[1]{0}', space=sflag, size = 0x4, scoped, tag = 'scoped memory for srcnn_forward.3']
    #allocation7 [shape = 'u8[2048]{0}', space=vmem, size = 0x800, scoped, tag = 'input window, operand 2, single buffered']
    #allocation8 [shape = 'u8[16384]{0}', space=vmem, size = 0x4000, scoped, tag = 'output window, operand 0']
    %8 = vsyncpa [#allocation3], 0
    %s9 = scalar_lea.sflag [#allocation3], 1
    %10 = vsyncpa %s9, 0
    %11 = vsyncpa [#allocation6], 0
    %12 = vsyncpa [#allocation4], 0
    %s13 = scalar_lea.sflag [#allocation4], 1
    %14 = vsyncpa %s13, 0
    loop: start=0, step=1, limit=6
    $region2: #{srcnn_forward.3} parent=1 // loop_pre_header
      _
    $region3: #{srcnn_forward.3} parent=1 // loop_header
      %s16 = sphi 0, %s20
      %p17 = scmp.ge.s32.totalorder %s16, 6
      %s23 = sphi 0, %s35
      %s24 = sphi 0, %s31
      %s25 = sphi 0, %s23
      %s26 = sphi 0, %s24
      %s27 = sphi 0, %s25
      %s28 = sphi 0, %s26
      %s38 = sphi 0, %s40
      %s41 = sphi 0, %s38
      %s42 = sphi 0, %s41
      %s58 = sphi 0, %s42
      %s62 = sphi 0, %s62
      %s64 = sphi 0, %s62
      %s65 = sphi 0, %s64
      %s79 = sphi 0, %s65
      %s83 = sphi 0, %s83
      %s85 = sphi 0, %s83
      %s86 = sphi 0, %s85
      %s100 = sphi 0, %s86
      %s108 = sphi 0, %s110
      %s111 = sphi 0, %s108
      %s112 = sphi 0, %s111
      %s128 = sphi 0, %s112
    $region4: #{srcnn_forward.3} parent=1 // loop_header_branch
      %19 = sbr.rel (%p17) target = $region8
    $region5: #{srcnn_forward.3} parent=1 // loop_body
      %s21 = ssub.s32 %s16, 1
      %s22 = ssub.s32 %s16, 2
      %s29 = sadd.s32 1, %s24
      %p30 = scmp.ge.s32.totalorder %s29, 2
      %s31 = scalar_select %p30, 0, %s29
      %s32 = sadd.s32 1, %s23
      %s33 = scalar_select %p30, %s32, %s23
      %p34 = scmp.ge.s32.totalorder %s33, 2
      %s35 = scalar_select %p34, 0, %s33
      %s36 = ssub.s32 %s23, %s35
      %p37 = scmp.eq.s32.totalorder %s36, 0
      %s39 = sadd.s32 %s38, 1
      %s40 = scalar_select %p37, %s38, %s39
      %p43 = pneg %p37
      %p44 = scmp.eq.s32.totalorder %s16, 3
      %p45 = por %p43, %p44
      %p46 = scmp.ne.s32.totalorder %s38, %s41
      %p47 = scmp.eq.s32.totalorder %s16, 0
      %p48 = por %p46, %p47
      %p49 = scmp.ne.s32.totalorder %s38, %s41
      %p50 = scmp.eq.s32.totalorder %s21, 3
      %p51 = por %p49, %p50
      %p52 = scmp.ne.s32.totalorder %s41, %s42
      %p53 = scmp.eq.s32.totalorder %s21, 0
      %p54 = por %p52, %p53
      %p55 = scmp.ne.s32.totalorder %s41, %s42
      %p56 = scmp.eq.s32.totalorder %s22, 3
      %p57 = por %p55, %p56
      %p59 = scmp.ne.s32.totalorder %s42, %s58
      %p60 = scmp.eq.s32.totalorder %s22, 0
      %p61 = por %p59, %p60
      %s63 = sadd.s32 %s62, 1
      %p66 = scmp.eq.s32.totalorder %s16, 3
      %p67 = scmp.ne.s32.totalorder %s62, %s64
      %p68 = scmp.eq.s32.totalorder %s16, 0
      %p69 = por %p67, %p68
      %p70 = scmp.ne.s32.totalorder %s62, %s64
      %p71 = scmp.eq.s32.totalorder %s21, 3
      %p72 = por %p70, %p71
      %p73 = scmp.ne.s32.totalorder %s64, %s65
      %p74 = scmp.eq.s32.totalorder %s21, 0
      %p75 = por %p73, %p74
      %p76 = scmp.ne.s32.totalorder %s64, %s65
      %p77 = scmp.eq.s32.totalorder %s22, 3
      %p78 = por %p76, %p77
      %p80 = scmp.ne.s32.totalorder %s65, %s79
      %p81 = scmp.eq.s32.totalorder %s22, 0
      %p82 = por %p80, %p81
      %s84 = sadd.s32 %s83, 1
      %p87 = scmp.eq.s32.totalorder %s16, 3
      %p88 = scmp.ne.s32.totalorder %s83, %s85
      %p89 = scmp.eq.s32.totalorder %s16, 0
      %p90 = por %p88, %p89
      %p91 = scmp.ne.s32.totalorder %s83, %s85
      %p92 = scmp.eq.s32.totalorder %s21, 3
      %p93 = por %p91, %p92
      %p94 = scmp.ne.s32.totalorder %s85, %s86
      %p95 = scmp.eq.s32.totalorder %s21, 0
      %p96 = por %p94, %p95
      %p97 = scmp.ne.s32.totalorder %s85, %s86
      %p98 = scmp.eq.s32.totalorder %s22, 3
      %p99 = por %p97, %p98
      %p101 = scmp.ne.s32.totalorder %s86, %s100
      %p102 = scmp.eq.s32.totalorder %s22, 0
      %p103 = por %p101, %p102
      %s104 = ssub.s32 %s23, %s35
      %s105 = ssub.s32 %s24, %s31
      %s106 = sor.u32 %s104, %s105
      %p107 = scmp.eq.s32.totalorder %s106, 0
      %s109 = sadd.s32 %s108, 1
      %s110 = scalar_select %p107, %s108, %s109
      %p113 = pneg %p107
      %p114 = scmp.eq.s32.totalorder %s16, 3
      %p115 = por %p113, %p114
      %p116 = scmp.ne.s32.totalorder %s108, %s111
      %p117 = scmp.eq.s32.totalorder %s16, 0
      %p118 = por %p116, %p117
      %p119 = scmp.ne.s32.totalorder %s108, %s111
      %p120 = scmp.eq.s32.totalorder %s21, 3
      %p121 = por %p119, %p120
      %p122 = scmp.ne.s32.totalorder %s111, %s112
      %p123 = scmp.eq.s32.totalorder %s21, 0
      %p124 = por %p122, %p123
      %p125 = scmp.ne.s32.totalorder %s111, %s112
      %p126 = scmp.eq.s32.totalorder %s22, 3
      %p127 = por %p125, %p126
      %p129 = scmp.ne.s32.totalorder %s112, %s128
      %p130 = scmp.eq.s32.totalorder %s22, 0
      %p131 = por %p129, %p130
      %p132 = scmp.le.s32.totalorder 1, %s16
      %p133 = scmp.lt.s32.totalorder %s16, 5
      %p134 = pnand %p132, %p133
      %p135 = pneg %p134
      // Predicated region
      $region9: #{srcnn_forward.3} parent=5 // pred_check
        _
      $region10: #{srcnn_forward.3} parent=5 // pred_check_branch
        %137 = sbr.rel (%p134) target = $region12
      $region11: #{srcnn_forward.3} parent=5 // pred_region
        %s138 = ssub.s32 %s16, 1
        // Predicated region
        $region13: #{srcnn_forward.3} parent=11 // pred_check
          %p139 = pneg %p75
        $region14: #{srcnn_forward.3} parent=11 // pred_check_branch
          %141 = sbr.rel (%p139) target = $region16
        $region15: #{srcnn_forward.3} parent=11 // pred_region
          %s143 = ssub.s32 448, 448
          %144 = vsyncadd [#allocation6], %s143
          %s146 = sshll.u32 [#allocation5], 4
          %s147 = int_to_ptr.vmem [resolvable:$true] %s146
          %149 = dma.hbm_to_vmem [thread:$0]  %s1, 448, %s147, [#allocation6]
        $region16: #{srcnn_forward.3} parent=11 // pred_fallthru
          _
        // Predicated region
        $region17: #{srcnn_forward.3} parent=11 // pred_check
          %p150 = pneg %p96
        $region18: #{srcnn_forward.3} parent=11 // pred_check_branch
          %152 = sbr.rel (%p150) target = $region20
        $region19: #{srcnn_forward.3} parent=11 // pred_region
          %s154 = ssub.s32 64, 64
          %155 = vsyncadd [#allocation6], %s154
          %s157 = sshll.u32 [#allocation7], 4
          %s158 = int_to_ptr.vmem [resolvable:$true] %s157
          %160 = dma.hbm_to_vmem [thread:$0]  %s2, 64, %s158, [#allocation6]
        $region20: #{srcnn_forward.3} parent=11 // pred_fallthru
          _
      $region12: #{srcnn_forward.3} parent=5 // pred_fallthru
        _
      %p161 = scmp.lt.s32.totalorder %s16, 4
      // Predicated region
      $region21: #{srcnn_forward.3} parent=5 // pred_check
        %p162 = pneg %p161
      $region22: #{srcnn_forward.3} parent=5 // pred_check_branch
        %164 = sbr.rel (%p162) target = $region24
      $region23: #{srcnn_forward.3} parent=5 // pred_region
        // Predicated region
        $region25: #{srcnn_forward.3} parent=23 // pred_check
          %p165 = pneg %p48
        $region26: #{srcnn_forward.3} parent=23 // pred_check_branch
          %167 = sbr.rel (%p165) target = $region28
        $region27: #{srcnn_forward.3} parent=23 // pred_region
          %s168 = sand.u32 %s38, 1
          %s169 = scalar_lea.sflag [#allocation3], %s168
          %s170 = sand.u32 %s38, 1
          %s171 = smul.addr %s170, 384
          %s172 = scalar_lea.vmem [#allocation2], %s171
          %s174 = ssub.s32 6144, 6144
          %175 = vsyncadd %s169, %s174
          %s176 = smul.addr %s23, 48
          %s177 = smul.addr %s176, 128
          %s178 = scalar_lea.hbm %s0, %s177
          %s179 = sshll.u32 %s172, 4
          %s180 = int_to_ptr.vmem [resolvable:$true] %s179
          %185 = dma.hbm_to_vmem [thread:$0]  %s178, 6144, %s180, %s169, 128, 128, 8
        $region28: #{srcnn_forward.3} parent=23 // pred_fallthru
          _
      $region24: #{srcnn_forward.3} parent=5 // pred_fallthru
        _
      %p186 = scmp.le.s32.totalorder 1, %s16
      %p187 = scmp.lt.s32.totalorder %s16, 5
      %p188 = pnand %p186, %p187
      %p189 = pneg %p188
      // Predicated region
      $region29: #{srcnn_forward.3} parent=5 // pred_check
        _
      $region30: #{srcnn_forward.3} parent=5 // pred_check_branch
        %191 = sbr.rel (%p188) target = $region32
      $region31: #{srcnn_forward.3} parent=5 // pred_region
        %s192 = ssub.s32 %s16, 1
        %s193 = sand.u32 %s41, 1
        %s194 = scalar_lea.sflag [#allocation3], %s193
        %s195 = sand.u32 %s41, 1
        %s196 = smul.addr %s195, 384
        %s197 = scalar_lea.vmem [#allocation2], %s196
        // Predicated region
        $region33: #{srcnn_forward.3} parent=31 // pred_check
          %p198 = pneg %p54
        $region34: #{srcnn_forward.3} parent=31 // pred_check_branch
          %200 = sbr.rel (%p198) target = $region36
        $region35: #{srcnn_forward.3} parent=31 // pred_region
          %201 = dma.done %s194, 6144
        $region36: #{srcnn_forward.3} parent=31 // pred_fallthru
          _
        // Predicated region
        $region37: #{srcnn_forward.3} parent=31 // pred_check
          %p202 = pneg %p75
        $region38: #{srcnn_forward.3} parent=31 // pred_check_branch
          %204 = sbr.rel (%p202) target = $region40
        $region39: #{srcnn_forward.3} parent=31 // pred_region
          %205 = dma.done [#allocation6], 448
        $region40: #{srcnn_forward.3} parent=31 // pred_fallthru
          _
        // Predicated region
        $region41: #{srcnn_forward.3} parent=31 // pred_check
          %p206 = pneg %p96
        $region42: #{srcnn_forward.3} parent=31 // pred_check_branch
          %208 = sbr.rel (%p206) target = $region44
        $region43: #{srcnn_forward.3} parent=31 // pred_region
          %209 = dma.done [#allocation6], 64
        $region44: #{srcnn_forward.3} parent=31 // pred_fallthru
          _
        %s210 = sand.u32 %s41, 1
        %s211 = scalar_lea.sflag [#allocation3], %s210
        %s212 = sand.u32 %s41, 1
        %s213 = smul.addr %s212, 384
        %s214 = scalar_lea.vmem [#allocation2], %s213
        %p215 = pneg %p54
        %p216 = pneg %p51
        %p217 = pneg %p75
        %p218 = pneg %p72
        %p219 = pneg %p96
        %p220 = pneg %p93
        %p221 = pneg %p124
        %p222 = pneg %p121
        %s223 = sand.u32 %s111, 1
        %s224 = scalar_lea.sflag [#allocation4], %s223
        %s225 = sand.u32 %s111, 1
        %s226 = smul.addr %s225, 16
        %s227 = scalar_lea.vmem [#allocation8], %s226
        %s228 = smul.u32 4, %s26
        %v229 = vld [vmem:[#allocation5] sm:$0x77]
        %v230 = vld [vmem:[#allocation5 + $0x8] sm:$0x77]
        %v231 = vld [vmem:[#allocation5 + $0x10] sm:$0x77]
        %v232 = vld [vmem:[#allocation5 + $0x18] sm:$0x7]
        %v233 = vld [vmem:[#allocation7] sm:$0x7]
        %s234 = smul.u32 %s26, 4
        %s235 = smul.u32 %s234, 32
        %s236 = scalar_lea.vmem %s197, %s235 [#allocation2]
        %v237 = vld [vmem:[%s236] sm:$0xff]
        %v238 = vld [vmem:[%s236 + $0x8] sm:$0xff]
        %v239 = vld [vmem:[%s236 + $0x10] sm:$0xff]
        %v240 = vld [vmem:[%s236 + $0x18] sm:$0xff]
        %s241 = sadd.s32 %s234, 1
        %s242 = smul.u32 %s241, 32
        %s243 = scalar_lea.vmem %s197, %s242 [#allocation2]
        %v244 = vld [vmem:[%s243] sm:$0xff]
        %v245 = vld [vmem:[%s243 + $0x8] sm:$0xff]
        %v246 = vld [vmem:[%s243 + $0x10] sm:$0xff]
        %v247 = vld [vmem:[%s243 + $0x18] sm:$0xff]
        %s248 = sadd.s32 %s234, 2
        %s249 = smul.u32 %s248, 32
        %s250 = scalar_lea.vmem %s197, %s249 [#allocation2]
        %v251 = vld [vmem:[%s250] sm:$0xff]
        %v252 = vld [vmem:[%s250 + $0x8] sm:$0xff]
        %v253 = vld [vmem:[%s250 + $0x10] sm:$0xff]
        %v254 = vld [vmem:[%s250 + $0x18] sm:$0xff]
        %s255 = sadd.s32 %s234, 3
        %s256 = smul.u32 %s255, 32
        %s257 = scalar_lea.vmem %s197, %s256 [#allocation2]
        %v258 = vld [vmem:[%s257] sm:$0xff]
        %v259 = vld [vmem:[%s257 + $0x8] sm:$0xff]
        %v260 = vld [vmem:[%s257 + $0x10] sm:$0xff]
        %v261 = vld [vmem:[%s257 + $0x18] sm:$0xff]
        %s262 = sadd.s32 %s234, 4
        %s263 = smul.u32 %s262, 32
        %s264 = scalar_lea.vmem %s197, %s263 [#allocation2]
        %v265 = vld [vmem:[%s264] sm:$0xff]
        %v266 = vld [vmem:[%s264 + $0x8] sm:$0xff]
        %v267 = vld [vmem:[%s264 + $0x10] sm:$0xff]
        %v268 = vld [vmem:[%s264 + $0x18] sm:$0xff]
        %273 = vrot.lane.b32.xlu0 %v237, 127
        %v274 = vpop.permute.xlu0 %273
        %275 = vrot.lane.b32.xlu0 %v238, 127
        %v276 = vpop.permute.xlu0 %275
        %277 = vrot.lane.b32.xlu0 %v239, 127
        %v278 = vpop.permute.xlu0 %277
        %279 = vrot.lane.b32.xlu0 %v240, 127
        %v280 = vpop.permute.xlu0 %279
        %285 = vrot.lane.b32.xlu0 %v237, 126
        %v286 = vpop.permute.xlu0 %285
        %287 = vrot.lane.b32.xlu0 %v238, 126
        %v288 = vpop.permute.xlu0 %287
        %289 = vrot.lane.b32.xlu0 %v239, 126
        %v290 = vpop.permute.xlu0 %289
        %291 = vrot.lane.b32.xlu0 %v240, 126
        %v292 = vpop.permute.xlu0 %291
        %297 = vrot.lane.b32.xlu0 %v237, 125
        %v298 = vpop.permute.xlu0 %297
        %299 = vrot.lane.b32.xlu0 %v238, 125
        %v300 = vpop.permute.xlu0 %299
        %301 = vrot.lane.b32.xlu0 %v239, 125
        %v302 = vpop.permute.xlu0 %301
        %303 = vrot.lane.b32.xlu0 %v240, 125
        %v304 = vpop.permute.xlu0 %303
        %309 = vrot.lane.b32.xlu0 %v237, 124
        %v310 = vpop.permute.xlu0 %309
        %311 = vrot.lane.b32.xlu0 %v238, 124
        %v312 = vpop.permute.xlu0 %311
        %313 = vrot.lane.b32.xlu0 %v239, 124
        %v314 = vpop.permute.xlu0 %313
        %315 = vrot.lane.b32.xlu0 %v240, 124
        %v316 = vpop.permute.xlu0 %315
        %325 = vrot.lane.b32.xlu0 %v244, 127
        %v326 = vpop.permute.xlu0 %325
        %327 = vrot.lane.b32.xlu0 %v245, 127
        %v328 = vpop.permute.xlu0 %327
        %329 = vrot.lane.b32.xlu0 %v246, 127
        %v330 = vpop.permute.xlu0 %329
        %331 = vrot.lane.b32.xlu0 %v247, 127
        %v332 = vpop.permute.xlu0 %331
        %337 = vrot.lane.b32.xlu0 %v244, 126
        %v338 = vpop.permute.xlu0 %337
        %339 = vrot.lane.b32.xlu0 %v245, 126
        %v340 = vpop.permute.xlu0 %339
        %341 = vrot.lane.b32.xlu0 %v246, 126
        %v342 = vpop.permute.xlu0 %341
        %343 = vrot.lane.b32.xlu0 %v247, 126
        %v344 = vpop.permute.xlu0 %343
        %349 = vrot.lane.b32.xlu0 %v244, 125
        %v350 = vpop.permute.xlu0 %349
        %351 = vrot.lane.b32.xlu0 %v245, 125
        %v352 = vpop.permute.xlu0 %351
        %353 = vrot.lane.b32.xlu0 %v246, 125
        %v354 = vpop.permute.xlu0 %353
        %355 = vrot.lane.b32.xlu0 %v247, 125
        %v356 = vpop.permute.xlu0 %355
        %361 = vrot.lane.b32.xlu0 %v244, 124
        %v362 = vpop.permute.xlu0 %361
        %363 = vrot.lane.b32.xlu0 %v245, 124
        %v364 = vpop.permute.xlu0 %363
        %365 = vrot.lane.b32.xlu0 %v246, 124
        %v366 = vpop.permute.xlu0 %365
        %367 = vrot.lane.b32.xlu0 %v247, 124
        %v368 = vpop.permute.xlu0 %367
        %377 = vrot.lane.b32.xlu0 %v251, 127
        %v378 = vpop.permute.xlu0 %377
        %379 = vrot.lane.b32.xlu0 %v252, 127
        %v380 = vpop.permute.xlu0 %379
        %381 = vrot.lane.b32.xlu0 %v253, 127
        %v382 = vpop.permute.xlu0 %381
        %383 = vrot.lane.b32.xlu0 %v254, 127
        %v384 = vpop.permute.xlu0 %383
        %389 = vrot.lane.b32.xlu0 %v251, 126
        %v390 = vpop.permute.xlu0 %389
        %391 = vrot.lane.b32.xlu0 %v252, 126
        %v392 = vpop.permute.xlu0 %391
        %393 = vrot.lane.b32.xlu0 %v253, 126
        %v394 = vpop.permute.xlu0 %393
        %395 = vrot.lane.b32.xlu0 %v254, 126
        %v396 = vpop.permute.xlu0 %395
        %401 = vrot.lane.b32.xlu0 %v251, 125
        %v402 = vpop.permute.xlu0 %401
        %403 = vrot.lane.b32.xlu0 %v252, 125
        %v404 = vpop.permute.xlu0 %403
        %405 = vrot.lane.b32.xlu0 %v253, 125
        %v406 = vpop.permute.xlu0 %405
        %407 = vrot.lane.b32.xlu0 %v254, 125
        %v408 = vpop.permute.xlu0 %407
        %413 = vrot.lane.b32.xlu0 %v251, 124
        %v414 = vpop.permute.xlu0 %413
        %415 = vrot.lane.b32.xlu0 %v252, 124
        %v416 = vpop.permute.xlu0 %415
        %417 = vrot.lane.b32.xlu0 %v253, 124
        %v418 = vpop.permute.xlu0 %417
        %419 = vrot.lane.b32.xlu0 %v254, 124
        %v420 = vpop.permute.xlu0 %419
        %429 = vrot.lane.b32.xlu0 %v258, 127
        %v430 = vpop.permute.xlu0 %429
        %431 = vrot.lane.b32.xlu0 %v259, 127
        %v432 = vpop.permute.xlu0 %431
        %433 = vrot.lane.b32.xlu0 %v260, 127
        %v434 = vpop.permute.xlu0 %433
        %435 = vrot.lane.b32.xlu0 %v261, 127
        %v436 = vpop.permute.xlu0 %435
        %437 = vrot.lane.b32.xlu0 %v258, 126
        %v438 = vpop.permute.xlu0 %437
        %439 = vrot.lane.b32.xlu0 %v259, 126
        %v440 = vpop.permute.xlu0 %439
        %441 = vrot.lane.b32.xlu0 %v260, 126
        %v442 = vpop.permute.xlu0 %441
        %443 = vrot.lane.b32.xlu0 %v261, 126
        %v444 = vpop.permute.xlu0 %443
        %445 = vrot.lane.b32.xlu0 %v258, 125
        %v446 = vpop.permute.xlu0 %445
        %447 = vrot.lane.b32.xlu0 %v259, 125
        %v448 = vpop.permute.xlu0 %447
        %449 = vrot.lane.b32.xlu0 %v260, 125
        %v450 = vpop.permute.xlu0 %449
        %451 = vrot.lane.b32.xlu0 %v261, 125
        %v452 = vpop.permute.xlu0 %451
        %457 = vrot.lane.b32.xlu0 %v265, 1
        %v458 = vpop.permute.xlu0 %457
        %459 = vrot.lane.b32.xlu0 %v266, 1
        %v460 = vpop.permute.xlu0 %459
        %461 = vrot.lane.b32.xlu0 %v267, 1
        %v462 = vpop.permute.xlu0 %461
        %463 = vrot.lane.b32.xlu0 %v268, 1
        %v464 = vpop.permute.xlu0 %463
        %465 = vrot.lane.b32.xlu0 %v265, 127
        %v466 = vpop.permute.xlu0 %465
        %467 = vrot.lane.b32.xlu0 %v266, 127
        %v468 = vpop.permute.xlu0 %467
        %469 = vrot.lane.b32.xlu0 %v267, 127
        %v470 = vpop.permute.xlu0 %469
        %471 = vrot.lane.b32.xlu0 %v268, 127
        %v472 = vpop.permute.xlu0 %471
        %473 = vrot.lane.b32.xlu0 %v265, 126
        %v474 = vpop.permute.xlu0 %473
        %475 = vrot.lane.b32.xlu0 %v266, 126
        %v476 = vpop.permute.xlu0 %475
        %477 = vrot.lane.b32.xlu0 %v267, 126
        %v478 = vpop.permute.xlu0 %477
        %479 = vrot.lane.b32.xlu0 %v268, 126
        %v480 = vpop.permute.xlu0 %479
        %481 = vrot.lane.b32.xlu0 %v265, 125
        %v482 = vpop.permute.xlu0 %481
        %483 = vrot.lane.b32.xlu0 %v266, 125
        %v484 = vpop.permute.xlu0 %483
        %485 = vrot.lane.b32.xlu0 %v267, 125
        %v486 = vpop.permute.xlu0 %485
        %487 = vrot.lane.b32.xlu0 %v268, 125
        %v488 = vpop.permute.xlu0 %487
        %489 = vrot.lane.b32.xlu0 %v430, 127
        %v490 = vpop.permute.xlu0 %489
        %491 = vrot.lane.b32.xlu0 %v432, 127
        %v492 = vpop.permute.xlu0 %491
        %493 = vrot.lane.b32.xlu0 %v434, 127
        %v494 = vpop.permute.xlu0 %493
        %495 = vrot.lane.b32.xlu0 %v436, 127
        %v496 = vpop.permute.xlu0 %495
        %497 = vrot.lane.b32.xlu0 %v438, 127
        %v498 = vpop.permute.xlu0 %497
        %499 = vrot.lane.b32.xlu0 %v440, 127
        %v500 = vpop.permute.xlu0 %499
        %501 = vrot.lane.b32.xlu0 %v442, 127
        %v502 = vpop.permute.xlu0 %501
        %503 = vrot.lane.b32.xlu0 %v444, 127
        %v504 = vpop.permute.xlu0 %503
        %505 = vrot.lane.b32.xlu0 %v446, 127
        %v506 = vpop.permute.xlu0 %505
        %507 = vrot.lane.b32.xlu0 %v448, 127
        %v508 = vpop.permute.xlu0 %507
        %509 = vrot.lane.b32.xlu0 %v450, 127
        %v510 = vpop.permute.xlu0 %509
        %511 = vrot.lane.b32.xlu0 %v452, 127
        %v512 = vpop.permute.xlu0 %511
        %513 = vrot.lane.b32.xlu0 %v458, 127
        %v514 = vpop.permute.xlu0 %513
        %515 = vrot.lane.b32.xlu0 %v460, 127
        %v516 = vpop.permute.xlu0 %515
        %517 = vrot.lane.b32.xlu0 %v462, 127
        %v518 = vpop.permute.xlu0 %517
        %519 = vrot.lane.b32.xlu0 %v464, 127
        %v520 = vpop.permute.xlu0 %519
        %521 = vrot.lane.b32.xlu0 %v466, 127
        %v522 = vpop.permute.xlu0 %521
        %523 = vrot.lane.b32.xlu0 %v468, 127
        %v524 = vpop.permute.xlu0 %523
        %525 = vrot.lane.b32.xlu0 %v470, 127
        %v526 = vpop.permute.xlu0 %525
        %527 = vrot.lane.b32.xlu0 %v472, 127
        %v528 = vpop.permute.xlu0 %527
        %529 = vrot.lane.b32.xlu0 %v474, 127
        %v530 = vpop.permute.xlu0 %529
        %531 = vrot.lane.b32.xlu0 %v476, 127
        %v532 = vpop.permute.xlu0 %531
        %533 = vrot.lane.b32.xlu0 %v478, 127
        %v534 = vpop.permute.xlu0 %533
        %535 = vrot.lane.b32.xlu0 %v480, 127
        %v536 = vpop.permute.xlu0 %535
        %537 = vrot.lane.b32.xlu0 %v482, 127
        %v538 = vpop.permute.xlu0 %537
        %539 = vrot.lane.b32.xlu0 %v484, 127
        %v540 = vpop.permute.xlu0 %539
        %541 = vrot.lane.b32.xlu0 %v486, 127
        %v542 = vpop.permute.xlu0 %541
        %543 = vrot.lane.b32.xlu0 %v488, 127
        %v544 = vpop.permute.xlu0 %543
        %582 = vset.pattern.permute.xlu0 0
        %583 = vperm.xlu0 %582, %v233
        %v584 = vpop.permute.xlu0 %583
        %v590 = vcombine.high %v229, %v229
        %v591 = vcombine.high %v230, %v230
        %v592 = vcombine.high %v231, %v231
        %vm596 = vcmask 261120
        %v597 = vsel %vm596, %v232, 0
        %599 = vmatprep.subr.mxu0 0.0
        %600 = vmatpush1.msra.mxu0 %v237
        %601 = vmatprep.subr.mxu0 0.0
        %602 = vmatpush1.msra.mxu0 %v238
        %603 = vmatprep.subr.mxu0 0.0
        %604 = vmatpush1.msra.mxu0 %v239
        %605 = vmatprep.subr.mxu0 0.0
        %606 = vmatpush1.msra.mxu0 %v240
        %607 = vmatprep.subr.mxu0 0.0
        %608 = vmatpush1.msra.mxu0 %v274
        %609 = vmatprep.subr.mxu0 0.0
        %610 = vmatpush1.msra.mxu0 %v276
        %611 = vmatprep.subr.mxu0 0.0
        %612 = vmatpush1.msra.mxu0 %v278
        %613 = vmatprep.subr.mxu0 0.0
        %614 = vmatpush1.msra.mxu0 %v280
        %615 = vmatprep.subr.mxu0 0.0
        %616 = vmatpush1.msra.mxu0 %v286
        %617 = vmatprep.subr.mxu0 0.0
        %618 = vmatpush1.msra.mxu0 %v288
        %619 = vmatprep.subr.mxu0 0.0
        %620 = vmatpush1.msra.mxu0 %v290
        %621 = vmatprep.subr.mxu0 0.0
        %622 = vmatpush1.msra.mxu0 %v292
        %623 = vmatprep.subr.mxu0 0.0
        %624 = vmatpush1.msra.mxu0 %v298
        %625 = vmatprep.subr.mxu0 0.0
        %626 = vmatpush1.msra.mxu0 %v300
        %627 = vmatprep.subr.mxu0 0.0
        %628 = vmatpush1.msra.mxu0 %v302
        %629 = vmatprep.subr.mxu0 0.0
        %630 = vmatpush1.msra.mxu0 %v304
        %631 = vmatprep.subr.mxu0 0.0
        %632 = vmatpush1.msra.mxu0 %v310
        %633 = vmatprep.subr.mxu0 0.0
        %634 = vmatpush1.msra.mxu0 %v312
        %635 = vmatprep.subr.mxu0 0.0
        %636 = vmatpush1.msra.mxu0 %v314
        %637 = vmatprep.subr.mxu0 0.0
        %638 = vmatpush1.msra.mxu0 %v316
        %639 = vmatprep.subr.mxu0 0.0
        %640 = vmatpush1.msra.mxu0 %v244
        %641 = vmatprep.subr.mxu0 0.0
        %642 = vmatpush1.msra.mxu0 %v245
        %643 = vmatprep.subr.mxu0 0.0
        %644 = vmatpush1.msra.mxu0 %v246
        %645 = vmatprep.subr.mxu0 0.0
        %646 = vmatpush1.msra.mxu0 %v247
        %647 = vmatprep.subr.mxu0 0.0
        %648 = vmatpush1.msra.mxu0 %v326
        %649 = vmatprep.subr.mxu0 0.0
        %650 = vmatpush1.msra.mxu0 %v328
        %651 = vmatprep.subr.mxu0 0.0
        %652 = vmatpush1.msra.mxu0 %v330
        %653 = vmatprep.subr.mxu0 0.0
        %654 = vmatpush1.msra.mxu0 %v332
        %655 = vmatprep.subr.mxu0 0.0
        %656 = vmatpush1.msra.mxu0 %v338
        %657 = vmatprep.subr.mxu0 0.0
        %658 = vmatpush1.msra.mxu0 %v340
        %659 = vmatprep.subr.mxu0 0.0
        %660 = vmatpush1.msra.mxu0 %v342
        %661 = vmatprep.subr.mxu0 0.0
        %662 = vmatpush1.msra.mxu0 %v344
        %663 = vmatprep.mubr.f32.mxu0 %v590
        %664 = vmatmul.mubr.f32.gmra.mrb[0].mxu0 %v229
        %v665 = vpop.f32.mrb[0].mxu0
        %v666 = vadd.f32 %v584, %v665
        %v667 = vpop.f32.mrb[0].mxu0
        %668 = vdwg.mxu0
        %669 = vmatprep.subr.mxu0 0.0
        %670 = vmatpush1.msra.mxu0 %v350
        %671 = vmatprep.subr.mxu0 0.0
        %672 = vmatpush1.msra.mxu0 %v352
        %673 = vmatprep.subr.mxu0 0.0
        %674 = vmatpush1.msra.mxu0 %v354
        %675 = vmatprep.subr.mxu0 0.0
        %676 = vmatpush1.msra.mxu0 %v356
        %677 = vmatprep.subr.mxu0 0.0
        %678 = vmatpush1.msra.mxu0 %v362
        %679 = vmatprep.subr.mxu0 0.0
        %680 = vmatpush1.msra.mxu0 %v364
        %681 = vmatprep.subr.mxu0 0.0
        %682 = vmatpush1.msra.mxu0 %v366
        %683 = vmatprep.subr.mxu0 0.0
        %684 = vmatpush1.msra.mxu0 %v368
        %685 = vmatprep.subr.mxu0 0.0
        %686 = vmatpush1.msra.mxu0 %v251
        %687 = vmatprep.subr.mxu0 0.0
        %688 = vmatpush1.msra.mxu0 %v252
        %689 = vmatprep.subr.mxu0 0.0
        %690 = vmatpush1.msra.mxu0 %v253
        %691 = vmatprep.subr.mxu0 0.0
        %692 = vmatpush1.msra.mxu0 %v254
        %693 = vmatprep.subr.mxu0 0.0
        %694 = vmatpush1.msra.mxu0 %v378
        %695 = vmatprep.subr.mxu0 0.0
        %696 = vmatpush1.msra.mxu0 %v380
        %697 = vmatprep.subr.mxu0 0.0
        %698 = vmatpush1.msra.mxu0 %v382
        %699 = vmatprep.subr.mxu0 0.0
        %700 = vmatpush1.msra.mxu0 %v384
        %701 = vmatprep.subr.mxu0 0.0
        %702 = vmatpush1.msra.mxu0 %v390
        %703 = vmatprep.subr.mxu0 0.0
        %704 = vmatpush1.msra.mxu0 %v392
        %705 = vmatprep.subr.mxu0 0.0
        %706 = vmatpush1.msra.mxu0 %v394
        %707 = vmatprep.subr.mxu0 0.0
        %708 = vmatpush1.msra.mxu0 %v396
        %709 = vmatprep.subr.mxu0 0.0
        %710 = vmatpush1.msra.mxu0 %v402
        %711 = vmatprep.subr.mxu0 0.0
        %712 = vmatpush1.msra.mxu0 %v404
        %713 = vmatprep.subr.mxu0 0.0
        %714 = vmatpush1.msra.mxu0 %v406
        %715 = vmatprep.subr.mxu0 0.0
        %716 = vmatpush1.msra.mxu0 %v408
        %717 = vmatprep.subr.mxu0 0.0
        %718 = vmatpush1.msra.mxu0 %v414
        %719 = vmatprep.subr.mxu0 0.0
        %720 = vmatpush1.msra.mxu0 %v416
        %721 = vmatprep.subr.mxu0 0.0
        %722 = vmatpush1.msra.mxu0 %v418
        %723 = vmatprep.subr.mxu0 0.0
        %724 = vmatpush1.msra.mxu0 %v420
        %725 = vmatprep.subr.mxu0 0.0
        %726 = vmatpush1.msra.mxu0 %v258
        %727 = vmatprep.subr.mxu0 0.0
        %728 = vmatpush1.msra.mxu0 %v259
        %729 = vmatprep.subr.mxu0 0.0
        %730 = vmatpush1.msra.mxu0 %v260
        %731 = vmatprep.subr.mxu0 0.0
        %732 = vmatpush1.msra.mxu0 %v261
        %733 = vmatprep.mubr.f32.mxu0 %v591
        %734 = vmatmul.mubr.f32.gmra.mrb[0].mxu0 %v230
        %v735 = vpop.f32.mrb[0].mxu0
        %v736 = vadd.f32 %v666, %v735
        %v737 = vpop.f32.mrb[0].mxu0
        %738 = vdwg.mxu0
        %739 = vmatprep.subr.mxu0 0.0
        %740 = vmatpush1.msra.mxu0 %v430
        %741 = vmatprep.subr.mxu0 0.0
        %742 = vmatpush1.msra.mxu0 %v432
        %743 = vmatprep.subr.mxu0 0.0
        %744 = vmatpush1.msra.mxu0 %v434
        %745 = vmatprep.subr.mxu0 0.0
        %746 = vmatpush1.msra.mxu0 %v436
        %747 = vmatprep.subr.mxu0 0.0
        %748 = vmatpush1.msra.mxu0 %v490
        %749 = vmatprep.subr.mxu0 0.0
        %750 = vmatpush1.msra.mxu0 %v492
        %751 = vmatprep.subr.mxu0 0.0
        %752 = vmatpush1.msra.mxu0 %v494
        %753 = vmatprep.subr.mxu0 0.0
        %754 = vmatpush1.msra.mxu0 %v496
        %755 = vmatprep.subr.mxu0 0.0
        %756 = vmatpush1.msra.mxu0 %v498
        %757 = vmatprep.subr.mxu0 0.0
        %758 = vmatpush1.msra.mxu0 %v500
        %759 = vmatprep.subr.mxu0 0.0
        %760 = vmatpush1.msra.mxu0 %v502
        %761 = vmatprep.subr.mxu0 0.0
        %762 = vmatpush1.msra.mxu0 %v504
        %763 = vmatprep.subr.mxu0 0.0
        %764 = vmatpush1.msra.mxu0 %v506
        %765 = vmatprep.subr.mxu0 0.0
        %766 = vmatpush1.msra.mxu0 %v508
        %767 = vmatprep.subr.mxu0 0.0
        %768 = vmatpush1.msra.mxu0 %v510
        %769 = vmatprep.subr.mxu0 0.0
        %770 = vmatpush1.msra.mxu0 %v512
        %771 = vmatprep.subr.mxu0 0.0
        %772 = vmatpush1.msra.mxu0 %v514
        %773 = vmatprep.subr.mxu0 0.0
        %774 = vmatpush1.msra.mxu0 %v516
        %775 = vmatprep.subr.mxu0 0.0
        %776 = vmatpush1.msra.mxu0 %v518
        %777 = vmatprep.subr.mxu0 0.0
        %778 = vmatpush1.msra.mxu0 %v520
        %779 = vmatprep.subr.mxu0 0.0
        %780 = vmatpush1.msra.mxu0 %v466
        %781 = vmatprep.subr.mxu0 0.0
        %782 = vmatpush1.msra.mxu0 %v468
        %783 = vmatprep.subr.mxu0 0.0
        %784 = vmatpush1.msra.mxu0 %v470
        %785 = vmatprep.subr.mxu0 0.0
        %786 = vmatpush1.msra.mxu0 %v472
        %787 = vmatprep.subr.mxu0 0.0
        %788 = vmatpush1.msra.mxu0 %v522
        %789 = vmatprep.subr.mxu0 0.0
        %790 = vmatpush1.msra.mxu0 %v524
        %791 = vmatprep.subr.mxu0 0.0
        %792 = vmatpush1.msra.mxu0 %v526
        %793 = vmatprep.subr.mxu0 0.0
        %794 = vmatpush1.msra.mxu0 %v528
        %795 = vmatprep.subr.mxu0 0.0
        %796 = vmatpush1.msra.mxu0 %v530
        %797 = vmatprep.subr.mxu0 0.0
        %798 = vmatpush1.msra.mxu0 %v532
        %799 = vmatprep.subr.mxu0 0.0
        %800 = vmatpush1.msra.mxu0 %v534
        %801 = vmatprep.subr.mxu0 0.0
        %802 = vmatpush1.msra.mxu0 %v536
        %803 = vmatprep.mubr.f32.mxu0 %v592
        %804 = vmatmul.mubr.f32.gmra.mrb[0].mxu0 %v231
        %v805 = vpop.f32.mrb[0].mxu0
        %v806 = vadd.f32 %v736, %v805
        %v807 = vpop.f32.mrb[0].mxu0
        %808 = vdwg.mxu0
        %809 = vmatprep.subr.mxu0 0.0
        %810 = vmatpush1.msra.mxu0 %v538
        %811 = vmatprep.subr.mxu0 0.0
        %812 = vmatpush1.msra.mxu0 %v540
        %813 = vmatprep.subr.mxu0 0.0
        %814 = vmatpush1.msra.mxu0 %v542
        %815 = vmatprep.subr.mxu0 0.0
        %816 = vmatpush1.msra.mxu0 %v544
        %817 = vmatprep.subr.mxu0 0.0
        %818 = vmatpush1.msra.mxu0 0.0
        %819 = vmatprep.subr.mxu0 0.0
        %820 = vmatpush1.msra.mxu0 0.0
        %821 = vmatprep.subr.mxu0 0.0
        %822 = vmatpush1.msra.mxu0 0.0
        %823 = vmatprep.subr.mxu0 0.0
        %824 = vmatpush1.msra.mxu0 0.0
        %825 = vmatprep.subr.mxu0 0.0
        %826 = vmatpush1.msra.mxu0 0.0
        %827 = vmatprep.subr.mxu0 0.0
        %828 = vmatpush1.msra.mxu0 0.0
        %829 = vmatprep.subr.mxu0 0.0
        %830 = vmatpush1.msra.mxu0 0.0
        %831 = vmatprep.subr.mxu0 0.0
        %832 = vmatpush1.msra.mxu0 0.0
        %833 = vmatprep.subr.mxu0 0.0
        %834 = vmatpush1.msra.mxu0 0.0
        %835 = vmatprep.subr.mxu0 0.0
        %836 = vmatpush1.msra.mxu0 0.0
        %837 = vmatprep.subr.mxu0 0.0
        %838 = vmatpush1.msra.mxu0 0.0
        %839 = vmatprep.subr.mxu0 0.0
        %840 = vmatpush1.msra.mxu0 0.0
        %841 = vmatprep.subr.mxu0 0.0
        %842 = vmatpush1.msra.mxu0 0.0
        %843 = vmatprep.subr.mxu0 0.0
        %844 = vmatpush1.msra.mxu0 0.0
        %845 = vmatprep.subr.mxu0 0.0
        %846 = vmatpush1.msra.mxu0 0.0
        %847 = vmatprep.subr.mxu0 0.0
        %848 = vmatpush1.msra.mxu0 0.0
        %849 = vmatprep.subr.mxu0 0.0
        %850 = vmatpush1.msra.mxu0 0.0
        %851 = vmatprep.subr.mxu0 0.0
        %852 = vmatpush1.msra.mxu0 0.0
        %853 = vmatprep.subr.mxu0 0.0
        %854 = vmatpush1.msra.mxu0 0.0
        %855 = vmatprep.subr.mxu0 0.0
        %856 = vmatpush1.msra.mxu0 0.0
        %857 = vmatprep.subr.mxu0 0.0
        %858 = vmatpush1.msra.mxu0 0.0
        %859 = vmatprep.subr.mxu0 0.0
        %860 = vmatpush1.msra.mxu0 0.0
        %861 = vmatprep.subr.mxu0 0.0
        %862 = vmatpush1.msra.mxu0 0.0
        %863 = vmatprep.subr.mxu0 0.0
        %864 = vmatpush1.msra.mxu0 0.0
        %865 = vmatprep.subr.mxu0 0.0
        %866 = vmatpush1.msra.mxu0 0.0
        %867 = vmatprep.subr.mxu0 0.0
        %868 = vmatpush1.msra.mxu0 0.0
        %869 = vmatprep.subr.mxu0 0.0
        %870 = vmatpush1.msra.mxu0 0.0
        %871 = vmatprep.subr.mxu0 0.0
        %872 = vmatpush1.msra.mxu0 0.0
        %873 = vmatprep.mubr.f32.mxu0 0.0
        %874 = vmatmul.mubr.f32.gmra.mrb[0].mxu0 %v597
        %v875 = vpop.f32.mrb[0].mxu0
        %v876 = vadd.f32 %v806, %v875
        %v877 = vpop.f32.mrb[0].mxu0
        %878 = vdwg.mxu0
        %vm879 = vcmask 59392
        %880 = vst.msk [vmem:[%s227] sm:$0x7] %vm879, %v876
        %v881 = vld [vmem:[%s243] sm:$0xff]
        %v882 = vld [vmem:[%s243 + $0x8] sm:$0xff]
        %v883 = vld [vmem:[%s243 + $0x10] sm:$0xff]
        %v884 = vld [vmem:[%s243 + $0x18] sm:$0xff]
        %v885 = vld [vmem:[%s250] sm:$0xff]
        %v886 = vld [vmem:[%s250 + $0x8] sm:$0xff]
        %v887 = vld [vmem:[%s250 + $0x10] sm:$0xff]
        %v888 = vld [vmem:[%s250 + $0x18] sm:$0xff]
        %v889 = vld [vmem:[%s257] sm:$0xff]
        %v890 = vld [vmem:[%s257 + $0x8] sm:$0xff]
        %v891 = vld [vmem:[%s257 + $0x10] sm:$0xff]
        %v892 = vld [vmem:[%s257 + $0x18] sm:$0xff]
        %v893 = vld [vmem:[%s264] sm:$0xff]
        %v894 = vld [vmem:[%s264 + $0x8] sm:$0xff]
        %v895 = vld [vmem:[%s264 + $0x10] sm:$0xff]
        %v896 = vld [vmem:[%s264 + $0x18] sm:$0xff]
        %s897 = sadd.s32 %s234, 5
        %s898 = smul.u32 %s897, 32
        %s899 = scalar_lea.vmem %s197, %s898 [#allocation2]
        %v900 = vld [vmem:[%s899] sm:$0xff]
        %v901 = vld [vmem:[%s899 + $0x8] sm:$0xff]
        %v902 = vld [vmem:[%s899 + $0x10] sm:$0xff]
        %v903 = vld [vmem:[%s899 + $0x18] sm:$0xff]
        %908 = vrot.lane.b32.xlu0 %v881, 127
        %v909 = vpop.permute.xlu0 %908
        %910 = vrot.lane.b32.xlu0 %v882, 127
        %v911 = vpop.permute.xlu0 %910
        %912 = vrot.lane.b32.xlu0 %v883, 127
        %v913 = vpop.permute.xlu0 %912
        %914 = vrot.lane.b32.xlu0 %v884, 127
        %v915 = vpop.permute.xlu0 %914
        %920 = vrot.lane.b32.xlu0 %v881, 126
        %v921 = vpop.permute.xlu0 %920
        %922 = vrot.lane.b32.xlu0 %v882, 126
        %v923 = vpop.permute.xlu0 %922
        %924 = vrot.lane.b32.xlu0 %v883, 126
        %v925 = vpop.permute.xlu0 %924
        %926 = vrot.lane.b32.xlu0 %v884, 126
        %v927 = vpop.permute.xlu0 %926
        %932 = vrot.lane.b32.xlu0 %v881, 125
        %v933 = vpop.permute.xlu0 %932
        %934 = vrot.lane.b32.xlu0 %v882, 125
        %v935 = vpop.permute.xlu0 %934
        %936 = vrot.lane.b32.xlu0 %v883, 125
        %v937 = vpop.permute.xlu0 %936
        %938 = vrot.lane.b32.xlu0 %v884, 125
        %v939 = vpop.permute.xlu0 %938
        %944 = vrot.lane.b32.xlu0 %v881, 124
        %v945 = vpop.permute.xlu0 %944
        %946 = vrot.lane.b32.xlu0 %v882, 124
        %v947 = vpop.permute.xlu0 %946
        %948 = vrot.lane.b32.xlu0 %v883, 124
        %v949 = vpop.permute.xlu0 %948
        %950 = vrot.lane.b32.xlu0 %v884, 124
        %v951 = vpop.permute.xlu0 %950
        %960 = vrot.lane.b32.xlu0 %v885, 127
        %v961 = vpop.permute.xlu0 %960
        %962 = vrot.lane.b32.xlu0 %v886, 127
        %v963 = vpop.permute.xlu0 %962
        %964 = vrot.lane.b32.xlu0 %v887, 127
        %v965 = vpop.permute.xlu0 %964
        %966 = vrot.lane.b32.xlu0 %v888, 127
        %v967 = vpop.permute.xlu0 %966
        %972 = vrot.lane.b32.xlu0 %v885, 126
        %v973 = vpop.permute.xlu0 %972
        %974 = vrot.lane.b32.xlu0 %v886, 126
        %v975 = vpop.permute.xlu0 %974
        %976 = vrot.lane.b32.xlu0 %v887, 126
        %v977 = vpop.permute.xlu0 %976
        %978 = vrot.lane.b32.xlu0 %v888, 126
        %v979 = vpop.permute.xlu0 %978
        %984 = vrot.lane.b32.xlu0 %v885, 125
        %v985 = vpop.permute.xlu0 %984
        %986 = vrot.lane.b32.xlu0 %v886, 125
        %v987 = vpop.permute.xlu0 %986
        %988 = vrot.lane.b32.xlu0 %v887, 125
        %v989 = vpop.permute.xlu0 %988
        %990 = vrot.lane.b32.xlu0 %v888, 125
        %v991 = vpop.permute.xlu0 %990
        %996 = vrot.lane.b32.xlu0 %v885, 124
        %v997 = vpop.permute.xlu0 %996
        %998 = vrot.lane.b32.xlu0 %v886, 124
        %v999 = vpop.permute.xlu0 %998
        %1000 = vrot.lane.b32.xlu0 %v887, 124
        %v1001 = vpop.permute.xlu0 %1000
        %1002 = vrot.lane.b32.xlu0 %v888, 124
        %v1003 = vpop.permute.xlu0 %1002
        %1012 = vrot.lane.b32.xlu0 %v889, 127
        %v1013 = vpop.permute.xlu0 %1012
        %1014 = vrot.lane.b32.xlu0 %v890, 127
        %v1015 = vpop.permute.xlu0 %1014
        %1016 = vrot.lane.b32.xlu0 %v891, 127
        %v1017 = vpop.permute.xlu0 %1016
        %1018 = vrot.lane.b32.xlu0 %v892, 127
        %v1019 = vpop.permute.xlu0 %1018
        %1024 = vrot.lane.b32.xlu0 %v889, 126
        %v1025 = vpop.permute.xlu0 %1024
        %1026 = vrot.lane.b32.xlu0 %v890, 126
        %v1027 = vpop.permute.xlu0 %1026
        %1028 = vrot.lane.b32.xlu0 %v891, 126
        %v1029 = vpop.permute.xlu0 %1028
        %1030 = vrot.lane.b32.xlu0 %v892, 126
        %v1031 = vpop.permute.xlu0 %1030
        %1036 = vrot.lane.b32.xlu0 %v889, 125
        %v1037 = vpop.permute.xlu0 %1036
        %1038 = vrot.lane.b32.xlu0 %v890, 125
        %v1039 = vpop.permute.xlu0 %1038
        %1040 = vrot.lane.b32.xlu0 %v891, 125
        %v1041 = vpop.permute.xlu0 %1040
        %1042 = vrot.lane.b32.xlu0 %v892, 125
        %v1043 = vpop.permute.xlu0 %1042
        %1048 = vrot.lane.b32.xlu0 %v889, 124
        %v1049 = vpop.permute.xlu0 %1048
        %1050 = vrot.lane.b32.xlu0 %v890, 124
        %v1051 = vpop.permute.xlu0 %1050
        %1052 = vrot.lane.b32.xlu0 %v891, 124
        %v1053 = vpop.permute.xlu0 %1052
        %1054 = vrot.lane.b32.xlu0 %v892, 124
        %v1055 = vpop.permute.xlu0 %1054
        %1064 = vrot.lane.b32.xlu0 %v893, 127
        %v1065 = vpop.permute.xlu0 %1064
        %1066 = vrot.lane.b32.xlu0 %v894, 127
        %v1067 = vpop.permute.xlu0 %1066
        %1068 = vrot.lane.b32.xlu0 %v895, 127
        %v1069 = vpop.permute.xlu0 %1068
        %1070 = vrot.lane.b32.xlu0 %v896, 127
        %v1071 = vpop.permute.xlu0 %1070
        %1072 = vrot.lane.b32.xlu0 %v893, 126
        %v1073 = vpop.permute.xlu0 %1072
        %1074 = vrot.lane.b32.xlu0 %v894, 126
        %v1075 = vpop.permute.xlu0 %1074
        %1076 = vrot.lane.b32.xlu0 %v895, 126
        %v1077 = vpop.permute.xlu0 %1076
        %1078 = vrot.lane.b32.xlu0 %v896, 126
        %v1079 = vpop.permute.xlu0 %1078
        %1080 = vrot.lane.b32.xlu0 %v893, 125
        %v1081 = vpop.permute.xlu0 %1080
        %1082 = vrot.lane.b32.xlu0 %v894, 125
        %v1083 = vpop.permute.xlu0 %1082
        %1084 = vrot.lane.b32.xlu0 %v895, 125
        %v1085 = vpop.permute.xlu0 %1084
        %1086 = vrot.lane.b32.xlu0 %v896, 125
        %v1087 = vpop.permute.xlu0 %1086
        %1092 = vrot.lane.b32.xlu0 %v900, 1
        %v1093 = vpop.permute.xlu0 %1092
        %1094 = vrot.lane.b32.xlu0 %v901, 1
        %v1095 = vpop.permute.xlu0 %1094
        %1096 = vrot.lane.b32.xlu0 %v902, 1
        %v1097 = vpop.permute.xlu0 %1096
        %1098 = vrot.lane.b32.xlu0 %v903, 1
        %v1099 = vpop.permute.xlu0 %1098
        %1100 = vrot.lane.b32.xlu0 %v900, 127
        %v1101 = vpop.permute.xlu0 %1100
        %1102 = vrot.lane.b32.xlu0 %v901, 127
        %v1103 = vpop.permute.xlu0 %1102
        %1104 = vrot.lane.b32.xlu0 %v902, 127
        %v1105 = vpop.permute.xlu0 %1104
        %1106 = vrot.lane.b32.xlu0 %v903, 127
        %v1107 = vpop.permute.xlu0 %1106
        %1108 = vrot.lane.b32.xlu0 %v900, 126
        %v1109 = vpop.permute.xlu0 %1108
        %1110 = vrot.lane.b32.xlu0 %v901, 126
        %v1111 = vpop.permute.xlu0 %1110
        %1112 = vrot.lane.b32.xlu0 %v902, 126
        %v1113 = vpop.permute.xlu0 %1112
        %1114 = vrot.lane.b32.xlu0 %v903, 126
        %v1115 = vpop.permute.xlu0 %1114
        %1116 = vrot.lane.b32.xlu0 %v900, 125
        %v1117 = vpop.permute.xlu0 %1116
        %1118 = vrot.lane.b32.xlu0 %v901, 125
        %v1119 = vpop.permute.xlu0 %1118
        %1120 = vrot.lane.b32.xlu0 %v902, 125
        %v1121 = vpop.permute.xlu0 %1120
        %1122 = vrot.lane.b32.xlu0 %v903, 125
        %v1123 = vpop.permute.xlu0 %1122
        %1124 = vrot.lane.b32.xlu0 %v1065, 127
        %v1125 = vpop.permute.xlu0 %1124
        %1126 = vrot.lane.b32.xlu0 %v1067, 127
        %v1127 = vpop.permute.xlu0 %1126
        %1128 = vrot.lane.b32.xlu0 %v1069, 127
        %v1129 = vpop.permute.xlu0 %1128
        %1130 = vrot.lane.b32.xlu0 %v1071, 127
        %v1131 = vpop.permute.xlu0 %1130
        %1132 = vrot.lane.b32.xlu0 %v1073, 127
        %v1133 = vpop.permute.xlu0 %1132
        %1134 = vrot.lane.b32.xlu0 %v1075, 127
        %v1135 = vpop.permute.xlu0 %1134
        %1136 = vrot.lane.b32.xlu0 %v1077, 127
        %v1137 = vpop.permute.xlu0 %1136
        %1138 = vrot.lane.b32.xlu0 %v1079, 127
        %v1139 = vpop.permute.xlu0 %1138
        %1140 = vrot.lane.b32.xlu0 %v1081, 127
        %v1141 = vpop.permute.xlu0 %1140
        %1142 = vrot.lane.b32.xlu0 %v1083, 127
        %v1143 = vpop.permute.xlu0 %1142
        %1144 = vrot.lane.b32.xlu0 %v1085, 127
        %v1145 = vpop.permute.xlu0 %1144
        %1146 = vrot.lane.b32.xlu0 %v1087, 127
        %v1147 = vpop.permute.xlu0 %1146
        %1148 = vrot.lane.b32.xlu0 %v1093, 127
        %v1149 = vpop.permute.xlu0 %1148
        %1150 = vrot.lane.b32.xlu0 %v1095, 127
        %v1151 = vpop.permute.xlu0 %1150
        %1152 = vrot.lane.b32.xlu0 %v1097, 127
        %v1153 = vpop.permute.xlu0 %1152
        %1154 = vrot.lane.b32.xlu0 %v1099, 127
        %v1155 = vpop.permute.xlu0 %1154
        %1156 = vrot.lane.b32.xlu0 %v1101, 127
        %v1157 = vpop.permute.xlu0 %1156
        %1158 = vrot.lane.b32.xlu0 %v1103, 127
        %v1159 = vpop.permute.xlu0 %1158
        %1160 = vrot.lane.b32.xlu0 %v1105, 127
        %v1161 = vpop.permute.xlu0 %1160
        %1162 = vrot.lane.b32.xlu0 %v1107, 127
        %v1163 = vpop.permute.xlu0 %1162
        %1164 = vrot.lane.b32.xlu0 %v1109, 127
        %v1165 = vpop.permute.xlu0 %1164
        %1166 = vrot.lane.b32.xlu0 %v1111, 127
        %v1167 = vpop.permute.xlu0 %1166
        %1168 = vrot.lane.b32.xlu0 %v1113, 127
        %v1169 = vpop.permute.xlu0 %1168
        %1170 = vrot.lane.b32.xlu0 %v1115, 127
        %v1171 = vpop.permute.xlu0 %1170
        %1172 = vrot.lane.b32.xlu0 %v1117, 127
        %v1173 = vpop.permute.xlu0 %1172
        %1174 = vrot.lane.b32.xlu0 %v1119, 127
        %v1175 = vpop.permute.xlu0 %1174
        %1176 = vrot.lane.b32.xlu0 %v1121, 127
        %v1177 = vpop.permute.xlu0 %1176
        %1178 = vrot.lane.b32.xlu0 %v1123, 127
        %v1179 = vpop.permute.xlu0 %1178
        %1216 = vmatprep.subr.mxu0 0.0
        %1217 = vmatpush1.msra.mxu0 %v881
        %1218 = vmatprep.subr.mxu0 0.0
        %1219 = vmatpush1.msra.mxu0 %v882
        %1220 = vmatprep.subr.mxu0 0.0
        %1221 = vmatpush1.msra.mxu0 %v883
        %1222 = vmatprep.subr.mxu0 0.0
        %1223 = vmatpush1.msra.mxu0 %v884
        %1224 = vmatprep.subr.mxu0 0.0
        %1225 = vmatpush1.msra.mxu0 %v909
        %1226 = vmatprep.subr.mxu0 0.0
        %1227 = vmatpush1.msra.mxu0 %v911
        %1228 = vmatprep.subr.mxu0 0.0
        %1229 = vmatpush1.msra.mxu0 %v913
        %1230 = vmatprep.subr.mxu0 0.0
        %1231 = vmatpush1.msra.mxu0 %v915
        %1232 = vmatprep.subr.mxu0 0.0
        %1233 = vmatpush1.msra.mxu0 %v921
        %1234 = vmatprep.subr.mxu0 0.0
        %1235 = vmatpush1.msra.mxu0 %v923
        %1236 = vmatprep.subr.mxu0 0.0
        %1237 = vmatpush1.msra.mxu0 %v925
        %1238 = vmatprep.subr.mxu0 0.0
        %1239 = vmatpush1.msra.mxu0 %v927
        %1240 = vmatprep.subr.mxu0 0.0
        %1241 = vmatpush1.msra.mxu0 %v933
        %1242 = vmatprep.subr.mxu0 0.0
        %1243 = vmatpush1.msra.mxu0 %v935
        %1244 = vmatprep.subr.mxu0 0.0
        %1245 = vmatpush1.msra.mxu0 %v937
        %1246 = vmatprep.subr.mxu0 0.0
        %1247 = vmatpush1.msra.mxu0 %v939
        %1248 = vmatprep.subr.mxu0 0.0
        %1249 = vmatpush1.msra.mxu0 %v945
        %1250 = vmatprep.subr.mxu0 0.0
        %1251 = vmatpush1.msra.mxu0 %v947
        %1252 = vmatprep.subr.mxu0 0.0
        %1253 = vmatpush1.msra.mxu0 %v949
        %1254 = vmatprep.subr.mxu0 0.0
        %1255 = vmatpush1.msra.mxu0 %v951
        %1256 = vmatprep.subr.mxu0 0.0
        %1257 = vmatpush1.msra.mxu0 %v885
        %1258 = vmatprep.subr.mxu0 0.0
        %1259 = vmatpush1.msra.mxu0 %v886
        %1260 = vmatprep.subr.mxu0 0.0
        %1261 = vmatpush1.msra.mxu0 %v887
        %1262 = vmatprep.subr.mxu0 0.0
        %1263 = vmatpush1.msra.mxu0 %v888
        %1264 = vmatprep.subr.mxu0 0.0
        %1265 = vmatpush1.msra.mxu0 %v961
        %1266 = vmatprep.subr.mxu0 0.0
        %1267 = vmatpush1.msra.mxu0 %v963
        %1268 = vmatprep.subr.mxu0 0.0
        %1269 = vmatpush1.msra.mxu0 %v965
        %1270 = vmatprep.subr.mxu0 0.0
        %1271 = vmatpush1.msra.mxu0 %v967
        %1272 = vmatprep.subr.mxu0 0.0
        %1273 = vmatpush1.msra.mxu0 %v973
        %1274 = vmatprep.subr.mxu0 0.0
        %1275 = vmatpush1.msra.mxu0 %v975
        %1276 = vmatprep.subr.mxu0 0.0
        %1277 = vmatpush1.msra.mxu0 %v977
        %1278 = vmatprep.subr.mxu0 0.0
        %1279 = vmatpush1.msra.mxu0 %v979
        %1280 = vmatprep.mubr.f32.mxu0 %v590
        %1281 = vmatmul.mubr.f32.gmra.mrb[0].mxu0 %v229
        %v1282 = vpop.f32.mrb[0].mxu0
        %v1283 = vadd.f32 %v584, %v1282
        %v1284 = vpop.f32.mrb[0].mxu0
        %1285 = vdwg.mxu0
        %1286 = vmatprep.subr.mxu0 0.0
        %1287 = vmatpush1.msra.mxu0 %v985
        %1288 = vmatprep.subr.mxu0 0.0
        %1289 = vmatpush1.msra.mxu0 %v987
        %1290 = vmatprep.subr.mxu0 0.0
        %1291 = vmatpush1.msra.mxu0 %v989
        %1292 = vmatprep.subr.mxu0 0.0
        %1293 = vmatpush1.msra.mxu0 %v991
        %1294 = vmatprep.subr.mxu0 0.0
        %1295 = vmatpush1.msra.mxu0 %v997
        %1296 = vmatprep.subr.mxu0 0.0
        %1297 = vmatpush1.msra.mxu0 %v999
        %1298 = vmatprep.subr.mxu0 0.0
        %1299 = vmatpush1.msra.mxu0 %v1001
        %1300 = vmatprep.subr.mxu0 0.0
        %1301 = vmatpush1.msra.mxu0 %v1003
        %1302 = vmatprep.subr.mxu0 0.0
        %1303 = vmatpush1.msra.mxu0 %v889
        %1304 = vmatprep.subr.mxu0 0.0
        %1305 = vmatpush1.msra.mxu0 %v890
        %1306 = vmatprep.subr.mxu0 0.0
        %1307 = vmatpush1.msra.mxu0 %v891
        %1308 = vmatprep.subr.mxu0 0.0
        %1309 = vmatpush1.msra.mxu0 %v892
        %1310 = vmatprep.subr.mxu0 0.0
        %1311 = vmatpush1.msra.mxu0 %v1013
        %1312 = vmatprep.subr.mxu0 0.0
        %1313 = vmatpush1.msra.mxu0 %v1015
        %1314 = vmatprep.subr.mxu0 0.0
        %1315 = vmatpush1.msra.mxu0 %v1017
        %1316 = vmatprep.subr.mxu0 0.0
        %1317 = vmatpush1.msra.mxu0 %v1019
        %1318 = vmatprep.subr.mxu0 0.0
        %1319 = vmatpush1.msra.mxu0 %v1025
        %1320 = vmatprep.subr.mxu0 0.0
        %1321 = vmatpush1.msra.mxu0 %v1027
        %1322 = vmatprep.subr.mxu0 0.0
        %1323 = vmatpush1.msra.mxu0 %v1029
        %1324 = vmatprep.subr.mxu0 0.0
        %1325 = vmatpush1.msra.mxu0 %v1031
        %1326 = vmatprep.subr.mxu0 0.0
        %1327 = vmatpush1.msra.mxu0 %v1037
        %1328 = vmatprep.subr.mxu0 0.0
        %1329 = vmatpush1.msra.mxu0 %v1039
        %1330 = vmatprep.subr.mxu0 0.0
        %1331 = vmatpush1.msra.mxu0 %v1041
        %1332 = vmatprep.subr.mxu0 0.0
        %1333 = vmatpush1.msra.mxu0 %v1043
        %1334 = vmatprep.subr.mxu0 0.0
        %1335 = vmatpush1.msra.mxu0 %v1049
        %1336 = vmatprep.subr.mxu0 0.0
        %1337 = vmatpush1.msra.mxu0 %v1051
        %1338 = vmatprep.subr.mxu0 0.0
        %1339 = vmatpush1.msra.mxu0 %v1053
        %1340 = vmatprep.subr.mxu0 0.0
        %1341 = vmatpush1.msra.mxu0 %v1055
        %1342 = vmatprep.subr.mxu0 0.0
        %1343 = vmatpush1.msra.mxu0 %v893
        %1344 = vmatprep.subr.mxu0 0.0
        %1345 = vmatpush1.msra.mxu0 %v894
        %1346 = vmatprep.subr.mxu0 0.0
        %1347 = vmatpush1.msra.mxu0 %v895
        %1348 = vmatprep.subr.mxu0 0.0
        %1349 = vmatpush1.msra.mxu0 %v896
        %1350 = vmatprep.mubr.f32.mxu0 %v591
        %1351 = vmatmul.mubr.f32.gmra.mrb[0].mxu0 %v230
        %v1352 = vpop.f32.mrb[0].mxu0
        %v1353 = vadd.f32 %v1283, %v1352
        %v1354 = vpop.f32.mrb[0].mxu0
        %1355 = vdwg.mxu0
        %1356 = vmatprep.subr.mxu0 0.0
        %1357 = vmatpush1.msra.mxu0 %v1065
        %1358 = vmatprep.subr.mxu0 0.0
        %1359 = vmatpush1.msra.mxu0 %v1067
        %1360 = vmatprep.subr.mxu0 0.0
        %1361 = vmatpush1.msra.mxu0 %v1069
        %1362 = vmatprep.subr.mxu0 0.0
        %1363 = vmatpush1.msra.mxu0 %v1071
        %1364 = vmatprep.subr.mxu0 0.0
        %1365 = vmatpush1.msra.mxu0 %v1125
        %1366 = vmatprep.subr.mxu0 0.0
        %1367 = vmatpush1.msra.mxu0 %v1127
        %1368 = vmatprep.subr.mxu0 0.0
        %1369 = vmatpush1.msra.mxu0 %v1129
        %1370 = vmatprep.subr.mxu0 0.0
        %1371 = vmatpush1.msra.mxu0 %v1131
        %1372 = vmatprep.subr.mxu0 0.0
        %1373 = vmatpush1.msra.mxu0 %v1133
        %1374 = vmatprep.subr.mxu0 0.0
        %1375 = vmatpush1.msra.mxu0 %v1135
        %1376 = vmatprep.subr.mxu0 0.0
        %1377 = vmatpush1.msra.mxu0 %v1137
        %1378 = vmatprep.subr.mxu0 0.0
        %1379 = vmatpush1.msra.mxu0 %v1139
        %1380 = vmatprep.subr.mxu0 0.0
        %1381 = vmatpush1.msra.mxu0 %v1141
        %1382 = vmatprep.subr.mxu0 0.0
        %1383 = vmatpush1.msra.mxu0 %v1143
        %1384 = vmatprep.subr.mxu0 0.0
        %1385 = vmatpush1.msra.mxu0 %v1145
        %1386 = vmatprep.subr.mxu0 0.0
        %1387 = vmatpush1.msra.mxu0 %v1147
        %1388 = vmatprep.subr.mxu0 0.0
        %1389 = vmatpush1.msra.mxu0 %v1149
        %1390 = vmatprep.subr.mxu0 0.0
        %1391 = vmatpush1.msra.mxu0 %v1151
        %1392 = vmatprep.subr.mxu0 0.0
        %1393 = vmatpush1.msra.mxu0 %v1153
        %1394 = vmatprep.subr.mxu0 0.0
        %1395 = vmatpush1.msra.mxu0 %v1155
        %1396 = vmatprep.subr.mxu0 0.0
        %1397 = vmatpush1.msra.mxu0 %v1101
        %1398 = vmatprep.subr.mxu0 0.0
        %1399 = vmatpush1.msra.mxu0 %v1103
        %1400 = vmatprep.subr.mxu0 0.0
        %1401 = vmatpush1.msra.mxu0 %v1105
        %1402 = vmatprep.subr.mxu0 0.0
        %1403 = vmatpush1.msra.mxu0 %v1107
        %1404 = vmatprep.subr.mxu0 0.0
        %1405 = vmatpush1.msra.mxu0 %v1157
        %1406 = vmatprep.subr.mxu0 0.0
        %1407 = vmatpush1.msra.mxu0 %v1159
        %1408 = vmatprep.subr.mxu0 0.0
        %1409 = vmatpush1.msra.mxu0 %v1161
        %1410 = vmatprep.subr.mxu0 0.0
        %1411 = vmatpush1.msra.mxu0 %v1163
        %1412 = vmatprep.subr.mxu0 0.0
        %1413 = vmatpush1.msra.mxu0 %v1165
        %1414 = vmatprep.subr.mxu0 0.0
        %1415 = vmatpush1.msra.mxu0 %v1167
        %1416 = vmatprep.subr.mxu0 0.0
        %1417 = vmatpush1.msra.mxu0 %v1169
        %1418 = vmatprep.subr.mxu0 0.0
        %1419 = vmatpush1.msra.mxu0 %v1171
        %1420 = vmatprep.mubr.f32.mxu0 %v592
        %1421 = vmatmul.mubr.f32.gmra.mrb[0].mxu0 %v231
        %v1422 = vpop.f32.mrb[0].mxu0
        %v1423 = vadd.f32 %v1353, %v1422
        %v1424 = vpop.f32.mrb[0].mxu0
        %1425 = vdwg.mxu0
        %1426 = vmatprep.subr.mxu0 0.0
        %1427 = vmatpush1.msra.mxu0 %v1173
        %1428 = vmatprep.subr.mxu0 0.0
        %1429 = vmatpush1.msra.mxu0 %v1175
        %1430 = vmatprep.subr.mxu0 0.0
        %1431 = vmatpush1.msra.mxu0 %v1177
        %1432 = vmatprep.subr.mxu0 0.0
        %1433 = vmatpush1.msra.mxu0 %v1179
        %1434 = vmatprep.subr.mxu0 0.0
        %1435 = vmatpush1.msra.mxu0 0.0
        %1436 = vmatprep.subr.mxu0 0.0
        %1437 = vmatpush1.msra.mxu0 0.0
        %1438 = vmatprep.subr.mxu0 0.0
        %1439 = vmatpush1.msra.mxu0 0.0
        %1440 = vmatprep.subr.mxu0 0.0
        %1441 = vmatpush1.msra.mxu0 0.0
        %1442 = vmatprep.subr.mxu0 0.0
        %1443 = vmatpush1.msra.mxu0 0.0
        %1444 = vmatprep.subr.mxu0 0.0
        %1445 = vmatpush1.msra.mxu0 0.0
        %1446 = vmatprep.subr.mxu0 0.0
        %1447 = vmatpush1.msra.mxu0 0.0
        %1448 = vmatprep.subr.mxu0 0.0
        %1449 = vmatpush1.msra.mxu0 0.0
        %1450 = vmatprep.subr.mxu0 0.0
        %1451 = vmatpush1.msra.mxu0 0.0
        %1452 = vmatprep.subr.mxu0 0.0
        %1453 = vmatpush1.msra.mxu0 0.0
        %1454 = vmatprep.subr.mxu0 0.0
        %1455 = vmatpush1.msra.mxu0 0.0
        %1456 = vmatprep.subr.mxu0 0.0
        %1457 = vmatpush1.msra.mxu0 0.0
        %1458 = vmatprep.subr.mxu0 0.0
        %1459 = vmatpush1.msra.mxu0 0.0
        %1460 = vmatprep.subr.mxu0 0.0
        %1461 = vmatpush1.msra.mxu0 0.0
        %1462 = vmatprep.subr.mxu0 0.0
        %1463 = vmatpush1.msra.mxu0 0.0
        %1464 = vmatprep.subr.mxu0 0.0
        %1465 = vmatpush1.msra.mxu0 0.0
        %1466 = vmatprep.subr.mxu0 0.0
        %1467 = vmatpush1.msra.mxu0 0.0
        %1468 = vmatprep.subr.mxu0 0.0
        %1469 = vmatpush1.msra.mxu0 0.0
        %1470 = vmatprep.subr.mxu0 0.0
        %1471 = vmatpush1.msra.mxu0 0.0
        %1472 = vmatprep.subr.mxu0 0.0
        %1473 = vmatpush1.msra.mxu0 0.0
        %1474 = vmatprep.subr.mxu0 0.0
        %1475 = vmatpush1.msra.mxu0 0.0
        %1476 = vmatprep.subr.mxu0 0.0
        %1477 = vmatpush1.msra.mxu0 0.0
        %1478 = vmatprep.subr.mxu0 0.0
        %1479 = vmatpush1.msra.mxu0 0.0
        %1480 = vmatprep.subr.mxu0 0.0
        %1481 = vmatpush1.msra.mxu0 0.0
        %1482 = vmatprep.subr.mxu0 0.0
        %1483 = vmatpush1.msra.mxu0 0.0
        %1484 = vmatprep.subr.mxu0 0.0
        %1485 = vmatpush1.msra.mxu0 0.0
        %1486 = vmatprep.subr.mxu0 0.0
        %1487 = vmatpush1.msra.mxu0 0.0
        %1488 = vmatprep.subr.mxu0 0.0
        %1489 = vmatpush1.msra.mxu0 0.0
        %1490 = vmatprep.mubr.f32.mxu0 0.0
        %1491 = vmatmul.mubr.f32.gmra.mrb[0].mxu0 %v597
        %v1492 = vpop.f32.mrb[0].mxu0
        %v1493 = vadd.f32 %v1423, %v1492
        %v1494 = vpop.f32.mrb[0].mxu0
        %1495 = vdwg.mxu0
        %s1496 = scalar_lea.vmem %s227, 4 [#allocation8]
        %1497 = vst.msk [vmem:[%s1496] sm:$0x7] %vm879, %v1493
        %v1498 = vld [vmem:[%s250] sm:$0xff]
        %v1499 = vld [vmem:[%s250 + $0x8] sm:$0xff]
        %v1500 = vld [vmem:[%s250 + $0x10] sm:$0xff]
        %v1501 = vld [vmem:[%s250 + $0x18] sm:$0xff]
        %v1502 = vld [vmem:[%s257] sm:$0xff]
        %v1503 = vld [vmem:[%s257 + $0x8] sm:$0xff]
        %v1504 = vld [vmem:[%s257 + $0x10] sm:$0xff]
        %v1505 = vld [vmem:[%s257 + $0x18] sm:$0xff]
        %v1506 = vld [vmem:[%s264] sm:$0xff]
        %v1507 = vld [vmem:[%s264 + $0x8] sm:$0xff]
        %v1508 = vld [vmem:[%s264 + $0x10] sm:$0xff]
        %v1509 = vld [vmem:[%s264 + $0x18] sm:$0xff]
        %v1510 = vld [vmem:[%s899] sm:$0xff]
        %v1511 = vld [vmem:[%s899 + $0x8] sm:$0xff]
        %v1512 = vld [vmem:[%s899 + $0x10] sm:$0xff]
        %v1513 = vld [vmem:[%s899 + $0x18] sm:$0xff]
        %s1514 = sadd.s32 %s234, 6
        %s1515 = smul.u32 %s1514, 32
        %s1516 = scalar_lea.vmem %s197, %s1515 [#allocation2]
        %v1517 = vld [vmem:[%s1516] sm:$0xff]
        %v1518 = vld [vmem:[%s1516 + $0x8] sm:$0xff]
        %v1519 = vld [vmem:[%s1516 + $0x10] sm:$0xff]
        %v1520 = vld [vmem:[%s1516 + $0x18] sm:$0xff]
        %1525 = vrot.lane.b32.xlu0 %v1498, 127
        %v1526 = vpop.permute.xlu0 %1525
        %1527 = vrot.lane.b32.xlu0 %v1499, 127
        %v1528 = vpop.permute.xlu0 %1527
        %1529 = vrot.lane.b32.xlu0 %v1500, 127
        %v1530 = vpop.permute.xlu0 %1529
        %1531 = vrot.lane.b32.xlu0 %v1501, 127
        %v1532 = vpop.permute.xlu0 %1531
        %1537 = vrot.lane.b32.xlu0 %v1498, 126
        %v1538 = vpop.permute.xlu0 %1537
        %1539 = vrot.lane.b32.xlu0 %v1499, 126
        %v1540 = vpop.permute.xlu0 %1539
        %1541 = vrot.lane.b32.xlu0 %v1500, 126
        %v1542 = vpop.permute.xlu0 %1541
        %1543 = vrot.lane.b32.xlu0 %v1501, 126
        %v1544 = vpop.permute.xlu0 %1543
        %1549 = vrot.lane.b32.xlu0 %v1498, 125
        %v1550 = vpop.permute.xlu0 %1549
        %1551 = vrot.lane.b32.xlu0 %v1499, 125
        %v1552 = vpop.permute.xlu0 %1551
        %1553 = vrot.lane.b32.xlu0 %v1500, 125
        %v1554 = vpop.permute.xlu0 %1553
        %1555 = vrot.lane.b32.xlu0 %v1501, 125
        %v1556 = vpop.permute.xlu0 %1555
        %1561 = vrot.lane.b32.xlu0 %v1498, 124
        %v1562 = vpop.permute.xlu0 %1561
        %1563 = vrot.lane.b32.xlu0 %v1499, 124
        %v1564 = vpop.permute.xlu0 %1563
        %1565 = vrot.lane.b32.xlu0 %v1500, 124
        %v1566 = vpop.permute.xlu0 %1565
        %1567 = vrot.lane.b32.xlu0 %v1501, 124
        %v1568 = vpop.permute.xlu0 %1567
        %1577 = vrot.lane.b32.xlu0 %v1502, 127
        %v1578 = vpop.permute.xlu0 %1577
        %1579 = vrot.lane.b32.xlu0 %v1503, 127
        %v1580 = vpop.permute.xlu0 %1579
        %1581 = vrot.lane.b32.xlu0 %v1504, 127
        %v1582 = vpop.permute.xlu0 %1581
        %1583 = vrot.lane.b32.xlu0 %v1505, 127
        %v1584 = vpop.permute.xlu0 %1583
        %1589 = vrot.lane.b32.xlu0 %v1502, 126
        %v1590 = vpop.permute.xlu0 %1589
        %1591 = vrot.lane.b32.xlu0 %v1503, 126
        %v1592 = vpop.permute.xlu0 %1591
        %1593 = vrot.lane.b32.xlu0 %v1504, 126
        %v1594 = vpop.permute.xlu0 %1593
        %1595 = vrot.lane.b32.xlu0 %v1505, 126
        %v1596 = vpop.permute.xlu0 %1595
        %1601 = vrot.lane.b32.xlu0 %v1502, 125
        %v1602 = vpop.permute.xlu0 %1601
        %1603 = vrot.lane.b32.xlu0 %v1503, 125
        %v1604 = vpop.permute.xlu0 %1603
        %1605 = vrot.lane.b32.xlu0 %v1504, 125
        %v1606 = vpop.permute.xlu0 %1605
        %1607 = vrot.lane.b32.xlu0 %v1505, 125
        %v1608 = vpop.permute.xlu0 %1607
        %1613 = vrot.lane.b32.xlu0 %v1502, 124
        %v1614 = vpop.permute.xlu0 %1613
        %1615 = vrot.lane.b32.xlu0 %v1503, 124
        %v1616 = vpop.permute.xlu0 %1615
        %1617 = vrot.lane.b32.xlu0 %v1504, 124
        %v1618 = vpop.permute.xlu0 %1617
        %1619 = vrot.lane.b32.xlu0 %v1505, 124
        %v1620 = vpop.permute.xlu0 %1619
        %1629 = vrot.lane.b32.xlu0 %v1506, 127
        %v1630 = vpop.permute.xlu0 %1629
        %1631 = vrot.lane.b32.xlu0 %v1507, 127
        %v1632 = vpop.permute.xlu0 %1631
        %1633 = vrot.lane.b32.xlu0 %v1508, 127
        %v1634 = vpop.permute.xlu0 %1633
        %1635 = vrot.lane.b32.xlu0 %v1509, 127
        %v1636 = vpop.permute.xlu0 %1635
        %1641 = vrot.lane.b32.xlu0 %v1506, 126
        %v1642 = vpop.permute.xlu0 %1641
        %1643 = vrot.lane.b32.xlu0 %v1507, 126
        %v1644 = vpop.permute.xlu0 %1643
        %1645 = vrot.lane.b32.xlu0 %v1508, 126
        %v1646 = vpop.permute.xlu0 %1645
        %1647 = vrot.lane.b32.xlu0 %v1509, 126
        %v1648 = vpop.permute.xlu0 %1647
        %1653 = vrot.lane.b32.xlu0 %v1506, 125
        %v1654 = vpop.permute.xlu0 %1653
        %1655 = vrot.lane.b32.xlu0 %v1507, 125
        %v1656 = vpop.permute.xlu0 %1655
        %1657 = vrot.lane.b32.xlu0 %v1508, 125
        %v1658 = vpop.permute.xlu0 %1657
        %1659 = vrot.lane.b32.xlu0 %v1509, 125
        %v1660 = vpop.permute.xlu0 %1659
        %1665 = vrot.lane.b32.xlu0 %v1506, 124
        %v1666 = vpop.permute.xlu0 %1665
        %1667 = vrot.lane.b32.xlu0 %v1507, 124
        %v1668 = vpop.permute.xlu0 %1667
        %1669 = vrot.lane.b32.xlu0 %v1508, 124
        %v1670 = vpop.permute.xlu0 %1669
        %1671 = vrot.lane.b32.xlu0 %v1509, 124
        %v1672 = vpop.permute.xlu0 %1671
        %1681 = vrot.lane.b32.xlu0 %v1510, 127
        %v1682 = vpop.permute.xlu0 %1681
        %1683 = vrot.lane.b32.xlu0 %v1511, 127
        %v1684 = vpop.permute.xlu0 %1683
        %1685 = vrot.lane.b32.xlu0 %v1512, 127
        %v1686 = vpop.permute.xlu0 %1685
        %1687 = vrot.lane.b32.xlu0 %v1513, 127
        %v1688 = vpop.permute.xlu0 %1687
        %1689 = vrot.lane.b32.xlu0 %v1510, 126
        %v1690 = vpop.permute.xlu0 %1689
        %1691 = vrot.lane.b32.xlu0 %v1511, 126
        %v1692 = vpop.permute.xlu0 %1691
        %1693 = vrot.lane.b32.xlu0 %v1512, 126
        %v1694 = vpop.permute.xlu0 %1693
        %1695 = vrot.lane.b32.xlu0 %v1513, 126
        %v1696 = vpop.permute.xlu0 %1695
        %1697 = vrot.lane.b32.xlu0 %v1510, 125
        %v1698 = vpop.permute.xlu0 %1697
        %1699 = vrot.lane.b32.xlu0 %v1511, 125
        %v1700 = vpop.permute.xlu0 %1699
        %1701 = vrot.lane.b32.xlu0 %v1512, 125
        %v1702 = vpop.permute.xlu0 %1701
        %1703 = vrot.lane.b32.xlu0 %v1513, 125
        %v1704 = vpop.permute.xlu0 %1703
        %1709 = vrot.lane.b32.xlu0 %v1517, 1
        %v1710 = vpop.permute.xlu0 %1709
        %1711 = vrot.lane.b32.xlu0 %v1518, 1
        %v1712 = vpop.permute.xlu0 %1711
        %1713 = vrot.lane.b32.xlu0 %v1519, 1
        %v1714 = vpop.permute.xlu0 %1713
        %1715 = vrot.lane.b32.xlu0 %v1520, 1
        %v1716 = vpop.permute.xlu0 %1715
        %1717 = vrot.lane.b32.xlu0 %v1517, 127
        %v1718 = vpop.permute.xlu0 %1717
        %1719 = vrot.lane.b32.xlu0 %v1518, 127
        %v1720 = vpop.permute.xlu0 %1719
        %1721 = vrot.lane.b32.xlu0 %v1519, 127
        %v1722 = vpop.permute.xlu0 %1721
        %1723 = vrot.lane.b32.xlu0 %v1520, 127
        %v1724 = vpop.permute.xlu0 %1723
        %1725 = vrot.lane.b32.xlu0 %v1517, 126
        %v1726 = vpop.permute.xlu0 %1725
        %1727 = vrot.lane.b32.xlu0 %v1518, 126
        %v1728 = vpop.permute.xlu0 %1727
        %1729 = vrot.lane.b32.xlu0 %v1519, 126
        %v1730 = vpop.permute.xlu0 %1729
        %1731 = vrot.lane.b32.xlu0 %v1520, 126
        %v1732 = vpop.permute.xlu0 %1731
        %1733 = vrot.lane.b32.xlu0 %v1517, 125
        %v1734 = vpop.permute.xlu0 %1733
        %1735 = vrot.lane.b32.xlu0 %v1518, 125
        %v1736 = vpop.permute.xlu0 %1735
        %1737 = vrot.lane.b32.xlu0 %v1519, 125
        %v1738 = vpop.permute.xlu0 %1737
        %1739 = vrot.lane.b32.xlu0 %v1520, 125
        %v1740 = vpop.permute.xlu0 %1739
        %1741 = vrot.lane.b32.xlu0 %v1682, 127
        %v1742 = vpop.permute.xlu0 %1741
        %1743 = vrot.lane.b32.xlu0 %v1684, 127
        %v1744 = vpop.permute.xlu0 %1743
        %1745 = vrot.lane.b32.xlu0 %v1686, 127
        %v1746 = vpop.permute.xlu0 %1745
        %1747 = vrot.lane.b32.xlu0 %v1688, 127
        %v1748 = vpop.permute.xlu0 %1747
        %1749 = vrot.lane.b32.xlu0 %v1690, 127
        %v1750 = vpop.permute.xlu0 %1749
        %1751 = vrot.lane.b32.xlu0 %v1692, 127
        %v1752 = vpop.permute.xlu0 %1751
        %1753 = vrot.lane.b32.xlu0 %v1694, 127
        %v1754 = vpop.permute.xlu0 %1753
        %1755 = vrot.lane.b32.xlu0 %v1696, 127
        %v1756 = vpop.permute.xlu0 %1755
        %1757 = vrot.lane.b32.xlu0 %v1698, 127
        %v1758 = vpop.permute.xlu0 %1757
        %1759 = vrot.lane.b32.xlu0 %v1700, 127
        %v1760 = vpop.permute.xlu0 %1759
        %1761 = vrot.lane.b32.xlu0 %v1702, 127
        %v1762 = vpop.permute.xlu0 %1761
        %1763 = vrot.lane.b32.xlu0 %v1704, 127
        %v1764 = vpop.permute.xlu0 %1763
        %1765 = vrot.lane.b32.xlu0 %v1710, 127
        %v1766 = vpop.permute.xlu0 %1765
        %1767 = vrot.lane.b32.xlu0 %v1712, 127
        %v1768 = vpop.permute.xlu0 %1767
        %1769 = vrot.lane.b32.xlu0 %v1714, 127
        %v1770 = vpop.permute.xlu0 %1769
        %1771 = vrot.lane.b32.xlu0 %v1716, 127
        %v1772 = vpop.permute.xlu0 %1771
        %1773 = vrot.lane.b32.xlu0 %v1718, 127
        %v1774 = vpop.permute.xlu0 %1773
        %1775 = vrot.lane.b32.xlu0 %v1720, 127
        %v1776 = vpop.permute.xlu0 %1775
        %1777 = vrot.lane.b32.xlu0 %v1722, 127
        %v1778 = vpop.permute.xlu0 %1777
        %1779 = vrot.lane.b32.xlu0 %v1724, 127
        %v1780 = vpop.permute.xlu0 %1779
        %1781 = vrot.lane.b32.xlu0 %v1726, 127
        %v1782 = vpop.permute.xlu0 %1781
        %1783 = vrot.lane.b32.xlu0 %v1728, 127
        %v1784 = vpop.permute.xlu0 %1783
        %1785 = vrot.lane.b32.xlu0 %v1730, 127
        %v1786 = vpop.permute.xlu0 %1785
        %1787 = vrot.lane.b32.xlu0 %v1732, 127
        %v1788 = vpop.permute.xlu0 %1787
        %1789 = vrot.lane.b32.xlu0 %v1734, 127
        %v1790 = vpop.permute.xlu0 %1789
        %1791 = vrot.lane.b32.xlu0 %v1736, 127
        %v1792 = vpop.permute.xlu0 %1791
        %1793 = vrot.lane.b32.xlu0 %v1738, 127
        %v1794 = vpop.permute.xlu0 %1793
        %1795 = vrot.lane.b32.xlu0 %v1740, 127
        %v1796 = vpop.permute.xlu0 %1795
        %1833 = vmatprep.subr.mxu0 0.0
        %1834 = vmatpush1.msra.mxu0 %v1498
        %1835 = vmatprep.subr.mxu0 0.0
        %1836 = vmatpush1.msra.mxu0 %v1499
        %1837 = vmatprep.subr.mxu0 0.0
        %1838 = vmatpush1.msra.mxu0 %v1500
        %1839 = vmatprep.subr.mxu0 0.0
        %1840 = vmatpush1.msra.mxu0 %v1501
        %1841 = vmatprep.subr.mxu0 0.0
        %1842 = vmatpush1.msra.mxu0 %v1526
        %1843 = vmatprep.subr.mxu0 0.0
        %1844 = vmatpush1.msra.mxu0 %v1528
        %1845 = vmatprep.subr.mxu0 0.0
        %1846 = vmatpush1.msra.mxu0 %v1530
        %1847 = vmatprep.subr.mxu0 0.0
        %1848 = vmatpush1.msra.mxu0 %v1532
        %1849 = vmatprep.subr.mxu0 0.0
        %1850 = vmatpush1.msra.mxu0 %v1538
        %1851 = vmatprep.subr.mxu0 0.0
        %1852 = vmatpush1.msra.mxu0 %v1540
        %1853 = vmatprep.subr.mxu0 0.0
        %1854 = vmatpush1.msra.mxu0 %v1542
        %1855 = vmatprep.subr.mxu0 0.0
        %1856 = vmatpush1.msra.mxu0 %v1544
        %1857 = vmatprep.subr.mxu0 0.0
        %1858 = vmatpush1.msra.mxu0 %v1550
        %1859 = vmatprep.subr.mxu0 0.0
        %1860 = vmatpush1.msra.mxu0 %v1552
        %1861 = vmatprep.subr.mxu0 0.0
        %1862 = vmatpush1.msra.mxu0 %v1554
        %1863 = vmatprep.subr.mxu0 0.0
        %1864 = vmatpush1.msra.mxu0 %v1556
        %1865 = vmatprep.subr.mxu0 0.0
        %1866 = vmatpush1.msra.mxu0 %v1562
        %1867 = vmatprep.subr.mxu0 0.0
        %1868 = vmatpush1.msra.mxu0 %v1564
        %1869 = vmatprep.subr.mxu0 0.0
        %1870 = vmatpush1.msra.mxu0 %v1566
        %1871 = vmatprep.subr.mxu0 0.0
        %1872 = vmatpush1.msra.mxu0 %v1568
        %1873 = vmatprep.subr.mxu0 0.0
        %1874 = vmatpush1.msra.mxu0 %v1502
        %1875 = vmatprep.subr.mxu0 0.0
        %1876 = vmatpush1.msra.mxu0 %v1503
        %1877 = vmatprep.subr.mxu0 0.0
        %1878 = vmatpush1.msra.mxu0 %v1504
        %1879 = vmatprep.subr.mxu0 0.0
        %1880 = vmatpush1.msra.mxu0 %v1505
        %1881 = vmatprep.subr.mxu0 0.0
        %1882 = vmatpush1.msra.mxu0 %v1578
        %1883 = vmatprep.subr.mxu0 0.0
        %1884 = vmatpush1.msra.mxu0 %v1580
        %1885 = vmatprep.subr.mxu0 0.0
        %1886 = vmatpush1.msra.mxu0 %v1582
        %1887 = vmatprep.subr.mxu0 0.0
        %1888 = vmatpush1.msra.mxu0 %v1584
        %1889 = vmatprep.subr.mxu0 0.0
        %1890 = vmatpush1.msra.mxu0 %v1590
        %1891 = vmatprep.subr.mxu0 0.0
        %1892 = vmatpush1.msra.mxu0 %v1592
        %1893 = vmatprep.subr.mxu0 0.0
        %1894 = vmatpush1.msra.mxu0 %v1594
        %1895 = vmatprep.subr.mxu0 0.0
        %1896 = vmatpush1.msra.mxu0 %v1596
        %1897 = vmatprep.mubr.f32.mxu0 %v590
        %1898 = vmatmul.mubr.f32.gmra.mrb[0].mxu0 %v229
        %v1899 = vpop.f32.mrb[0].mxu0
        %v1900 = vadd.f32 %v584, %v1899
        %v1901 = vpop.f32.mrb[0].mxu0
        %1902 = vdwg.mxu0
        %1903 = vmatprep.subr.mxu0 0.0
        %1904 = vmatpush1.msra.mxu0 %v1602
        %1905 = vmatprep.subr.mxu0 0.0
        %1906 = vmatpush1.msra.mxu0 %v1604
        %1907 = vmatprep.subr.mxu0 0.0
        %1908 = vmatpush1.msra.mxu0 %v1606
        %1909 = vmatprep.subr.mxu0 0.0
        %1910 = vmatpush1.msra.mxu0 %v1608
        %1911 = vmatprep.subr.mxu0 0.0
        %1912 = vmatpush1.msra.mxu0 %v1614
        %1913 = vmatprep.subr.mxu0 0.0
        %1914 = vmatpush1.msra.mxu0 %v1616
        %1915 = vmatprep.subr.mxu0 0.0
        %1916 = vmatpush1.msra.mxu0 %v1618
        %1917 = vmatprep.subr.mxu0 0.0
        %1918 = vmatpush1.msra.mxu0 %v1620
        %1919 = vmatprep.subr.mxu0 0.0
        %1920 = vmatpush1.msra.mxu0 %v1506
        %1921 = vmatprep.subr.mxu0 0.0
        %1922 = vmatpush1.msra.mxu0 %v1507
        %1923 = vmatprep.subr.mxu0 0.0
        %1924 = vmatpush1.msra.mxu0 %v1508
        %1925 = vmatprep.subr.mxu0 0.0
        %1926 = vmatpush1.msra.mxu0 %v1509
        %1927 = vmatprep.subr.mxu0 0.0
        %1928 = vmatpush1.msra.mxu0 %v1630
        %1929 = vmatprep.subr.mxu0 0.0
        %1930 = vmatpush1.msra.mxu0 %v1632
        %1931 = vmatprep.subr.mxu0 0.0
        %1932 = vmatpush1.msra.mxu0 %v1634
        %1933 = vmatprep.subr.mxu0 0.0
        %1934 = vmatpush1.msra.mxu0 %v1636
        %1935 = vmatprep.subr.mxu0 0.0
        %1936 = vmatpush1.msra.mxu0 %v1642
        %1937 = vmatprep.subr.mxu0 0.0
        %1938 = vmatpush1.msra.mxu0 %v1644
        %1939 = vmatprep.subr.mxu0 0.0
        %1940 = vmatpush1.msra.mxu0 %v1646
        %1941 = vmatprep.subr.mxu0 0.0
        %1942 = vmatpush1.msra.mxu0 %v1648
        %1943 = vmatprep.subr.mxu0 0.0
        %1944 = vmatpush1.msra.mxu0 %v1654
        %1945 = vmatprep.subr.mxu0 0.0
        %1946 = vmatpush1.msra.mxu0 %v1656
        %1947 = vmatprep.subr.mxu0 0.0
        %1948 = vmatpush1.msra.mxu0 %v1658
        %1949 = vmatprep.subr.mxu0 0.0
        %1950 = vmatpush1.msra.mxu0 %v1660
        %1951 = vmatprep.subr.mxu0 0.0
        %1952 = vmatpush1.msra.mxu0 %v1666
        %1953 = vmatprep.subr.mxu0 0.0
        %1954 = vmatpush1.msra.mxu0 %v1668
        %1955 = vmatprep.subr.mxu0 0.0
        %1956 = vmatpush1.msra.mxu0 %v1670
        %1957 = vmatprep.subr.mxu0 0.0
        %1958 = vmatpush1.msra.mxu0 %v1672
        %1959 = vmatprep.subr.mxu0 0.0
        %1960 = vmatpush1.msra.mxu0 %v1510
        %1961 = vmatprep.subr.mxu0 0.0
        %1962 = vmatpush1.msra.mxu0 %v1511
        %1963 = vmatprep.subr.mxu0 0.0
        %1964 = vmatpush1.msra.mxu0 %v1512
        %1965 = vmatprep.subr.mxu0 0.0
        %1966 = vmatpush1.msra.mxu0 %v1513
        %1967 = vmatprep.mubr.f32.mxu0 %v591
        %1968 = vmatmul.mubr.f32.gmra.mrb[0].mxu0 %v230
        %v1969 = vpop.f32.mrb[0].mxu0
        %v1970 = vadd.f32 %v1900, %v1969
        %v1971 = vpop.f32.mrb[0].mxu0
        %1972 = vdwg.mxu0
        %1973 = vmatprep.subr.mxu0 0.0
        %1974 = vmatpush1.msra.mxu0 %v1682
        %1975 = vmatprep.subr.mxu0 0.0
        %1976 = vmatpush1.msra.mxu0 %v1684
        %1977 = vmatprep.subr.mxu0 0.0
        %1978 = vmatpush1.msra.mxu0 %v1686
        %1979 = vmatprep.subr.mxu0 0.0
        %1980 = vmatpush1.msra.mxu0 %v1688
        %1981 = vmatprep.subr.mxu0 0.0
        %1982 = vmatpush1.msra.mxu0 %v1742
        %1983 = vmatprep.subr.mxu0 0.0
        %1984 = vmatpush1.msra.mxu0 %v1744
        %1985 = vmatprep.subr.mxu0 0.0
        %1986 = vmatpush1.msra.mxu0 %v1746
        %1987 = vmatprep.subr.mxu0 0.0
        %1988 = vmatpush1.msra.mxu0 %v1748
        %1989 = vmatprep.subr.mxu0 0.0
        %1990 = vmatpush1.msra.mxu0 %v1750
        %1991 = vmatprep.subr.mxu0 0.0
        %1992 = vmatpush1.msra.mxu0 %v1752
        %1993 = vmatprep.subr.mxu0 0.0
        %1994 = vmatpush1.msra.mxu0 %v1754
        %1995 = vmatprep.subr.mxu0 0.0
        %1996 = vmatpush1.msra.mxu0 %v1756
        %1997 = vmatprep.subr.mxu0 0.0
        %1998 = vmatpush1.msra.mxu0 %v1758
        %1999 = vmatprep.subr.mxu0 0.0
        %2000 = vmatpush1.msra.mxu0 %v1760
        %2001 = vmatprep.subr.mxu0 0.0
        %2002 = vmatpush1.msra.mxu0 %v1762
        %2003 = vmatprep.subr.mxu0 0.0
        %2004 = vmatpush1.msra.mxu0 %v1764
        %2005 = vmatprep.subr.mxu0 0.0
        %2006 = vmatpush1.msra.mxu0 %v1766
        %2007 = vmatprep.subr.mxu0 0.0
        %2008 = vmatpush1.msra.mxu0 %v1768
        %2009 = vmatprep.subr.mxu0 0.0
        %2010 = vmatpush1.msra.mxu0 %v1770
        %2011 = vmatprep.subr.mxu0 0.0
        %2012 = vmatpush1.msra.mxu0 %v1772
        %2013 = vmatprep.subr.mxu0 0.0
        %2014 = vmatpush1.msra.mxu0 %v1718
        %2015 = vmatprep.subr.mxu0 0.0
        %2016 = vmatpush1.msra.mxu0 %v1720
        %2017 = vmatprep.subr.mxu0 0.0
        %2018 = vmatpush1.msra.mxu0 %v1722
        %2019 = vmatprep.subr.mxu0 0.0
        %2020 = vmatpush1.msra.mxu0 %v1724
        %2021 = vmatprep.subr.mxu0 0.0
        %2022 = vmatpush1.msra.mxu0 %v1774
        %2023 = vmatprep.subr.mxu0 0.0
        %2024 = vmatpush1.msra.mxu0 %v1776
        %2025 = vmatprep.subr.mxu0 0.0
        %2026 = vmatpush1.msra.mxu0 %v1778
        %2027 = vmatprep.subr.mxu0 0.0
        %2028 = vmatpush1.msra.mxu0 %v1780
        %2029 = vmatprep.subr.mxu0 0.0
        %2030 = vmatpush1.msra.mxu0 %v1782
        %2031 = vmatprep.subr.mxu0 0.0
        %2032 = vmatpush1.msra.mxu0 %v1784
        %2033 = vmatprep.subr.mxu0 0.0
        %2034 = vmatpush1.msra.mxu0 %v1786
        %2035 = vmatprep.subr.mxu0 0.0
        %2036 = vmatpush1.msra.mxu0 %v1788
        %2037 = vmatprep.mubr.f32.mxu0 %v592
        %2038 = vmatmul.mubr.f32.gmra.mrb[0].mxu0 %v231
        %v2039 = vpop.f32.mrb[0].mxu0
        %v2040 = vadd.f32 %v1970, %v2039
        %v2041 = vpop.f32.mrb[0].mxu0
        %2042 = vdwg.mxu0
        %2043 = vmatprep.subr.mxu0 0.0
        %2044 = vmatpush1.msra.mxu0 %v1790
        %2045 = vmatprep.subr.mxu0 0.0
        %2046 = vmatpush1.msra.mxu0 %v1792
        %2047 = vmatprep.subr.mxu0 0.0
        %2048 = vmatpush1.msra.mxu0 %v1794
        %2049 = vmatprep.subr.mxu0 0.0
        %2050 = vmatpush1.msra.mxu0 %v1796
        %2051 = vmatprep.subr.mxu0 0.0
        %2052 = vmatpush1.msra.mxu0 0.0
        %2053 = vmatprep.subr.mxu0 0.0
        %2054 = vmatpush1.msra.mxu0 0.0
        %2055 = vmatprep.subr.mxu0 0.0
        %2056 = vmatpush1.msra.mxu0 0.0
        %2057 = vmatprep.subr.mxu0 0.0
        %2058 = vmatpush1.msra.mxu0 0.0
        %2059 = vmatprep.subr.mxu0 0.0
        %2060 = vmatpush1.msra.mxu0 0.0
        %2061 = vmatprep.subr.mxu0 0.0
        %2062 = vmatpush1.msra.mxu0 0.0
        %2063 = vmatprep.subr.mxu0 0.0
        %2064 = vmatpush1.msra.mxu0 0.0
        %2065 = vmatprep.subr.mxu0 0.0
        %2066 = vmatpush1.msra.mxu0 0.0
        %2067 = vmatprep.subr.mxu0 0.0
        %2068 = vmatpush1.msra.mxu0 0.0
        %2069 = vmatprep.subr.mxu0 0.0
        %2070 = vmatpush1.msra.mxu0 0.0
        %2071 = vmatprep.subr.mxu0 0.0
        %2072 = vmatpush1.msra.mxu0 0.0
        %2073 = vmatprep.subr.mxu0 0.0
        %2074 = vmatpush1.msra.mxu0 0.0
        %2075 = vmatprep.subr.mxu0 0.0
        %2076 = vmatpush1.msra.mxu0 0.0
        %2077 = vmatprep.subr.mxu0 0.0
        %2078 = vmatpush1.msra.mxu0 0.0
        %2079 = vmatprep.subr.mxu0 0.0
        %2080 = vmatpush1.msra.mxu0 0.0
        %2081 = vmatprep.subr.mxu0 0.0
        %2082 = vmatpush1.msra.mxu0 0.0
        %2083 = vmatprep.subr.mxu0 0.0
        %2084 = vmatpush1.msra.mxu0 0.0
        %2085 = vmatprep.subr.mxu0 0.0
        %2086 = vmatpush1.msra.mxu0 0.0
        %2087 = vmatprep.subr.mxu0 0.0
        %2088 = vmatpush1.msra.mxu0 0.0
        %2089 = vmatprep.subr.mxu0 0.0
        %2090 = vmatpush1.msra.mxu0 0.0
        %2091 = vmatprep.subr.mxu0 0.0
        %2092 = vmatpush1.msra.mxu0 0.0
        %2093 = vmatprep.subr.mxu0 0.0
        %2094 = vmatpush1.msra.mxu0 0.0
        %2095 = vmatprep.subr.mxu0 0.0
        %2096 = vmatpush1.msra.mxu0 0.0
        %2097 = vmatprep.subr.mxu0 0.0
        %2098 = vmatpush1.msra.mxu0 0.0
        %2099 = vmatprep.subr.mxu0 0.0
        %2100 = vmatpush1.msra.mxu0 0.0
        %2101 = vmatprep.subr.mxu0 0.0
        %2102 = vmatpush1.msra.mxu0 0.0
        %2103 = vmatprep.subr.mxu0 0.0
        %2104 = vmatpush1.msra.mxu0 0.0
        %2105 = vmatprep.subr.mxu0 0.0
        %2106 = vmatpush1.msra.mxu0 0.0
        %2107 = vmatprep.mubr.f32.mxu0 0.0
        %2108 = vmatmul.mubr.f32.gmra.mrb[0].mxu0 %v597
        %v2109 = vpop.f32.mrb[0].mxu0
        %v2110 = vadd.f32 %v2040, %v2109
        %v2111 = vpop.f32.mrb[0].mxu0
        %2112 = vdwg.mxu0
        %s2113 = scalar_lea.vmem %s227, 8 [#allocation8]
        %2114 = vst.msk [vmem:[%s2113] sm:$0x7] %vm879, %v2110
        %v2115 = vld [vmem:[%s257] sm:$0xff]
        %v2116 = vld [vmem:[%s257 + $0x8] sm:$0xff]
        %v2117 = vld [vmem:[%s257 + $0x10] sm:$0xff]
        %v2118 = vld [vmem:[%s257 + $0x18] sm:$0xff]
        %v2119 = vld [vmem:[%s264] sm:$0xff]
        %v2120 = vld [vmem:[%s264 + $0x8] sm:$0xff]
        %v2121 = vld [vmem:[%s264 + $0x10] sm:$0xff]
        %v2122 = vld [vmem:[%s264 + $0x18] sm:$0xff]
        %v2123 = vld [vmem:[%s899] sm:$0xff]
        %v2124 = vld [vmem:[%s899 + $0x8] sm:$0xff]
        %v2125 = vld [vmem:[%s899 + $0x10] sm:$0xff]
        %v2126 = vld [vmem:[%s899 + $0x18] sm:$0xff]
        %v2127 = vld [vmem:[%s1516] sm:$0xff]
        %v2128 = vld [vmem:[%s1516 + $0x8] sm:$0xff]
        %v2129 = vld [vmem:[%s1516 + $0x10] sm:$0xff]
        %v2130 = vld [vmem:[%s1516 + $0x18] sm:$0xff]
        %s2131 = sadd.s32 %s234, 7
        %s2132 = smul.u32 %s2131, 32
        %s2133 = scalar_lea.vmem %s197, %s2132 [#allocation2]
        %v2134 = vld [vmem:[%s2133] sm:$0xff]
        %v2135 = vld [vmem:[%s2133 + $0x8] sm:$0xff]
        %v2136 = vld [vmem:[%s2133 + $0x10] sm:$0xff]
        %v2137 = vld [vmem:[%s2133 + $0x18] sm:$0xff]
        %2142 = vrot.lane.b32.xlu0 %v2115, 127
        %v2143 = vpop.permute.xlu0 %2142
        %2144 = vrot.lane.b32.xlu0 %v2116, 127
        %v2145 = vpop.permute.xlu0 %2144
        %2146 = vrot.lane.b32.xlu0 %v2117, 127
        %v2147 = vpop.permute.xlu0 %2146
        %2148 = vrot.lane.b32.xlu0 %v2118, 127
        %v2149 = vpop.permute.xlu0 %2148
        %2154 = vrot.lane.b32.xlu0 %v2115, 126
        %v2155 = vpop.permute.xlu0 %2154
        %2156 = vrot.lane.b32.xlu0 %v2116, 126
        %v2157 = vpop.permute.xlu0 %2156
        %2158 = vrot.lane.b32.xlu0 %v2117, 126
        %v2159 = vpop.permute.xlu0 %2158
        %2160 = vrot.lane.b32.xlu0 %v2118, 126
        %v2161 = vpop.permute.xlu0 %2160
        %2166 = vrot.lane.b32.xlu0 %v2115, 125
        %v2167 = vpop.permute.xlu0 %2166
        %2168 = vrot.lane.b32.xlu0 %v2116, 125
        %v2169 = vpop.permute.xlu0 %2168
        %2170 = vrot.lane.b32.xlu0 %v2117, 125
        %v2171 = vpop.permute.xlu0 %2170
        %2172 = vrot.lane.b32.xlu0 %v2118, 125
        %v2173 = vpop.permute.xlu0 %2172
        %2178 = vrot.lane.b32.xlu0 %v2115, 124
        %v2179 = vpop.permute.xlu0 %2178
        %2180 = vrot.lane.b32.xlu0 %v2116, 124
        %v2181 = vpop.permute.xlu0 %2180
        %2182 = vrot.lane.b32.xlu0 %v2117, 124
        %v2183 = vpop.permute.xlu0 %2182
        %2184 = vrot.lane.b32.xlu0 %v2118, 124
        %v2185 = vpop.permute.xlu0 %2184
        %2194 = vrot.lane.b32.xlu0 %v2119, 127
        %v2195 = vpop.permute.xlu0 %2194
        %2196 = vrot.lane.b32.xlu0 %v2120, 127
        %v2197 = vpop.permute.xlu0 %2196
        %2198 = vrot.lane.b32.xlu0 %v2121, 127
        %v2199 = vpop.permute.xlu0 %2198
        %2200 = vrot.lane.b32.xlu0 %v2122, 127
        %v2201 = vpop.permute.xlu0 %2200
        %2206 = vrot.lane.b32.xlu0 %v2119, 126
        %v2207 = vpop.permute.xlu0 %2206
        %2208 = vrot.lane.b32.xlu0 %v2120, 126
        %v2209 = vpop.permute.xlu0 %2208
        %2210 = vrot.lane.b32.xlu0 %v2121, 126
        %v2211 = vpop.permute.xlu0 %2210
        %2212 = vrot.lane.b32.xlu0 %v2122, 126
        %v2213 = vpop.permute.xlu0 %2212
        %2218 = vrot.lane.b32.xlu0 %v2119, 125
        %v2219 = vpop.permute.xlu0 %2218
        %2220 = vrot.lane.b32.xlu0 %v2120, 125
        %v2221 = vpop.permute.xlu0 %2220
        %2222 = vrot.lane.b32.xlu0 %v2121, 125
        %v2223 = vpop.permute.xlu0 %2222
        %2224 = vrot.lane.b32.xlu0 %v2122, 125
        %v2225 = vpop.permute.xlu0 %2224
        %2230 = vrot.lane.b32.xlu0 %v2119, 124
        %v2231 = vpop.permute.xlu0 %2230
        %2232 = vrot.lane.b32.xlu0 %v2120, 124
        %v2233 = vpop.permute.xlu0 %2232
        %2234 = vrot.lane.b32.xlu0 %v2121, 124
        %v2235 = vpop.permute.xlu0 %2234
        %2236 = vrot.lane.b32.xlu0 %v2122, 124
        %v2237 = vpop.permute.xlu0 %2236
        %2246 = vrot.lane.b32.xlu0 %v2123, 127
        %v2247 = vpop.permute.xlu0 %2246
        %2248 = vrot.lane.b32.xlu0 %v2124, 127
        %v2249 = vpop.permute.xlu0 %2248
        %2250 = vrot.lane.b32.xlu0 %v2125, 127
        %v2251 = vpop.permute.xlu0 %2250
        %2252 = vrot.lane.b32.xlu0 %v2126, 127
        %v2253 = vpop.permute.xlu0 %2252
        %2258 = vrot.lane.b32.xlu0 %v2123, 126
        %v2259 = vpop.permute.xlu0 %2258
        %2260 = vrot.lane.b32.xlu0 %v2124, 126
        %v2261 = vpop.permute.xlu0 %2260
        %2262 = vrot.lane.b32.xlu0 %v2125, 126
        %v2263 = vpop.permute.xlu0 %2262
        %2264 = vrot.lane.b32.xlu0 %v2126, 126
        %v2265 = vpop.permute.xlu0 %2264
        %2270 = vrot.lane.b32.xlu0 %v2123, 125
        %v2271 = vpop.permute.xlu0 %2270
        %2272 = vrot.lane.b32.xlu0 %v2124, 125
        %v2273 = vpop.permute.xlu0 %2272
        %2274 = vrot.lane.b32.xlu0 %v2125, 125
        %v2275 = vpop.permute.xlu0 %2274
        %2276 = vrot.lane.b32.xlu0 %v2126, 125
        %v2277 = vpop.permute.xlu0 %2276
        %2282 = vrot.lane.b32.xlu0 %v2123, 124
        %v2283 = vpop.permute.xlu0 %2282
        %2284 = vrot.lane.b32.xlu0 %v2124, 124
        %v2285 = vpop.permute.xlu0 %2284
        %2286 = vrot.lane.b32.xlu0 %v2125, 124
        %v2287 = vpop.permute.xlu0 %2286
        %2288 = vrot.lane.b32.xlu0 %v2126, 124
        %v2289 = vpop.permute.xlu0 %2288
        %2298 = vrot.lane.b32.xlu0 %v2127, 127
        %v2299 = vpop.permute.xlu0 %2298
        %2300 = vrot.lane.b32.xlu0 %v2128, 127
        %v2301 = vpop.permute.xlu0 %2300
        %2302 = vrot.lane.b32.xlu0 %v2129, 127
        %v2303 = vpop.permute.xlu0 %2302
        %2304 = vrot.lane.b32.xlu0 %v2130, 127
        %v2305 = vpop.permute.xlu0 %2304
        %2306 = vrot.lane.b32.xlu0 %v2127, 126
        %v2307 = vpop.permute.xlu0 %2306
        %2308 = vrot.lane.b32.xlu0 %v2128, 126
        %v2309 = vpop.permute.xlu0 %2308
        %2310 = vrot.lane.b32.xlu0 %v2129, 126
        %v2311 = vpop.permute.xlu0 %2310
        %2312 = vrot.lane.b32.xlu0 %v2130, 126
        %v2313 = vpop.permute.xlu0 %2312
        %2314 = vrot.lane.b32.xlu0 %v2127, 125
        %v2315 = vpop.permute.xlu0 %2314
        %2316 = vrot.lane.b32.xlu0 %v2128, 125
        %v2317 = vpop.permute.xlu0 %2316
        %2318 = vrot.lane.b32.xlu0 %v2129, 125
        %v2319 = vpop.permute.xlu0 %2318
        %2320 = vrot.lane.b32.xlu0 %v2130, 125
        %v2321 = vpop.permute.xlu0 %2320
        %2326 = vrot.lane.b32.xlu0 %v2134, 1
        %v2327 = vpop.permute.xlu0 %2326
        %2328 = vrot.lane.b32.xlu0 %v2135, 1
        %v2329 = vpop.permute.xlu0 %2328
        %2330 = vrot.lane.b32.xlu0 %v2136, 1
        %v2331 = vpop.permute.xlu0 %2330
        %2332 = vrot.lane.b32.xlu0 %v2137, 1
        %v2333 = vpop.permute.xlu0 %2332
        %2334 = vrot.lane.b32.xlu0 %v2134, 127
        %v2335 = vpop.permute.xlu0 %2334
        %2336 = vrot.lane.b32.xlu0 %v2135, 127
        %v2337 = vpop.permute.xlu0 %2336
        %2338 = vrot.lane.b32.xlu0 %v2136, 127
        %v2339 = vpop.permute.xlu0 %2338
        %2340 = vrot.lane.b32.xlu0 %v2137, 127
        %v2341 = vpop.permute.xlu0 %2340
        %2342 = vrot.lane.b32.xlu0 %v2134, 126
        %v2343 = vpop.permute.xlu0 %2342
        %2344 = vrot.lane.b32.xlu0 %v2135, 126
        %v2345 = vpop.permute.xlu0 %2344
        %2346 = vrot.lane.b32.xlu0 %v2136, 126
        %v2347 = vpop.permute.xlu0 %2346
        %2348 = vrot.lane.b32.xlu0 %v2137, 126
        %v2349 = vpop.permute.xlu0 %2348
        %2350 = vrot.lane.b32.xlu0 %v2134, 125
        %v2351 = vpop.permute.xlu0 %2350
        %2352 = vrot.lane.b32.xlu0 %v2135, 125
        %v2353 = vpop.permute.xlu0 %2352
        %2354 = vrot.lane.b32.xlu0 %v2136, 125
        %v2355 = vpop.permute.xlu0 %2354
        %2356 = vrot.lane.b32.xlu0 %v2137, 125
        %v2357 = vpop.permute.xlu0 %2356
        %2358 = vrot.lane.b32.xlu0 %v2299, 127
        %v2359 = vpop.permute.xlu0 %2358
        %2360 = vrot.lane.b32.xlu0 %v2301, 127
        %v2361 = vpop.permute.xlu0 %2360
        %2362 = vrot.lane.b32.xlu0 %v2303, 127
        %v2363 = vpop.permute.xlu0 %2362
        %2364 = vrot.lane.b32.xlu0 %v2305, 127
        %v2365 = vpop.permute.xlu0 %2364
        %2366 = vrot.lane.b32.xlu0 %v2307, 127
        %v2367 = vpop.permute.xlu0 %2366
        %2368 = vrot.lane.b32.xlu0 %v2309, 127
        %v2369 = vpop.permute.xlu0 %2368
        %2370 = vrot.lane.b32.xlu0 %v2311, 127
        %v2371 = vpop.permute.xlu0 %2370
        %2372 = vrot.lane.b32.xlu0 %v2313, 127
        %v2373 = vpop.permute.xlu0 %2372
        %2374 = vrot.lane.b32.xlu0 %v2315, 127
        %v2375 = vpop.permute.xlu0 %2374
        %2376 = vrot.lane.b32.xlu0 %v2317, 127
        %v2377 = vpop.permute.xlu0 %2376
        %2378 = vrot.lane.b32.xlu0 %v2319, 127
        %v2379 = vpop.permute.xlu0 %2378
        %2380 = vrot.lane.b32.xlu0 %v2321, 127
        %v2381 = vpop.permute.xlu0 %2380
        %2382 = vrot.lane.b32.xlu0 %v2327, 127
        %v2383 = vpop.permute.xlu0 %2382
        %2384 = vrot.lane.b32.xlu0 %v2329, 127
        %v2385 = vpop.permute.xlu0 %2384
        %2386 = vrot.lane.b32.xlu0 %v2331, 127
        %v2387 = vpop.permute.xlu0 %2386
        %2388 = vrot.lane.b32.xlu0 %v2333, 127
        %v2389 = vpop.permute.xlu0 %2388
        %2390 = vrot.lane.b32.xlu0 %v2335, 127
        %v2391 = vpop.permute.xlu0 %2390
        %2392 = vrot.lane.b32.xlu0 %v2337, 127
        %v2393 = vpop.permute.xlu0 %2392
        %2394 = vrot.lane.b32.xlu0 %v2339, 127
        %v2395 = vpop.permute.xlu0 %2394
        %2396 = vrot.lane.b32.xlu0 %v2341, 127
        %v2397 = vpop.permute.xlu0 %2396
        %2398 = vrot.lane.b32.xlu0 %v2343, 127
        %v2399 = vpop.permute.xlu0 %2398
        %2400 = vrot.lane.b32.xlu0 %v2345, 127
        %v2401 = vpop.permute.xlu0 %2400
        %2402 = vrot.lane.b32.xlu0 %v2347, 127
        %v2403 = vpop.permute.xlu0 %2402
        %2404 = vrot.lane.b32.xlu0 %v2349, 127
        %v2405 = vpop.permute.xlu0 %2404
        %2406 = vrot.lane.b32.xlu0 %v2351, 127
        %v2407 = vpop.permute.xlu0 %2406
        %2408 = vrot.lane.b32.xlu0 %v2353, 127
        %v2409 = vpop.permute.xlu0 %2408
        %2410 = vrot.lane.b32.xlu0 %v2355, 127
        %v2411 = vpop.permute.xlu0 %2410
        %2412 = vrot.lane.b32.xlu0 %v2357, 127
        %v2413 = vpop.permute.xlu0 %2412
        %2450 = vmatprep.subr.mxu0 0.0
        %2451 = vmatpush1.msra.mxu0 %v2115
        %2452 = vmatprep.subr.mxu0 0.0
        %2453 = vmatpush1.msra.mxu0 %v2116
        %2454 = vmatprep.subr.mxu0 0.0
        %2455 = vmatpush1.msra.mxu0 %v2117
        %2456 = vmatprep.subr.mxu0 0.0
        %2457 = vmatpush1.msra.mxu0 %v2118
        %2458 = vmatprep.subr.mxu0 0.0
        %2459 = vmatpush1.msra.mxu0 %v2143
        %2460 = vmatprep.subr.mxu0 0.0
        %2461 = vmatpush1.msra.mxu0 %v2145
        %2462 = vmatprep.subr.mxu0 0.0
        %2463 = vmatpush1.msra.mxu0 %v2147
        %2464 = vmatprep.subr.mxu0 0.0
        %2465 = vmatpush1.msra.mxu0 %v2149
        %2466 = vmatprep.subr.mxu0 0.0
        %2467 = vmatpush1.msra.mxu0 %v2155
        %2468 = vmatprep.subr.mxu0 0.0
        %2469 = vmatpush1.msra.mxu0 %v2157
        %2470 = vmatprep.subr.mxu0 0.0
        %2471 = vmatpush1.msra.mxu0 %v2159
        %2472 = vmatprep.subr.mxu0 0.0
        %2473 = vmatpush1.msra.mxu0 %v2161
        %2474 = vmatprep.subr.mxu0 0.0
        %2475 = vmatpush1.msra.mxu0 %v2167
        %2476 = vmatprep.subr.mxu0 0.0
        %2477 = vmatpush1.msra.mxu0 %v2169
        %2478 = vmatprep.subr.mxu0 0.0
        %2479 = vmatpush1.msra.mxu0 %v2171
        %2480 = vmatprep.subr.mxu0 0.0
        %2481 = vmatpush1.msra.mxu0 %v2173
        %2482 = vmatprep.subr.mxu0 0.0
        %2483 = vmatpush1.msra.mxu0 %v2179
        %2484 = vmatprep.subr.mxu0 0.0
        %2485 = vmatpush1.msra.mxu0 %v2181
        %2486 = vmatprep.subr.mxu0 0.0
        %2487 = vmatpush1.msra.mxu0 %v2183
        %2488 = vmatprep.subr.mxu0 0.0
        %2489 = vmatpush1.msra.mxu0 %v2185
        %2490 = vmatprep.subr.mxu0 0.0
        %2491 = vmatpush1.msra.mxu0 %v2119
        %2492 = vmatprep.subr.mxu0 0.0
        %2493 = vmatpush1.msra.mxu0 %v2120
        %2494 = vmatprep.subr.mxu0 0.0
        %2495 = vmatpush1.msra.mxu0 %v2121
        %2496 = vmatprep.subr.mxu0 0.0
        %2497 = vmatpush1.msra.mxu0 %v2122
        %2498 = vmatprep.subr.mxu0 0.0
        %2499 = vmatpush1.msra.mxu0 %v2195
        %2500 = vmatprep.subr.mxu0 0.0
        %2501 = vmatpush1.msra.mxu0 %v2197
        %2502 = vmatprep.subr.mxu0 0.0
        %2503 = vmatpush1.msra.mxu0 %v2199
        %2504 = vmatprep.subr.mxu0 0.0
        %2505 = vmatpush1.msra.mxu0 %v2201
        %2506 = vmatprep.subr.mxu0 0.0
        %2507 = vmatpush1.msra.mxu0 %v2207
        %2508 = vmatprep.subr.mxu0 0.0
        %2509 = vmatpush1.msra.mxu0 %v2209
        %2510 = vmatprep.subr.mxu0 0.0
        %2511 = vmatpush1.msra.mxu0 %v2211
        %2512 = vmatprep.subr.mxu0 0.0
        %2513 = vmatpush1.msra.mxu0 %v2213
        %2514 = vmatprep.mubr.f32.mxu0 %v590
        %2515 = vmatmul.mubr.f32.gmra.mrb[0].mxu0 %v229
        %v2516 = vpop.f32.mrb[0].mxu0
        %v2517 = vadd.f32 %v584, %v2516
        %v2518 = vpop.f32.mrb[0].mxu0
        %2519 = vdwg.mxu0
        %2520 = vmatprep.subr.mxu0 0.0
        %2521 = vmatpush1.msra.mxu0 %v2219
        %2522 = vmatprep.subr.mxu0 0.0
        %2523 = vmatpush1.msra.mxu0 %v2221
        %2524 = vmatprep.subr.mxu0 0.0
        %2525 = vmatpush1.msra.mxu0 %v2223
        %2526 = vmatprep.subr.mxu0 0.0
        %2527 = vmatpush1.msra.mxu0 %v2225
        %2528 = vmatprep.subr.mxu0 0.0
        %2529 = vmatpush1.msra.mxu0 %v2231
        %2530 = vmatprep.subr.mxu0 0.0
        %2531 = vmatpush1.msra.mxu0 %v2233
        %2532 = vmatprep.subr.mxu0 0.0
        %2533 = vmatpush1.msra.mxu0 %v2235
        %2534 = vmatprep.subr.mxu0 0.0
        %2535 = vmatpush1.msra.mxu0 %v2237
        %2536 = vmatprep.subr.mxu0 0.0
        %2537 = vmatpush1.msra.mxu0 %v2123
        %2538 = vmatprep.subr.mxu0 0.0
        %2539 = vmatpush1.msra.mxu0 %v2124
        %2540 = vmatprep.subr.mxu0 0.0
        %2541 = vmatpush1.msra.mxu0 %v2125
        %2542 = vmatprep.subr.mxu0 0.0
        %2543 = vmatpush1.msra.mxu0 %v2126
        %2544 = vmatprep.subr.mxu0 0.0
        %2545 = vmatpush1.msra.mxu0 %v2247
        %2546 = vmatprep.subr.mxu0 0.0
        %2547 = vmatpush1.msra.mxu0 %v2249
        %2548 = vmatprep.subr.mxu0 0.0
        %2549 = vmatpush1.msra.mxu0 %v2251
        %2550 = vmatprep.subr.mxu0 0.0
        %2551 = vmatpush1.msra.mxu0 %v2253
        %2552 = vmatprep.subr.mxu0 0.0
        %2553 = vmatpush1.msra.mxu0 %v2259
        %2554 = vmatprep.subr.mxu0 0.0
        %2555 = vmatpush1.msra.mxu0 %v2261
        %2556 = vmatprep.subr.mxu0 0.0
        %2557 = vmatpush1.msra.mxu0 %v2263
        %2558 = vmatprep.subr.mxu0 0.0
        %2559 = vmatpush1.msra.mxu0 %v2265
        %2560 = vmatprep.subr.mxu0 0.0
        %2561 = vmatpush1.msra.mxu0 %v2271
        %2562 = vmatprep.subr.mxu0 0.0
        %2563 = vmatpush1.msra.mxu0 %v2273
        %2564 = vmatprep.subr.mxu0 0.0
        %2565 = vmatpush1.msra.mxu0 %v2275
        %2566 = vmatprep.subr.mxu0 0.0
        %2567 = vmatpush1.msra.mxu0 %v2277
        %2568 = vmatprep.subr.mxu0 0.0
        %2569 = vmatpush1.msra.mxu0 %v2283
        %2570 = vmatprep.subr.mxu0 0.0
        %2571 = vmatpush1.msra.mxu0 %v2285
        %2572 = vmatprep.subr.mxu0 0.0
        %2573 = vmatpush1.msra.mxu0 %v2287
        %2574 = vmatprep.subr.mxu0 0.0
        %2575 = vmatpush1.msra.mxu0 %v2289
        %2576 = vmatprep.subr.mxu0 0.0
        %2577 = vmatpush1.msra.mxu0 %v2127
        %2578 = vmatprep.subr.mxu0 0.0
        %2579 = vmatpush1.msra.mxu0 %v2128
        %2580 = vmatprep.subr.mxu0 0.0
        %2581 = vmatpush1.msra.mxu0 %v2129
        %2582 = vmatprep.subr.mxu0 0.0
        %2583 = vmatpush1.msra.mxu0 %v2130
        %2584 = vmatprep.mubr.f32.mxu0 %v591
        %2585 = vmatmul.mubr.f32.gmra.mrb[0].mxu0 %v230
        %v2586 = vpop.f32.mrb[0].mxu0
        %v2587 = vadd.f32 %v2517, %v2586
        %v2588 = vpop.f32.mrb[0].mxu0
        %2589 = vdwg.mxu0
        %2590 = vmatprep.subr.mxu0 0.0
        %2591 = vmatpush1.msra.mxu0 %v2299
        %2592 = vmatprep.subr.mxu0 0.0
        %2593 = vmatpush1.msra.mxu0 %v2301
        %2594 = vmatprep.subr.mxu0 0.0
        %2595 = vmatpush1.msra.mxu0 %v2303
        %2596 = vmatprep.subr.mxu0 0.0
        %2597 = vmatpush1.msra.mxu0 %v2305
        %2598 = vmatprep.subr.mxu0 0.0
        %2599 = vmatpush1.msra.mxu0 %v2359
        %2600 = vmatprep.subr.mxu0 0.0
        %2601 = vmatpush1.msra.mxu0 %v2361
        %2602 = vmatprep.subr.mxu0 0.0
        %2603 = vmatpush1.msra.mxu0 %v2363
        %2604 = vmatprep.subr.mxu0 0.0
        %2605 = vmatpush1.msra.mxu0 %v2365
        %2606 = vmatprep.subr.mxu0 0.0
        %2607 = vmatpush1.msra.mxu0 %v2367
        %2608 = vmatprep.subr.mxu0 0.0
        %2609 = vmatpush1.msra.mxu0 %v2369
        %2610 = vmatprep.subr.mxu0 0.0
        %2611 = vmatpush1.msra.mxu0 %v2371
        %2612 = vmatprep.subr.mxu0 0.0
        %2613 = vmatpush1.msra.mxu0 %v2373
        %2614 = vmatprep.subr.mxu0 0.0
        %2615 = vmatpush1.msra.mxu0 %v2375
        %2616 = vmatprep.subr.mxu0 0.0
        %2617 = vmatpush1.msra.mxu0 %v2377
        %2618 = vmatprep.subr.mxu0 0.0
        %2619 = vmatpush1.msra.mxu0 %v2379
        %2620 = vmatprep.subr.mxu0 0.0
        %2621 = vmatpush1.msra.mxu0 %v2381
        %2622 = vmatprep.subr.mxu0 0.0
        %2623 = vmatpush1.msra.mxu0 %v2383
        %2624 = vmatprep.subr.mxu0 0.0
        %2625 = vmatpush1.msra.mxu0 %v2385
        %2626 = vmatprep.subr.mxu0 0.0
        %2627 = vmatpush1.msra.mxu0 %v2387
        %2628 = vmatprep.subr.mxu0 0.0
        %2629 = vmatpush1.msra.mxu0 %v2389
        %2630 = vmatprep.subr.mxu0 0.0
        %2631 = vmatpush1.msra.mxu0 %v2335
        %2632 = vmatprep.subr.mxu0 0.0
        %2633 = vmatpush1.msra.mxu0 %v2337
        %2634 = vmatprep.subr.mxu0 0.0
        %2635 = vmatpush1.msra.mxu0 %v2339
        %2636 = vmatprep.subr.mxu0 0.0
        %2637 = vmatpush1.msra.mxu0 %v2341
        %2638 = vmatprep.subr.mxu0 0.0
        %2639 = vmatpush1.msra.mxu0 %v2391
        %2640 = vmatprep.subr.mxu0 0.0
        %2641 = vmatpush1.msra.mxu0 %v2393
        %2642 = vmatprep.subr.mxu0 0.0
        %2643 = vmatpush1.msra.mxu0 %v2395
        %2644 = vmatprep.subr.mxu0 0.0
        %2645 = vmatpush1.msra.mxu0 %v2397
        %2646 = vmatprep.subr.mxu0 0.0
        %2647 = vmatpush1.msra.mxu0 %v2399
        %2648 = vmatprep.subr.mxu0 0.0
        %2649 = vmatpush1.msra.mxu0 %v2401
        %2650 = vmatprep.subr.mxu0 0.0
        %2651 = vmatpush1.msra.mxu0 %v2403
        %2652 = vmatprep.subr.mxu0 0.0
        %2653 = vmatpush1.msra.mxu0 %v2405
        %2654 = vmatprep.mubr.f32.mxu0 %v592
        %2655 = vmatmul.mubr.f32.gmra.mrb[0].mxu0 %v231
        %v2656 = vpop.f32.mrb[0].mxu0
        %v2657 = vadd.f32 %v2587, %v2656
        %v2658 = vpop.f32.mrb[0].mxu0
        %2659 = vdwg.mxu0
        %2660 = vmatprep.subr.mxu0 0.0
        %2661 = vmatpush1.msra.mxu0 %v2407
        %2662 = vmatprep.subr.mxu0 0.0
        %2663 = vmatpush1.msra.mxu0 %v2409
        %2664 = vmatprep.subr.mxu0 0.0
        %2665 = vmatpush1.msra.mxu0 %v2411
        %2666 = vmatprep.subr.mxu0 0.0
        %2667 = vmatpush1.msra.mxu0 %v2413
        %2668 = vmatprep.subr.mxu0 0.0
        %2669 = vmatpush1.msra.mxu0 0.0
        %2670 = vmatprep.subr.mxu0 0.0
        %2671 = vmatpush1.msra.mxu0 0.0
        %2672 = vmatprep.subr.mxu0 0.0
        %2673 = vmatpush1.msra.mxu0 0.0
        %2674 = vmatprep.subr.mxu0 0.0
        %2675 = vmatpush1.msra.mxu0 0.0
        %2676 = vmatprep.subr.mxu0 0.0
        %2677 = vmatpush1.msra.mxu0 0.0
        %2678 = vmatprep.subr.mxu0 0.0
        %2679 = vmatpush1.msra.mxu0 0.0
        %2680 = vmatprep.subr.mxu0 0.0
        %2681 = vmatpush1.msra.mxu0 0.0
        %2682 = vmatprep.subr.mxu0 0.0
        %2683 = vmatpush1.msra.mxu0 0.0
        %2684 = vmatprep.subr.mxu0 0.0
        %2685 = vmatpush1.msra.mxu0 0.0
        %2686 = vmatprep.subr.mxu0 0.0
        %2687 = vmatpush1.msra.mxu0 0.0
        %2688 = vmatprep.subr.mxu0 0.0
        %2689 = vmatpush1.msra.mxu0 0.0
        %2690 = vmatprep.subr.mxu0 0.0
        %2691 = vmatpush1.msra.mxu0 0.0
        %2692 = vmatprep.subr.mxu0 0.0
        %2693 = vmatpush1.msra.mxu0 0.0
        %2694 = vmatprep.subr.mxu0 0.0
        %2695 = vmatpush1.msra.mxu0 0.0
        %2696 = vmatprep.subr.mxu0 0.0
        %2697 = vmatpush1.msra.mxu0 0.0
        %2698 = vmatprep.subr.mxu0 0.0
        %2699 = vmatpush1.msra.mxu0 0.0
        %2700 = vmatprep.subr.mxu0 0.0
        %2701 = vmatpush1.msra.mxu0 0.0
        %2702 = vmatprep.subr.mxu0 0.0
        %2703 = vmatpush1.msra.mxu0 0.0
        %2704 = vmatprep.subr.mxu0 0.0
        %2705 = vmatpush1.msra.mxu0 0.0
        %2706 = vmatprep.subr.mxu0 0.0
        %2707 = vmatpush1.msra.mxu0 0.0
        %2708 = vmatprep.subr.mxu0 0.0
        %2709 = vmatpush1.msra.mxu0 0.0
        %2710 = vmatprep.subr.mxu0 0.0
        %2711 = vmatpush1.msra.mxu0 0.0
        %2712 = vmatprep.subr.mxu0 0.0
        %2713 = vmatpush1.msra.mxu0 0.0
        %2714 = vmatprep.subr.mxu0 0.0
        %2715 = vmatpush1.msra.mxu0 0.0
        %2716 = vmatprep.subr.mxu0 0.0
        %2717 = vmatpush1.msra.mxu0 0.0
        %2718 = vmatprep.subr.mxu0 0.0
        %2719 = vmatpush1.msra.mxu0 0.0
        %2720 = vmatprep.subr.mxu0 0.0
        %2721 = vmatpush1.msra.mxu0 0.0
        %2722 = vmatprep.subr.mxu0 0.0
        %2723 = vmatpush1.msra.mxu0 0.0
        %2724 = vmatprep.mubr.f32.mxu0 0.0
        %2725 = vmatmul.mubr.f32.gmra.mrb[0].mxu0 %v597
        %v2726 = vpop.f32.mrb[0].mxu0
        %v2727 = vadd.f32 %v2657, %v2726
        %v2728 = vpop.f32.mrb[0].mxu0
        %2729 = vdwg.mxu0
        %s2730 = scalar_lea.vmem %s227, 12 [#allocation8]
        %2731 = vst.msk [vmem:[%s2730] sm:$0x7] %vm879, %v2727
        %s2732 = sand.u32 %s111, 1
        %s2733 = scalar_lea.sflag [#allocation4], %s2732
        %s2734 = sand.u32 %s111, 1
        %s2735 = smul.addr %s2734, 16
        %s2736 = scalar_lea.vmem [#allocation8], %s2735
        // Predicated region
        $region45: #{srcnn_forward.3} parent=31 // pred_check
          %p2737 = pneg %p121
        $region46: #{srcnn_forward.3} parent=31 // pred_check_branch
          %2739 = sbr.rel (%p2737) target = $region48
        $region47: #{srcnn_forward.3} parent=31 // pred_region
          %s2740 = smul.u32 4, %s26
          %s2742 = ssub.s32 256, 256
          %2743 = vsyncadd %s2733, %s2742
          %s2744 = smul.addr %s25, 8
          %s2745 = sadd.s32 %s2740, %s2744
          %s2746 = smul.addr %s2745, 64
          %s2747 = scalar_lea.hbm %s3, %s2746
          %s2748 = sshll.u32 %s2736, 4
          %s2749 = int_to_ptr.vmem [resolvable:$true] %s2748
          %2754 = dma.vmem_to_hbm [thread:$0]  %s2749, 256, %s2747, %s2733, 64, 64, 4
        $region48: #{srcnn_forward.3} parent=31 // pred_fallthru
          _
      $region32: #{srcnn_forward.3} parent=5 // pred_fallthru
        _
      %p2755 = scmp.le.s32.totalorder 2, %s16
      // Predicated region
      $region49: #{srcnn_forward.3} parent=5 // pred_check
        %p2756 = pneg %p2755
      $region50: #{srcnn_forward.3} parent=5 // pred_check_branch
        %2758 = sbr.rel (%p2756) target = $region52
      $region51: #{srcnn_forward.3} parent=5 // pred_region
        %s2759 = ssub.s32 %s16, 2
        // Predicated region
        $region53: #{srcnn_forward.3} parent=51 // pred_check
          %p2760 = pneg %p127
        $region54: #{srcnn_forward.3} parent=51 // pred_check_branch
          %2762 = sbr.rel (%p2760) target = $region56
        $region55: #{srcnn_forward.3} parent=51 // pred_region
          %s2763 = sand.u32 %s112, 1
          %s2764 = scalar_lea.sflag [#allocation4], %s2763
          %s2765 = sand.u32 %s112, 1
          %s2766 = smul.addr %s2765, 16
          %s2767 = scalar_lea.vmem [#allocation8], %s2766
          %2768 = dma.done %s2764, 256
        $region56: #{srcnn_forward.3} parent=51 // pred_fallthru
          _
      $region52: #{srcnn_forward.3} parent=5 // pred_fallthru
        _
    $region6: #{srcnn_forward.3} parent=1 // loop_footer
      %s20 = sadd.s32 1, %s16
    $region7: #{srcnn_forward.3} parent=1 // loop_footer_branch
      %15 = sbr.rel target = $region3
    $region8: #{srcnn_forward.3} parent=1 // loop_exit
      _
    %2769 = vsyncpa [#allocation3], 1
    %s2770 = scalar_lea.sflag [#allocation3], 1
    %2771 = vsyncpa %s2770, 1
    %2772 = vsyncpa [#allocation6], 1
    %2773 = vsyncpa [#allocation4], 1
    %s2774 = scalar_lea.sflag [#allocation4], 1
    %2775 = vsyncpa %s2774, 1

// kernel: srcnn_forward.2
$region0: #{srcnn_forward.2}
  #allocation0 [shape = 'u32[]', space=smem, size = 0x4, offset = 0x4, fixed_abs, tag = 'smem constant byte address 0x4 - core index']
  #allocation1 [shape = 'u32[144,128]{1,0:T(1,128)}', space=vmem, size = 0x12000, scoped, tag = 'internal scratch']
  %s0 = inlined_call_operand.hbm [shape: f32[2,20,8,20], index: 0, kind: input, shape index: {}]
  %s1 = inlined_call_operand.hbm [shape: f32[64,648], index: 1, kind: input, shape index: {}]
  %s2 = inlined_call_operand.hbm [shape: f32[64,1], index: 2, kind: input, shape index: {}]
  %s3 = inlined_call_operand.hbm [shape: f32[32,64], index: 3, kind: input, shape index: {}]
  %s4 = inlined_call_operand.hbm [shape: f32[32,1], index: 4, kind: input, shape index: {}]
  %s5 = inlined_call_operand.hbm [shape: f32[2,12,32,12], index: 5, kind: output, shape index: {}]
  %s6 = sld [smem:[#allocation0]]
  $region73: #{srcnn_forward.2} parent=0
    _
  %s8 = ssub.s32 1, %s6
  %s9 = scalar_select 0, %s8, %s6
  $region1: #{srcnn_forward.2} parent=0
    #allocation2 [shape = 'u8[163840]{0}', space=vmem, size = 0x28000, scoped, tag = 'input window, operand 0']
    #allocation3 [shape = 's32[2]{0}', space=sflag, size = 0x8, scoped, tag = 'scoped memory for srcnn_forward.2']
    #allocation4 [shape = 's32[2]{0}', space=sflag, size = 0x8, scoped, tag = 'scoped memory for srcnn_forward.2']
    #allocation5 [shape = 'u8[196608]{0}', space=vmem, size = 0x30000, scoped, tag = 'input window, operand 1, single buffered']
    #allocation6 [shape = 's32[1]{0}', space=sflag, size = 0x4, scoped, tag = 'scoped memory for srcnn_forward.2']
    #allocation7 [shape = 'u8[32768]{0}', space=vmem, size = 0x8000, scoped, tag = 'input window, operand 2, single buffered']
    #allocation8 [shape = 'u8[16384]{0}', space=vmem, size = 0x4000, scoped, tag = 'input window, operand 3, single buffered']
    #allocation9 [shape = 's32[1]{0}', space=sflag, size = 0x4, scoped, tag = 'scoped memory for srcnn_forward.2']
    #allocation10 [shape = 'u8[16384]{0}', space=vmem, size = 0x4000, scoped, tag = 'input window, operand 4, single buffered']
    #allocation11 [shape = 'u8[131072]{0}', space=vmem, size = 0x20000, scoped, tag = 'output window, operand 0']
    %10 = vsyncpa [#allocation3], 0
    %s11 = scalar_lea.sflag [#allocation3], 1
    %12 = vsyncpa %s11, 0
    %13 = vsyncpa [#allocation6], 0
    %14 = vsyncpa [#allocation9], 0
    %15 = vsyncpa [#allocation4], 0
    %s16 = scalar_lea.sflag [#allocation4], 1
    %17 = vsyncpa %s16, 0
    loop: start=0, step=1, limit=8
    $region2: #{srcnn_forward.2} parent=1 // loop_pre_header
      _
    $region3: #{srcnn_forward.2} parent=1 // loop_header
      %s19 = sphi 0, %s23
      %p20 = scmp.ge.s32.totalorder %s19, 8
      %s26 = sphi 0, %s38
      %s27 = sphi 0, %s34
      %s28 = sphi 0, %s26
      %s29 = sphi 0, %s27
      %s30 = sphi 0, %s28
      %s31 = sphi 0, %s29
      %s41 = sphi 0, %s43
      %s44 = sphi 0, %s41
      %s45 = sphi 0, %s44
      %s61 = sphi 0, %s45
      %s65 = sphi 0, %s65
      %s67 = sphi 0, %s65
      %s68 = sphi 0, %s67
      %s82 = sphi 0, %s68
      %s86 = sphi 0, %s86
      %s88 = sphi 0, %s86
      %s89 = sphi 0, %s88
      %s103 = sphi 0, %s89
      %s107 = sphi 0, %s107
      %s109 = sphi 0, %s107
      %s110 = sphi 0, %s109
      %s124 = sphi 0, %s110
      %s128 = sphi 0, %s128
      %s130 = sphi 0, %s128
      %s131 = sphi 0, %s130
      %s145 = sphi 0, %s131
      %s153 = sphi 0, %s155
      %s156 = sphi 0, %s153
      %s157 = sphi 0, %s156
      %s173 = sphi 0, %s157
    $region4: #{srcnn_forward.2} parent=1 // loop_header_branch
      %22 = sbr.rel (%p20) target = $region8
    $region5: #{srcnn_forward.2} parent=1 // loop_body
      %s24 = ssub.s32 %s19, 1
      %s25 = ssub.s32 %s19, 2
      %s32 = sadd.s32 1, %s27
      %p33 = scmp.ge.s32.totalorder %s32, 3
      %s34 = scalar_select %p33, 0, %s32
      %s35 = sadd.s32 1, %s26
      %s36 = scalar_select %p33, %s35, %s26
      %p37 = scmp.ge.s32.totalorder %s36, 2
      %s38 = scalar_select %p37, 0, %s36
      %s39 = ssub.s32 %s26, %s38
      %p40 = scmp.eq.s32.totalorder %s39, 0
      %s42 = sadd.s32 %s41, 1
      %s43 = scalar_select %p40, %s41, %s42
      %p46 = pneg %p40
      %p47 = scmp.eq.s32.totalorder %s19, 5
      %p48 = por %p46, %p47
      %p49 = scmp.ne.s32.totalorder %s41, %s44
      %p50 = scmp.eq.s32.totalorder %s19, 0
      %p51 = por %p49, %p50
      %p52 = scmp.ne.s32.totalorder %s41, %s44
      %p53 = scmp.eq.s32.totalorder %s24, 5
      %p54 = por %p52, %p53
      %p55 = scmp.ne.s32.totalorder %s44, %s45
      %p56 = scmp.eq.s32.totalorder %s24, 0
      %p57 = por %p55, %p56
      %p58 = scmp.ne.s32.totalorder %s44, %s45
      %p59 = scmp.eq.s32.totalorder %s25, 5
      %p60 = por %p58, %p59
      %p62 = scmp.ne.s32.totalorder %s45, %s61
      %p63 = scmp.eq.s32.totalorder %s25, 0
      %p64 = por %p62, %p63
      %s66 = sadd.s32 %s65, 1
      %p69 = scmp.eq.s32.totalorder %s19, 5
      %p70 = scmp.ne.s32.totalorder %s65, %s67
      %p71 = scmp.eq.s32.totalorder %s19, 0
      %p72 = por %p70, %p71
      %p73 = scmp.ne.s32.totalorder %s65, %s67
      %p74 = scmp.eq.s32.totalorder %s24, 5
      %p75 = por %p73, %p74
      %p76 = scmp.ne.s32.totalorder %s67, %s68
      %p77 = scmp.eq.s32.totalorder %s24, 0
      %p78 = por %p76, %p77
      %p79 = scmp.ne.s32.totalorder %s67, %s68
      %p80 = scmp.eq.s32.totalorder %s25, 5
      %p81 = por %p79, %p80
      %p83 = scmp.ne.s32.totalorder %s68, %s82
      %p84 = scmp.eq.s32.totalorder %s25, 0
      %p85 = por %p83, %p84
      %s87 = sadd.s32 %s86, 1
      %p90 = scmp.eq.s32.totalorder %s19, 5
      %p91 = scmp.ne.s32.totalorder %s86, %s88
      %p92 = scmp.eq.s32.totalorder %s19, 0
      %p93 = por %p91, %p92
      %p94 = scmp.ne.s32.totalorder %s86, %s88
      %p95 = scmp.eq.s32.totalorder %s24, 5
      %p96 = por %p94, %p95
      %p97 = scmp.ne.s32.totalorder %s88, %s89
      %p98 = scmp.eq.s32.totalorder %s24, 0
      %p99 = por %p97, %p98
      %p100 = scmp.ne.s32.totalorder %s88, %s89
      %p101 = scmp.eq.s32.totalorder %s25, 5
      %p102 = por %p100, %p101
      %p104 = scmp.ne.s32.totalorder %s89, %s103
      %p105 = scmp.eq.s32.totalorder %s25, 0
      %p106 = por %p104, %p105
      %s108 = sadd.s32 %s107, 1
      %p111 = scmp.eq.s32.totalorder %s19, 5
      %p112 = scmp.ne.s32.totalorder %s107, %s109
      %p113 = scmp.eq.s32.totalorder %s19, 0
      %p114 = por %p112, %p113
      %p115 = scmp.ne.s32.totalorder %s107, %s109
      %p116 = scmp.eq.s32.totalorder %s24, 5
      %p117 = por %p115, %p116
      %p118 = scmp.ne.s32.totalorder %s109, %s110
      %p119 = scmp.eq.s32.totalorder %s24, 0
      %p120 = por %p118, %p119
      %p121 = scmp.ne.s32.totalorder %s109, %s110
      %p122 = scmp.eq.s32.totalorder %s25, 5
      %p123 = por %p121, %p122
      %p125 = scmp.ne.s32.totalorder %s110, %s124
      %p126 = scmp.eq.s32.totalorder %s25, 0
      %p127 = por %p125, %p126
      %s129 = sadd.s32 %s128, 1
      %p132 = scmp.eq.s32.totalorder %s19, 5
      %p133 = scmp.ne.s32.totalorder %s128, %s130
      %p134 = scmp.eq.s32.totalorder %s19, 0
      %p135 = por %p133, %p134
      %p136 = scmp.ne.s32.totalorder %s128, %s130
      %p137 = scmp.eq.s32.totalorder %s24, 5
      %p138 = por %p136, %p137
      %p139 = scmp.ne.s32.totalorder %s130, %s131
      %p140 = scmp.eq.s32.totalorder %s24, 0
      %p141 = por %p139, %p140
      %p142 = scmp.ne.s32.totalorder %s130, %s131
      %p143 = scmp.eq.s32.totalorder %s25, 5
      %p144 = por %p142, %p143
      %p146 = scmp.ne.s32.totalorder %s131, %s145
      %p147 = scmp.eq.s32.totalorder %s25, 0
      %p148 = por %p146, %p147
      %s149 = ssub.s32 %s26, %s38
      %s150 = ssub.s32 %s27, %s34
      %s151 = sor.u32 %s149, %s150
      %p152 = scmp.eq.s32.totalorder %s151, 0
      %s154 = sadd.s32 %s153, 1
      %s155 = scalar_select %p152, %s153, %s154
      %p158 = pneg %p152
      %p159 = scmp.eq.s32.totalorder %s19, 5
      %p160 = por %p158, %p159
      %p161 = scmp.ne.s32.totalorder %s153, %s156
      %p162 = scmp.eq.s32.totalorder %s19, 0
      %p163 = por %p161, %p162
      %p164 = scmp.ne.s32.totalorder %s153, %s156
      %p165 = scmp.eq.s32.totalorder %s24, 5
      %p166 = por %p164, %p165
      %p167 = scmp.ne.s32.totalorder %s156, %s157
      %p168 = scmp.eq.s32.totalorder %s24, 0
      %p169 = por %p167, %p168
      %p170 = scmp.ne.s32.totalorder %s156, %s157
      %p171 = scmp.eq.s32.totalorder %s25, 5
      %p172 = por %p170, %p171
      %p174 = scmp.ne.s32.totalorder %s157, %s173
      %p175 = scmp.eq.s32.totalorder %s25, 0
      %p176 = por %p174, %p175
      %p177 = scmp.le.s32.totalorder 1, %s19
      %p178 = scmp.lt.s32.totalorder %s19, 7
      %p179 = pnand %p177, %p178
      %p180 = pneg %p179
      // Predicated region
      $region9: #{srcnn_forward.2} parent=5 // pred_check
        _
      $region10: #{srcnn_forward.2} parent=5 // pred_check_branch
        %182 = sbr.rel (%p179) target = $region12
      $region11: #{srcnn_forward.2} parent=5 // pred_region
        %s183 = ssub.s32 %s19, 1
        // Predicated region
        $region13: #{srcnn_forward.2} parent=11 // pred_check
          %p184 = pneg %p78
        $region14: #{srcnn_forward.2} parent=11 // pred_check_branch
          %186 = sbr.rel (%p184) target = $region16
        $region15: #{srcnn_forward.2} parent=11 // pred_region
          %s188 = ssub.s32 6144, 6144
          %189 = vsyncadd [#allocation6], %s188
          %s190 = sshll.u32 [#allocation5], 4
          %s191 = int_to_ptr.vmem [resolvable:$true] %s190
          %196 = dma.hbm_to_vmem [thread:$0]  %s1, 6144, %s191, [#allocation6], 768, 768, 48
        $region16: #{srcnn_forward.2} parent=11 // pred_fallthru
          _
        // Predicated region
        $region17: #{srcnn_forward.2} parent=11 // pred_check
          %p197 = pneg %p99
        $region18: #{srcnn_forward.2} parent=11 // pred_check_branch
          %199 = sbr.rel (%p197) target = $region20
        $region19: #{srcnn_forward.2} parent=11 // pred_region
          %s201 = ssub.s32 1024, 1024
          %202 = vsyncadd [#allocation6], %s201
          %s203 = sshll.u32 [#allocation7], 4
          %s204 = int_to_ptr.vmem [resolvable:$true] %s203
          %209 = dma.hbm_to_vmem [thread:$0]  %s2, 1024, %s204, [#allocation6], 128, 128, 8
        $region20: #{srcnn_forward.2} parent=11 // pred_fallthru
          _
        // Predicated region
        $region21: #{srcnn_forward.2} parent=11 // pred_check
          %p210 = pneg %p120
        $region22: #{srcnn_forward.2} parent=11 // pred_check_branch
          %212 = sbr.rel (%p210) target = $region24
        $region23: #{srcnn_forward.2} parent=11 // pred_region
          %s214 = ssub.s32 512, 512
          %215 = vsyncadd [#allocation9], %s214
          %s216 = sshll.u32 [#allocation8], 4
          %s217 = int_to_ptr.vmem [resolvable:$true] %s216
          %222 = dma.hbm_to_vmem [thread:$0]  %s3, 512, %s217, [#allocation9], 128, 128, 8
        $region24: #{srcnn_forward.2} parent=11 // pred_fallthru
          _
        // Predicated region
        $region25: #{srcnn_forward.2} parent=11 // pred_check
          %p223 = pneg %p141
        $region26: #{srcnn_forward.2} parent=11 // pred_check_branch
          %225 = sbr.rel (%p223) target = $region28
        $region27: #{srcnn_forward.2} parent=11 // pred_region
          %s227 = ssub.s32 512, 512
          %228 = vsyncadd [#allocation9], %s227
          %s229 = sshll.u32 [#allocation10], 4
          %s230 = int_to_ptr.vmem [resolvable:$true] %s229
          %235 = dma.hbm_to_vmem [thread:$0]  %s4, 512, %s230, [#allocation9], 128, 128, 8
        $region28: #{srcnn_forward.2} parent=11 // pred_fallthru
          _
      $region12: #{srcnn_forward.2} parent=5 // pred_fallthru
        _
      %p236 = scmp.lt.s32.totalorder %s19, 6
      // Predicated region
      $region29: #{srcnn_forward.2} parent=5 // pred_check
        %p237 = pneg %p236
      $region30: #{srcnn_forward.2} parent=5 // pred_check_branch
        %239 = sbr.rel (%p237) target = $region32
      $region31: #{srcnn_forward.2} parent=5 // pred_region
        // Predicated region
        $region33: #{srcnn_forward.2} parent=31 // pred_check
          %p240 = pneg %p51
        $region34: #{srcnn_forward.2} parent=31 // pred_check_branch
          %242 = sbr.rel (%p240) target = $region36
        $region35: #{srcnn_forward.2} parent=31 // pred_region
          %s243 = sand.u32 %s41, 1
          %s244 = scalar_lea.sflag [#allocation3], %s243
          %s245 = sand.u32 %s41, 1
          %s246 = smul.addr %s245, 160
          %s247 = scalar_lea.vmem [#allocation2], %s246
          %s249 = ssub.s32 2560, 2560
          %250 = vsyncadd %s244, %s249
          %s251 = smul.addr %s26, 20
          %s252 = smul.addr %s251, 128
          %s253 = scalar_lea.hbm %s0, %s252
          %s254 = sshll.u32 %s247, 4
          %s255 = int_to_ptr.vmem [resolvable:$true] %s254
          %260 = dma.hbm_to_vmem [thread:$0]  %s253, 2560, %s255, %s244, 128, 128, 8
        $region36: #{srcnn_forward.2} parent=31 // pred_fallthru
          _
      $region32: #{srcnn_forward.2} parent=5 // pred_fallthru
        _
      %p261 = scmp.le.s32.totalorder 1, %s19
      %p262 = scmp.lt.s32.totalorder %s19, 7
      %p263 = pnand %p261, %p262
      %p264 = pneg %p263
      // Predicated region
      $region37: #{srcnn_forward.2} parent=5 // pred_check
        _
      $region38: #{srcnn_forward.2} parent=5 // pred_check_branch
        %266 = sbr.rel (%p263) target = $region40
      $region39: #{srcnn_forward.2} parent=5 // pred_region
        %s267 = ssub.s32 %s19, 1
        %s268 = sand.u32 %s44, 1
        %s269 = scalar_lea.sflag [#allocation3], %s268
        %s270 = sand.u32 %s44, 1
        %s271 = smul.addr %s270, 160
        %s272 = scalar_lea.vmem [#allocation2], %s271
        // Predicated region
        $region41: #{srcnn_forward.2} parent=39 // pred_check
          %p273 = pneg %p57
        $region42: #{srcnn_forward.2} parent=39 // pred_check_branch
          %275 = sbr.rel (%p273) target = $region44
        $region43: #{srcnn_forward.2} parent=39 // pred_region
          %276 = dma.done %s269, 2560
        $region44: #{srcnn_forward.2} parent=39 // pred_fallthru
          _
        // Predicated region
        $region45: #{srcnn_forward.2} parent=39 // pred_check
          %p277 = pneg %p78
        $region46: #{srcnn_forward.2} parent=39 // pred_check_branch
          %279 = sbr.rel (%p277) target = $region48
        $region47: #{srcnn_forward.2} parent=39 // pred_region
          %280 = dma.done [#allocation6], 6144
        $region48: #{srcnn_forward.2} parent=39 // pred_fallthru
          _
        // Predicated region
        $region49: #{srcnn_forward.2} parent=39 // pred_check
          %p281 = pneg %p99
        $region50: #{srcnn_forward.2} parent=39 // pred_check_branch
          %283 = sbr.rel (%p281) target = $region52
        $region51: #{srcnn_forward.2} parent=39 // pred_region
          %284 = dma.done [#allocation6], 1024
        $region52: #{srcnn_forward.2} parent=39 // pred_fallthru
          _
        // Predicated region
        $region53: #{srcnn_forward.2} parent=39 // pred_check
          %p285 = pneg %p120
        $region54: #{srcnn_forward.2} parent=39 // pred_check_branch
          %287 = sbr.rel (%p285) target = $region56
        $region55: #{srcnn_forward.2} parent=39 // pred_region
          %288 = dma.done [#allocation9], 512
        $region56: #{srcnn_forward.2} parent=39 // pred_fallthru
          _
        // Predicated region
        $region57: #{srcnn_forward.2} parent=39 // pred_check
          %p289 = pneg %p141
        $region58: #{srcnn_forward.2} parent=39 // pred_check_branch
          %291 = sbr.rel (%p289) target = $region60
        $region59: #{srcnn_forward.2} parent=39 // pred_region
          %292 = dma.done [#allocation9], 512
        $region60: #{srcnn_forward.2} parent=39 // pred_fallthru
          _
        %s293 = sand.u32 %s44, 1
        %s294 = scalar_lea.sflag [#allocation3], %s293
        %s295 = sand.u32 %s44, 1
        %s296 = smul.addr %s295, 160
        %s297 = scalar_lea.vmem [#allocation2], %s296
        %p298 = pneg %p57
        %p299 = pneg %p54
        %p300 = pneg %p78
        %p301 = pneg %p75
        %p302 = pneg %p99
        %p303 = pneg %p96
        %p304 = pneg %p120
        %p305 = pneg %p117
        %p306 = pneg %p141
        %p307 = pneg %p138
        %p308 = pneg %p169
        %p309 = pneg %p166
        %s310 = sand.u32 %s156, 1
        %s311 = scalar_lea.sflag [#allocation4], %s310
        %s312 = sand.u32 %s156, 1
        %s313 = smul.addr %s312, 128
        %s314 = scalar_lea.vmem [#allocation11], %s313
        %s315 = smul.u32 4, %s29
        %v316 = vld [vmem:[#allocation5] sm:$0xff]
        %v317 = vld [vmem:[#allocation5 + $0x8] sm:$0xff]
        %v318 = vld [vmem:[#allocation5 + $0x10] sm:$0xff]
        %v319 = vld [vmem:[#allocation5 + $0x18] sm:$0xff]
        %v320 = vld [vmem:[#allocation5 + $0x20] sm:$0xff]
        %v321 = vld [vmem:[#allocation5 + $0x28] sm:$0xff]
        %v322 = vld [vmem:[#allocation5 + $0x30] sm:$0xff]
        %v323 = vld [vmem:[#allocation5 + $0x38] sm:$0xff]
        %v324 = vld [vmem:[#allocation5 + $0x40] sm:$0xff]
        %v325 = vld [vmem:[#allocation5 + $0x48] sm:$0xff]
        %v326 = vld [vmem:[#allocation5 + $0x50] sm:$0xff]
        %v327 = vld [vmem:[#allocation5 + $0x58] sm:$0xff]
        %v328 = vld [vmem:[#allocation5 + $0x60] sm:$0xff]
        %v329 = vld [vmem:[#allocation5 + $0x68] sm:$0xff]
        %v330 = vld [vmem:[#allocation5 + $0x70] sm:$0xff]
        %v331 = vld [vmem:[#allocation5 + $0x78] sm:$0xff]
        %v332 = vld [vmem:[#allocation5 + $0x80] sm:$0xff]
        %v333 = vld [vmem:[#allocation5 + $0x88] sm:$0xff]
        %v334 = vld [vmem:[#allocation5 + $0x90] sm:$0xff]
        %v335 = vld [vmem:[#allocation5 + $0x98] sm:$0xff]
        %v336 = vld [vmem:[#allocation5 + $0xa0] sm:$0xff]
        %v337 = vld [vmem:[#allocation5 + $0xa8] sm:$0xff]
        %v338 = vld [vmem:[#allocation5 + $0xb0] sm:$0xff]
        %v339 = vld [vmem:[#allocation5 + $0xb8] sm:$0xff]
        %v340 = vld [vmem:[#allocation5 + $0xc0] sm:$0xff]
        %v341 = vld [vmem:[#allocation5 + $0xc8] sm:$0xff]
        %v342 = vld [vmem:[#allocation5 + $0xd0] sm:$0xff]
        %v343 = vld [vmem:[#allocation5 + $0xd8] sm:$0xff]
        %v344 = vld [vmem:[#allocation5 + $0xe0] sm:$0xff]
        %v345 = vld [vmem:[#allocation5 + $0xe8] sm:$0xff]
        %v346 = vld [vmem:[#allocation5 + $0xf0] sm:$0xff]
        %v347 = vld [vmem:[#allocation5 + $0xf8] sm:$0xff]
        %v348 = vld [vmem:[#allocation5 + $0x100] sm:$0xff]
        %v349 = vld [vmem:[#allocation5 + $0x108] sm:$0xff]
        %v350 = vld [vmem:[#allocation5 + $0x110] sm:$0xff]
        %v351 = vld [vmem:[#allocation5 + $0x118] sm:$0xff]
        %v352 = vld [vmem:[#allocation5 + $0x120] sm:$0xff]
        %v353 = vld [vmem:[#allocation5 + $0x128] sm:$0xff]
        %v354 = vld [vmem:[#allocation5 + $0x130] sm:$0xff]
        %v355 = vld [vmem:[#allocation5 + $0x138] sm:$0xff]
        %v356 = vld [vmem:[#allocation5 + $0x140] sm:$0xff]
        %v357 = vld [vmem:[#allocation5 + $0x148] sm:$0xff]
        %v358 = vld [vmem:[#allocation5 + $0x150] sm:$0xff]
        %v359 = vld [vmem:[#allocation5 + $0x158] sm:$0xff]
        %v360 = vld [vmem:[#allocation5 + $0x160] sm:$0xff]
        %v361 = vld [vmem:[#allocation5 + $0x168] sm:$0xff]
        %v362 = vld [vmem:[#allocation5 + $0x170] sm:$0xff]
        %v363 = vld [vmem:[#allocation5 + $0x178] sm:$0xff]
        %v364 = vld [vmem:[#allocation7] sm:$0xff]
        %v365 = vld [vmem:[#allocation7 + $0x8] sm:$0xff]
        %v366 = vld [vmem:[#allocation7 + $0x10] sm:$0xff]
        %v367 = vld [vmem:[#allocation7 + $0x18] sm:$0xff]
        %v368 = vld [vmem:[#allocation7 + $0x20] sm:$0xff]
        %v369 = vld [vmem:[#allocation7 + $0x28] sm:$0xff]
        %v370 = vld [vmem:[#allocation7 + $0x30] sm:$0xff]
        %v371 = vld [vmem:[#allocation7 + $0x38] sm:$0xff]
        %v372 = vld [vmem:[#allocation8] sm:$0xff]
        %v373 = vld [vmem:[#allocation8 + $0x8] sm:$0xff]
        %v374 = vld [vmem:[#allocation8 + $0x10] sm:$0xff]
        %v375 = vld [vmem:[#allocation8 + $0x18] sm:$0xff]
        %v376 = vld [vmem:[#allocation10] sm:$0xff]
        %v377 = vld [vmem:[#allocation10 + $0x8] sm:$0xff]
        %v378 = vld [vmem:[#allocation10 + $0x10] sm:$0xff]
        %v379 = vld [vmem:[#allocation10 + $0x18] sm:$0xff]
        %s380 = smul.u32 %s29, 4
        %s381 = smul.u32 %s380, 8
        %s382 = scalar_lea.vmem %s272, %s381 [#allocation2]
        %v383 = vld [vmem:[%s382] sm:$0xff]
        %s384 = sadd.s32 %s380, 1
        %s385 = smul.u32 %s384, 8
        %s386 = scalar_lea.vmem %s272, %s385 [#allocation2]
        %v387 = vld [vmem:[%s386] sm:$0xff]
        %s388 = sadd.s32 %s380, 2
        %s389 = smul.u32 %s388, 8
        %s390 = scalar_lea.vmem %s272, %s389 [#allocation2]
        %v391 = vld [vmem:[%s390] sm:$0xff]
        %s392 = sadd.s32 %s380, 3
        %s393 = smul.u32 %s392, 8
        %s394 = scalar_lea.vmem %s272, %s393 [#allocation2]
        %v395 = vld [vmem:[%s394] sm:$0xff]
        %s396 = sadd.s32 %s380, 4
        %s397 = smul.u32 %s396, 8
        %s398 = scalar_lea.vmem %s272, %s397 [#allocation2]
        %v399 = vld [vmem:[%s398] sm:$0xff]
        %s400 = sadd.s32 %s380, 5
        %s401 = smul.u32 %s400, 8
        %s402 = scalar_lea.vmem %s272, %s401 [#allocation2]
        %v403 = vld [vmem:[%s402] sm:$0xff]
        %s404 = sadd.s32 %s380, 6
        %s405 = smul.u32 %s404, 8
        %s406 = scalar_lea.vmem %s272, %s405 [#allocation2]
        %v407 = vld [vmem:[%s406] sm:$0xff]
        %s408 = sadd.s32 %s380, 7
        %s409 = smul.u32 %s408, 8
        %s410 = scalar_lea.vmem %s272, %s409 [#allocation2]
        %v411 = vld [vmem:[%s410] sm:$0xff]
        %s412 = sadd.s32 %s380, 8
        %s413 = smul.u32 %s412, 8
        %s414 = scalar_lea.vmem %s272, %s413 [#allocation2]
        %v415 = vld [vmem:[%s414] sm:$0xff]
        %417 = vrot.lane.b32.xlu0 %v383, 127
        %v418 = vpop.permute.xlu0 %417
        %420 = vrot.lane.b32.xlu0 %v383, 126
        %v421 = vpop.permute.xlu0 %420
        %423 = vrot.lane.b32.xlu0 %v383, 125
        %v424 = vpop.permute.xlu0 %423
        %426 = vrot.lane.b32.xlu0 %v383, 124
        %v427 = vpop.permute.xlu0 %426
        %429 = vrot.lane.b32.xlu0 %v383, 123
        %v430 = vpop.permute.xlu0 %429
        %432 = vrot.lane.b32.xlu0 %v383, 122
        %v433 = vpop.permute.xlu0 %432
        %435 = vrot.lane.b32.xlu0 %v383, 121
        %v436 = vpop.permute.xlu0 %435
        %438 = vrot.lane.b32.xlu0 %v383, 120
        %v439 = vpop.permute.xlu0 %438
        %442 = vrot.lane.b32.xlu0 %v387, 127
        %v443 = vpop.permute.xlu0 %442
        %445 = vrot.lane.b32.xlu0 %v387, 126
        %v446 = vpop.permute.xlu0 %445
        %448 = vrot.lane.b32.xlu0 %v387, 125
        %v449 = vpop.permute.xlu0 %448
        %451 = vrot.lane.b32.xlu0 %v387, 124
        %v452 = vpop.permute.xlu0 %451
        %454 = vrot.lane.b32.xlu0 %v387, 123
        %v455 = vpop.permute.xlu0 %454
        %457 = vrot.lane.b32.xlu0 %v387, 122
        %v458 = vpop.permute.xlu0 %457
        %461 = vrot.lane.b32.xlu0 %v391, 7
        %v462 = vpop.permute.xlu0 %461
        %463 = vrot.lane.b32.xlu0 %v391, 6
        %v464 = vpop.permute.xlu0 %463
        %465 = vrot.lane.b32.xlu0 %v391, 5
        %v466 = vpop.permute.xlu0 %465
        %467 = vrot.lane.b32.xlu0 %v391, 4
        %v468 = vpop.permute.xlu0 %467
        %469 = vrot.lane.b32.xlu0 %v391, 3
        %v470 = vpop.permute.xlu0 %469
        %471 = vrot.lane.b32.xlu0 %v391, 2
        %v472 = vpop.permute.xlu0 %471
        %473 = vrot.lane.b32.xlu0 %v391, 1
        %v474 = vpop.permute.xlu0 %473
        %475 = vrot.lane.b32.xlu0 %v391, 127
        %v476 = vpop.permute.xlu0 %475
        %478 = vrot.lane.b32.xlu0 %v395, 7
        %v479 = vpop.permute.xlu0 %478
        %480 = vrot.lane.b32.xlu0 %v395, 6
        %v481 = vpop.permute.xlu0 %480
        %482 = vrot.lane.b32.xlu0 %v395, 5
        %v483 = vpop.permute.xlu0 %482
        %484 = vrot.lane.b32.xlu0 %v395, 4
        %v485 = vpop.permute.xlu0 %484
        %486 = vrot.lane.b32.xlu0 %v395, 3
        %v487 = vpop.permute.xlu0 %486
        %488 = vrot.lane.b32.xlu0 %v395, 127
        %v489 = vpop.permute.xlu0 %488
        %490 = vrot.lane.b32.xlu0 %v395, 126
        %v491 = vpop.permute.xlu0 %490
        %492 = vrot.lane.b32.xlu0 %v395, 125
        %v493 = vpop.permute.xlu0 %492
        %495 = vrot.lane.b32.xlu0 %v399, 5
        %v496 = vpop.permute.xlu0 %495
        %497 = vrot.lane.b32.xlu0 %v399, 4
        %v498 = vpop.permute.xlu0 %497
        %499 = vrot.lane.b32.xlu0 %v399, 3
        %v500 = vpop.permute.xlu0 %499
        %501 = vrot.lane.b32.xlu0 %v399, 2
        %v502 = vpop.permute.xlu0 %501
        %503 = vrot.lane.b32.xlu0 %v399, 1
        %v504 = vpop.permute.xlu0 %503
        %505 = vrot.lane.b32.xlu0 %v399, 127
        %v506 = vpop.permute.xlu0 %505
        %507 = vrot.lane.b32.xlu0 %v399, 126
        %v508 = vpop.permute.xlu0 %507
        %509 = vrot.lane.b32.xlu0 %v399, 125
        %v510 = vpop.permute.xlu0 %509
        %512 = vrot.lane.b32.xlu0 %v403, 5
        %v513 = vpop.permute.xlu0 %512
        %514 = vrot.lane.b32.xlu0 %v403, 4
        %v515 = vpop.permute.xlu0 %514
        %516 = vrot.lane.b32.xlu0 %v403, 3
        %v517 = vpop.permute.xlu0 %516
        %518 = vrot.lane.b32.xlu0 %v403, 127
        %v519 = vpop.permute.xlu0 %518
        %520 = vrot.lane.b32.xlu0 %v403, 126
        %v521 = vpop.permute.xlu0 %520
        %522 = vrot.lane.b32.xlu0 %v403, 125
        %v523 = vpop.permute.xlu0 %522
        %524 = vrot.lane.b32.xlu0 %v403, 124
        %v525 = vpop.permute.xlu0 %524
        %526 = vrot.lane.b32.xlu0 %v403, 123
        %v527 = vpop.permute.xlu0 %526
        %529 = vrot.lane.b32.xlu0 %v407, 3
        %v530 = vpop.permute.xlu0 %529
        %531 = vrot.lane.b32.xlu0 %v407, 2
        %v532 = vpop.permute.xlu0 %531
        %533 = vrot.lane.b32.xlu0 %v407, 1
        %v534 = vpop.permute.xlu0 %533
        %535 = vrot.lane.b32.xlu0 %v407, 127
        %v536 = vpop.permute.xlu0 %535
        %537 = vrot.lane.b32.xlu0 %v407, 126
        %v538 = vpop.permute.xlu0 %537
        %539 = vrot.lane.b32.xlu0 %v407, 125
        %v540 = vpop.permute.xlu0 %539
        %541 = vrot.lane.b32.xlu0 %v407, 124
        %v542 = vpop.permute.xlu0 %541
        %543 = vrot.lane.b32.xlu0 %v407, 123
        %v544 = vpop.permute.xlu0 %543
        %546 = vrot.lane.b32.xlu0 %v411, 3
        %v547 = vpop.permute.xlu0 %546
        %548 = vrot.lane.b32.xlu0 %v411, 127
        %v549 = vpop.permute.xlu0 %548
        %550 = vrot.lane.b32.xlu0 %v411, 126
        %v551 = vpop.permute.xlu0 %550
        %552 = vrot.lane.b32.xlu0 %v411, 125
        %v553 = vpop.permute.xlu0 %552
        %554 = vrot.lane.b32.xlu0 %v411, 124
        %v555 = vpop.permute.xlu0 %554
        %556 = vrot.lane.b32.xlu0 %v411, 123
        %v557 = vpop.permute.xlu0 %556
        %558 = vrot.lane.b32.xlu0 %v411, 122
        %v559 = vpop.permute.xlu0 %558
        %560 = vrot.lane.b32.xlu0 %v411, 121
        %v561 = vpop.permute.xlu0 %560
        %563 = vrot.lane.b32.xlu0 %v415, 1
        %v564 = vpop.permute.xlu0 %563
        %565 = vrot.lane.b32.xlu0 %v415, 127
        %v566 = vpop.permute.xlu0 %565
        %567 = vrot.lane.b32.xlu0 %v415, 126
        %v568 = vpop.permute.xlu0 %567
        %569 = vrot.lane.b32.xlu0 %v415, 125
        %v570 = vpop.permute.xlu0 %569
        %571 = vrot.lane.b32.xlu0 %v415, 124
        %v572 = vpop.permute.xlu0 %571
        %573 = vrot.lane.b32.xlu0 %v415, 123
        %v574 = vpop.permute.xlu0 %573
        %575 = vrot.lane.b32.xlu0 %v415, 122
        %v576 = vpop.permute.xlu0 %575
        %577 = vrot.lane.b32.xlu0 %v387, 121
        %v578 = vpop.permute.xlu0 %577
        %579 = vrot.lane.b32.xlu0 %v443, 121
        %v580 = vpop.permute.xlu0 %579
        %581 = vrot.lane.b32.xlu0 %v462, 121
        %v582 = vpop.permute.xlu0 %581
        %583 = vrot.lane.b32.xlu0 %v464, 121
        %v584 = vpop.permute.xlu0 %583
        %585 = vrot.lane.b32.xlu0 %v466, 121
        %v586 = vpop.permute.xlu0 %585
        %587 = vrot.lane.b32.xlu0 %v468, 121
        %v588 = vpop.permute.xlu0 %587
        %589 = vrot.lane.b32.xlu0 %v470, 121
        %v590 = vpop.permute.xlu0 %589
        %591 = vrot.lane.b32.xlu0 %v472, 121
        %v592 = vpop.permute.xlu0 %591
        %593 = vrot.lane.b32.xlu0 %v474, 121
        %v594 = vpop.permute.xlu0 %593
        %595 = vrot.lane.b32.xlu0 %v391, 121
        %v596 = vpop.permute.xlu0 %595
        %597 = vrot.lane.b32.xlu0 %v476, 121
        %v598 = vpop.permute.xlu0 %597
        %599 = vrot.lane.b32.xlu0 %v479, 121
        %v600 = vpop.permute.xlu0 %599
        %601 = vrot.lane.b32.xlu0 %v481, 121
        %v602 = vpop.permute.xlu0 %601
        %603 = vrot.lane.b32.xlu0 %v483, 121
        %v604 = vpop.permute.xlu0 %603
        %605 = vrot.lane.b32.xlu0 %v485, 121
        %v606 = vpop.permute.xlu0 %605
        %607 = vrot.lane.b32.xlu0 %v487, 121
        %v608 = vpop.permute.xlu0 %607
        %625 = vrot.lane.b32.xlu0 %v395, 123
        %v626 = vpop.permute.xlu0 %625
        %627 = vrot.lane.b32.xlu0 %v489, 123
        %v628 = vpop.permute.xlu0 %627
        %629 = vrot.lane.b32.xlu0 %v491, 123
        %v630 = vpop.permute.xlu0 %629
        %631 = vrot.lane.b32.xlu0 %v493, 123
        %v632 = vpop.permute.xlu0 %631
        %633 = vrot.lane.b32.xlu0 %v496, 123
        %v634 = vpop.permute.xlu0 %633
        %635 = vrot.lane.b32.xlu0 %v498, 123
        %v636 = vpop.permute.xlu0 %635
        %637 = vrot.lane.b32.xlu0 %v500, 123
        %v638 = vpop.permute.xlu0 %637
        %639 = vrot.lane.b32.xlu0 %v502, 123
        %v640 = vpop.permute.xlu0 %639
        %641 = vrot.lane.b32.xlu0 %v504, 123
        %v642 = vpop.permute.xlu0 %641
        %643 = vrot.lane.b32.xlu0 %v399, 123
        %v644 = vpop.permute.xlu0 %643
        %645 = vrot.lane.b32.xlu0 %v506, 123
        %v646 = vpop.permute.xlu0 %645
        %647 = vrot.lane.b32.xlu0 %v508, 123
        %v648 = vpop.permute.xlu0 %647
        %649 = vrot.lane.b32.xlu0 %v510, 123
        %v650 = vpop.permute.xlu0 %649
        %651 = vrot.lane.b32.xlu0 %v513, 123
        %v652 = vpop.permute.xlu0 %651
        %653 = vrot.lane.b32.xlu0 %v515, 123
        %v654 = vpop.permute.xlu0 %653
        %655 = vrot.lane.b32.xlu0 %v517, 123
        %v656 = vpop.permute.xlu0 %655
        %673 = vrot.lane.b32.xlu0 %v519, 125
        %v674 = vpop.permute.xlu0 %673
        %675 = vrot.lane.b32.xlu0 %v521, 125
        %v676 = vpop.permute.xlu0 %675
        %677 = vrot.lane.b32.xlu0 %v523, 125
        %v678 = vpop.permute.xlu0 %677
        %679 = vrot.lane.b32.xlu0 %v525, 125
        %v680 = vpop.permute.xlu0 %679
        %681 = vrot.lane.b32.xlu0 %v527, 125
        %v682 = vpop.permute.xlu0 %681
        %683 = vrot.lane.b32.xlu0 %v530, 125
        %v684 = vpop.permute.xlu0 %683
        %685 = vrot.lane.b32.xlu0 %v532, 125
        %v686 = vpop.permute.xlu0 %685
        %687 = vrot.lane.b32.xlu0 %v534, 125
        %v688 = vpop.permute.xlu0 %687
        %689 = vrot.lane.b32.xlu0 %v536, 125
        %v690 = vpop.permute.xlu0 %689
        %691 = vrot.lane.b32.xlu0 %v538, 125
        %v692 = vpop.permute.xlu0 %691
        %693 = vrot.lane.b32.xlu0 %v540, 125
        %v694 = vpop.permute.xlu0 %693
        %695 = vrot.lane.b32.xlu0 %v542, 125
        %v696 = vpop.permute.xlu0 %695
        %697 = vrot.lane.b32.xlu0 %v544, 125
        %v698 = vpop.permute.xlu0 %697
        %699 = vrot.lane.b32.xlu0 %v547, 125
        %v700 = vpop.permute.xlu0 %699
        %717 = vrot.lane.b32.xlu0 %v549, 127
        %v718 = vpop.permute.xlu0 %717
        %719 = vrot.lane.b32.xlu0 %v551, 127
        %v720 = vpop.permute.xlu0 %719
        %721 = vrot.lane.b32.xlu0 %v553, 127
        %v722 = vpop.permute.xlu0 %721
        %723 = vrot.lane.b32.xlu0 %v555, 127
        %v724 = vpop.permute.xlu0 %723
        %725 = vrot.lane.b32.xlu0 %v557, 127
        %v726 = vpop.permute.xlu0 %725
        %727 = vrot.lane.b32.xlu0 %v559, 127
        %v728 = vpop.permute.xlu0 %727
        %729 = vrot.lane.b32.xlu0 %v561, 127
        %v730 = vpop.permute.xlu0 %729
        %731 = vrot.lane.b32.xlu0 %v564, 127
        %v732 = vpop.permute.xlu0 %731
        %733 = vrot.lane.b32.xlu0 %v566, 127
        %v734 = vpop.permute.xlu0 %733
        %735 = vrot.lane.b32.xlu0 %v568, 127
        %v736 = vpop.permute.xlu0 %735
        %737 = vrot.lane.b32.xlu0 %v570, 127
        %v738 = vpop.permute.xlu0 %737
        %739 = vrot.lane.b32.xlu0 %v572, 127
        %v740 = vpop.permute.xlu0 %739
        %741 = vrot.lane.b32.xlu0 %v574, 127
        %v742 = vpop.permute.xlu0 %741
        %743 = vrot.lane.b32.xlu0 %v576, 127
        %v744 = vpop.permute.xlu0 %743
        %761 = vrot.lane.b32.xlu0 %v415, 120
        %v762 = vpop.permute.xlu0 %761
        %765 = vset.pattern.permute.xlu0 0
        %766 = vperm.xlu0 %765, %v364
        %v767 = vpop.permute.xlu0 %766
        %770 = vset.pattern.permute.xlu0 0
        %771 = vperm.xlu0 %770, %v365
        %v772 = vpop.permute.xlu0 %771
        %775 = vset.pattern.permute.xlu0 0
        %776 = vperm.xlu0 %775, %v366
        %v777 = vpop.permute.xlu0 %776
        %780 = vset.pattern.permute.xlu0 0
        %781 = vperm.xlu0 %780, %v367
        %v782 = vpop.permute.xlu0 %781
        %785 = vset.pattern.permute.xlu0 0
        %786 = vperm.xlu0 %785, %v368
        %v787 = vpop.permute.xlu0 %786
        %790 = vset.pattern.permute.xlu0 0
        %791 = vperm.xlu0 %790, %v369
        %v792 = vpop.permute.xlu0 %791
        %795 = vset.pattern.permute.xlu0 0
        %796 = vperm.xlu0 %795, %v370
        %v797 = vpop.permute.xlu0 %796
        %800 = vset.pattern.permute.xlu0 0
        %801 = vperm.xlu0 %800, %v371
        %v802 = vpop.permute.xlu0 %801
        %vm804 = vcmask 64512
        %v806 = vsel %vm804, %v321, 0
        %v809 = vsel %vm804, %v327, 0
        %v812 = vsel %vm804, %v333, 0
        %v815 = vsel %vm804, %v339, 0
        %v818 = vsel %vm804, %v345, 0
        %v821 = vsel %vm804, %v351, 0
        %v824 = vsel %vm804, %v357, 0
        %v827 = vsel %vm804, %v363, 0
        %829 = vmatprep.subr.mxu0 0.0
        %830 = vmatpush1.msra.mxu0 %v383
        %831 = vmatprep.subr.mxu0 0.0
        %832 = vmatpush1.msra.mxu0 %v418
        %833 = vmatprep.subr.mxu0 0.0
        %834 = vmatpush1.msra.mxu0 %v421
        %835 = vmatprep.subr.mxu0 0.0
        %836 = vmatpush1.msra.mxu0 %v424
        %837 = vmatprep.subr.mxu0 0.0
        %838 = vmatpush1.msra.mxu0 %v427
        %839 = vmatprep.subr.mxu0 0.0
        %840 = vmatpush1.msra.mxu0 %v430
        %841 = vmatprep.subr.mxu0 0.0
        %842 = vmatpush1.msra.mxu0 %v433
        %843 = vmatprep.subr.mxu0 0.0
        %844 = vmatpush1.msra.mxu0 %v436
        %845 = vmatprep.subr.mxu0 0.0
        %846 = vmatpush1.msra.mxu0 %v439
        %847 = vmatprep.subr.mxu0 0.0
        %848 = vmatpush1.msra.mxu0 %v387
        %849 = vmatprep.subr.mxu0 0.0
        %850 = vmatpush1.msra.mxu0 %v443
        %851 = vmatprep.subr.mxu0 0.0
        %852 = vmatpush1.msra.mxu0 %v446
        %853 = vmatprep.subr.mxu0 0.0
        %854 = vmatpush1.msra.mxu0 %v449
        %855 = vmatprep.subr.mxu0 0.0
        %856 = vmatpush1.msra.mxu0 %v452
        %857 = vmatprep.subr.mxu0 0.0
        %858 = vmatpush1.msra.mxu0 %v455
        %859 = vmatprep.subr.mxu0 0.0
        %860 = vmatpush1.msra.mxu0 %v458
        %861 = vmatprep.subr.mxu0 0.0
        %862 = vmatpush1.msra.mxu0 %v578
        %863 = vmatprep.subr.mxu0 0.0
        %864 = vmatpush1.msra.mxu0 %v580
        %865 = vmatprep.subr.mxu0 0.0
        %866 = vmatpush1.msra.mxu0 %v582
        %867 = vmatprep.subr.mxu0 0.0
        %868 = vmatpush1.msra.mxu0 %v584
        %869 = vmatprep.subr.mxu0 0.0
        %870 = vmatpush1.msra.mxu0 %v586
        %871 = vmatprep.subr.mxu0 0.0
        %872 = vmatpush1.msra.mxu0 %v588
        %873 = vmatprep.subr.mxu0 0.0
        %874 = vmatpush1.msra.mxu0 %v590
        %875 = vmatprep.subr.mxu0 0.0
        %876 = vmatpush1.msra.mxu0 %v592
        %877 = vmatprep.subr.mxu0 0.0
        %878 = vmatpush1.msra.mxu0 %v594
        %879 = vmatprep.subr.mxu0 0.0
        %880 = vmatpush1.msra.mxu0 %v596
        %881 = vmatprep.subr.mxu0 0.0
        %882 = vmatpush1.msra.mxu0 %v598
        %883 = vmatprep.subr.mxu0 0.0
        %884 = vmatpush1.msra.mxu0 %v600
        %885 = vmatprep.subr.mxu0 0.0
        %886 = vmatpush1.msra.mxu0 %v602
        %887 = vmatprep.subr.mxu0 0.0
        %888 = vmatpush1.msra.mxu0 %v604
        %889 = vmatprep.subr.mxu0 0.0
        %890 = vmatpush1.msra.mxu0 %v606
        %891 = vmatprep.subr.mxu0 0.0
        %892 = vmatpush1.msra.mxu0 %v608
        %893 = vmatprep.mubr.f32.mxu0 %v317
        %894 = vmatmul.mubr.f32.gmra.mrb[0].mxu0 %v316
        %v895 = vpop.f32.mrb[0].mxu0
        %v896 = vadd.f32 %v767, %v895
        %v897 = vpop.f32.mrb[0].mxu0
        %898 = vmatprep.mubr.f32.mxu0 %v323
        %899 = vmatmul.mubr.f32.gmra.mrb[0].mxu0 %v322
        %v900 = vpop.f32.mrb[0].mxu0
        %v901 = vadd.f32 %v772, %v900
        %v902 = vpop.f32.mrb[0].mxu0
        %903 = vmatprep.mubr.f32.mxu0 %v329
        %904 = vmatmul.mubr.f32.gmra.mrb[0].mxu0 %v328
        %v905 = vpop.f32.mrb[0].mxu0
        %v906 = vadd.f32 %v777, %v905
        %v907 = vpop.f32.mrb[0].mxu0
        %908 = vmatprep.mubr.f32.mxu0 %v335
        %909 = vmatmul.mubr.f32.gmra.mrb[0].mxu0 %v334
        %v910 = vpop.f32.mrb[0].mxu0
        %v911 = vadd.f32 %v782, %v910
        %v912 = vpop.f32.mrb[0].mxu0
        %913 = vmatprep.mubr.f32.mxu0 %v341
        %914 = vmatmul.mubr.f32.gmra.mrb[0].mxu0 %v340
        %v915 = vpop.f32.mrb[0].mxu0
        %v916 = vadd.f32 %v787, %v915
        %v917 = vpop.f32.mrb[0].mxu0
        %918 = vmatprep.mubr.f32.mxu0 %v347
        %919 = vmatmul.mubr.f32.gmra.mrb[0].mxu0 %v346
        %v920 = vpop.f32.mrb[0].mxu0
        %v921 = vadd.f32 %v792, %v920
        %v922 = vpop.f32.mrb[0].mxu0
        %923 = vmatprep.mubr.f32.mxu0 %v353
        %924 = vmatmul.mubr.f32.gmra.mrb[0].mxu0 %v352
        %v925 = vpop.f32.mrb[0].mxu0
        %v926 = vadd.f32 %v797, %v925
        %v927 = vpop.f32.mrb[0].mxu0
        %928 = vmatprep.mubr.f32.mxu0 %v359
        %929 = vmatmul.mubr.f32.gmra.mrb[0].mxu0 %v358
        %v930 = vpop.f32.mrb[0].mxu0
        %v931 = vadd.f32 %v802, %v930
        %v932 = vpop.f32.mrb[0].mxu0
        %933 = vdwg.mxu0
        %934 = vmatprep.subr.mxu0 0.0
        %935 = vmatpush1.msra.mxu0 %v626
        %936 = vmatprep.subr.mxu0 0.0
        %937 = vmatpush1.msra.mxu0 %v628
        %938 = vmatprep.subr.mxu0 0.0
        %939 = vmatpush1.msra.mxu0 %v630
        %940 = vmatprep.subr.mxu0 0.0
        %941 = vmatpush1.msra.mxu0 %v632
        %942 = vmatprep.subr.mxu0 0.0
        %943 = vmatpush1.msra.mxu0 %v634
        %944 = vmatprep.subr.mxu0 0.0
        %945 = vmatpush1.msra.mxu0 %v636
        %946 = vmatprep.subr.mxu0 0.0
        %947 = vmatpush1.msra.mxu0 %v638
        %948 = vmatprep.subr.mxu0 0.0
        %949 = vmatpush1.msra.mxu0 %v640
        %950 = vmatprep.subr.mxu0 0.0
        %951 = vmatpush1.msra.mxu0 %v642
        %952 = vmatprep.subr.mxu0 0.0
        %953 = vmatpush1.msra.mxu0 %v644
        %954 = vmatprep.subr.mxu0 0.0
        %955 = vmatpush1.msra.mxu0 %v646
        %956 = vmatprep.subr.mxu0 0.0
        %957 = vmatpush1.msra.mxu0 %v648
        %958 = vmatprep.subr.mxu0 0.0
        %959 = vmatpush1.msra.mxu0 %v650
        %960 = vmatprep.subr.mxu0 0.0
        %961 = vmatpush1.msra.mxu0 %v652
        %962 = vmatprep.subr.mxu0 0.0
        %963 = vmatpush1.msra.mxu0 %v654
        %964 = vmatprep.subr.mxu0 0.0
        %965 = vmatpush1.msra.mxu0 %v656
        %966 = vmatprep.subr.mxu0 0.0
        %967 = vmatpush1.msra.mxu0 %v523
        %968 = vmatprep.subr.mxu0 0.0
        %969 = vmatpush1.msra.mxu0 %v674
        %970 = vmatprep.subr.mxu0 0.0
        %971 = vmatpush1.msra.mxu0 %v676
        %972 = vmatprep.subr.mxu0 0.0
        %973 = vmatpush1.msra.mxu0 %v678
        %974 = vmatprep.subr.mxu0 0.0
        %975 = vmatpush1.msra.mxu0 %v680
        %976 = vmatprep.subr.mxu0 0.0
        %977 = vmatpush1.msra.mxu0 %v682
        %978 = vmatprep.subr.mxu0 0.0
        %979 = vmatpush1.msra.mxu0 %v684
        %980 = vmatprep.subr.mxu0 0.0
        %981 = vmatpush1.msra.mxu0 %v686
        %982 = vmatprep.subr.mxu0 0.0
        %983 = vmatpush1.msra.mxu0 %v688
        %984 = vmatprep.subr.mxu0 0.0
        %985 = vmatpush1.msra.mxu0 %v540
        %986 = vmatprep.subr.mxu0 0.0
        %987 = vmatpush1.msra.mxu0 %v690
        %988 = vmatprep.subr.mxu0 0.0
        %989 = vmatpush1.msra.mxu0 %v692
        %990 = vmatprep.subr.mxu0 0.0
        %991 = vmatpush1.msra.mxu0 %v694
        %992 = vmatprep.subr.mxu0 0.0
        %993 = vmatpush1.msra.mxu0 %v696
        %994 = vmatprep.subr.mxu0 0.0
        %995 = vmatpush1.msra.mxu0 %v698
        %996 = vmatprep.subr.mxu0 0.0
        %997 = vmatpush1.msra.mxu0 %v700
        %998 = vmatprep.mubr.f32.mxu0 %v319
        %999 = vmatmul.mubr.f32.gmra.mrb[0].mxu0 %v318
        %v1000 = vpop.f32.mrb[0].mxu0
        %v1001 = vadd.f32 %v896, %v1000
        %v1002 = vpop.f32.mrb[0].mxu0
        %1003 = vmatprep.mubr.f32.mxu0 %v325
        %1004 = vmatmul.mubr.f32.gmra.mrb[0].mxu0 %v324
        %v1005 = vpop.f32.mrb[0].mxu0
        %v1006 = vadd.f32 %v901, %v1005
        %v1007 = vpop.f32.mrb[0].mxu0
        %1008 = vmatprep.mubr.f32.mxu0 %v331
        %1009 = vmatmul.mubr.f32.gmra.mrb[0].mxu0 %v330
        %v1010 = vpop.f32.mrb[0].mxu0
        %v1011 = vadd.f32 %v906, %v1010
        %v1012 = vpop.f32.mrb[0].mxu0
        %1013 = vmatprep.mubr.f32.mxu0 %v337
        %1014 = vmatmul.mubr.f32.gmra.mrb[0].mxu0 %v336
        %v1015 = vpop.f32.mrb[0].mxu0
        %v1016 = vadd.f32 %v911, %v1015
        %v1017 = vpop.f32.mrb[0].mxu0
        %1018 = vmatprep.mubr.f32.mxu0 %v343
        %1019 = vmatmul.mubr.f32.gmra.mrb[0].mxu0 %v342
        %v1020 = vpop.f32.mrb[0].mxu0
        %v1021 = vadd.f32 %v916, %v1020
        %v1022 = vpop.f32.mrb[0].mxu0
        %1023 = vmatprep.mubr.f32.mxu0 %v349
        %1024 = vmatmul.mubr.f32.gmra.mrb[0].mxu0 %v348
        %v1025 = vpop.f32.mrb[0].mxu0
        %v1026 = vadd.f32 %v921, %v1025
        %v1027 = vpop.f32.mrb[0].mxu0
        %1028 = vmatprep.mubr.f32.mxu0 %v355
        %1029 = vmatmul.mubr.f32.gmra.mrb[0].mxu0 %v354
        %v1030 = vpop.f32.mrb[0].mxu0
        %v1031 = vadd.f32 %v926, %v1030
        %v1032 = vpop.f32.mrb[0].mxu0
        %1033 = vmatprep.mubr.f32.mxu0 %v361
        %1034 = vmatmul.mubr.f32.gmra.mrb[0].mxu0 %v360
        %v1035 = vpop.f32.mrb[0].mxu0
        %v1036 = vadd.f32 %v931, %v1035
        %v1037 = vpop.f32.mrb[0].mxu0
        %1038 = vdwg.mxu0
        %1039 = vmatprep.subr.mxu0 0.0
        %1040 = vmatpush1.msra.mxu0 %v549
        %1041 = vmatprep.subr.mxu0 0.0
        %1042 = vmatpush1.msra.mxu0 %v718
        %1043 = vmatprep.subr.mxu0 0.0
        %1044 = vmatpush1.msra.mxu0 %v720
        %1045 = vmatprep.subr.mxu0 0.0
        %1046 = vmatpush1.msra.mxu0 %v722
        %1047 = vmatprep.subr.mxu0 0.0
        %1048 = vmatpush1.msra.mxu0 %v724
        %1049 = vmatprep.subr.mxu0 0.0
        %1050 = vmatpush1.msra.mxu0 %v726
        %1051 = vmatprep.subr.mxu0 0.0
        %1052 = vmatpush1.msra.mxu0 %v728
        %1053 = vmatprep.subr.mxu0 0.0
        %1054 = vmatpush1.msra.mxu0 %v730
        %1055 = vmatprep.subr.mxu0 0.0
        %1056 = vmatpush1.msra.mxu0 %v732
        %1057 = vmatprep.subr.mxu0 0.0
        %1058 = vmatpush1.msra.mxu0 %v566
        %1059 = vmatprep.subr.mxu0 0.0
        %1060 = vmatpush1.msra.mxu0 %v734
        %1061 = vmatprep.subr.mxu0 0.0
        %1062 = vmatpush1.msra.mxu0 %v736
        %1063 = vmatprep.subr.mxu0 0.0
        %1064 = vmatpush1.msra.mxu0 %v738
        %1065 = vmatprep.subr.mxu0 0.0
        %1066 = vmatpush1.msra.mxu0 %v740
        %1067 = vmatprep.subr.mxu0 0.0
        %1068 = vmatpush1.msra.mxu0 %v742
        %1069 = vmatprep.subr.mxu0 0.0
        %1070 = vmatpush1.msra.mxu0 %v744
        %1071 = vmatprep.subr.mxu0 0.0
        %1072 = vmatpush1.msra.mxu0 %v762
        %1073 = vmatprep.subr.mxu0 0.0
        %1074 = vmatpush1.msra.mxu0 0.0
        %1075 = vmatprep.subr.mxu0 0.0
        %1076 = vmatpush1.msra.mxu0 0.0
        %1077 = vmatprep.subr.mxu0 0.0
        %1078 = vmatpush1.msra.mxu0 0.0
        %1079 = vmatprep.subr.mxu0 0.0
        %1080 = vmatpush1.msra.mxu0 0.0
        %1081 = vmatprep.subr.mxu0 0.0
        %1082 = vmatpush1.msra.mxu0 0.0
        %1083 = vmatprep.subr.mxu0 0.0
        %1084 = vmatpush1.msra.mxu0 0.0
        %1085 = vmatprep.subr.mxu0 0.0
        %1086 = vmatpush1.msra.mxu0 0.0
        %1087 = vmatprep.subr.mxu0 0.0
        %1088 = vmatpush1.msra.mxu0 0.0
        %1089 = vmatprep.subr.mxu0 0.0
        %1090 = vmatpush1.msra.mxu0 0.0
        %1091 = vmatprep.subr.mxu0 0.0
        %1092 = vmatpush1.msra.mxu0 0.0
        %1093 = vmatprep.subr.mxu0 0.0
        %1094 = vmatpush1.msra.mxu0 0.0
        %1095 = vmatprep.subr.mxu0 0.0
        %1096 = vmatpush1.msra.mxu0 0.0
        %1097 = vmatprep.subr.mxu0 0.0
        %1098 = vmatpush1.msra.mxu0 0.0
        %1099 = vmatprep.subr.mxu0 0.0
        %1100 = vmatpush1.msra.mxu0 0.0
        %1101 = vmatprep.subr.mxu0 0.0
        %1102 = vmatpush1.msra.mxu0 0.0
        %1103 = vmatprep.mubr.f32.mxu0 %v806
        %1104 = vmatmul.mubr.f32.gmra.mrb[0].mxu0 %v320
        %v1105 = vpop.f32.mrb[0].mxu0
        %v1106 = vadd.f32 %v1001, %v1105
        %v1107 = vpop.f32.mrb[0].mxu0
        %1108 = vmatprep.mubr.f32.mxu0 %v809
        %1109 = vmatmul.mubr.f32.gmra.mrb[0].mxu0 %v326
        %v1110 = vpop.f32.mrb[0].mxu0
        %v1111 = vadd.f32 %v1006, %v1110
        %v1112 = vpop.f32.mrb[0].mxu0
        %1113 = vmatprep.mubr.f32.mxu0 %v812
        %1114 = vmatmul.mubr.f32.gmra.mrb[0].mxu0 %v332
        %v1115 = vpop.f32.mrb[0].mxu0
        %v1116 = vadd.f32 %v1011, %v1115
        %v1117 = vpop.f32.mrb[0].mxu0
        %1118 = vmatprep.mubr.f32.mxu0 %v815
        %1119 = vmatmul.mubr.f32.gmra.mrb[0].mxu0 %v338
        %v1120 = vpop.f32.mrb[0].mxu0
        %v1121 = vadd.f32 %v1016, %v1120
        %v1122 = vpop.f32.mrb[0].mxu0
        %1123 = vmatprep.mubr.f32.mxu0 %v818
        %1124 = vmatmul.mubr.f32.gmra.mrb[0].mxu0 %v344
        %v1125 = vpop.f32.mrb[0].mxu0
        %v1126 = vadd.f32 %v1021, %v1125
        %v1127 = vpop.f32.mrb[0].mxu0
        %1128 = vmatprep.mubr.f32.mxu0 %v821
        %1129 = vmatmul.mubr.f32.gmra.mrb[0].mxu0 %v350
        %v1130 = vpop.f32.mrb[0].mxu0
        %v1131 = vadd.f32 %v1026, %v1130
        %v1132 = vpop.f32.mrb[0].mxu0
        %1133 = vmatprep.mubr.f32.mxu0 %v824
        %1134 = vmatmul.mubr.f32.gmra.mrb[0].mxu0 %v356
        %v1135 = vpop.f32.mrb[0].mxu0
        %v1136 = vadd.f32 %v1031, %v1135
        %v1137 = vpop.f32.mrb[0].mxu0
        %1138 = vmatprep.mubr.f32.mxu0 %v827
        %1139 = vmatmul.mubr.f32.gmra.mrb[0].mxu0 %v362
        %v1140 = vpop.f32.mrb[0].mxu0
        %v1141 = vadd.f32 %v1036, %v1140
        %v1142 = vpop.f32.mrb[0].mxu0
        %1143 = vdwg.mxu0
        %v1144 = vmax.f32 %v1106, 0.0
        %v1145 = vmax.f32 %v1111, 0.0
        %v1146 = vmax.f32 %v1116, 0.0
        %v1147 = vmax.f32 %v1121, 0.0
        %v1148 = vmax.f32 %v1126, 0.0
        %v1149 = vmax.f32 %v1131, 0.0
        %v1150 = vmax.f32 %v1136, 0.0
        %v1151 = vmax.f32 %v1141, 0.0
        %1153 = vset.pattern.permute.xlu0 0
        %1154 = vperm.xlu0 %1153, %v376
        %v1155 = vpop.permute.xlu0 %1154
        %1158 = vset.pattern.permute.xlu0 0
        %1159 = vperm.xlu0 %1158, %v377
        %v1160 = vpop.permute.xlu0 %1159
        %1163 = vset.pattern.permute.xlu0 0
        %1164 = vperm.xlu0 %1163, %v378
        %v1165 = vpop.permute.xlu0 %1164
        %1168 = vset.pattern.permute.xlu0 0
        %1169 = vperm.xlu0 %1168, %v379
        %v1170 = vpop.permute.xlu0 %1169
        %vm1172 = vcmask 523264
        %v1174 = vsel %vm1172, %v372, 0
        %v1177 = vsel %vm1172, %v373, 0
        %v1180 = vsel %vm1172, %v374, 0
        %v1183 = vsel %vm1172, %v375, 0
        %1185 = vmatprep.subr.mxu0 0.0
        %1186 = vmatpush1.msra.mxu0 %v1144
        %1187 = vmatprep.subr.mxu0 0.0
        %1188 = vmatpush1.msra.mxu0 %v1145
        %1189 = vmatprep.subr.mxu0 0.0
        %1190 = vmatpush1.msra.mxu0 %v1146
        %1191 = vmatprep.subr.mxu0 0.0
        %1192 = vmatpush1.msra.mxu0 %v1147
        %1193 = vmatprep.subr.mxu0 0.0
        %1194 = vmatpush1.msra.mxu0 %v1148
        %1195 = vmatprep.subr.mxu0 0.0
        %1196 = vmatpush1.msra.mxu0 %v1149
        %1197 = vmatprep.subr.mxu0 0.0
        %1198 = vmatpush1.msra.mxu0 %v1150
        %1199 = vmatprep.subr.mxu0 0.0
        %1200 = vmatpush1.msra.mxu0 %v1151
        %1201 = vmatprep.subr.mxu0 0.0
        %1202 = vmatpush1.msra.mxu0 0.0
        %1203 = vmatprep.subr.mxu0 0.0
        %1204 = vmatpush1.msra.mxu0 0.0
        %1205 = vmatprep.subr.mxu0 0.0
        %1206 = vmatpush1.msra.mxu0 0.0
        %1207 = vmatprep.subr.mxu0 0.0
        %1208 = vmatpush1.msra.mxu0 0.0
        %1209 = vmatprep.subr.mxu0 0.0
        %1210 = vmatpush1.msra.mxu0 0.0
        %1211 = vmatprep.subr.mxu0 0.0
        %1212 = vmatpush1.msra.mxu0 0.0
        %1213 = vmatprep.subr.mxu0 0.0
        %1214 = vmatpush1.msra.mxu0 0.0
        %1215 = vmatprep.subr.mxu0 0.0
        %1216 = vmatpush1.msra.mxu0 0.0
        %1217 = vmatprep.subr.mxu0 0.0
        %1218 = vmatpush1.msra.mxu0 0.0
        %1219 = vmatprep.subr.mxu0 0.0
        %1220 = vmatpush1.msra.mxu0 0.0
        %1221 = vmatprep.subr.mxu0 0.0
        %1222 = vmatpush1.msra.mxu0 0.0
        %1223 = vmatprep.subr.mxu0 0.0
        %1224 = vmatpush1.msra.mxu0 0.0
        %1225 = vmatprep.subr.mxu0 0.0
        %1226 = vmatpush1.msra.mxu0 0.0
        %1227 = vmatprep.subr.mxu0 0.0
        %1228 = vmatpush1.msra.mxu0 0.0
        %1229 = vmatprep.subr.mxu0 0.0
        %1230 = vmatpush1.msra.mxu0 0.0
        %1231 = vmatprep.subr.mxu0 0.0
        %1232 = vmatpush1.msra.mxu0 0.0
        %1233 = vmatprep.subr.mxu0 0.0
        %1234 = vmatpush1.msra.mxu0 0.0
        %1235 = vmatprep.subr.mxu0 0.0
        %1236 = vmatpush1.msra.mxu0 0.0
        %1237 = vmatprep.subr.mxu0 0.0
        %1238 = vmatpush1.msra.mxu0 0.0
        %1239 = vmatprep.subr.mxu0 0.0
        %1240 = vmatpush1.msra.mxu0 0.0
        %1241 = vmatprep.subr.mxu0 0.0
        %1242 = vmatpush1.msra.mxu0 0.0
        %1243 = vmatprep.subr.mxu0 0.0
        %1244 = vmatpush1.msra.mxu0 0.0
        %1245 = vmatprep.subr.mxu0 0.0
        %1246 = vmatpush1.msra.mxu0 0.0
        %1247 = vmatprep.subr.mxu0 0.0
        %1248 = vmatpush1.msra.mxu0 0.0
        %1249 = vmatprep.mubr.f32.mxu0 0.0
        %1250 = vmatmul.mubr.f32.gmra.mrb[0].mxu0 %v1174
        %v1251 = vpop.f32.mrb[0].mxu0
        %v1252 = vadd.f32 %v1155, %v1251
        %v1253 = vpop.f32.mrb[0].mxu0
        %1254 = vmatprep.mubr.f32.mxu0 0.0
        %1255 = vmatmul.mubr.f32.gmra.mrb[0].mxu0 %v1177
        %v1256 = vpop.f32.mrb[0].mxu0
        %v1257 = vadd.f32 %v1160, %v1256
        %v1258 = vpop.f32.mrb[0].mxu0
        %1259 = vmatprep.mubr.f32.mxu0 0.0
        %1260 = vmatmul.mubr.f32.gmra.mrb[0].mxu0 %v1180
        %v1261 = vpop.f32.mrb[0].mxu0
        %v1262 = vadd.f32 %v1165, %v1261
        %v1263 = vpop.f32.mrb[0].mxu0
        %1264 = vmatprep.mubr.f32.mxu0 0.0
        %1265 = vmatmul.mubr.f32.gmra.mrb[0].mxu0 %v1183
        %v1266 = vpop.f32.mrb[0].mxu0
        %v1267 = vadd.f32 %v1170, %v1266
        %v1268 = vpop.f32.mrb[0].mxu0
        %1269 = vdwg.mxu0
        %v1270 = vmax.f32 %v1252, 0.0
        %v1271 = vmax.f32 %v1257, 0.0
        %v1272 = vmax.f32 %v1262, 0.0
        %v1273 = vmax.f32 %v1267, 0.0
        %vm1274 = vcmask 97280
        %1275 = vst.msk [vmem:[%s314] sm:$0xff] %vm1274, %v1270
        %1276 = vst.msk [vmem:[%s314 + $0x8] sm:$0xff] %vm1274, %v1271
        %1277 = vst.msk [vmem:[%s314 + $0x10] sm:$0xff] %vm1274, %v1272
        %1278 = vst.msk [vmem:[%s314 + $0x18] sm:$0xff] %vm1274, %v1273
        %v1279 = vld [vmem:[%s386] sm:$0xff]
        %v1280 = vld [vmem:[%s390] sm:$0xff]
        %v1281 = vld [vmem:[%s394] sm:$0xff]
        %v1282 = vld [vmem:[%s398] sm:$0xff]
        %v1283 = vld [vmem:[%s402] sm:$0xff]
        %v1284 = vld [vmem:[%s406] sm:$0xff]
        %v1285 = vld [vmem:[%s410] sm:$0xff]
        %v1286 = vld [vmem:[%s414] sm:$0xff]
        %s1287 = sadd.s32 %s380, 9
        %s1288 = smul.u32 %s1287, 8
        %s1289 = scalar_lea.vmem %s272, %s1288 [#allocation2]
        %v1290 = vld [vmem:[%s1289] sm:$0xff]
        %1292 = vrot.lane.b32.xlu0 %v1279, 127
        %v1293 = vpop.permute.xlu0 %1292
        %1295 = vrot.lane.b32.xlu0 %v1279, 126
        %v1296 = vpop.permute.xlu0 %1295
        %1298 = vrot.lane.b32.xlu0 %v1279, 125
        %v1299 = vpop.permute.xlu0 %1298
        %1301 = vrot.lane.b32.xlu0 %v1279, 124
        %v1302 = vpop.permute.xlu0 %1301
        %1304 = vrot.lane.b32.xlu0 %v1279, 123
        %v1305 = vpop.permute.xlu0 %1304
        %1307 = vrot.lane.b32.xlu0 %v1279, 122
        %v1308 = vpop.permute.xlu0 %1307
        %1310 = vrot.lane.b32.xlu0 %v1279, 121
        %v1311 = vpop.permute.xlu0 %1310
        %1313 = vrot.lane.b32.xlu0 %v1279, 120
        %v1314 = vpop.permute.xlu0 %1313
        %1317 = vrot.lane.b32.xlu0 %v1280, 127
        %v1318 = vpop.permute.xlu0 %1317
        %1320 = vrot.lane.b32.xlu0 %v1280, 126
        %v1321 = vpop.permute.xlu0 %1320
        %1323 = vrot.lane.b32.xlu0 %v1280, 125
        %v1324 = vpop.permute.xlu0 %1323
        %1326 = vrot.lane.b32.xlu0 %v1280, 124
        %v1327 = vpop.permute.xlu0 %1326
        %1329 = vrot.lane.b32.xlu0 %v1280, 123
        %v1330 = vpop.permute.xlu0 %1329
        %1332 = vrot.lane.b32.xlu0 %v1280, 122
        %v1333 = vpop.permute.xlu0 %1332
        %1336 = vrot.lane.b32.xlu0 %v1281, 7
        %v1337 = vpop.permute.xlu0 %1336
        %1338 = vrot.lane.b32.xlu0 %v1281, 6
        %v1339 = vpop.permute.xlu0 %1338
        %1340 = vrot.lane.b32.xlu0 %v1281, 5
        %v1341 = vpop.permute.xlu0 %1340
        %1342 = vrot.lane.b32.xlu0 %v1281, 4
        %v1343 = vpop.permute.xlu0 %1342
        %1344 = vrot.lane.b32.xlu0 %v1281, 3
        %v1345 = vpop.permute.xlu0 %1344
        %1346 = vrot.lane.b32.xlu0 %v1281, 2
        %v1347 = vpop.permute.xlu0 %1346
        %1348 = vrot.lane.b32.xlu0 %v1281, 1
        %v1349 = vpop.permute.xlu0 %1348
        %1350 = vrot.lane.b32.xlu0 %v1281, 127
        %v1351 = vpop.permute.xlu0 %1350
        %1353 = vrot.lane.b32.xlu0 %v1282, 7
        %v1354 = vpop.permute.xlu0 %1353
        %1355 = vrot.lane.b32.xlu0 %v1282, 6
        %v1356 = vpop.permute.xlu0 %1355
        %1357 = vrot.lane.b32.xlu0 %v1282, 5
        %v1358 = vpop.permute.xlu0 %1357
        %1359 = vrot.lane.b32.xlu0 %v1282, 4
        %v1360 = vpop.permute.xlu0 %1359
        %1361 = vrot.lane.b32.xlu0 %v1282, 3
        %v1362 = vpop.permute.xlu0 %1361
        %1363 = vrot.lane.b32.xlu0 %v1282, 127
        %v1364 = vpop.permute.xlu0 %1363
        %1365 = vrot.lane.b32.xlu0 %v1282, 126
        %v1366 = vpop.permute.xlu0 %1365
        %1367 = vrot.lane.b32.xlu0 %v1282, 125
        %v1368 = vpop.permute.xlu0 %1367
        %1370 = vrot.lane.b32.xlu0 %v1283, 5
        %v1371 = vpop.permute.xlu0 %1370
        %1372 = vrot.lane.b32.xlu0 %v1283, 4
        %v1373 = vpop.permute.xlu0 %1372
        %1374 = vrot.lane.b32.xlu0 %v1283, 3
        %v1375 = vpop.permute.xlu0 %1374
        %1376 = vrot.lane.b32.xlu0 %v1283, 2
        %v1377 = vpop.permute.xlu0 %1376
        %1378 = vrot.lane.b32.xlu0 %v1283, 1
        %v1379 = vpop.permute.xlu0 %1378
        %1380 = vrot.lane.b32.xlu0 %v1283, 127
        %v1381 = vpop.permute.xlu0 %1380
        %1382 = vrot.lane.b32.xlu0 %v1283, 126
        %v1383 = vpop.permute.xlu0 %1382
        %1384 = vrot.lane.b32.xlu0 %v1283, 125
        %v1385 = vpop.permute.xlu0 %1384
        %1387 = vrot.lane.b32.xlu0 %v1284, 5
        %v1388 = vpop.permute.xlu0 %1387
        %1389 = vrot.lane.b32.xlu0 %v1284, 4
        %v1390 = vpop.permute.xlu0 %1389
        %1391 = vrot.lane.b32.xlu0 %v1284, 3
        %v1392 = vpop.permute.xlu0 %1391
        %1393 = vrot.lane.b32.xlu0 %v1284, 127
        %v1394 = vpop.permute.xlu0 %1393
        %1395 = vrot.lane.b32.xlu0 %v1284, 126
        %v1396 = vpop.permute.xlu0 %1395
        %1397 = vrot.lane.b32.xlu0 %v1284, 125
        %v1398 = vpop.permute.xlu0 %1397
        %1399 = vrot.lane.b32.xlu0 %v1284, 124
        %v1400 = vpop.permute.xlu0 %1399
        %1401 = vrot.lane.b32.xlu0 %v1284, 123
        %v1402 = vpop.permute.xlu0 %1401
        %1404 = vrot.lane.b32.xlu0 %v1285, 3
        %v1405 = vpop.permute.xlu0 %1404
        %1406 = vrot.lane.b32.xlu0 %v1285, 2
        %v1407 = vpop.permute.xlu0 %1406
        %1408 = vrot.lane.b32.xlu0 %v1285, 1
        %v1409 = vpop.permute.xlu0 %1408
        %1410 = vrot.lane.b32.xlu0 %v1285, 127
        %v1411 = vpop.permute.xlu0 %1410
        %1412 = vrot.lane.b32.xlu0 %v1285, 126
        %v1413 = vpop.permute.xlu0 %1412
        %1414 = vrot.lane.b32.xlu0 %v1285, 125
        %v1415 = vpop.permute.xlu0 %1414
        %1416 = vrot.lane.b32.xlu0 %v1285, 124
        %v1417 = vpop.permute.xlu0 %1416
        %1418 = vrot.lane.b32.xlu0 %v1285, 123
        %v1419 = vpop.permute.xlu0 %1418
        %1421 = vrot.lane.b32.xlu0 %v1286, 3
        %v1422 = vpop.permute.xlu0 %1421
        %1423 = vrot.lane.b32.xlu0 %v1286, 127
        %v1424 = vpop.permute.xlu0 %1423
        %1425 = vrot.lane.b32.xlu0 %v1286, 126
        %v1426 = vpop.permute.xlu0 %1425
        %1427 = vrot.lane.b32.xlu0 %v1286, 125
        %v1428 = vpop.permute.xlu0 %1427
        %1429 = vrot.lane.b32.xlu0 %v1286, 124
        %v1430 = vpop.permute.xlu0 %1429
        %1431 = vrot.lane.b32.xlu0 %v1286, 123
        %v1432 = vpop.permute.xlu0 %1431
        %1433 = vrot.lane.b32.xlu0 %v1286, 122
        %v1434 = vpop.permute.xlu0 %1433
        %1435 = vrot.lane.b32.xlu0 %v1286, 121
        %v1436 = vpop.permute.xlu0 %1435
        %1438 = vrot.lane.b32.xlu0 %v1290, 1
        %v1439 = vpop.permute.xlu0 %1438
        %1440 = vrot.lane.b32.xlu0 %v1290, 127
        %v1441 = vpop.permute.xlu0 %1440
        %1442 = vrot.lane.b32.xlu0 %v1290, 126
        %v1443 = vpop.permute.xlu0 %1442
        %1444 = vrot.lane.b32.xlu0 %v1290, 125
        %v1445 = vpop.permute.xlu0 %1444
        %1446 = vrot.lane.b32.xlu0 %v1290, 124
        %v1447 = vpop.permute.xlu0 %1446
        %1448 = vrot.lane.b32.xlu0 %v1290, 123
        %v1449 = vpop.permute.xlu0 %1448
        %1450 = vrot.lane.b32.xlu0 %v1290, 122
        %v1451 = vpop.permute.xlu0 %1450
        %1452 = vrot.lane.b32.xlu0 %v1280, 121
        %v1453 = vpop.permute.xlu0 %1452
        %1454 = vrot.lane.b32.xlu0 %v1318, 121
        %v1455 = vpop.permute.xlu0 %1454
        %1456 = vrot.lane.b32.xlu0 %v1337, 121
        %v1457 = vpop.permute.xlu0 %1456
        %1458 = vrot.lane.b32.xlu0 %v1339, 121
        %v1459 = vpop.permute.xlu0 %1458
        %1460 = vrot.lane.b32.xlu0 %v1341, 121
        %v1461 = vpop.permute.xlu0 %1460
        %1462 = vrot.lane.b32.xlu0 %v1343, 121
        %v1463 = vpop.permute.xlu0 %1462
        %1464 = vrot.lane.b32.xlu0 %v1345, 121
        %v1465 = vpop.permute.xlu0 %1464
        %1466 = vrot.lane.b32.xlu0 %v1347, 121
        %v1467 = vpop.permute.xlu0 %1466
        %1468 = vrot.lane.b32.xlu0 %v1349, 121
        %v1469 = vpop.permute.xlu0 %1468
        %1470 = vrot.lane.b32.xlu0 %v1281, 121
        %v1471 = vpop.permute.xlu0 %1470
        %1472 = vrot.lane.b32.xlu0 %v1351, 121
        %v1473 = vpop.permute.xlu0 %1472
        %1474 = vrot.lane.b32.xlu0 %v1354, 121
        %v1475 = vpop.permute.xlu0 %1474
        %1476 = vrot.lane.b32.xlu0 %v1356, 121
        %v1477 = vpop.permute.xlu0 %1476
        %1478 = vrot.lane.b32.xlu0 %v1358, 121
        %v1479 = vpop.permute.xlu0 %1478
        %1480 = vrot.lane.b32.xlu0 %v1360, 121
        %v1481 = vpop.permute.xlu0 %1480
        %1482 = vrot.lane.b32.xlu0 %v1362, 121
        %v1483 = vpop.permute.xlu0 %1482
        %1500 = vrot.lane.b32.xlu0 %v1282, 123
        %v1501 = vpop.permute.xlu0 %1500
        %1502 = vrot.lane.b32.xlu0 %v1364, 123
        %v1503 = vpop.permute.xlu0 %1502
        %1504 = vrot.lane.b32.xlu0 %v1366, 123
        %v1505 = vpop.permute.xlu0 %1504
        %1506 = vrot.lane.b32.xlu0 %v1368, 123
        %v1507 = vpop.permute.xlu0 %1506
        %1508 = vrot.lane.b32.xlu0 %v1371, 123
        %v1509 = vpop.permute.xlu0 %1508
        %1510 = vrot.lane.b32.xlu0 %v1373, 123
        %v1511 = vpop.permute.xlu0 %1510
        %1512 = vrot.lane.b32.xlu0 %v1375, 123
        %v1513 = vpop.permute.xlu0 %1512
        %1514 = vrot.lane.b32.xlu0 %v1377, 123
        %v1515 = vpop.permute.xlu0 %1514
        %1516 = vrot.lane.b32.xlu0 %v1379, 123
        %v1517 = vpop.permute.xlu0 %1516
        %1518 = vrot.lane.b32.xlu0 %v1283, 123
        %v1519 = vpop.permute.xlu0 %1518
        %1520 = vrot.lane.b32.xlu0 %v1381, 123
        %v1521 = vpop.permute.xlu0 %1520
        %1522 = vrot.lane.b32.xlu0 %v1383, 123
        %v1523 = vpop.permute.xlu0 %1522
        %1524 = vrot.lane.b32.xlu0 %v1385, 123
        %v1525 = vpop.permute.xlu0 %1524
        %1526 = vrot.lane.b32.xlu0 %v1388, 123
        %v1527 = vpop.permute.xlu0 %1526
        %1528 = vrot.lane.b32.xlu0 %v1390, 123
        %v1529 = vpop.permute.xlu0 %1528
        %1530 = vrot.lane.b32.xlu0 %v1392, 123
        %v1531 = vpop.permute.xlu0 %1530
        %1548 = vrot.lane.b32.xlu0 %v1394, 125
        %v1549 = vpop.permute.xlu0 %1548
        %1550 = vrot.lane.b32.xlu0 %v1396, 125
        %v1551 = vpop.permute.xlu0 %1550
        %1552 = vrot.lane.b32.xlu0 %v1398, 125
        %v1553 = vpop.permute.xlu0 %1552
        %1554 = vrot.lane.b32.xlu0 %v1400, 125
        %v1555 = vpop.permute.xlu0 %1554
        %1556 = vrot.lane.b32.xlu0 %v1402, 125
        %v1557 = vpop.permute.xlu0 %1556
        %1558 = vrot.lane.b32.xlu0 %v1405, 125
        %v1559 = vpop.permute.xlu0 %1558
        %1560 = vrot.lane.b32.xlu0 %v1407, 125
        %v1561 = vpop.permute.xlu0 %1560
        %1562 = vrot.lane.b32.xlu0 %v1409, 125
        %v1563 = vpop.permute.xlu0 %1562
        %1564 = vrot.lane.b32.xlu0 %v1411, 125
        %v1565 = vpop.permute.xlu0 %1564
        %1566 = vrot.lane.b32.xlu0 %v1413, 125
        %v1567 = vpop.permute.xlu0 %1566
        %1568 = vrot.lane.b32.xlu0 %v1415, 125
        %v1569 = vpop.permute.xlu0 %1568
        %1570 = vrot.lane.b32.xlu0 %v1417, 125
        %v1571 = vpop.permute.xlu0 %1570
        %1572 = vrot.lane.b32.xlu0 %v1419, 125
        %v1573 = vpop.permute.xlu0 %1572
        %1574 = vrot.lane.b32.xlu0 %v1422, 125
        %v1575 = vpop.permute.xlu0 %1574
        %1592 = vrot.lane.b32.xlu0 %v1424, 127
        %v1593 = vpop.permute.xlu0 %1592
        %1594 = vrot.lane.b32.xlu0 %v1426, 127
        %v1595 = vpop.permute.xlu0 %1594
        %1596 = vrot.lane.b32.xlu0 %v1428, 127
        %v1597 = vpop.permute.xlu0 %1596
        %1598 = vrot.lane.b32.xlu0 %v1430, 127
        %v1599 = vpop.permute.xlu0 %1598
        %1600 = vrot.lane.b32.xlu0 %v1432, 127
        %v1601 = vpop.permute.xlu0 %1600
        %1602 = vrot.lane.b32.xlu0 %v1434, 127
        %v1603 = vpop.permute.xlu0 %1602
        %1604 = vrot.lane.b32.xlu0 %v1436, 127
        %v1605 = vpop.permute.xlu0 %1604
        %1606 = vrot.lane.b32.xlu0 %v1439, 127
        %v1607 = vpop.permute.xlu0 %1606
        %1608 = vrot.lane.b32.xlu0 %v1441, 127
        %v1609 = vpop.permute.xlu0 %1608
        %1610 = vrot.lane.b32.xlu0 %v1443, 127
        %v1611 = vpop.permute.xlu0 %1610
        %1612 = vrot.lane.b32.xlu0 %v1445, 127
        %v1613 = vpop.permute.xlu0 %1612
        %1614 = vrot.lane.b32.xlu0 %v1447, 127
        %v1615 = vpop.permute.xlu0 %1614
        %1616 = vrot.lane.b32.xlu0 %v1449, 127
        %v1617 = vpop.permute.xlu0 %1616
        %1618 = vrot.lane.b32.xlu0 %v1451, 127
        %v1619 = vpop.permute.xlu0 %1618
        %1636 = vrot.lane.b32.xlu0 %v1290, 120
        %v1637 = vpop.permute.xlu0 %1636
        %1639 = vmatprep.subr.mxu0 0.0
        %1640 = vmatpush1.msra.mxu0 %v1279
        %1641 = vmatprep.subr.mxu0 0.0
        %1642 = vmatpush1.msra.mxu0 %v1293
        %1643 = vmatprep.subr.mxu0 0.0
        %1644 = vmatpush1.msra.mxu0 %v1296
        %1645 = vmatprep.subr.mxu0 0.0
        %1646 = vmatpush1.msra.mxu0 %v1299
        %1647 = vmatprep.subr.mxu0 0.0
        %1648 = vmatpush1.msra.mxu0 %v1302
        %1649 = vmatprep.subr.mxu0 0.0
        %1650 = vmatpush1.msra.mxu0 %v1305
        %1651 = vmatprep.subr.mxu0 0.0
        %1652 = vmatpush1.msra.mxu0 %v1308
        %1653 = vmatprep.subr.mxu0 0.0
        %1654 = vmatpush1.msra.mxu0 %v1311
        %1655 = vmatprep.subr.mxu0 0.0
        %1656 = vmatpush1.msra.mxu0 %v1314
        %1657 = vmatprep.subr.mxu0 0.0
        %1658 = vmatpush1.msra.mxu0 %v1280
        %1659 = vmatprep.subr.mxu0 0.0
        %1660 = vmatpush1.msra.mxu0 %v1318
        %1661 = vmatprep.subr.mxu0 0.0
        %1662 = vmatpush1.msra.mxu0 %v1321
        %1663 = vmatprep.subr.mxu0 0.0
        %1664 = vmatpush1.msra.mxu0 %v1324
        %1665 = vmatprep.subr.mxu0 0.0
        %1666 = vmatpush1.msra.mxu0 %v1327
        %1667 = vmatprep.subr.mxu0 0.0
        %1668 = vmatpush1.msra.mxu0 %v1330
        %1669 = vmatprep.subr.mxu0 0.0
        %1670 = vmatpush1.msra.mxu0 %v1333
        %1671 = vmatprep.subr.mxu0 0.0
        %1672 = vmatpush1.msra.mxu0 %v1453
        %1673 = vmatprep.subr.mxu0 0.0
        %1674 = vmatpush1.msra.mxu0 %v1455
        %1675 = vmatprep.subr.mxu0 0.0
        %1676 = vmatpush1.msra.mxu0 %v1457
        %1677 = vmatprep.subr.mxu0 0.0
        %1678 = vmatpush1.msra.mxu0 %v1459
        %1679 = vmatprep.subr.mxu0 0.0
        %1680 = vmatpush1.msra.mxu0 %v1461
        %1681 = vmatprep.subr.mxu0 0.0
        %1682 = vmatpush1.msra.mxu0 %v1463
        %1683 = vmatprep.subr.mxu0 0.0
        %1684 = vmatpush1.msra.mxu0 %v1465
        %1685 = vmatprep.subr.mxu0 0.0
        %1686 = vmatpush1.msra.mxu0 %v1467
        %1687 = vmatprep.subr.mxu0 0.0
        %1688 = vmatpush1.msra.mxu0 %v1469
        %1689 = vmatprep.subr.mxu0 0.0
        %1690 = vmatpush1.msra.mxu0 %v1471
        %1691 = vmatprep.subr.mxu0 0.0
        %1692 = vmatpush1.msra.mxu0 %v1473
        %1693 = vmatprep.subr.mxu0 0.0
        %1694 = vmatpush1.msra.mxu0 %v1475
        %1695 = vmatprep.subr.mxu0 0.0
        %1696 = vmatpush1.msra.mxu0 %v1477
        %1697 = vmatprep.subr.mxu0 0.0
        %1698 = vmatpush1.msra.mxu0 %v1479
        %1699 = vmatprep.subr.mxu0 0.0
        %1700 = vmatpush1.msra.mxu0 %v1481
        %1701 = vmatprep.subr.mxu0 0.0
        %1702 = vmatpush1.msra.mxu0 %v1483
        %1703 = vmatprep.mubr.f32.mxu0 %v317
        %1704 = vmatmul.mubr.f32.gmra.mrb[0].mxu0 %v316
        %v1705 = vpop.f32.mrb[0].mxu0
        %v1706 = vadd.f32 %v767, %v1705
        %v1707 = vpop.f32.mrb[0].mxu0
        %1708 = vmatprep.mubr.f32.mxu0 %v323
        %1709 = vmatmul.mubr.f32.gmra.mrb[0].mxu0 %v322
        %v1710 = vpop.f32.mrb[0].mxu0
        %v1711 = vadd.f32 %v772, %v1710
        %v1712 = vpop.f32.mrb[0].mxu0
        %1713 = vmatprep.mubr.f32.mxu0 %v329
        %1714 = vmatmul.mubr.f32.gmra.mrb[0].mxu0 %v328
        %v1715 = vpop.f32.mrb[0].mxu0
        %v1716 = vadd.f32 %v777, %v1715
        %v1717 = vpop.f32.mrb[0].mxu0
        %1718 = vmatprep.mubr.f32.mxu0 %v335
        %1719 = vmatmul.mubr.f32.gmra.mrb[0].mxu0 %v334
        %v1720 = vpop.f32.mrb[0].mxu0
        %v1721 = vadd.f32 %v782, %v1720
        %v1722 = vpop.f32.mrb[0].mxu0
        %1723 = vmatprep.mubr.f32.mxu0 %v341
        %1724 = vmatmul.mubr.f32.gmra.mrb[0].mxu0 %v340
        %v1725 = vpop.f32.mrb[0].mxu0
        %v1726 = vadd.f32 %v787, %v1725
        %v1727 = vpop.f32.mrb[0].mxu0
        %1728 = vmatprep.mubr.f32.mxu0 %v347
        %1729 = vmatmul.mubr.f32.gmra.mrb[0].mxu0 %v346
        %v1730 = vpop.f32.mrb[0].mxu0
        %v1731 = vadd.f32 %v792, %v1730
        %v1732 = vpop.f32.mrb[0].mxu0
        %1733 = vmatprep.mubr.f32.mxu0 %v353
        %1734 = vmatmul.mubr.f32.gmra.mrb[0].mxu0 %v352
        %v1735 = vpop.f32.mrb[0].mxu0
        %v1736 = vadd.f32 %v797, %v1735
        %v1737 = vpop.f32.mrb[0].mxu0
        %1738 = vmatprep.mubr.f32.mxu0 %v359
        %1739 = vmatmul.mubr.f32.gmra.mrb[0].mxu0 %v358
        %v1740 = vpop.f32.mrb[0].mxu0
        %v1741 = vadd.f32 %v802, %v1740
        %v1742 = vpop.f32.mrb[0].mxu0
        %1743 = vdwg.mxu0
        %1744 = vmatprep.subr.mxu0 0.0
        %1745 = vmatpush1.msra.mxu0 %v1501
        %1746 = vmatprep.subr.mxu0 0.0
        %1747 = vmatpush1.msra.mxu0 %v1503
        %1748 = vmatprep.subr.mxu0 0.0
        %1749 = vmatpush1.msra.mxu0 %v1505
        %1750 = vmatprep.subr.mxu0 0.0
        %1751 = vmatpush1.msra.mxu0 %v1507
        %1752 = vmatprep.subr.mxu0 0.0
        %1753 = vmatpush1.msra.mxu0 %v1509
        %1754 = vmatprep.subr.mxu0 0.0
        %1755 = vmatpush1.msra.mxu0 %v1511
        %1756 = vmatprep.subr.mxu0 0.0
        %1757 = vmatpush1.msra.mxu0 %v1513
        %1758 = vmatprep.subr.mxu0 0.0
        %1759 = vmatpush1.msra.mxu0 %v1515
        %1760 = vmatprep.subr.mxu0 0.0
        %1761 = vmatpush1.msra.mxu0 %v1517
        %1762 = vmatprep.subr.mxu0 0.0
        %1763 = vmatpush1.msra.mxu0 %v1519
        %1764 = vmatprep.subr.mxu0 0.0
        %1765 = vmatpush1.msra.mxu0 %v1521
        %1766 = vmatprep.subr.mxu0 0.0
        %1767 = vmatpush1.msra.mxu0 %v1523
        %1768 = vmatprep.subr.mxu0 0.0
        %1769 = vmatpush1.msra.mxu0 %v1525
        %1770 = vmatprep.subr.mxu0 0.0
        %1771 = vmatpush1.msra.mxu0 %v1527
        %1772 = vmatprep.subr.mxu0 0.0
        %1773 = vmatpush1.msra.mxu0 %v1529
        %1774 = vmatprep.subr.mxu0 0.0
        %1775 = vmatpush1.msra.mxu0 %v1531
        %1776 = vmatprep.subr.mxu0 0.0
        %1777 = vmatpush1.msra.mxu0 %v1398
        %1778 = vmatprep.subr.mxu0 0.0
        %1779 = vmatpush1.msra.mxu0 %v1549
        %1780 = vmatprep.subr.mxu0 0.0
        %1781 = vmatpush1.msra.mxu0 %v1551
        %1782 = vmatprep.subr.mxu0 0.0
        %1783 = vmatpush1.msra.mxu0 %v1553
        %1784 = vmatprep.subr.mxu0 0.0
        %1785 = vmatpush1.msra.mxu0 %v1555
        %1786 = vmatprep.subr.mxu0 0.0
        %1787 = vmatpush1.msra.mxu0 %v1557
        %1788 = vmatprep.subr.mxu0 0.0
        %1789 = vmatpush1.msra.mxu0 %v1559
        %1790 = vmatprep.subr.mxu0 0.0
        %1791 = vmatpush1.msra.mxu0 %v1561
        %1792 = vmatprep.subr.mxu0 0.0
        %1793 = vmatpush1.msra.mxu0 %v1563
        %1794 = vmatprep.subr.mxu0 0.0
        %1795 = vmatpush1.msra.mxu0 %v1415
        %1796 = vmatprep.subr.mxu0 0.0
        %1797 = vmatpush1.msra.mxu0 %v1565
        %1798 = vmatprep.subr.mxu0 0.0
        %1799 = vmatpush1.msra.mxu0 %v1567
        %1800 = vmatprep.subr.mxu0 0.0
        %1801 = vmatpush1.msra.mxu0 %v1569
        %1802 = vmatprep.subr.mxu0 0.0
        %1803 = vmatpush1.msra.mxu0 %v1571
        %1804 = vmatprep.subr.mxu0 0.0
        %1805 = vmatpush1.msra.mxu0 %v1573
        %1806 = vmatprep.subr.mxu0 0.0
        %1807 = vmatpush1.msra.mxu0 %v1575
        %1808 = vmatprep.mubr.f32.mxu0 %v319
        %1809 = vmatmul.mubr.f32.gmra.mrb[0].mxu0 %v318
        %v1810 = vpop.f32.mrb[0].mxu0
        %v1811 = vadd.f32 %v1706, %v1810
        %v1812 = vpop.f32.mrb[0].mxu0
        %1813 = vmatprep.mubr.f32.mxu0 %v325
        %1814 = vmatmul.mubr.f32.gmra.mrb[0].mxu0 %v324
        %v1815 = vpop.f32.mrb[0].mxu0
        %v1816 = vadd.f32 %v1711, %v1815
        %v1817 = vpop.f32.mrb[0].mxu0
        %1818 = vmatprep.mubr.f32.mxu0 %v331
        %1819 = vmatmul.mubr.f32.gmra.mrb[0].mxu0 %v330
        %v1820 = vpop.f32.mrb[0].mxu0
        %v1821 = vadd.f32 %v1716, %v1820
        %v1822 = vpop.f32.mrb[0].mxu0
        %1823 = vmatprep.mubr.f32.mxu0 %v337
        %1824 = vmatmul.mubr.f32.gmra.mrb[0].mxu0 %v336
        %v1825 = vpop.f32.mrb[0].mxu0
        %v1826 = vadd.f32 %v1721, %v1825
        %v1827 = vpop.f32.mrb[0].mxu0
        %1828 = vmatprep.mubr.f32.mxu0 %v343
        %1829 = vmatmul.mubr.f32.gmra.mrb[0].mxu0 %v342
        %v1830 = vpop.f32.mrb[0].mxu0
        %v1831 = vadd.f32 %v1726, %v1830
        %v1832 = vpop.f32.mrb[0].mxu0
        %1833 = vmatprep.mubr.f32.mxu0 %v349
        %1834 = vmatmul.mubr.f32.gmra.mrb[0].mxu0 %v348
        %v1835 = vpop.f32.mrb[0].mxu0
        %v1836 = vadd.f32 %v1731, %v1835
        %v1837 = vpop.f32.mrb[0].mxu0
        %1838 = vmatprep.mubr.f32.mxu0 %v355
        %1839 = vmatmul.mubr.f32.gmra.mrb[0].mxu0 %v354
        %v1840 = vpop.f32.mrb[0].mxu0
        %v1841 = vadd.f32 %v1736, %v1840
        %v1842 = vpop.f32.mrb[0].mxu0
        %1843 = vmatprep.mubr.f32.mxu0 %v361
        %1844 = vmatmul.mubr.f32.gmra.mrb[0].mxu0 %v360
        %v1845 = vpop.f32.mrb[0].mxu0
        %v1846 = vadd.f32 %v1741, %v1845
        %v1847 = vpop.f32.mrb[0].mxu0
        %1848 = vdwg.mxu0
        %1849 = vmatprep.subr.mxu0 0.0
        %1850 = vmatpush1.msra.mxu0 %v1424
        %1851 = vmatprep.subr.mxu0 0.0
        %1852 = vmatpush1.msra.mxu0 %v1593
        %1853 = vmatprep.subr.mxu0 0.0
        %1854 = vmatpush1.msra.mxu0 %v1595
        %1855 = vmatprep.subr.mxu0 0.0
        %1856 = vmatpush1.msra.mxu0 %v1597
        %1857 = vmatprep.subr.mxu0 0.0
        %1858 = vmatpush1.msra.mxu0 %v1599
        %1859 = vmatprep.subr.mxu0 0.0
        %1860 = vmatpush1.msra.mxu0 %v1601
        %1861 = vmatprep.subr.mxu0 0.0
        %1862 = vmatpush1.msra.mxu0 %v1603
        %1863 = vmatprep.subr.mxu0 0.0
        %1864 = vmatpush1.msra.mxu0 %v1605
        %1865 = vmatprep.subr.mxu0 0.0
        %1866 = vmatpush1.msra.mxu0 %v1607
        %1867 = vmatprep.subr.mxu0 0.0
        %1868 = vmatpush1.msra.mxu0 %v1441
        %1869 = vmatprep.subr.mxu0 0.0
        %1870 = vmatpush1.msra.mxu0 %v1609
        %1871 = vmatprep.subr.mxu0 0.0
        %1872 = vmatpush1.msra.mxu0 %v1611
        %1873 = vmatprep.subr.mxu0 0.0
        %1874 = vmatpush1.msra.mxu0 %v1613
        %1875 = vmatprep.subr.mxu0 0.0
        %1876 = vmatpush1.msra.mxu0 %v1615
        %1877 = vmatprep.subr.mxu0 0.0
        %1878 = vmatpush1.msra.mxu0 %v1617
        %1879 = vmatprep.subr.mxu0 0.0
        %1880 = vmatpush1.msra.mxu0 %v1619
        %1881 = vmatprep.subr.mxu0 0.0
        %1882 = vmatpush1.msra.mxu0 %v1637
        %1883 = vmatprep.subr.mxu0 0.0
        %1884 = vmatpush1.msra.mxu0 0.0
        %1885 = vmatprep.subr.mxu0 0.0
        %1886 = vmatpush1.msra.mxu0 0.0
        %1887 = vmatprep.subr.mxu0 0.0
        %1888 = vmatpush1.msra.mxu0 0.0
        %1889 = vmatprep.subr.mxu0 0.0
        %1890 = vmatpush1.msra.mxu0 0.0
        %1891 = vmatprep.subr.mxu0 0.0
        %1892 = vmatpush1.msra.mxu0 0.0
        %1893 = vmatprep.subr.mxu0 0.0
        %1894 = vmatpush1.msra.mxu0 0.0
        %1895 = vmatprep.subr.mxu0 0.0
        %1896 = vmatpush1.msra.mxu0 0.0
        %1897 = vmatprep.subr.mxu0 0.0
        %1898 = vmatpush1.msra.mxu0 0.0
        %1899 = vmatprep.subr.mxu0 0.0
        %1900 = vmatpush1.msra.mxu0 0.0
        %1901 = vmatprep.subr.mxu0 0.0
        %1902 = vmatpush1.msra.mxu0 0.0
        %1903 = vmatprep.subr.mxu0 0.0
        %1904 = vmatpush1.msra.mxu0 0.0
        %1905 = vmatprep.subr.mxu0 0.0
        %1906 = vmatpush1.msra.mxu0 0.0
        %1907 = vmatprep.subr.mxu0 0.0
        %1908 = vmatpush1.msra.mxu0 0.0
        %1909 = vmatprep.subr.mxu0 0.0
        %1910 = vmatpush1.msra.mxu0 0.0
        %1911 = vmatprep.subr.mxu0 0.0
        %1912 = vmatpush1.msra.mxu0 0.0
        %1913 = vmatprep.mubr.f32.mxu0 %v806
        %1914 = vmatmul.mubr.f32.gmra.mrb[0].mxu0 %v320
        %v1915 = vpop.f32.mrb[0].mxu0
        %v1916 = vadd.f32 %v1811, %v1915
        %v1917 = vpop.f32.mrb[0].mxu0
        %1918 = vmatprep.mubr.f32.mxu0 %v809
        %1919 = vmatmul.mubr.f32.gmra.mrb[0].mxu0 %v326
        %v1920 = vpop.f32.mrb[0].mxu0
        %v1921 = vadd.f32 %v1816, %v1920
        %v1922 = vpop.f32.mrb[0].mxu0
        %1923 = vmatprep.mubr.f32.mxu0 %v812
        %1924 = vmatmul.mubr.f32.gmra.mrb[0].mxu0 %v332
        %v1925 = vpop.f32.mrb[0].mxu0
        %v1926 = vadd.f32 %v1821, %v1925
        %v1927 = vpop.f32.mrb[0].mxu0
        %1928 = vmatprep.mubr.f32.mxu0 %v815
        %1929 = vmatmul.mubr.f32.gmra.mrb[0].mxu0 %v338
        %v1930 = vpop.f32.mrb[0].mxu0
        %v1931 = vadd.f32 %v1826, %v1930
        %v1932 = vpop.f32.mrb[0].mxu0
        %1933 = vmatprep.mubr.f32.mxu0 %v818
        %1934 = vmatmul.mubr.f32.gmra.mrb[0].mxu0 %v344
        %v1935 = vpop.f32.mrb[0].mxu0
        %v1936 = vadd.f32 %v1831, %v1935
        %v1937 = vpop.f32.mrb[0].mxu0
        %1938 = vmatprep.mubr.f32.mxu0 %v821
        %1939 = vmatmul.mubr.f32.gmra.mrb[0].mxu0 %v350
        %v1940 = vpop.f32.mrb[0].mxu0
        %v1941 = vadd.f32 %v1836, %v1940
        %v1942 = vpop.f32.mrb[0].mxu0
        %1943 = vmatprep.mubr.f32.mxu0 %v824
        %1944 = vmatmul.mubr.f32.gmra.mrb[0].mxu0 %v356
        %v1945 = vpop.f32.mrb[0].mxu0
        %v1946 = vadd.f32 %v1841, %v1945
        %v1947 = vpop.f32.mrb[0].mxu0
        %1948 = vmatprep.mubr.f32.mxu0 %v827
        %1949 = vmatmul.mubr.f32.gmra.mrb[0].mxu0 %v362
        %v1950 = vpop.f32.mrb[0].mxu0
        %v1951 = vadd.f32 %v1846, %v1950
        %v1952 = vpop.f32.mrb[0].mxu0
        %1953 = vdwg.mxu0
        %v1954 = vmax.f32 %v1916, 0.0
        %v1955 = vmax.f32 %v1921, 0.0
        %v1956 = vmax.f32 %v1926, 0.0
        %v1957 = vmax.f32 %v1931, 0.0
        %v1958 = vmax.f32 %v1936, 0.0
        %v1959 = vmax.f32 %v1941, 0.0
        %v1960 = vmax.f32 %v1946, 0.0
        %v1961 = vmax.f32 %v1951, 0.0
        %1962 = vmatprep.subr.mxu0 0.0
        %1963 = vmatpush1.msra.mxu0 %v1954
        %1964 = vmatprep.subr.mxu0 0.0
        %1965 = vmatpush1.msra.mxu0 %v1955
        %1966 = vmatprep.subr.mxu0 0.0
        %1967 = vmatpush1.msra.mxu0 %v1956
        %1968 = vmatprep.subr.mxu0 0.0
        %1969 = vmatpush1.msra.mxu0 %v1957
        %1970 = vmatprep.subr.mxu0 0.0
        %1971 = vmatpush1.msra.mxu0 %v1958
        %1972 = vmatprep.subr.mxu0 0.0
        %1973 = vmatpush1.msra.mxu0 %v1959
        %1974 = vmatprep.subr.mxu0 0.0
        %1975 = vmatpush1.msra.mxu0 %v1960
        %1976 = vmatprep.subr.mxu0 0.0
        %1977 = vmatpush1.msra.mxu0 %v1961
        %1978 = vmatprep.subr.mxu0 0.0
        %1979 = vmatpush1.msra.mxu0 0.0
        %1980 = vmatprep.subr.mxu0 0.0
        %1981 = vmatpush1.msra.mxu0 0.0
        %1982 = vmatprep.subr.mxu0 0.0
        %1983 = vmatpush1.msra.mxu0 0.0
        %1984 = vmatprep.subr.mxu0 0.0
        %1985 = vmatpush1.msra.mxu0 0.0
        %1986 = vmatprep.subr.mxu0 0.0
        %1987 = vmatpush1.msra.mxu0 0.0
        %1988 = vmatprep.subr.mxu0 0.0
        %1989 = vmatpush1.msra.mxu0 0.0
        %1990 = vmatprep.subr.mxu0 0.0
        %1991 = vmatpush1.msra.mxu0 0.0
        %1992 = vmatprep.subr.mxu0 0.0
        %1993 = vmatpush1.msra.mxu0 0.0
        %1994 = vmatprep.subr.mxu0 0.0
        %1995 = vmatpush1.msra.mxu0 0.0
        %1996 = vmatprep.subr.mxu0 0.0
        %1997 = vmatpush1.msra.mxu0 0.0
        %1998 = vmatprep.subr.mxu0 0.0
        %1999 = vmatpush1.msra.mxu0 0.0
        %2000 = vmatprep.subr.mxu0 0.0
        %2001 = vmatpush1.msra.mxu0 0.0
        %2002 = vmatprep.subr.mxu0 0.0
        %2003 = vmatpush1.msra.mxu0 0.0
        %2004 = vmatprep.subr.mxu0 0.0
        %2005 = vmatpush1.msra.mxu0 0.0
        %2006 = vmatprep.subr.mxu0 0.0
        %2007 = vmatpush1.msra.mxu0 0.0
        %2008 = vmatprep.subr.mxu0 0.0
        %2009 = vmatpush1.msra.mxu0 0.0
        %2010 = vmatprep.subr.mxu0 0.0
        %2011 = vmatpush1.msra.mxu0 0.0
        %2012 = vmatprep.subr.mxu0 0.0
        %2013 = vmatpush1.msra.mxu0 0.0
        %2014 = vmatprep.subr.mxu0 0.0
        %2015 = vmatpush1.msra.mxu0 0.0
        %2016 = vmatprep.subr.mxu0 0.0
        %2017 = vmatpush1.msra.mxu0 0.0
        %2018 = vmatprep.subr.mxu0 0.0
        %2019 = vmatpush1.msra.mxu0 0.0
        %2020 = vmatprep.subr.mxu0 0.0
        %2021 = vmatpush1.msra.mxu0 0.0
        %2022 = vmatprep.subr.mxu0 0.0
        %2023 = vmatpush1.msra.mxu0 0.0
        %2024 = vmatprep.subr.mxu0 0.0
        %2025 = vmatpush1.msra.mxu0 0.0
        %2026 = vmatprep.mubr.f32.mxu0 0.0
        %2027 = vmatmul.mubr.f32.gmra.mrb[0].mxu0 %v1174
        %v2028 = vpop.f32.mrb[0].mxu0
        %v2029 = vadd.f32 %v1155, %v2028
        %v2030 = vpop.f32.mrb[0].mxu0
        %2031 = vmatprep.mubr.f32.mxu0 0.0
        %2032 = vmatmul.mubr.f32.gmra.mrb[0].mxu0 %v1177
        %v2033 = vpop.f32.mrb[0].mxu0
        %v2034 = vadd.f32 %v1160, %v2033
        %v2035 = vpop.f32.mrb[0].mxu0
        %2036 = vmatprep.mubr.f32.mxu0 0.0
        %2037 = vmatmul.mubr.f32.gmra.mrb[0].mxu0 %v1180
        %v2038 = vpop.f32.mrb[0].mxu0
        %v2039 = vadd.f32 %v1165, %v2038
        %v2040 = vpop.f32.mrb[0].mxu0
        %2041 = vmatprep.mubr.f32.mxu0 0.0
        %2042 = vmatmul.mubr.f32.gmra.mrb[0].mxu0 %v1183
        %v2043 = vpop.f32.mrb[0].mxu0
        %v2044 = vadd.f32 %v1170, %v2043
        %v2045 = vpop.f32.mrb[0].mxu0
        %2046 = vdwg.mxu0
        %v2047 = vmax.f32 %v2029, 0.0
        %v2048 = vmax.f32 %v2034, 0.0
        %v2049 = vmax.f32 %v2039, 0.0
        %v2050 = vmax.f32 %v2044, 0.0
        %s2051 = scalar_lea.vmem %s314, 32 [#allocation11]
        %2052 = vst.msk [vmem:[%s2051] sm:$0xff] %vm1274, %v2047
        %2053 = vst.msk [vmem:[%s2051 + $0x8] sm:$0xff] %vm1274, %v2048
        %2054 = vst.msk [vmem:[%s2051 + $0x10] sm:$0xff] %vm1274, %v2049
        %2055 = vst.msk [vmem:[%s2051 + $0x18] sm:$0xff] %vm1274, %v2050
        %v2056 = vld [vmem:[%s390] sm:$0xff]
        %v2057 = vld [vmem:[%s394] sm:$0xff]
        %v2058 = vld [vmem:[%s398] sm:$0xff]
        %v2059 = vld [vmem:[%s402] sm:$0xff]
        %v2060 = vld [vmem:[%s406] sm:$0xff]
        %v2061 = vld [vmem:[%s410] sm:$0xff]
        %v2062 = vld [vmem:[%s414] sm:$0xff]
        %v2063 = vld [vmem:[%s1289] sm:$0xff]
        %s2064 = sadd.s32 %s380, 10
        %s2065 = smul.u32 %s2064, 8
        %s2066 = scalar_lea.vmem %s272, %s2065 [#allocation2]
        %v2067 = vld [vmem:[%s2066] sm:$0xff]
        %2069 = vrot.lane.b32.xlu0 %v2056, 127
        %v2070 = vpop.permute.xlu0 %2069
        %2072 = vrot.lane.b32.xlu0 %v2056, 126
        %v2073 = vpop.permute.xlu0 %2072
        %2075 = vrot.lane.b32.xlu0 %v2056, 125
        %v2076 = vpop.permute.xlu0 %2075
        %2078 = vrot.lane.b32.xlu0 %v2056, 124
        %v2079 = vpop.permute.xlu0 %2078
        %2081 = vrot.lane.b32.xlu0 %v2056, 123
        %v2082 = vpop.permute.xlu0 %2081
        %2084 = vrot.lane.b32.xlu0 %v2056, 122
        %v2085 = vpop.permute.xlu0 %2084
        %2087 = vrot.lane.b32.xlu0 %v2056, 121
        %v2088 = vpop.permute.xlu0 %2087
        %2090 = vrot.lane.b32.xlu0 %v2056, 120
        %v2091 = vpop.permute.xlu0 %2090
        %2094 = vrot.lane.b32.xlu0 %v2057, 127
        %v2095 = vpop.permute.xlu0 %2094
        %2097 = vrot.lane.b32.xlu0 %v2057, 126
        %v2098 = vpop.permute.xlu0 %2097
        %2100 = vrot.lane.b32.xlu0 %v2057, 125
        %v2101 = vpop.permute.xlu0 %2100
        %2103 = vrot.lane.b32.xlu0 %v2057, 124
        %v2104 = vpop.permute.xlu0 %2103
        %2106 = vrot.lane.b32.xlu0 %v2057, 123
        %v2107 = vpop.permute.xlu0 %2106
        %2109 = vrot.lane.b32.xlu0 %v2057, 122
        %v2110 = vpop.permute.xlu0 %2109
        %2113 = vrot.lane.b32.xlu0 %v2058, 7
        %v2114 = vpop.permute.xlu0 %2113
        %2115 = vrot.lane.b32.xlu0 %v2058, 6
        %v2116 = vpop.permute.xlu0 %2115
        %2117 = vrot.lane.b32.xlu0 %v2058, 5
        %v2118 = vpop.permute.xlu0 %2117
        %2119 = vrot.lane.b32.xlu0 %v2058, 4
        %v2120 = vpop.permute.xlu0 %2119
        %2121 = vrot.lane.b32.xlu0 %v2058, 3
        %v2122 = vpop.permute.xlu0 %2121
        %2123 = vrot.lane.b32.xlu0 %v2058, 2
        %v2124 = vpop.permute.xlu0 %2123
        %2125 = vrot.lane.b32.xlu0 %v2058, 1
        %v2126 = vpop.permute.xlu0 %2125
        %2127 = vrot.lane.b32.xlu0 %v2058, 127
        %v2128 = vpop.permute.xlu0 %2127
        %2130 = vrot.lane.b32.xlu0 %v2059, 7
        %v2131 = vpop.permute.xlu0 %2130
        %2132 = vrot.lane.b32.xlu0 %v2059, 6
        %v2133 = vpop.permute.xlu0 %2132
        %2134 = vrot.lane.b32.xlu0 %v2059, 5
        %v2135 = vpop.permute.xlu0 %2134
        %2136 = vrot.lane.b32.xlu0 %v2059, 4
        %v2137 = vpop.permute.xlu0 %2136
        %2138 = vrot.lane.b32.xlu0 %v2059, 3
        %v2139 = vpop.permute.xlu0 %2138
        %2140 = vrot.lane.b32.xlu0 %v2059, 127
        %v2141 = vpop.permute.xlu0 %2140
        %2142 = vrot.lane.b32.xlu0 %v2059, 126
        %v2143 = vpop.permute.xlu0 %2142
        %2144 = vrot.lane.b32.xlu0 %v2059, 125
        %v2145 = vpop.permute.xlu0 %2144
        %2147 = vrot.lane.b32.xlu0 %v2060, 5
        %v2148 = vpop.permute.xlu0 %2147
        %2149 = vrot.lane.b32.xlu0 %v2060, 4
        %v2150 = vpop.permute.xlu0 %2149
        %2151 = vrot.lane.b32.xlu0 %v2060, 3
        %v2152 = vpop.permute.xlu0 %2151
        %2153 = vrot.lane.b32.xlu0 %v2060, 2
        %v2154 = vpop.permute.xlu0 %2153
        %2155 = vrot.lane.b32.xlu0 %v2060, 1
        %v2156 = vpop.permute.xlu0 %2155
        %2157 = vrot.lane.b32.xlu0 %v2060, 127
        %v2158 = vpop.permute.xlu0 %2157
        %2159 = vrot.lane.b32.xlu0 %v2060, 126
        %v2160 = vpop.permute.xlu0 %2159
        %2161 = vrot.lane.b32.xlu0 %v2060, 125
        %v2162 = vpop.permute.xlu0 %2161
        %2164 = vrot.lane.b32.xlu0 %v2061, 5
        %v2165 = vpop.permute.xlu0 %2164
        %2166 = vrot.lane.b32.xlu0 %v2061, 4
        %v2167 = vpop.permute.xlu0 %2166
        %2168 = vrot.lane.b32.xlu0 %v2061, 3
        %v2169 = vpop.permute.xlu0 %2168
        %2170 = vrot.lane.b32.xlu0 %v2061, 127
        %v2171 = vpop.permute.xlu0 %2170
        %2172 = vrot.lane.b32.xlu0 %v2061, 126
        %v2173 = vpop.permute.xlu0 %2172
        %2174 = vrot.lane.b32.xlu0 %v2061, 125
        %v2175 = vpop.permute.xlu0 %2174
        %2176 = vrot.lane.b32.xlu0 %v2061, 124
        %v2177 = vpop.permute.xlu0 %2176
        %2178 = vrot.lane.b32.xlu0 %v2061, 123
        %v2179 = vpop.permute.xlu0 %2178
        %2181 = vrot.lane.b32.xlu0 %v2062, 3
        %v2182 = vpop.permute.xlu0 %2181
        %2183 = vrot.lane.b32.xlu0 %v2062, 2
        %v2184 = vpop.permute.xlu0 %2183
        %2185 = vrot.lane.b32.xlu0 %v2062, 1
        %v2186 = vpop.permute.xlu0 %2185
        %2187 = vrot.lane.b32.xlu0 %v2062, 127
        %v2188 = vpop.permute.xlu0 %2187
        %2189 = vrot.lane.b32.xlu0 %v2062, 126
        %v2190 = vpop.permute.xlu0 %2189
        %2191 = vrot.lane.b32.xlu0 %v2062, 125
        %v2192 = vpop.permute.xlu0 %2191
        %2193 = vrot.lane.b32.xlu0 %v2062, 124
        %v2194 = vpop.permute.xlu0 %2193
        %2195 = vrot.lane.b32.xlu0 %v2062, 123
        %v2196 = vpop.permute.xlu0 %2195
        %2198 = vrot.lane.b32.xlu0 %v2063, 3
        %v2199 = vpop.permute.xlu0 %2198
        %2200 = vrot.lane.b32.xlu0 %v2063, 127
        %v2201 = vpop.permute.xlu0 %2200
        %2202 = vrot.lane.b32.xlu0 %v2063, 126
        %v2203 = vpop.permute.xlu0 %2202
        %2204 = vrot.lane.b32.xlu0 %v2063, 125
        %v2205 = vpop.permute.xlu0 %2204
        %2206 = vrot.lane.b32.xlu0 %v2063, 124
        %v2207 = vpop.permute.xlu0 %2206
        %2208 = vrot.lane.b32.xlu0 %v2063, 123
        %v2209 = vpop.permute.xlu0 %2208
        %2210 = vrot.lane.b32.xlu0 %v2063, 122
        %v2211 = vpop.permute.xlu0 %2210
        %2212 = vrot.lane.b32.xlu0 %v2063, 121
        %v2213 = vpop.permute.xlu0 %2212
        %2215 = vrot.lane.b32.xlu0 %v2067, 1
        %v2216 = vpop.permute.xlu0 %2215
        %2217 = vrot.lane.b32.xlu0 %v2067, 127
        %v2218 = vpop.permute.xlu0 %2217
        %2219 = vrot.lane.b32.xlu0 %v2067, 126
        %v2220 = vpop.permute.xlu0 %2219
        %2221 = vrot.lane.b32.xlu0 %v2067, 125
        %v2222 = vpop.permute.xlu0 %2221
        %2223 = vrot.lane.b32.xlu0 %v2067, 124
        %v2224 = vpop.permute.xlu0 %2223
        %2225 = vrot.lane.b32.xlu0 %v2067, 123
        %v2226 = vpop.permute.xlu0 %2225
        %2227 = vrot.lane.b32.xlu0 %v2067, 122
        %v2228 = vpop.permute.xlu0 %2227
        %2229 = vrot.lane.b32.xlu0 %v2057, 121
        %v2230 = vpop.permute.xlu0 %2229
        %2231 = vrot.lane.b32.xlu0 %v2095, 121
        %v2232 = vpop.permute.xlu0 %2231
        %2233 = vrot.lane.b32.xlu0 %v2114, 121
        %v2234 = vpop.permute.xlu0 %2233
        %2235 = vrot.lane.b32.xlu0 %v2116, 121
        %v2236 = vpop.permute.xlu0 %2235
        %2237 = vrot.lane.b32.xlu0 %v2118, 121
        %v2238 = vpop.permute.xlu0 %2237
        %2239 = vrot.lane.b32.xlu0 %v2120, 121
        %v2240 = vpop.permute.xlu0 %2239
        %2241 = vrot.lane.b32.xlu0 %v2122, 121
        %v2242 = vpop.permute.xlu0 %2241
        %2243 = vrot.lane.b32.xlu0 %v2124, 121
        %v2244 = vpop.permute.xlu0 %2243
        %2245 = vrot.lane.b32.xlu0 %v2126, 121
        %v2246 = vpop.permute.xlu0 %2245
        %2247 = vrot.lane.b32.xlu0 %v2058, 121
        %v2248 = vpop.permute.xlu0 %2247
        %2249 = vrot.lane.b32.xlu0 %v2128, 121
        %v2250 = vpop.permute.xlu0 %2249
        %2251 = vrot.lane.b32.xlu0 %v2131, 121
        %v2252 = vpop.permute.xlu0 %2251
        %2253 = vrot.lane.b32.xlu0 %v2133, 121
        %v2254 = vpop.permute.xlu0 %2253
        %2255 = vrot.lane.b32.xlu0 %v2135, 121
        %v2256 = vpop.permute.xlu0 %2255
        %2257 = vrot.lane.b32.xlu0 %v2137, 121
        %v2258 = vpop.permute.xlu0 %2257
        %2259 = vrot.lane.b32.xlu0 %v2139, 121
        %v2260 = vpop.permute.xlu0 %2259
        %2277 = vrot.lane.b32.xlu0 %v2059, 123
        %v2278 = vpop.permute.xlu0 %2277
        %2279 = vrot.lane.b32.xlu0 %v2141, 123
        %v2280 = vpop.permute.xlu0 %2279
        %2281 = vrot.lane.b32.xlu0 %v2143, 123
        %v2282 = vpop.permute.xlu0 %2281
        %2283 = vrot.lane.b32.xlu0 %v2145, 123
        %v2284 = vpop.permute.xlu0 %2283
        %2285 = vrot.lane.b32.xlu0 %v2148, 123
        %v2286 = vpop.permute.xlu0 %2285
        %2287 = vrot.lane.b32.xlu0 %v2150, 123
        %v2288 = vpop.permute.xlu0 %2287
        %2289 = vrot.lane.b32.xlu0 %v2152, 123
        %v2290 = vpop.permute.xlu0 %2289
        %2291 = vrot.lane.b32.xlu0 %v2154, 123
        %v2292 = vpop.permute.xlu0 %2291
        %2293 = vrot.lane.b32.xlu0 %v2156, 123
        %v2294 = vpop.permute.xlu0 %2293
        %2295 = vrot.lane.b32.xlu0 %v2060, 123
        %v2296 = vpop.permute.xlu0 %2295
        %2297 = vrot.lane.b32.xlu0 %v2158, 123
        %v2298 = vpop.permute.xlu0 %2297
        %2299 = vrot.lane.b32.xlu0 %v2160, 123
        %v2300 = vpop.permute.xlu0 %2299
        %2301 = vrot.lane.b32.xlu0 %v2162, 123
        %v2302 = vpop.permute.xlu0 %2301
        %2303 = vrot.lane.b32.xlu0 %v2165, 123
        %v2304 = vpop.permute.xlu0 %2303
        %2305 = vrot.lane.b32.xlu0 %v2167, 123
        %v2306 = vpop.permute.xlu0 %2305
        %2307 = vrot.lane.b32.xlu0 %v2169, 123
        %v2308 = vpop.permute.xlu0 %2307
        %2325 = vrot.lane.b32.xlu0 %v2171, 125
        %v2326 = vpop.permute.xlu0 %2325
        %2327 = vrot.lane.b32.xlu0 %v2173, 125
        %v2328 = vpop.permute.xlu0 %2327
        %2329 = vrot.lane.b32.xlu0 %v2175, 125
        %v2330 = vpop.permute.xlu0 %2329
        %2331 = vrot.lane.b32.xlu0 %v2177, 125
        %v2332 = vpop.permute.xlu0 %2331
        %2333 = vrot.lane.b32.xlu0 %v2179, 125
        %v2334 = vpop.permute.xlu0 %2333
        %2335 = vrot.lane.b32.xlu0 %v2182, 125
        %v2336 = vpop.permute.xlu0 %2335
        %2337 = vrot.lane.b32.xlu0 %v2184, 125
        %v2338 = vpop.permute.xlu0 %2337
        %2339 = vrot.lane.b32.xlu0 %v2186, 125
        %v2340 = vpop.permute.xlu0 %2339
        %2341 = vrot.lane.b32.xlu0 %v2188, 125
        %v2342 = vpop.permute.xlu0 %2341
        %2343 = vrot.lane.b32.xlu0 %v2190, 125
        %v2344 = vpop.permute.xlu0 %2343
        %2345 = vrot.lane.b32.xlu0 %v2192, 125
        %v2346 = vpop.permute.xlu0 %2345
        %2347 = vrot.lane.b32.xlu0 %v2194, 125
        %v2348 = vpop.permute.xlu0 %2347
        %2349 = vrot.lane.b32.xlu0 %v2196, 125
        %v2350 = vpop.permute.xlu0 %2349
        %2351 = vrot.lane.b32.xlu0 %v2199, 125
        %v2352 = vpop.permute.xlu0 %2351
        %2369 = vrot.lane.b32.xlu0 %v2201, 127
        %v2370 = vpop.permute.xlu0 %2369
        %2371 = vrot.lane.b32.xlu0 %v2203, 127
        %v2372 = vpop.permute.xlu0 %2371
        %2373 = vrot.lane.b32.xlu0 %v2205, 127
        %v2374 = vpop.permute.xlu0 %2373
        %2375 = vrot.lane.b32.xlu0 %v2207, 127
        %v2376 = vpop.permute.xlu0 %2375
        %2377 = vrot.lane.b32.xlu0 %v2209, 127
        %v2378 = vpop.permute.xlu0 %2377
        %2379 = vrot.lane.b32.xlu0 %v2211, 127
        %v2380 = vpop.permute.xlu0 %2379
        %2381 = vrot.lane.b32.xlu0 %v2213, 127
        %v2382 = vpop.permute.xlu0 %2381
        %2383 = vrot.lane.b32.xlu0 %v2216, 127
        %v2384 = vpop.permute.xlu0 %2383
        %2385 = vrot.lane.b32.xlu0 %v2218, 127
        %v2386 = vpop.permute.xlu0 %2385
        %2387 = vrot.lane.b32.xlu0 %v2220, 127
        %v2388 = vpop.permute.xlu0 %2387
        %2389 = vrot.lane.b32.xlu0 %v2222, 127
        %v2390 = vpop.permute.xlu0 %2389
        %2391 = vrot.lane.b32.xlu0 %v2224, 127
        %v2392 = vpop.permute.xlu0 %2391
        %2393 = vrot.lane.b32.xlu0 %v2226, 127
        %v2394 = vpop.permute.xlu0 %2393
        %2395 = vrot.lane.b32.xlu0 %v2228, 127
        %v2396 = vpop.permute.xlu0 %2395
        %2413 = vrot.lane.b32.xlu0 %v2067, 120
        %v2414 = vpop.permute.xlu0 %2413
        %2416 = vmatprep.subr.mxu0 0.0
        %2417 = vmatpush1.msra.mxu0 %v2056
        %2418 = vmatprep.subr.mxu0 0.0
        %2419 = vmatpush1.msra.mxu0 %v2070
        %2420 = vmatprep.subr.mxu0 0.0
        %2421 = vmatpush1.msra.mxu0 %v2073
        %2422 = vmatprep.subr.mxu0 0.0
        %2423 = vmatpush1.msra.mxu0 %v2076
        %2424 = vmatprep.subr.mxu0 0.0
        %2425 = vmatpush1.msra.mxu0 %v2079
        %2426 = vmatprep.subr.mxu0 0.0
        %2427 = vmatpush1.msra.mxu0 %v2082
        %2428 = vmatprep.subr.mxu0 0.0
        %2429 = vmatpush1.msra.mxu0 %v2085
        %2430 = vmatprep.subr.mxu0 0.0
        %2431 = vmatpush1.msra.mxu0 %v2088
        %2432 = vmatprep.subr.mxu0 0.0
        %2433 = vmatpush1.msra.mxu0 %v2091
        %2434 = vmatprep.subr.mxu0 0.0
        %2435 = vmatpush1.msra.mxu0 %v2057
        %2436 = vmatprep.subr.mxu0 0.0
        %2437 = vmatpush1.msra.mxu0 %v2095
        %2438 = vmatprep.subr.mxu0 0.0
        %2439 = vmatpush1.msra.mxu0 %v2098
        %2440 = vmatprep.subr.mxu0 0.0
        %2441 = vmatpush1.msra.mxu0 %v2101
        %2442 = vmatprep.subr.mxu0 0.0
        %2443 = vmatpush1.msra.mxu0 %v2104
        %2444 = vmatprep.subr.mxu0 0.0
        %2445 = vmatpush1.msra.mxu0 %v2107
        %2446 = vmatprep.subr.mxu0 0.0
        %2447 = vmatpush1.msra.mxu0 %v2110
        %2448 = vmatprep.subr.mxu0 0.0
        %2449 = vmatpush1.msra.mxu0 %v2230
        %2450 = vmatprep.subr.mxu0 0.0
        %2451 = vmatpush1.msra.mxu0 %v2232
        %2452 = vmatprep.subr.mxu0 0.0
        %2453 = vmatpush1.msra.mxu0 %v2234
        %2454 = vmatprep.subr.mxu0 0.0
        %2455 = vmatpush1.msra.mxu0 %v2236
        %2456 = vmatprep.subr.mxu0 0.0
        %2457 = vmatpush1.msra.mxu0 %v2238
        %2458 = vmatprep.subr.mxu0 0.0
        %2459 = vmatpush1.msra.mxu0 %v2240
        %2460 = vmatprep.subr.mxu0 0.0
        %2461 = vmatpush1.msra.mxu0 %v2242
        %2462 = vmatprep.subr.mxu0 0.0
        %2463 = vmatpush1.msra.mxu0 %v2244
        %2464 = vmatprep.subr.mxu0 0.0
        %2465 = vmatpush1.msra.mxu0 %v2246
        %2466 = vmatprep.subr.mxu0 0.0
        %2467 = vmatpush1.msra.mxu0 %v2248
        %2468 = vmatprep.subr.mxu0 0.0
        %2469 = vmatpush1.msra.mxu0 %v2250
        %2470 = vmatprep.subr.mxu0 0.0
        %2471 = vmatpush1.msra.mxu0 %v2252
        %2472 = vmatprep.subr.mxu0 0.0
        %2473 = vmatpush1.msra.mxu0 %v2254
        %2474 = vmatprep.subr.mxu0 0.0
        %2475 = vmatpush1.msra.mxu0 %v2256
        %2476 = vmatprep.subr.mxu0 0.0
        %2477 = vmatpush1.msra.mxu0 %v2258
        %2478 = vmatprep.subr.mxu0 0.0
        %2479 = vmatpush1.msra.mxu0 %v2260
        %2480 = vmatprep.mubr.f32.mxu0 %v317
        %2481 = vmatmul.mubr.f32.gmra.mrb[0].mxu0 %v316
        %v2482 = vpop.f32.mrb[0].mxu0
        %v2483 = vadd.f32 %v767, %v2482
        %v2484 = vpop.f32.mrb[0].mxu0
        %2485 = vmatprep.mubr.f32.mxu0 %v323
        %2486 = vmatmul.mubr.f32.gmra.mrb[0].mxu0 %v322
        %v2487 = vpop.f32.mrb[0].mxu0
        %v2488 = vadd.f32 %v772, %v2487
        %v2489 = vpop.f32.mrb[0].mxu0
        %2490 = vmatprep.mubr.f32.mxu0 %v329
        %2491 = vmatmul.mubr.f32.gmra.mrb[0].mxu0 %v328
        %v2492 = vpop.f32.mrb[0].mxu0
        %v2493 = vadd.f32 %v777, %v2492
        %v2494 = vpop.f32.mrb[0].mxu0
        %2495 = vmatprep.mubr.f32.mxu0 %v335
        %2496 = vmatmul.mubr.f32.gmra.mrb[0].mxu0 %v334
        %v2497 = vpop.f32.mrb[0].mxu0
        %v2498 = vadd.f32 %v782, %v2497
        %v2499 = vpop.f32.mrb[0].mxu0
        %2500 = vmatprep.mubr.f32.mxu0 %v341
        %2501 = vmatmul.mubr.f32.gmra.mrb[0].mxu0 %v340
        %v2502 = vpop.f32.mrb[0].mxu0
        %v2503 = vadd.f32 %v787, %v2502
        %v2504 = vpop.f32.mrb[0].mxu0
        %2505 = vmatprep.mubr.f32.mxu0 %v347
        %2506 = vmatmul.mubr.f32.gmra.mrb[0].mxu0 %v346
        %v2507 = vpop.f32.mrb[0].mxu0
        %v2508 = vadd.f32 %v792, %v2507
        %v2509 = vpop.f32.mrb[0].mxu0
        %2510 = vmatprep.mubr.f32.mxu0 %v353
        %2511 = vmatmul.mubr.f32.gmra.mrb[0].mxu0 %v352
        %v2512 = vpop.f32.mrb[0].mxu0
        %v2513 = vadd.f32 %v797, %v2512
        %v2514 = vpop.f32.mrb[0].mxu0
        %2515 = vmatprep.mubr.f32.mxu0 %v359
        %2516 = vmatmul.mubr.f32.gmra.mrb[0].mxu0 %v358
        %v2517 = vpop.f32.mrb[0].mxu0
        %v2518 = vadd.f32 %v802, %v2517
        %v2519 = vpop.f32.mrb[0].mxu0
        %2520 = vdwg.mxu0
        %2521 = vmatprep.subr.mxu0 0.0
        %2522 = vmatpush1.msra.mxu0 %v2278
        %2523 = vmatprep.subr.mxu0 0.0
        %2524 = vmatpush1.msra.mxu0 %v2280
        %2525 = vmatprep.subr.mxu0 0.0
        %2526 = vmatpush1.msra.mxu0 %v2282
        %2527 = vmatprep.subr.mxu0 0.0
        %2528 = vmatpush1.msra.mxu0 %v2284
        %2529 = vmatprep.subr.mxu0 0.0
        %2530 = vmatpush1.msra.mxu0 %v2286
        %2531 = vmatprep.subr.mxu0 0.0
        %2532 = vmatpush1.msra.mxu0 %v2288
        %2533 = vmatprep.subr.mxu0 0.0
        %2534 = vmatpush1.msra.mxu0 %v2290
        %2535 = vmatprep.subr.mxu0 0.0
        %2536 = vmatpush1.msra.mxu0 %v2292
        %2537 = vmatprep.subr.mxu0 0.0
        %2538 = vmatpush1.msra.mxu0 %v2294
        %2539 = vmatprep.subr.mxu0 0.0
        %2540 = vmatpush1.msra.mxu0 %v2296
        %2541 = vmatprep.subr.mxu0 0.0
        %2542 = vmatpush1.msra.mxu0 %v2298
        %2543 = vmatprep.subr.mxu0 0.0
        %2544 = vmatpush1.msra.mxu0 %v2300
        %2545 = vmatprep.subr.mxu0 0.0
        %2546 = vmatpush1.msra.mxu0 %v2302
        %2547 = vmatprep.subr.mxu0 0.0
        %2548 = vmatpush1.msra.mxu0 %v2304
        %2549 = vmatprep.subr.mxu0 0.0
        %2550 = vmatpush1.msra.mxu0 %v2306
        %2551 = vmatprep.subr.mxu0 0.0
        %2552 = vmatpush1.msra.mxu0 %v2308
        %2553 = vmatprep.subr.mxu0 0.0
        %2554 = vmatpush1.msra.mxu0 %v2175
        %2555 = vmatprep.subr.mxu0 0.0
        %2556 = vmatpush1.msra.mxu0 %v2326
        %2557 = vmatprep.subr.mxu0 0.0
        %2558 = vmatpush1.msra.mxu0 %v2328
        %2559 = vmatprep.subr.mxu0 0.0
        %2560 = vmatpush1.msra.mxu0 %v2330
        %2561 = vmatprep.subr.mxu0 0.0
        %2562 = vmatpush1.msra.mxu0 %v2332
        %2563 = vmatprep.subr.mxu0 0.0
        %2564 = vmatpush1.msra.mxu0 %v2334
        %2565 = vmatprep.subr.mxu0 0.0
        %2566 = vmatpush1.msra.mxu0 %v2336
        %2567 = vmatprep.subr.mxu0 0.0
        %2568 = vmatpush1.msra.mxu0 %v2338
        %2569 = vmatprep.subr.mxu0 0.0
        %2570 = vmatpush1.msra.mxu0 %v2340
        %2571 = vmatprep.subr.mxu0 0.0
        %2572 = vmatpush1.msra.mxu0 %v2192
        %2573 = vmatprep.subr.mxu0 0.0
        %2574 = vmatpush1.msra.mxu0 %v2342
        %2575 = vmatprep.subr.mxu0 0.0
        %2576 = vmatpush1.msra.mxu0 %v2344
        %2577 = vmatprep.subr.mxu0 0.0
        %2578 = vmatpush1.msra.mxu0 %v2346
        %2579 = vmatprep.subr.mxu0 0.0
        %2580 = vmatpush1.msra.mxu0 %v2348
        %2581 = vmatprep.subr.mxu0 0.0
        %2582 = vmatpush1.msra.mxu0 %v2350
        %2583 = vmatprep.subr.mxu0 0.0
        %2584 = vmatpush1.msra.mxu0 %v2352
        %2585 = vmatprep.mubr.f32.mxu0 %v319
        %2586 = vmatmul.mubr.f32.gmra.mrb[0].mxu0 %v318
        %v2587 = vpop.f32.mrb[0].mxu0
        %v2588 = vadd.f32 %v2483, %v2587
        %v2589 = vpop.f32.mrb[0].mxu0
        %2590 = vmatprep.mubr.f32.mxu0 %v325
        %2591 = vmatmul.mubr.f32.gmra.mrb[0].mxu0 %v324
        %v2592 = vpop.f32.mrb[0].mxu0
        %v2593 = vadd.f32 %v2488, %v2592
        %v2594 = vpop.f32.mrb[0].mxu0
        %2595 = vmatprep.mubr.f32.mxu0 %v331
        %2596 = vmatmul.mubr.f32.gmra.mrb[0].mxu0 %v330
        %v2597 = vpop.f32.mrb[0].mxu0
        %v2598 = vadd.f32 %v2493, %v2597
        %v2599 = vpop.f32.mrb[0].mxu0
        %2600 = vmatprep.mubr.f32.mxu0 %v337
        %2601 = vmatmul.mubr.f32.gmra.mrb[0].mxu0 %v336
        %v2602 = vpop.f32.mrb[0].mxu0
        %v2603 = vadd.f32 %v2498, %v2602
        %v2604 = vpop.f32.mrb[0].mxu0
        %2605 = vmatprep.mubr.f32.mxu0 %v343
        %2606 = vmatmul.mubr.f32.gmra.mrb[0].mxu0 %v342
        %v2607 = vpop.f32.mrb[0].mxu0
        %v2608 = vadd.f32 %v2503, %v2607
        %v2609 = vpop.f32.mrb[0].mxu0
        %2610 = vmatprep.mubr.f32.mxu0 %v349
        %2611 = vmatmul.mubr.f32.gmra.mrb[0].mxu0 %v348
        %v2612 = vpop.f32.mrb[0].mxu0
        %v2613 = vadd.f32 %v2508, %v2612
        %v2614 = vpop.f32.mrb[0].mxu0
        %2615 = vmatprep.mubr.f32.mxu0 %v355
        %2616 = vmatmul.mubr.f32.gmra.mrb[0].mxu0 %v354
        %v2617 = vpop.f32.mrb[0].mxu0
        %v2618 = vadd.f32 %v2513, %v2617
        %v2619 = vpop.f32.mrb[0].mxu0
        %2620 = vmatprep.mubr.f32.mxu0 %v361
        %2621 = vmatmul.mubr.f32.gmra.mrb[0].mxu0 %v360
        %v2622 = vpop.f32.mrb[0].mxu0
        %v2623 = vadd.f32 %v2518, %v2622
        %v2624 = vpop.f32.mrb[0].mxu0
        %2625 = vdwg.mxu0
        %2626 = vmatprep.subr.mxu0 0.0
        %2627 = vmatpush1.msra.mxu0 %v2201
        %2628 = vmatprep.subr.mxu0 0.0
        %2629 = vmatpush1.msra.mxu0 %v2370
        %2630 = vmatprep.subr.mxu0 0.0
        %2631 = vmatpush1.msra.mxu0 %v2372
        %2632 = vmatprep.subr.mxu0 0.0
        %2633 = vmatpush1.msra.mxu0 %v2374
        %2634 = vmatprep.subr.mxu0 0.0
        %2635 = vmatpush1.msra.mxu0 %v2376
        %2636 = vmatprep.subr.mxu0 0.0
        %2637 = vmatpush1.msra.mxu0 %v2378
        %2638 = vmatprep.subr.mxu0 0.0
        %2639 = vmatpush1.msra.mxu0 %v2380
        %2640 = vmatprep.subr.mxu0 0.0
        %2641 = vmatpush1.msra.mxu0 %v2382
        %2642 = vmatprep.subr.mxu0 0.0
        %2643 = vmatpush1.msra.mxu0 %v2384
        %2644 = vmatprep.subr.mxu0 0.0
        %2645 = vmatpush1.msra.mxu0 %v2218
        %2646 = vmatprep.subr.mxu0 0.0
        %2647 = vmatpush1.msra.mxu0 %v2386
        %2648 = vmatprep.subr.mxu0 0.0
        %2649 = vmatpush1.msra.mxu0 %v2388
        %2650 = vmatprep.subr.mxu0 0.0
        %2651 = vmatpush1.msra.mxu0 %v2390
        %2652 = vmatprep.subr.mxu0 0.0
        %2653 = vmatpush1.msra.mxu0 %v2392
        %2654 = vmatprep.subr.mxu0 0.0
        %2655 = vmatpush1.msra.mxu0 %v2394
        %2656 = vmatprep.subr.mxu0 0.0
        %2657 = vmatpush1.msra.mxu0 %v2396
        %2658 = vmatprep.subr.mxu0 0.0
        %2659 = vmatpush1.msra.mxu0 %v2414
        %2660 = vmatprep.subr.mxu0 0.0
        %2661 = vmatpush1.msra.mxu0 0.0
        %2662 = vmatprep.subr.mxu0 0.0
        %2663 = vmatpush1.msra.mxu0 0.0
        %2664 = vmatprep.subr.mxu0 0.0
        %2665 = vmatpush1.msra.mxu0 0.0
        %2666 = vmatprep.subr.mxu0 0.0
        %2667 = vmatpush1.msra.mxu0 0.0
        %2668 = vmatprep.subr.mxu0 0.0
        %2669 = vmatpush1.msra.mxu0 0.0
        %2670 = vmatprep.subr.mxu0 0.0
        %2671 = vmatpush1.msra.mxu0 0.0
        %2672 = vmatprep.subr.mxu0 0.0
        %2673 = vmatpush1.msra.mxu0 0.0
        %2674 = vmatprep.subr.mxu0 0.0
        %2675 = vmatpush1.msra.mxu0 0.0
        %2676 = vmatprep.subr.mxu0 0.0
        %2677 = vmatpush1.msra.mxu0 0.0
        %2678 = vmatprep.subr.mxu0 0.0
        %2679 = vmatpush1.msra.mxu0 0.0
        %2680 = vmatprep.subr.mxu0 0.0
        %2681 = vmatpush1.msra.mxu0 0.0
        %2682 = vmatprep.subr.mxu0 0.0
        %2683 = vmatpush1.msra.mxu0 0.0
        %2684 = vmatprep.subr.mxu0 0.0
        %2685 = vmatpush1.msra.mxu0 0.0
        %2686 = vmatprep.subr.mxu0 0.0
        %2687 = vmatpush1.msra.mxu0 0.0
        %2688 = vmatprep.subr.mxu0 0.0
        %2689 = vmatpush1.msra.mxu0 0.0
        %2690 = vmatprep.mubr.f32.mxu0 %v806
        %2691 = vmatmul.mubr.f32.gmra.mrb[0].mxu0 %v320
        %v2692 = vpop.f32.mrb[0].mxu0
        %v2693 = vadd.f32 %v2588, %v2692
        %v2694 = vpop.f32.mrb[0].mxu0
        %2695 = vmatprep.mubr.f32.mxu0 %v809
        %2696 = vmatmul.mubr.f32.gmra.mrb[0].mxu0 %v326
        %v2697 = vpop.f32.mrb[0].mxu0
        %v2698 = vadd.f32 %v2593, %v2697
        %v2699 = vpop.f32.mrb[0].mxu0
        %2700 = vmatprep.mubr.f32.mxu0 %v812
        %2701 = vmatmul.mubr.f32.gmra.mrb[0].mxu0 %v332
        %v2702 = vpop.f32.mrb[0].mxu0
        %v2703 = vadd.f32 %v2598, %v2702
        %v2704 = vpop.f32.mrb[0].mxu0
        %2705 = vmatprep.mubr.f32.mxu0 %v815
        %2706 = vmatmul.mubr.f32.gmra.mrb[0].mxu0 %v338
        %v2707 = vpop.f32.mrb[0].mxu0
        %v2708 = vadd.f32 %v2603, %v2707
        %v2709 = vpop.f32.mrb[0].mxu0
        %2710 = vmatprep.mubr.f32.mxu0 %v818
        %2711 = vmatmul.mubr.f32.gmra.mrb[0].mxu0 %v344
        %v2712 = vpop.f32.mrb[0].mxu0
        %v2713 = vadd.f32 %v2608, %v2712
        %v2714 = vpop.f32.mrb[0].mxu0
        %2715 = vmatprep.mubr.f32.mxu0 %v821
        %2716 = vmatmul.mubr.f32.gmra.mrb[0].mxu0 %v350
        %v2717 = vpop.f32.mrb[0].mxu0
        %v2718 = vadd.f32 %v2613, %v2717
        %v2719 = vpop.f32.mrb[0].mxu0
        %2720 = vmatprep.mubr.f32.mxu0 %v824
        %2721 = vmatmul.mubr.f32.gmra.mrb[0].mxu0 %v356
        %v2722 = vpop.f32.mrb[0].mxu0
        %v2723 = vadd.f32 %v2618, %v2722
        %v2724 = vpop.f32.mrb[0].mxu0
        %2725 = vmatprep.mubr.f32.mxu0 %v827
        %2726 = vmatmul.mubr.f32.gmra.mrb[0].mxu0 %v362
        %v2727 = vpop.f32.mrb[0].mxu0
        %v2728 = vadd.f32 %v2623, %v2727
        %v2729 = vpop.f32.mrb[0].mxu0
        %2730 = vdwg.mxu0
        %v2731 = vmax.f32 %v2693, 0.0
        %v2732 = vmax.f32 %v2698, 0.0
        %v2733 = vmax.f32 %v2703, 0.0
        %v2734 = vmax.f32 %v2708, 0.0
        %v2735 = vmax.f32 %v2713, 0.0
        %v2736 = vmax.f32 %v2718, 0.0
        %v2737 = vmax.f32 %v2723, 0.0
        %v2738 = vmax.f32 %v2728, 0.0
        %2739 = vmatprep.subr.mxu0 0.0
        %2740 = vmatpush1.msra.mxu0 %v2731
        %2741 = vmatprep.subr.mxu0 0.0
        %2742 = vmatpush1.msra.mxu0 %v2732
        %2743 = vmatprep.subr.mxu0 0.0
        %2744 = vmatpush1.msra.mxu0 %v2733
        %2745 = vmatprep.subr.mxu0 0.0
        %2746 = vmatpush1.msra.mxu0 %v2734
        %2747 = vmatprep.subr.mxu0 0.0
        %2748 = vmatpush1.msra.mxu0 %v2735
        %2749 = vmatprep.subr.mxu0 0.0
        %2750 = vmatpush1.msra.mxu0 %v2736
        %2751 = vmatprep.subr.mxu0 0.0
        %2752 = vmatpush1.msra.mxu0 %v2737
        %2753 = vmatprep.subr.mxu0 0.0
        %2754 = vmatpush1.msra.mxu0 %v2738
        %2755 = vmatprep.subr.mxu0 0.0
        %2756 = vmatpush1.msra.mxu0 0.0
        %2757 = vmatprep.subr.mxu0 0.0
        %2758 = vmatpush1.msra.mxu0 0.0
        %2759 = vmatprep.subr.mxu0 0.0
        %2760 = vmatpush1.msra.mxu0 0.0
        %2761 = vmatprep.subr.mxu0 0.0
        %2762 = vmatpush1.msra.mxu0 0.0
        %2763 = vmatprep.subr.mxu0 0.0
        %2764 = vmatpush1.msra.mxu0 0.0
        %2765 = vmatprep.subr.mxu0 0.0
        %2766 = vmatpush1.msra.mxu0 0.0
        %2767 = vmatprep.subr.mxu0 0.0
        %2768 = vmatpush1.msra.mxu0 0.0
        %2769 = vmatprep.subr.mxu0 0.0
        %2770 = vmatpush1.msra.mxu0 0.0
        %2771 = vmatprep.subr.mxu0 0.0
        %2772 = vmatpush1.msra.mxu0 0.0
        %2773 = vmatprep.subr.mxu0 0.0
        %2774 = vmatpush1.msra.mxu0 0.0
        %2775 = vmatprep.subr.mxu0 0.0
        %2776 = vmatpush1.msra.mxu0 0.0
        %2777 = vmatprep.subr.mxu0 0.0
        %2778 = vmatpush1.msra.mxu0 0.0
        %2779 = vmatprep.subr.mxu0 0.0
        %2780 = vmatpush1.msra.mxu0 0.0
        %2781 = vmatprep.subr.mxu0 0.0
        %2782 = vmatpush1.msra.mxu0 0.0
        %2783 = vmatprep.subr.mxu0 0.0
        %2784 = vmatpush1.msra.mxu0 0.0
        %2785 = vmatprep.subr.mxu0 0.0
        %2786 = vmatpush1.msra.mxu0 0.0
        %2787 = vmatprep.subr.mxu0 0.0
        %2788 = vmatpush1.msra.mxu0 0.0
        %2789 = vmatprep.subr.mxu0 0.0
        %2790 = vmatpush1.msra.mxu0 0.0
        %2791 = vmatprep.subr.mxu0 0.0
        %2792 = vmatpush1.msra.mxu0 0.0
        %2793 = vmatprep.subr.mxu0 0.0
        %2794 = vmatpush1.msra.mxu0 0.0
        %2795 = vmatprep.subr.mxu0 0.0
        %2796 = vmatpush1.msra.mxu0 0.0
        %2797 = vmatprep.subr.mxu0 0.0
        %2798 = vmatpush1.msra.mxu0 0.0
        %2799 = vmatprep.subr.mxu0 0.0
        %2800 = vmatpush1.msra.mxu0 0.0
        %2801 = vmatprep.subr.mxu0 0.0
        %2802 = vmatpush1.msra.mxu0 0.0
        %2803 = vmatprep.mubr.f32.mxu0 0.0
        %2804 = vmatmul.mubr.f32.gmra.mrb[0].mxu0 %v1174
        %v2805 = vpop.f32.mrb[0].mxu0
        %v2806 = vadd.f32 %v1155, %v2805
        %v2807 = vpop.f32.mrb[0].mxu0
        %2808 = vmatprep.mubr.f32.mxu0 0.0
        %2809 = vmatmul.mubr.f32.gmra.mrb[0].mxu0 %v1177
        %v2810 = vpop.f32.mrb[0].mxu0
        %v2811 = vadd.f32 %v1160, %v2810
        %v2812 = vpop.f32.mrb[0].mxu0
        %2813 = vmatprep.mubr.f32.mxu0 0.0
        %2814 = vmatmul.mubr.f32.gmra.mrb[0].mxu0 %v1180
        %v2815 = vpop.f32.mrb[0].mxu0
        %v2816 = vadd.f32 %v1165, %v2815
        %v2817 = vpop.f32.mrb[0].mxu0
        %2818 = vmatprep.mubr.f32.mxu0 0.0
        %2819 = vmatmul.mubr.f32.gmra.mrb[0].mxu0 %v1183
        %v2820 = vpop.f32.mrb[0].mxu0
        %v2821 = vadd.f32 %v1170, %v2820
        %v2822 = vpop.f32.mrb[0].mxu0
        %2823 = vdwg.mxu0
        %v2824 = vmax.f32 %v2806, 0.0
        %v2825 = vmax.f32 %v2811, 0.0
        %v2826 = vmax.f32 %v2816, 0.0
        %v2827 = vmax.f32 %v2821, 0.0
        %s2828 = scalar_lea.vmem %s314, 64 [#allocation11]
        %2829 = vst.msk [vmem:[%s2828] sm:$0xff] %vm1274, %v2824
        %2830 = vst.msk [vmem:[%s2828 + $0x8] sm:$0xff] %vm1274, %v2825
        %2831 = vst.msk [vmem:[%s2828 + $0x10] sm:$0xff] %vm1274, %v2826
        %2832 = vst.msk [vmem:[%s2828 + $0x18] sm:$0xff] %vm1274, %v2827
        %v2833 = vld [vmem:[%s394] sm:$0xff]
        %v2834 = vld [vmem:[%s398] sm:$0xff]
        %v2835 = vld [vmem:[%s402] sm:$0xff]
        %v2836 = vld [vmem:[%s406] sm:$0xff]
        %v2837 = vld [vmem:[%s410] sm:$0xff]
        %v2838 = vld [vmem:[%s414] sm:$0xff]
        %v2839 = vld [vmem:[%s1289] sm:$0xff]
        %v2840 = vld [vmem:[%s2066] sm:$0xff]
        %s2841 = sadd.s32 %s380, 11
        %s2842 = smul.u32 %s2841, 8
        %s2843 = scalar_lea.vmem %s272, %s2842 [#allocation2]
        %v2844 = vld [vmem:[%s2843] sm:$0xff]
        %2846 = vrot.lane.b32.xlu0 %v2833, 127
        %v2847 = vpop.permute.xlu0 %2846
        %2849 = vrot.lane.b32.xlu0 %v2833, 126
        %v2850 = vpop.permute.xlu0 %2849
        %2852 = vrot.lane.b32.xlu0 %v2833, 125
        %v2853 = vpop.permute.xlu0 %2852
        %2855 = vrot.lane.b32.xlu0 %v2833, 124
        %v2856 = vpop.permute.xlu0 %2855
        %2858 = vrot.lane.b32.xlu0 %v2833, 123
        %v2859 = vpop.permute.xlu0 %2858
        %2861 = vrot.lane.b32.xlu0 %v2833, 122
        %v2862 = vpop.permute.xlu0 %2861
        %2864 = vrot.lane.b32.xlu0 %v2833, 121
        %v2865 = vpop.permute.xlu0 %2864
        %2867 = vrot.lane.b32.xlu0 %v2833, 120
        %v2868 = vpop.permute.xlu0 %2867
        %2871 = vrot.lane.b32.xlu0 %v2834, 127
        %v2872 = vpop.permute.xlu0 %2871
        %2874 = vrot.lane.b32.xlu0 %v2834, 126
        %v2875 = vpop.permute.xlu0 %2874
        %2877 = vrot.lane.b32.xlu0 %v2834, 125
        %v2878 = vpop.permute.xlu0 %2877
        %2880 = vrot.lane.b32.xlu0 %v2834, 124
        %v2881 = vpop.permute.xlu0 %2880
        %2883 = vrot.lane.b32.xlu0 %v2834, 123
        %v2884 = vpop.permute.xlu0 %2883
        %2886 = vrot.lane.b32.xlu0 %v2834, 122
        %v2887 = vpop.permute.xlu0 %2886
        %2890 = vrot.lane.b32.xlu0 %v2835, 7
        %v2891 = vpop.permute.xlu0 %2890
        %2892 = vrot.lane.b32.xlu0 %v2835, 6
        %v2893 = vpop.permute.xlu0 %2892
        %2894 = vrot.lane.b32.xlu0 %v2835, 5
        %v2895 = vpop.permute.xlu0 %2894
        %2896 = vrot.lane.b32.xlu0 %v2835, 4
        %v2897 = vpop.permute.xlu0 %2896
        %2898 = vrot.lane.b32.xlu0 %v2835, 3
        %v2899 = vpop.permute.xlu0 %2898
        %2900 = vrot.lane.b32.xlu0 %v2835, 2
        %v2901 = vpop.permute.xlu0 %2900
        %2902 = vrot.lane.b32.xlu0 %v2835, 1
        %v2903 = vpop.permute.xlu0 %2902
        %2904 = vrot.lane.b32.xlu0 %v2835, 127
        %v2905 = vpop.permute.xlu0 %2904
        %2907 = vrot.lane.b32.xlu0 %v2836, 7
        %v2908 = vpop.permute.xlu0 %2907
        %2909 = vrot.lane.b32.xlu0 %v2836, 6
        %v2910 = vpop.permute.xlu0 %2909
        %2911 = vrot.lane.b32.xlu0 %v2836, 5
        %v2912 = vpop.permute.xlu0 %2911
        %2913 = vrot.lane.b32.xlu0 %v2836, 4
        %v2914 = vpop.permute.xlu0 %2913
        %2915 = vrot.lane.b32.xlu0 %v2836, 3
        %v2916 = vpop.permute.xlu0 %2915
        %2917 = vrot.lane.b32.xlu0 %v2836, 127
        %v2918 = vpop.permute.xlu0 %2917
        %2919 = vrot.lane.b32.xlu0 %v2836, 126
        %v2920 = vpop.permute.xlu0 %2919
        %2921 = vrot.lane.b32.xlu0 %v2836, 125
        %v2922 = vpop.permute.xlu0 %2921
        %2924 = vrot.lane.b32.xlu0 %v2837, 5
        %v2925 = vpop.permute.xlu0 %2924
        %2926 = vrot.lane.b32.xlu0 %v2837, 4
        %v2927 = vpop.permute.xlu0 %2926
        %2928 = vrot.lane.b32.xlu0 %v2837, 3
        %v2929 = vpop.permute.xlu0 %2928
        %2930 = vrot.lane.b32.xlu0 %v2837, 2
        %v2931 = vpop.permute.xlu0 %2930
        %2932 = vrot.lane.b32.xlu0 %v2837, 1
        %v2933 = vpop.permute.xlu0 %2932
        %2934 = vrot.lane.b32.xlu0 %v2837, 127
        %v2935 = vpop.permute.xlu0 %2934
        %2936 = vrot.lane.b32.xlu0 %v2837, 126
        %v2937 = vpop.permute.xlu0 %2936
        %2938 = vrot.lane.b32.xlu0 %v2837, 125
        %v2939 = vpop.permute.xlu0 %2938
        %2941 = vrot.lane.b32.xlu0 %v2838, 5
        %v2942 = vpop.permute.xlu0 %2941
        %2943 = vrot.lane.b32.xlu0 %v2838, 4
        %v2944 = vpop.permute.xlu0 %2943
        %2945 = vrot.lane.b32.xlu0 %v2838, 3
        %v2946 = vpop.permute.xlu0 %2945
        %2947 = vrot.lane.b32.xlu0 %v2838, 127
        %v2948 = vpop.permute.xlu0 %2947
        %2949 = vrot.lane.b32.xlu0 %v2838, 126
        %v2950 = vpop.permute.xlu0 %2949
        %2951 = vrot.lane.b32.xlu0 %v2838, 125
        %v2952 = vpop.permute.xlu0 %2951
        %2953 = vrot.lane.b32.xlu0 %v2838, 124
        %v2954 = vpop.permute.xlu0 %2953
        %2955 = vrot.lane.b32.xlu0 %v2838, 123
        %v2956 = vpop.permute.xlu0 %2955
        %2958 = vrot.lane.b32.xlu0 %v2839, 3
        %v2959 = vpop.permute.xlu0 %2958
        %2960 = vrot.lane.b32.xlu0 %v2839, 2
        %v2961 = vpop.permute.xlu0 %2960
        %2962 = vrot.lane.b32.xlu0 %v2839, 1
        %v2963 = vpop.permute.xlu0 %2962
        %2964 = vrot.lane.b32.xlu0 %v2839, 127
        %v2965 = vpop.permute.xlu0 %2964
        %2966 = vrot.lane.b32.xlu0 %v2839, 126
        %v2967 = vpop.permute.xlu0 %2966
        %2968 = vrot.lane.b32.xlu0 %v2839, 125
        %v2969 = vpop.permute.xlu0 %2968
        %2970 = vrot.lane.b32.xlu0 %v2839, 124
        %v2971 = vpop.permute.xlu0 %2970
        %2972 = vrot.lane.b32.xlu0 %v2839, 123
        %v2973 = vpop.permute.xlu0 %2972
        %2975 = vrot.lane.b32.xlu0 %v2840, 3
        %v2976 = vpop.permute.xlu0 %2975
        %2977 = vrot.lane.b32.xlu0 %v2840, 127
        %v2978 = vpop.permute.xlu0 %2977
        %2979 = vrot.lane.b32.xlu0 %v2840, 126
        %v2980 = vpop.permute.xlu0 %2979
        %2981 = vrot.lane.b32.xlu0 %v2840, 125
        %v2982 = vpop.permute.xlu0 %2981
        %2983 = vrot.lane.b32.xlu0 %v2840, 124
        %v2984 = vpop.permute.xlu0 %2983
        %2985 = vrot.lane.b32.xlu0 %v2840, 123
        %v2986 = vpop.permute.xlu0 %2985
        %2987 = vrot.lane.b32.xlu0 %v2840, 122
        %v2988 = vpop.permute.xlu0 %2987
        %2989 = vrot.lane.b32.xlu0 %v2840, 121
        %v2990 = vpop.permute.xlu0 %2989
        %2992 = vrot.lane.b32.xlu0 %v2844, 1
        %v2993 = vpop.permute.xlu0 %2992
        %2994 = vrot.lane.b32.xlu0 %v2844, 127
        %v2995 = vpop.permute.xlu0 %2994
        %2996 = vrot.lane.b32.xlu0 %v2844, 126
        %v2997 = vpop.permute.xlu0 %2996
        %2998 = vrot.lane.b32.xlu0 %v2844, 125
        %v2999 = vpop.permute.xlu0 %2998
        %3000 = vrot.lane.b32.xlu0 %v2844, 124
        %v3001 = vpop.permute.xlu0 %3000
        %3002 = vrot.lane.b32.xlu0 %v2844, 123
        %v3003 = vpop.permute.xlu0 %3002
        %3004 = vrot.lane.b32.xlu0 %v2844, 122
        %v3005 = vpop.permute.xlu0 %3004
        %3006 = vrot.lane.b32.xlu0 %v2834, 121
        %v3007 = vpop.permute.xlu0 %3006
        %3008 = vrot.lane.b32.xlu0 %v2872, 121
        %v3009 = vpop.permute.xlu0 %3008
        %3010 = vrot.lane.b32.xlu0 %v2891, 121
        %v3011 = vpop.permute.xlu0 %3010
        %3012 = vrot.lane.b32.xlu0 %v2893, 121
        %v3013 = vpop.permute.xlu0 %3012
        %3014 = vrot.lane.b32.xlu0 %v2895, 121
        %v3015 = vpop.permute.xlu0 %3014
        %3016 = vrot.lane.b32.xlu0 %v2897, 121
        %v3017 = vpop.permute.xlu0 %3016
        %3018 = vrot.lane.b32.xlu0 %v2899, 121
        %v3019 = vpop.permute.xlu0 %3018
        %3020 = vrot.lane.b32.xlu0 %v2901, 121
        %v3021 = vpop.permute.xlu0 %3020
        %3022 = vrot.lane.b32.xlu0 %v2903, 121
        %v3023 = vpop.permute.xlu0 %3022
        %3024 = vrot.lane.b32.xlu0 %v2835, 121
        %v3025 = vpop.permute.xlu0 %3024
        %3026 = vrot.lane.b32.xlu0 %v2905, 121
        %v3027 = vpop.permute.xlu0 %3026
        %3028 = vrot.lane.b32.xlu0 %v2908, 121
        %v3029 = vpop.permute.xlu0 %3028
        %3030 = vrot.lane.b32.xlu0 %v2910, 121
        %v3031 = vpop.permute.xlu0 %3030
        %3032 = vrot.lane.b32.xlu0 %v2912, 121
        %v3033 = vpop.permute.xlu0 %3032
        %3034 = vrot.lane.b32.xlu0 %v2914, 121
        %v3035 = vpop.permute.xlu0 %3034
        %3036 = vrot.lane.b32.xlu0 %v2916, 121
        %v3037 = vpop.permute.xlu0 %3036
        %3054 = vrot.lane.b32.xlu0 %v2836, 123
        %v3055 = vpop.permute.xlu0 %3054
        %3056 = vrot.lane.b32.xlu0 %v2918, 123
        %v3057 = vpop.permute.xlu0 %3056
        %3058 = vrot.lane.b32.xlu0 %v2920, 123
        %v3059 = vpop.permute.xlu0 %3058
        %3060 = vrot.lane.b32.xlu0 %v2922, 123
        %v3061 = vpop.permute.xlu0 %3060
        %3062 = vrot.lane.b32.xlu0 %v2925, 123
        %v3063 = vpop.permute.xlu0 %3062
        %3064 = vrot.lane.b32.xlu0 %v2927, 123
        %v3065 = vpop.permute.xlu0 %3064
        %3066 = vrot.lane.b32.xlu0 %v2929, 123
        %v3067 = vpop.permute.xlu0 %3066
        %3068 = vrot.lane.b32.xlu0 %v2931, 123
        %v3069 = vpop.permute.xlu0 %3068
        %3070 = vrot.lane.b32.xlu0 %v2933, 123
        %v3071 = vpop.permute.xlu0 %3070
        %3072 = vrot.lane.b32.xlu0 %v2837, 123
        %v3073 = vpop.permute.xlu0 %3072
        %3074 = vrot.lane.b32.xlu0 %v2935, 123
        %v3075 = vpop.permute.xlu0 %3074
        %3076 = vrot.lane.b32.xlu0 %v2937, 123
        %v3077 = vpop.permute.xlu0 %3076
        %3078 = vrot.lane.b32.xlu0 %v2939, 123
        %v3079 = vpop.permute.xlu0 %3078
        %3080 = vrot.lane.b32.xlu0 %v2942, 123
        %v3081 = vpop.permute.xlu0 %3080
        %3082 = vrot.lane.b32.xlu0 %v2944, 123
        %v3083 = vpop.permute.xlu0 %3082
        %3084 = vrot.lane.b32.xlu0 %v2946, 123
        %v3085 = vpop.permute.xlu0 %3084
        %3102 = vrot.lane.b32.xlu0 %v2948, 125
        %v3103 = vpop.permute.xlu0 %3102
        %3104 = vrot.lane.b32.xlu0 %v2950, 125
        %v3105 = vpop.permute.xlu0 %3104
        %3106 = vrot.lane.b32.xlu0 %v2952, 125
        %v3107 = vpop.permute.xlu0 %3106
        %3108 = vrot.lane.b32.xlu0 %v2954, 125
        %v3109 = vpop.permute.xlu0 %3108
        %3110 = vrot.lane.b32.xlu0 %v2956, 125
        %v3111 = vpop.permute.xlu0 %3110
        %3112 = vrot.lane.b32.xlu0 %v2959, 125
        %v3113 = vpop.permute.xlu0 %3112
        %3114 = vrot.lane.b32.xlu0 %v2961, 125
        %v3115 = vpop.permute.xlu0 %3114
        %3116 = vrot.lane.b32.xlu0 %v2963, 125
        %v3117 = vpop.permute.xlu0 %3116
        %3118 = vrot.lane.b32.xlu0 %v2965, 125
        %v3119 = vpop.permute.xlu0 %3118
        %3120 = vrot.lane.b32.xlu0 %v2967, 125
        %v3121 = vpop.permute.xlu0 %3120
        %3122 = vrot.lane.b32.xlu0 %v2969, 125
        %v3123 = vpop.permute.xlu0 %3122
        %3124 = vrot.lane.b32.xlu0 %v2971, 125
        %v3125 = vpop.permute.xlu0 %3124
        %3126 = vrot.lane.b32.xlu0 %v2973, 125
        %v3127 = vpop.permute.xlu0 %3126
        %3128 = vrot.lane.b32.xlu0 %v2976, 125
        %v3129 = vpop.permute.xlu0 %3128
        %3146 = vrot.lane.b32.xlu0 %v2978, 127
        %v3147 = vpop.permute.xlu0 %3146
        %3148 = vrot.lane.b32.xlu0 %v2980, 127
        %v3149 = vpop.permute.xlu0 %3148
        %3150 = vrot.lane.b32.xlu0 %v2982, 127
        %v3151 = vpop.permute.xlu0 %3150
        %3152 = vrot.lane.b32.xlu0 %v2984, 127
        %v3153 = vpop.permute.xlu0 %3152
        %3154 = vrot.lane.b32.xlu0 %v2986, 127
        %v3155 = vpop.permute.xlu0 %3154
        %3156 = vrot.lane.b32.xlu0 %v2988, 127
        %v3157 = vpop.permute.xlu0 %3156
        %3158 = vrot.lane.b32.xlu0 %v2990, 127
        %v3159 = vpop.permute.xlu0 %3158
        %3160 = vrot.lane.b32.xlu0 %v2993, 127
        %v3161 = vpop.permute.xlu0 %3160
        %3162 = vrot.lane.b32.xlu0 %v2995, 127
        %v3163 = vpop.permute.xlu0 %3162
        %3164 = vrot.lane.b32.xlu0 %v2997, 127
        %v3165 = vpop.permute.xlu0 %3164
        %3166 = vrot.lane.b32.xlu0 %v2999, 127
        %v3167 = vpop.permute.xlu0 %3166
        %3168 = vrot.lane.b32.xlu0 %v3001, 127
        %v3169 = vpop.permute.xlu0 %3168
        %3170 = vrot.lane.b32.xlu0 %v3003, 127
        %v3171 = vpop.permute.xlu0 %3170
        %3172 = vrot.lane.b32.xlu0 %v3005, 127
        %v3173 = vpop.permute.xlu0 %3172
        %3190 = vrot.lane.b32.xlu0 %v2844, 120
        %v3191 = vpop.permute.xlu0 %3190
        %3193 = vmatprep.subr.mxu0 0.0
        %3194 = vmatpush1.msra.mxu0 %v2833
        %3195 = vmatprep.subr.mxu0 0.0
        %3196 = vmatpush1.msra.mxu0 %v2847
        %3197 = vmatprep.subr.mxu0 0.0
        %3198 = vmatpush1.msra.mxu0 %v2850
        %3199 = vmatprep.subr.mxu0 0.0
        %3200 = vmatpush1.msra.mxu0 %v2853
        %3201 = vmatprep.subr.mxu0 0.0
        %3202 = vmatpush1.msra.mxu0 %v2856
        %3203 = vmatprep.subr.mxu0 0.0
        %3204 = vmatpush1.msra.mxu0 %v2859
        %3205 = vmatprep.subr.mxu0 0.0
        %3206 = vmatpush1.msra.mxu0 %v2862
        %3207 = vmatprep.subr.mxu0 0.0
        %3208 = vmatpush1.msra.mxu0 %v2865
        %3209 = vmatprep.subr.mxu0 0.0
        %3210 = vmatpush1.msra.mxu0 %v2868
        %3211 = vmatprep.subr.mxu0 0.0
        %3212 = vmatpush1.msra.mxu0 %v2834
        %3213 = vmatprep.subr.mxu0 0.0
        %3214 = vmatpush1.msra.mxu0 %v2872
        %3215 = vmatprep.subr.mxu0 0.0
        %3216 = vmatpush1.msra.mxu0 %v2875
        %3217 = vmatprep.subr.mxu0 0.0
        %3218 = vmatpush1.msra.mxu0 %v2878
        %3219 = vmatprep.subr.mxu0 0.0
        %3220 = vmatpush1.msra.mxu0 %v2881
        %3221 = vmatprep.subr.mxu0 0.0
        %3222 = vmatpush1.msra.mxu0 %v2884
        %3223 = vmatprep.subr.mxu0 0.0
        %3224 = vmatpush1.msra.mxu0 %v2887
        %3225 = vmatprep.subr.mxu0 0.0
        %3226 = vmatpush1.msra.mxu0 %v3007
        %3227 = vmatprep.subr.mxu0 0.0
        %3228 = vmatpush1.msra.mxu0 %v3009
        %3229 = vmatprep.subr.mxu0 0.0
        %3230 = vmatpush1.msra.mxu0 %v3011
        %3231 = vmatprep.subr.mxu0 0.0
        %3232 = vmatpush1.msra.mxu0 %v3013
        %3233 = vmatprep.subr.mxu0 0.0
        %3234 = vmatpush1.msra.mxu0 %v3015
        %3235 = vmatprep.subr.mxu0 0.0
        %3236 = vmatpush1.msra.mxu0 %v3017
        %3237 = vmatprep.subr.mxu0 0.0
        %3238 = vmatpush1.msra.mxu0 %v3019
        %3239 = vmatprep.subr.mxu0 0.0
        %3240 = vmatpush1.msra.mxu0 %v3021
        %3241 = vmatprep.subr.mxu0 0.0
        %3242 = vmatpush1.msra.mxu0 %v3023
        %3243 = vmatprep.subr.mxu0 0.0
        %3244 = vmatpush1.msra.mxu0 %v3025
        %3245 = vmatprep.subr.mxu0 0.0
        %3246 = vmatpush1.msra.mxu0 %v3027
        %3247 = vmatprep.subr.mxu0 0.0
        %3248 = vmatpush1.msra.mxu0 %v3029
        %3249 = vmatprep.subr.mxu0 0.0
        %3250 = vmatpush1.msra.mxu0 %v3031
        %3251 = vmatprep.subr.mxu0 0.0
        %3252 = vmatpush1.msra.mxu0 %v3033
        %3253 = vmatprep.subr.mxu0 0.0
        %3254 = vmatpush1.msra.mxu0 %v3035
        %3255 = vmatprep.subr.mxu0 0.0
        %3256 = vmatpush1.msra.mxu0 %v3037
        %3257 = vmatprep.mubr.f32.mxu0 %v317
        %3258 = vmatmul.mubr.f32.gmra.mrb[0].mxu0 %v316
        %v3259 = vpop.f32.mrb[0].mxu0
        %v3260 = vadd.f32 %v767, %v3259
        %v3261 = vpop.f32.mrb[0].mxu0
        %3262 = vmatprep.mubr.f32.mxu0 %v323
        %3263 = vmatmul.mubr.f32.gmra.mrb[0].mxu0 %v322
        %v3264 = vpop.f32.mrb[0].mxu0
        %v3265 = vadd.f32 %v772, %v3264
        %v3266 = vpop.f32.mrb[0].mxu0
        %3267 = vmatprep.mubr.f32.mxu0 %v329
        %3268 = vmatmul.mubr.f32.gmra.mrb[0].mxu0 %v328
        %v3269 = vpop.f32.mrb[0].mxu0
        %v3270 = vadd.f32 %v777, %v3269
        %v3271 = vpop.f32.mrb[0].mxu0
        %3272 = vmatprep.mubr.f32.mxu0 %v335
        %3273 = vmatmul.mubr.f32.gmra.mrb[0].mxu0 %v334
        %v3274 = vpop.f32.mrb[0].mxu0
        %v3275 = vadd.f32 %v782, %v3274
        %v3276 = vpop.f32.mrb[0].mxu0
        %3277 = vmatprep.mubr.f32.mxu0 %v341
        %3278 = vmatmul.mubr.f32.gmra.mrb[0].mxu0 %v340
        %v3279 = vpop.f32.mrb[0].mxu0
        %v3280 = vadd.f32 %v787, %v3279
        %v3281 = vpop.f32.mrb[0].mxu0
        %3282 = vmatprep.mubr.f32.mxu0 %v347
        %3283 = vmatmul.mubr.f32.gmra.mrb[0].mxu0 %v346
        %v3284 = vpop.f32.mrb[0].mxu0
        %v3285 = vadd.f32 %v792, %v3284
        %v3286 = vpop.f32.mrb[0].mxu0
        %3287 = vmatprep.mubr.f32.mxu0 %v353
        %3288 = vmatmul.mubr.f32.gmra.mrb[0].mxu0 %v352
        %v3289 = vpop.f32.mrb[0].mxu0
        %v3290 = vadd.f32 %v797, %v3289
        %v3291 = vpop.f32.mrb[0].mxu0
        %3292 = vmatprep.mubr.f32.mxu0 %v359
        %3293 = vmatmul.mubr.f32.gmra.mrb[0].mxu0 %v358
        %v3294 = vpop.f32.mrb[0].mxu0
        %v3295 = vadd.f32 %v802, %v3294
        %v3296 = vpop.f32.mrb[0].mxu0
        %3297 = vdwg.mxu0
        %3298 = vmatprep.subr.mxu0 0.0
        %3299 = vmatpush1.msra.mxu0 %v3055
        %3300 = vmatprep.subr.mxu0 0.0
        %3301 = vmatpush1.msra.mxu0 %v3057
        %3302 = vmatprep.subr.mxu0 0.0
        %3303 = vmatpush1.msra.mxu0 %v3059
        %3304 = vmatprep.subr.mxu0 0.0
        %3305 = vmatpush1.msra.mxu0 %v3061
        %3306 = vmatprep.subr.mxu0 0.0
        %3307 = vmatpush1.msra.mxu0 %v3063
        %3308 = vmatprep.subr.mxu0 0.0
        %3309 = vmatpush1.msra.mxu0 %v3065
        %3310 = vmatprep.subr.mxu0 0.0
        %3311 = vmatpush1.msra.mxu0 %v3067
        %3312 = vmatprep.subr.mxu0 0.0
        %3313 = vmatpush1.msra.mxu0 %v3069
        %3314 = vmatprep.subr.mxu0 0.0
        %3315 = vmatpush1.msra.mxu0 %v3071
        %3316 = vmatprep.subr.mxu0 0.0
        %3317 = vmatpush1.msra.mxu0 %v3073
        %3318 = vmatprep.subr.mxu0 0.0
        %3319 = vmatpush1.msra.mxu0 %v3075
        %3320 = vmatprep.subr.mxu0 0.0
        %3321 = vmatpush1.msra.mxu0 %v3077
        %3322 = vmatprep.subr.mxu0 0.0
        %3323 = vmatpush1.msra.mxu0 %v3079
        %3324 = vmatprep.subr.mxu0 0.0
        %3325 = vmatpush1.msra.mxu0 %v3081
        %3326 = vmatprep.subr.mxu0 0.0
        %3327 = vmatpush1.msra.mxu0 %v3083
        %3328 = vmatprep.subr.mxu0 0.0
        %3329 = vmatpush1.msra.mxu0 %v3085
        %3330 = vmatprep.subr.mxu0 0.0
        %3331 = vmatpush1.msra.mxu0 %v2952
        %3332 = vmatprep.subr.mxu0 0.0
        %3333 = vmatpush1.msra.mxu0 %v3103
        %3334 = vmatprep.subr.mxu0 0.0
        %3335 = vmatpush1.msra.mxu0 %v3105
        %3336 = vmatprep.subr.mxu0 0.0
        %3337 = vmatpush1.msra.mxu0 %v3107
        %3338 = vmatprep.subr.mxu0 0.0
        %3339 = vmatpush1.msra.mxu0 %v3109
        %3340 = vmatprep.subr.mxu0 0.0
        %3341 = vmatpush1.msra.mxu0 %v3111
        %3342 = vmatprep.subr.mxu0 0.0
        %3343 = vmatpush1.msra.mxu0 %v3113
        %3344 = vmatprep.subr.mxu0 0.0
        %3345 = vmatpush1.msra.mxu0 %v3115
        %3346 = vmatprep.subr.mxu0 0.0
        %3347 = vmatpush1.msra.mxu0 %v3117
        %3348 = vmatprep.subr.mxu0 0.0
        %3349 = vmatpush1.msra.mxu0 %v2969
        %3350 = vmatprep.subr.mxu0 0.0
        %3351 = vmatpush1.msra.mxu0 %v3119
        %3352 = vmatprep.subr.mxu0 0.0
        %3353 = vmatpush1.msra.mxu0 %v3121
        %3354 = vmatprep.subr.mxu0 0.0
        %3355 = vmatpush1.msra.mxu0 %v3123
        %3356 = vmatprep.subr.mxu0 0.0
        %3357 = vmatpush1.msra.mxu0 %v3125
        %3358 = vmatprep.subr.mxu0 0.0
        %3359 = vmatpush1.msra.mxu0 %v3127
        %3360 = vmatprep.subr.mxu0 0.0
        %3361 = vmatpush1.msra.mxu0 %v3129
        %3362 = vmatprep.mubr.f32.mxu0 %v319
        %3363 = vmatmul.mubr.f32.gmra.mrb[0].mxu0 %v318
        %v3364 = vpop.f32.mrb[0].mxu0
        %v3365 = vadd.f32 %v3260, %v3364
        %v3366 = vpop.f32.mrb[0].mxu0
        %3367 = vmatprep.mubr.f32.mxu0 %v325
        %3368 = vmatmul.mubr.f32.gmra.mrb[0].mxu0 %v324
        %v3369 = vpop.f32.mrb[0].mxu0
        %v3370 = vadd.f32 %v3265, %v3369
        %v3371 = vpop.f32.mrb[0].mxu0
        %3372 = vmatprep.mubr.f32.mxu0 %v331
        %3373 = vmatmul.mubr.f32.gmra.mrb[0].mxu0 %v330
        %v3374 = vpop.f32.mrb[0].mxu0
        %v3375 = vadd.f32 %v3270, %v3374
        %v3376 = vpop.f32.mrb[0].mxu0
        %3377 = vmatprep.mubr.f32.mxu0 %v337
        %3378 = vmatmul.mubr.f32.gmra.mrb[0].mxu0 %v336
        %v3379 = vpop.f32.mrb[0].mxu0
        %v3380 = vadd.f32 %v3275, %v3379
        %v3381 = vpop.f32.mrb[0].mxu0
        %3382 = vmatprep.mubr.f32.mxu0 %v343
        %3383 = vmatmul.mubr.f32.gmra.mrb[0].mxu0 %v342
        %v3384 = vpop.f32.mrb[0].mxu0
        %v3385 = vadd.f32 %v3280, %v3384
        %v3386 = vpop.f32.mrb[0].mxu0
        %3387 = vmatprep.mubr.f32.mxu0 %v349
        %3388 = vmatmul.mubr.f32.gmra.mrb[0].mxu0 %v348
        %v3389 = vpop.f32.mrb[0].mxu0
        %v3390 = vadd.f32 %v3285, %v3389
        %v3391 = vpop.f32.mrb[0].mxu0
        %3392 = vmatprep.mubr.f32.mxu0 %v355
        %3393 = vmatmul.mubr.f32.gmra.mrb[0].mxu0 %v354
        %v3394 = vpop.f32.mrb[0].mxu0
        %v3395 = vadd.f32 %v3290, %v3394
        %v3396 = vpop.f32.mrb[0].mxu0
        %3397 = vmatprep.mubr.f32.mxu0 %v361
        %3398 = vmatmul.mubr.f32.gmra.mrb[0].mxu0 %v360
        %v3399 = vpop.f32.mrb[0].mxu0
        %v3400 = vadd.f32 %v3295, %v3399
        %v3401 = vpop.f32.mrb[0].mxu0
        %3402 = vdwg.mxu0
        %3403 = vmatprep.subr.mxu0 0.0
        %3404 = vmatpush1.msra.mxu0 %v2978
        %3405 = vmatprep.subr.mxu0 0.0
        %3406 = vmatpush1.msra.mxu0 %v3147
        %3407 = vmatprep.subr.mxu0 0.0
        %3408 = vmatpush1.msra.mxu0 %v3149
        %3409 = vmatprep.subr.mxu0 0.0
        %3410 = vmatpush1.msra.mxu0 %v3151
        %3411 = vmatprep.subr.mxu0 0.0
        %3412 = vmatpush1.msra.mxu0 %v3153
        %3413 = vmatprep.subr.mxu0 0.0
        %3414 = vmatpush1.msra.mxu0 %v3155
        %3415 = vmatprep.subr.mxu0 0.0
        %3416 = vmatpush1.msra.mxu0 %v3157
        %3417 = vmatprep.subr.mxu0 0.0
        %3418 = vmatpush1.msra.mxu0 %v3159
        %3419 = vmatprep.subr.mxu0 0.0
        %3420 = vmatpush1.msra.mxu0 %v3161
        %3421 = vmatprep.subr.mxu0 0.0
        %3422 = vmatpush1.msra.mxu0 %v2995
        %3423 = vmatprep.subr.mxu0 0.0
        %3424 = vmatpush1.msra.mxu0 %v3163
        %3425 = vmatprep.subr.mxu0 0.0
        %3426 = vmatpush1.msra.mxu0 %v3165
        %3427 = vmatprep.subr.mxu0 0.0
        %3428 = vmatpush1.msra.mxu0 %v3167
        %3429 = vmatprep.subr.mxu0 0.0
        %3430 = vmatpush1.msra.mxu0 %v3169
        %3431 = vmatprep.subr.mxu0 0.0
        %3432 = vmatpush1.msra.mxu0 %v3171
        %3433 = vmatprep.subr.mxu0 0.0
        %3434 = vmatpush1.msra.mxu0 %v3173
        %3435 = vmatprep.subr.mxu0 0.0
        %3436 = vmatpush1.msra.mxu0 %v3191
        %3437 = vmatprep.subr.mxu0 0.0
        %3438 = vmatpush1.msra.mxu0 0.0
        %3439 = vmatprep.subr.mxu0 0.0
        %3440 = vmatpush1.msra.mxu0 0.0
        %3441 = vmatprep.subr.mxu0 0.0
        %3442 = vmatpush1.msra.mxu0 0.0
        %3443 = vmatprep.subr.mxu0 0.0
        %3444 = vmatpush1.msra.mxu0 0.0
        %3445 = vmatprep.subr.mxu0 0.0
        %3446 = vmatpush1.msra.mxu0 0.0
        %3447 = vmatprep.subr.mxu0 0.0
        %3448 = vmatpush1.msra.mxu0 0.0
        %3449 = vmatprep.subr.mxu0 0.0
        %3450 = vmatpush1.msra.mxu0 0.0
        %3451 = vmatprep.subr.mxu0 0.0
        %3452 = vmatpush1.msra.mxu0 0.0
        %3453 = vmatprep.subr.mxu0 0.0
        %3454 = vmatpush1.msra.mxu0 0.0
        %3455 = vmatprep.subr.mxu0 0.0
        %3456 = vmatpush1.msra.mxu0 0.0
        %3457 = vmatprep.subr.mxu0 0.0
        %3458 = vmatpush1.msra.mxu0 0.0
        %3459 = vmatprep.subr.mxu0 0.0
        %3460 = vmatpush1.msra.mxu0 0.0
        %3461 = vmatprep.subr.mxu0 0.0
        %3462 = vmatpush1.msra.mxu0 0.0
        %3463 = vmatprep.subr.mxu0 0.0
        %3464 = vmatpush1.msra.mxu0 0.0
        %3465 = vmatprep.subr.mxu0 0.0
        %3466 = vmatpush1.msra.mxu0 0.0
        %3467 = vmatprep.mubr.f32.mxu0 %v806
        %3468 = vmatmul.mubr.f32.gmra.mrb[0].mxu0 %v320
        %v3469 = vpop.f32.mrb[0].mxu0
        %v3470 = vadd.f32 %v3365, %v3469
        %v3471 = vpop.f32.mrb[0].mxu0
        %3472 = vmatprep.mubr.f32.mxu0 %v809
        %3473 = vmatmul.mubr.f32.gmra.mrb[0].mxu0 %v326
        %v3474 = vpop.f32.mrb[0].mxu0
        %v3475 = vadd.f32 %v3370, %v3474
        %v3476 = vpop.f32.mrb[0].mxu0
        %3477 = vmatprep.mubr.f32.mxu0 %v812
        %3478 = vmatmul.mubr.f32.gmra.mrb[0].mxu0 %v332
        %v3479 = vpop.f32.mrb[0].mxu0
        %v3480 = vadd.f32 %v3375, %v3479
        %v3481 = vpop.f32.mrb[0].mxu0
        %3482 = vmatprep.mubr.f32.mxu0 %v815
        %3483 = vmatmul.mubr.f32.gmra.mrb[0].mxu0 %v338
        %v3484 = vpop.f32.mrb[0].mxu0
        %v3485 = vadd.f32 %v3380, %v3484
        %v3486 = vpop.f32.mrb[0].mxu0
        %3487 = vmatprep.mubr.f32.mxu0 %v818
        %3488 = vmatmul.mubr.f32.gmra.mrb[0].mxu0 %v344
        %v3489 = vpop.f32.mrb[0].mxu0
        %v3490 = vadd.f32 %v3385, %v3489
        %v3491 = vpop.f32.mrb[0].mxu0
        %3492 = vmatprep.mubr.f32.mxu0 %v821
        %3493 = vmatmul.mubr.f32.gmra.mrb[0].mxu0 %v350
        %v3494 = vpop.f32.mrb[0].mxu0
        %v3495 = vadd.f32 %v3390, %v3494
        %v3496 = vpop.f32.mrb[0].mxu0
        %3497 = vmatprep.mubr.f32.mxu0 %v824
        %3498 = vmatmul.mubr.f32.gmra.mrb[0].mxu0 %v356
        %v3499 = vpop.f32.mrb[0].mxu0
        %v3500 = vadd.f32 %v3395, %v3499
        %v3501 = vpop.f32.mrb[0].mxu0
        %3502 = vmatprep.mubr.f32.mxu0 %v827
        %3503 = vmatmul.mubr.f32.gmra.mrb[0].mxu0 %v362
        %v3504 = vpop.f32.mrb[0].mxu0
        %v3505 = vadd.f32 %v3400, %v3504
        %v3506 = vpop.f32.mrb[0].mxu0
        %3507 = vdwg.mxu0
        %v3508 = vmax.f32 %v3470, 0.0
        %v3509 = vmax.f32 %v3475, 0.0
        %v3510 = vmax.f32 %v3480, 0.0
        %v3511 = vmax.f32 %v3485, 0.0
        %v3512 = vmax.f32 %v3490, 0.0
        %v3513 = vmax.f32 %v3495, 0.0
        %v3514 = vmax.f32 %v3500, 0.0
        %v3515 = vmax.f32 %v3505, 0.0
        %3516 = vmatprep.subr.mxu0 0.0
        %3517 = vmatpush1.msra.mxu0 %v3508
        %3518 = vmatprep.subr.mxu0 0.0
        %3519 = vmatpush1.msra.mxu0 %v3509
        %3520 = vmatprep.subr.mxu0 0.0
        %3521 = vmatpush1.msra.mxu0 %v3510
        %3522 = vmatprep.subr.mxu0 0.0
        %3523 = vmatpush1.msra.mxu0 %v3511
        %3524 = vmatprep.subr.mxu0 0.0
        %3525 = vmatpush1.msra.mxu0 %v3512
        %3526 = vmatprep.subr.mxu0 0.0
        %3527 = vmatpush1.msra.mxu0 %v3513
        %3528 = vmatprep.subr.mxu0 0.0
        %3529 = vmatpush1.msra.mxu0 %v3514
        %3530 = vmatprep.subr.mxu0 0.0
        %3531 = vmatpush1.msra.mxu0 %v3515
        %3532 = vmatprep.subr.mxu0 0.0
        %3533 = vmatpush1.msra.mxu0 0.0
        %3534 = vmatprep.subr.mxu0 0.0
        %3535 = vmatpush1.msra.mxu0 0.0
        %3536 = vmatprep.subr.mxu0 0.0
        %3537 = vmatpush1.msra.mxu0 0.0
        %3538 = vmatprep.subr.mxu0 0.0
        %3539 = vmatpush1.msra.mxu0 0.0
        %3540 = vmatprep.subr.mxu0 0.0
        %3541 = vmatpush1.msra.mxu0 0.0
        %3542 = vmatprep.subr.mxu0 0.0
        %3543 = vmatpush1.msra.mxu0 0.0
        %3544 = vmatprep.subr.mxu0 0.0
        %3545 = vmatpush1.msra.mxu0 0.0
        %3546 = vmatprep.subr.mxu0 0.0
        %3547 = vmatpush1.msra.mxu0 0.0
        %3548 = vmatprep.subr.mxu0 0.0
        %3549 = vmatpush1.msra.mxu0 0.0
        %3550 = vmatprep.subr.mxu0 0.0
        %3551 = vmatpush1.msra.mxu0 0.0
        %3552 = vmatprep.subr.mxu0 0.0
        %3553 = vmatpush1.msra.mxu0 0.0
        %3554 = vmatprep.subr.mxu0 0.0
        %3555 = vmatpush1.msra.mxu0 0.0
        %3556 = vmatprep.subr.mxu0 0.0
        %3557 = vmatpush1.msra.mxu0 0.0
        %3558 = vmatprep.subr.mxu0 0.0
        %3559 = vmatpush1.msra.mxu0 0.0
        %3560 = vmatprep.subr.mxu0 0.0
        %3561 = vmatpush1.msra.mxu0 0.0
        %3562 = vmatprep.subr.mxu0 0.0
        %3563 = vmatpush1.msra.mxu0 0.0
        %3564 = vmatprep.subr.mxu0 0.0
        %3565 = vmatpush1.msra.mxu0 0.0
        %3566 = vmatprep.subr.mxu0 0.0
        %3567 = vmatpush1.msra.mxu0 0.0
        %3568 = vmatprep.subr.mxu0 0.0
        %3569 = vmatpush1.msra.mxu0 0.0
        %3570 = vmatprep.subr.mxu0 0.0
        %3571 = vmatpush1.msra.mxu0 0.0
        %3572 = vmatprep.subr.mxu0 0.0
        %3573 = vmatpush1.msra.mxu0 0.0
        %3574 = vmatprep.subr.mxu0 0.0
        %3575 = vmatpush1.msra.mxu0 0.0
        %3576 = vmatprep.subr.mxu0 0.0
        %3577 = vmatpush1.msra.mxu0 0.0
        %3578 = vmatprep.subr.mxu0 0.0
        %3579 = vmatpush1.msra.mxu0 0.0
        %3580 = vmatprep.mubr.f32.mxu0 0.0
        %3581 = vmatmul.mubr.f32.gmra.mrb[0].mxu0 %v1174
        %v3582 = vpop.f32.mrb[0].mxu0
        %v3583 = vadd.f32 %v1155, %v3582
        %v3584 = vpop.f32.mrb[0].mxu0
        %3585 = vmatprep.mubr.f32.mxu0 0.0
        %3586 = vmatmul.mubr.f32.gmra.mrb[0].mxu0 %v1177
        %v3587 = vpop.f32.mrb[0].mxu0
        %v3588 = vadd.f32 %v1160, %v3587
        %v3589 = vpop.f32.mrb[0].mxu0
        %3590 = vmatprep.mubr.f32.mxu0 0.0
        %3591 = vmatmul.mubr.f32.gmra.mrb[0].mxu0 %v1180
        %v3592 = vpop.f32.mrb[0].mxu0
        %v3593 = vadd.f32 %v1165, %v3592
        %v3594 = vpop.f32.mrb[0].mxu0
        %3595 = vmatprep.mubr.f32.mxu0 0.0
        %3596 = vmatmul.mubr.f32.gmra.mrb[0].mxu0 %v1183
        %v3597 = vpop.f32.mrb[0].mxu0
        %v3598 = vadd.f32 %v1170, %v3597
        %v3599 = vpop.f32.mrb[0].mxu0
        %3600 = vdwg.mxu0
        %v3601 = vmax.f32 %v3583, 0.0
        %v3602 = vmax.f32 %v3588, 0.0
        %v3603 = vmax.f32 %v3593, 0.0
        %v3604 = vmax.f32 %v3598, 0.0
        %s3605 = scalar_lea.vmem %s314, 96 [#allocation11]
        %3606 = vst.msk [vmem:[%s3605] sm:$0xff] %vm1274, %v3601
        %3607 = vst.msk [vmem:[%s3605 + $0x8] sm:$0xff] %vm1274, %v3602
        %3608 = vst.msk [vmem:[%s3605 + $0x10] sm:$0xff] %vm1274, %v3603
        %3609 = vst.msk [vmem:[%s3605 + $0x18] sm:$0xff] %vm1274, %v3604
        %s3610 = sand.u32 %s156, 1
        %s3611 = scalar_lea.sflag [#allocation4], %s3610
        %s3612 = sand.u32 %s156, 1
        %s3613 = smul.addr %s3612, 128
        %s3614 = scalar_lea.vmem [#allocation11], %s3613
        // Predicated region
        $region61: #{srcnn_forward.2} parent=39 // pred_check
          %p3615 = pneg %p166
        $region62: #{srcnn_forward.2} parent=39 // pred_check_branch
          %3617 = sbr.rel (%p3615) target = $region64
        $region63: #{srcnn_forward.2} parent=39 // pred_region
          %s3618 = smul.u32 4, %s29
          %s3620 = ssub.s32 2048, 2048
          %3621 = vsyncadd %s3611, %s3620
          %s3622 = smul.addr %s3618, 4
          %s3623 = smul.addr %s28, 48
          %s3624 = sadd.s32 %s3622, %s3623
          %s3625 = smul.addr %s3624, 128
          %s3626 = scalar_lea.hbm %s5, %s3625
          %s3627 = sshll.u32 %s3614, 4
          %s3628 = int_to_ptr.vmem [resolvable:$true] %s3627
          %3633 = dma.vmem_to_hbm [thread:$0]  %s3628, 2048, %s3626, %s3611, 128, 128, 8
        $region64: #{srcnn_forward.2} parent=39 // pred_fallthru
          _
      $region40: #{srcnn_forward.2} parent=5 // pred_fallthru
        _
      %p3634 = scmp.le.s32.totalorder 2, %s19
      // Predicated region
      $region65: #{srcnn_forward.2} parent=5 // pred_check
        %p3635 = pneg %p3634
      $region66: #{srcnn_forward.2} parent=5 // pred_check_branch
        %3637 = sbr.rel (%p3635) target = $region68
      $region67: #{srcnn_forward.2} parent=5 // pred_region
        %s3638 = ssub.s32 %s19, 2
        // Predicated region
        $region69: #{srcnn_forward.2} parent=67 // pred_check
          %p3639 = pneg %p172
        $region70: #{srcnn_forward.2} parent=67 // pred_check_branch
          %3641 = sbr.rel (%p3639) target = $region72
        $region71: #{srcnn_forward.2} parent=67 // pred_region
          %s3642 = sand.u32 %s157, 1
          %s3643 = scalar_lea.sflag [#allocation4], %s3642
          %s3644 = sand.u32 %s157, 1
          %s3645 = smul.addr %s3644, 128
          %s3646 = scalar_lea.vmem [#allocation11], %s3645
          %3647 = dma.done %s3643, 2048
        $region72: #{srcnn_forward.2} parent=67 // pred_fallthru
          _
      $region68: #{srcnn_forward.2} parent=5 // pred_fallthru
        _
    $region6: #{srcnn_forward.2} parent=1 // loop_footer
      %s23 = sadd.s32 1, %s19
    $region7: #{srcnn_forward.2} parent=1 // loop_footer_branch
      %18 = sbr.rel target = $region3
    $region8: #{srcnn_forward.2} parent=1 // loop_exit
      _
    %3648 = vsyncpa [#allocation3], 1
    %s3649 = scalar_lea.sflag [#allocation3], 1
    %3650 = vsyncpa %s3649, 1
    %3651 = vsyncpa [#allocation6], 1
    %3652 = vsyncpa [#allocation9], 1
    %3653 = vsyncpa [#allocation4], 1
    %s3654 = scalar_lea.sflag [#allocation4], 1
    %3655 = vsyncpa %s3654, 1

</llo_original>
